<compile_context>
chip_gen: v7x
topology: tpu7x:2x2x1
jax: 0.10.0
libtpu: 0.0.40
codegen_flags: <defaults>
</compile_context>

<pallas_src>
import math
import functools

import jax
import jax.numpy as jnp
from jax import lax
from jax.experimental import pallas as pl
from jax.experimental.pallas import tpu as pltpu


def _layernorm(x, g, b, eps=1e-5):
    x = x.astype(jnp.float32)
    mu = jnp.mean(x, axis=-1, keepdims=True)
    var = jnp.mean((x - mu) ** 2, axis=-1, keepdims=True)
    return (x - mu) * lax.rsqrt(var + eps) * g + b


def block_kernel(
    x_ref, bias_ref,
    ln1_g_ref, ln1_b_ref,
    w_dq_ref, qln_g_ref, qln_b_ref, w_uq_ref,
    w_dkv_ref, kvln_g_ref, kvln_b_ref, w_ukv_ref,
    w_o_t_ref,
    ln2_g_ref, ln2_b_ref,
    w_fc_ref, b_fc_ref, w_proj_ref, b_proj_ref,
    out_ref, k_ref, v_ref,
    *, n_heads,
):
    f32 = jnp.float32
    bf16 = jnp.bfloat16

    x3 = x_ref[...]                                  # (Bt, T, C) fp32
    Bt, T, C = x3.shape
    dh = C // n_heads
    x = x3.reshape(Bt * T, C)                        # flatten rows -> big-M dense dots

    # ---- layer_norm_1 (fp32) ----
    x_ln = _layernorm(x, ln1_g_ref[...], ln1_b_ref[...])
    x_ln_bf = x_ln.astype(bf16)

    # ---- MLA low-rank Q / KV projections (bf16 MXU operands, fp32 accumulation) ----
    cq = jnp.dot(x_ln_bf, w_dq_ref[...], preferred_element_type=f32)
    cq = _layernorm(cq, qln_g_ref[...], qln_b_ref[...])
    q = jnp.dot(cq.astype(bf16), w_uq_ref[...], preferred_element_type=f32)      # (Bt*T, C)

    ckv = jnp.dot(x_ln_bf, w_dkv_ref[...], preferred_element_type=f32)
    ckv = _layernorm(ckv, kvln_g_ref[...], kvln_b_ref[...])
    kv = jnp.dot(ckv.astype(bf16), w_ukv_ref[...], preferred_element_type=f32)   # (Bt*T, 2C)

    k_bf = kv[:, :C].astype(bf16)
    v_bf = kv[:, C:].astype(bf16)

    # ---- bf16, lane-dense KV-cache outputs (Bt, T, C); head split happens in the wrapper.
    #      Attention below consumes the exact same bf16 K/V (cache == attention precision).
    k_ref[...] = k_bf.reshape(Bt, T, C)
    v_ref[...] = v_bf.reshape(Bt, T, C)

    # ---- causal attention, per batch element (static unroll over small b_tile) ----
    scale = 1.0 / math.sqrt(dh)
    bias = bias_ref[...]                             # (T, T) fp32, precomputed in wrapper
    q_bf = (q * scale).astype(bf16)

    att_rows = []
    for b in range(Bt):
        r0 = b * T
        qh = jnp.transpose(q_bf[r0:r0 + T, :].reshape(T, n_heads, dh), (1, 0, 2))
        kh = jnp.transpose(k_bf[r0:r0 + T, :].reshape(T, n_heads, dh), (1, 0, 2))
        vh = jnp.transpose(v_bf[r0:r0 + T, :].reshape(T, n_heads, dh), (1, 0, 2))

        s = jnp.einsum("htd,hsd->hts", qh, kh, preferred_element_type=f32)   # (H, T, T)
        s = s + bias[None, :, :]
        s = s - jnp.max(s, axis=-1, keepdims=True)
        p = jnp.exp(s)
        p = p * pl.reciprocal(jnp.sum(p, axis=-1, keepdims=True), approx=True)

        o = jnp.einsum("hts,hsd->htd", p.astype(bf16), vh, preferred_element_type=f32)
        att_rows.append(jnp.transpose(o, (1, 0, 2)).reshape(T, C))
    att = jnp.concatenate(att_rows, axis=0) if Bt > 1 else att_rows[0]        # (Bt*T, C)

    # output projection: W_o pre-transposed in the wrapper -> plain x @ W
    att = jnp.dot(att.astype(bf16), w_o_t_ref[...], preferred_element_type=f32)

    x1 = x + att

    # ---- layer_norm_2 + MLP (GELU tanh) ----
    x2_ln = _layernorm(x1, ln2_g_ref[...], ln2_b_ref[...])
    h = jnp.dot(x2_ln.astype(bf16), w_fc_ref[...], preferred_element_type=f32) + b_fc_ref[...]
    h = 0.5 * h * (1.0 + jnp.tanh(
        0.7978845608028654 * (h + 0.044715 * h * h * h)))
    mlp = jnp.dot(h.astype(bf16), w_proj_ref[...], preferred_element_type=f32) + b_proj_ref[...]

    out_ref[...] = (x1 + mlp).reshape(Bt, T, C)


def _const_spec(arr):
    """Full-array block, constant index_map, single-buffered (fetched once per core)."""
    nd = arr.ndim
    idx = lambda i, _nd=nd: (0,) * _nd
    buffered = getattr(pl, "Buffered", None)
    if buffered is not None:
        try:
            return pl.BlockSpec(arr.shape, idx, pipeline_mode=buffered(1))
        except TypeError:  # older BlockSpec signature without pipeline_mode
            pass
    return pl.BlockSpec(arr.shape, idx)


def _pick_b_tile(B, T, cap=8):
    """Batch elements per grid step: aim for >=128 rows in the dense dots."""
    target = min(cap, max(1, -(-128 // T)))
    bt = min(B, target)
    while B % bt:
        bt -= 1
    return max(bt, 1)


def prepare_params(params):
    """One-time weight prep (bf16 MXU operands, W_o pre-transposed). Call once, reuse."""
    (ln1_g, ln1_b, w_dq, qln_g, qln_b, w_uq, w_dkv, kvln_g, kvln_b,
     w_ukv, w_o, ln2_g, ln2_b, w_fc, b_fc, w_proj, b_proj) = params
    bf16 = jnp.bfloat16
    return (
        ln1_g, ln1_b,
        w_dq.astype(bf16), qln_g, qln_b, w_uq.astype(bf16),
        w_dkv.astype(bf16), kvln_g, kvln_b, w_ukv.astype(bf16),
        jnp.transpose(w_o).astype(bf16),      # kernel computes att @ W_o^T as plain x @ W
        ln2_g, ln2_b,
        w_fc.astype(bf16), b_fc, w_proj.astype(bf16), b_proj,
    )


def block_forward(x, prepared_params, n_heads, prev_seq_length=0, b_tile=None):
    """x: (B, T, C) fp32 -> (out (B,T,C) fp32, K_heads, V_heads each (B,H,T,dh) bf16)."""
    B, T, C = x.shape
    dh = C // n_heads
    if b_tile is None:
        b_tile = _pick_b_tile(B, T)
    assert B % b_tile == 0, "b_tile must divide B"

    # Causal bias hoisted out of the kernel body (identical for every batch element).
    rows = jnp.arange(T, dtype=jnp.int32)[:, None]
    cols = jnp.arange(T, dtype=jnp.int32)[None, :]
    bias = jnp.where(cols <= rows + prev_seq_length, 0.0, -1e30).astype(jnp.float32)

    kernel = functools.partial(block_kernel, n_heads=n_heads)

    in_specs = ([pl.BlockSpec((b_tile, T, C), lambda i: (i, 0, 0))]
                + [_const_spec(bias)]
                + [_const_spec(a) for a in prepared_params])

    out_shape = (
        jax.ShapeDtypeStruct((B, T, C), jnp.float32),
        jax.ShapeDtypeStruct((B, T, C), jnp.bfloat16),   # K cache, lane-dense bf16
        jax.ShapeDtypeStruct((B, T, C), jnp.bfloat16),   # V cache, lane-dense bf16
    )
    out_specs = (
        pl.BlockSpec((b_tile, T, C), lambda i: (i, 0, 0)),
        pl.BlockSpec((b_tile, T, C), lambda i: (i, 0, 0)),
        pl.BlockSpec((b_tile, T, C), lambda i: (i, 0, 0)),
    )

    out, k_flat, v_flat = pl.pallas_call(
        kernel,
        grid=(B // b_tile,),
        in_specs=in_specs,
        out_specs=out_specs,
        out_shape=out_shape,
        compiler_params=pltpu.CompilerParams(
            dimension_semantics=("parallel",),
            # Plenty for this working set on v5e/v6e/v7x; raise on v5e/v6e if T scales
            # with the unfused attention, or (better) KV-tile the attention first.
            vmem_limit_bytes=32 * 1024 * 1024,
        ),
    )(x, bias, *prepared_params)

    # Head split / transpose outside the kernel (keeps kernel stores lane-dense).
    k_heads = k_flat.reshape(B, T, n_heads, dh).transpose(0, 2, 1, 3)
    v_heads = v_flat.reshape(B, T, n_heads, dh).transpose(0, 2, 1, 3)
    return out, k_heads, v_heads


def init_params(key, n_embed):
    d_model = n_embed
    q_proj = d_model // 2
    kv_proj = 2 * d_model // 3
    ks = jax.random.split(key, 7)
    r = lambda k, s: (0.01 * jax.random.normal(k, s)).astype(jnp.float32)

    ln1_g = jnp.ones((1, n_embed), jnp.float32)
    ln1_b = jnp.zeros((1, n_embed), jnp.float32)
    w_dq = r(ks[0], (d_model, q_proj))
    qln_g = jnp.ones((1, q_proj), jnp.float32)
    qln_b = jnp.zeros((1, q_proj), jnp.float32)
    w_uq = r(ks[1], (q_proj, d_model))
    w_dkv = r(ks[2], (d_model, 2 * kv_proj))
    kvln_g = jnp.ones((1, 2 * kv_proj), jnp.float32)
    kvln_b = jnp.zeros((1, 2 * kv_proj), jnp.float32)
    w_ukv = r(ks[3], (2 * kv_proj, 2 * d_model))
    w_o = r(ks[4], (d_model, d_model))
    ln2_g = jnp.ones((1, n_embed), jnp.float32)
    ln2_b = jnp.zeros((1, n_embed), jnp.float32)
    # nn.Linear-style init, stored as (in, out) for the kernel
    w_fc = (jax.random.uniform(ks[5], (n_embed, 4 * n_embed), minval=-1.0, maxval=1.0)
            / math.sqrt(n_embed)).astype(jnp.float32)
    b_fc = jnp.zeros((1, 4 * n_embed), jnp.float32)
    w_proj = (jax.random.uniform(ks[6], (4 * n_embed, n_embed), minval=-1.0, maxval=1.0)
              / math.sqrt(4 * n_embed)).astype(jnp.float32)
    b_proj = jnp.zeros((1, n_embed), jnp.float32)

    return (ln1_g, ln1_b, w_dq, qln_g, qln_b, w_uq, w_dkv, kvln_g, kvln_b,
            w_ukv, w_o, ln2_g, ln2_b, w_fc, b_fc, w_proj, b_proj)


def block_reference(x, params, n_heads, prev_seq_length=0):
    """Pure-JAX fp32 reference mirroring the PyTorch forward (KV=None)."""
    (ln1_g, ln1_b, w_dq, qln_g, qln_b, w_uq, w_dkv, kvln_g, kvln_b,
     w_ukv, w_o, ln2_g, ln2_b, w_fc, b_fc, w_proj, b_proj) = params
    B, T, C = x.shape
    dh = C // n_heads
    P = lax.Precision.HIGHEST
    ln = lambda a, g, b: _layernorm(a, g, b)

    x_ln = ln(x, ln1_g, ln1_b)
    cq = ln(jnp.matmul(x_ln, w_dq, precision=P), qln_g, qln_b)
    q = jnp.matmul(cq, w_uq, precision=P)
    ckv = ln(jnp.matmul(x_ln, w_dkv, precision=P), kvln_g, kvln_b)
    kv = jnp.matmul(ckv, w_ukv, precision=P)
    k, v = kv[..., :C], kv[..., C:]
    qh = q.reshape(B, T, n_heads, dh).transpose(0, 2, 1, 3)
    kh = k.reshape(B, T, n_heads, dh).transpose(0, 2, 1, 3)
    vh = v.reshape(B, T, n_heads, dh).transpose(0, 2, 1, 3)
    s = jnp.einsum("bhtd,bhsd->bhts", qh, kh, precision=P) / math.sqrt(dh)
    mask = jnp.tril(jnp.ones((T, T), bool), k=prev_seq_length)
    s = jnp.where(mask, s, -1e30)
    p = jax.nn.softmax(s, axis=-1)
    o = jnp.einsum("bhts,bhsd->bhtd", p, vh, precision=P)
    o = o.transpose(0, 2, 1, 3).reshape(B, T, C)
    att = jnp.matmul(o, w_o.T, precision=P)
    x1 = x + att
    x2 = ln(x1, ln2_g, ln2_b)
    h = jnp.matmul(x2, w_fc, precision=P) + b_fc
    h = 0.5 * h * (1.0 + jnp.tanh(0.7978845608028654 * (h + 0.044715 * h ** 3)))
    mlp = jnp.matmul(h, w_proj, precision=P) + b_proj
    return x1 + mlp, kh, vh


if __name__ == "__main__":
    # Lane-friendly small demo: C=384 (3x128), dh=128, 2*kv_proj=512, 4C=1536, T=16, B=2.
    B, T, n_embed, n_heads = 2, 16, 384, 3

    key = jax.random.PRNGKey(0)
    kx, kp = jax.random.split(key)
    x = jax.random.normal(kx, (B, T, n_embed), dtype=jnp.float32)
    params = init_params(kp, n_embed)

    # Weight prep (bf16 cast + W_o transpose) done ONCE, outside the forward call.
    prepared = prepare_params(params)
    prepared = jax.block_until_ready(prepared)

    fwd = jax.jit(block_forward, static_argnums=(2, 3, 4))
    out, k_heads, v_heads = fwd(x, prepared, n_heads, 0, None)
    jax.block_until_ready((out, k_heads, v_heads))

    # Reference uses the same bf16-rounded matmul weights the kernel consumes
    # (kernel math: bf16 MXU operands, fp32 accumulation; K/V cache stored in bf16).
    matmul_idx = {2, 5, 6, 9, 10, 13, 15}
    params_q = tuple(
        p.astype(jnp.bfloat16).astype(jnp.float32) if i in matmul_idx else p
        for i, p in enumerate(params))
    ref_out, ref_k, ref_v = block_reference(x, params_q, n_heads, prev_seq_length=0)

    dh = n_embed // n_heads
    assert out.shape == (B, T, n_embed)
    assert k_heads.shape == (B, n_heads, T, dh)
    assert v_heads.shape == (B, n_heads, T, dh)
    ok = (jnp.allclose(out, ref_out, atol=2e-2, rtol=2e-2)
          and jnp.allclose(k_heads.astype(jnp.float32), ref_k, atol=2e-2, rtol=2e-2)
          and jnp.allclose(v_heads.astype(jnp.float32), ref_v, atol=2e-2, rtol=2e-2))
    assert bool(ok), "Pallas output mismatch vs reference"
    print("KERNEL_OK")
</pallas_src>

<mosaic_0001>
module attributes {stable_mosaic.version = 11 : i64} {
  func.func @block_kernel(%arg0: i32, %arg1: memref<2x16x384xf32, #tpu.memory_space<vmem>>, %arg2: memref<16x16xf32, #tpu.memory_space<vmem>>, %arg3: memref<1x384xf32, #tpu.memory_space<vmem>>, %arg4: memref<1x384xf32, #tpu.memory_space<vmem>>, %arg5: memref<384x192xbf16, #tpu.memory_space<vmem>>, %arg6: memref<1x192xf32, #tpu.memory_space<vmem>>, %arg7: memref<1x192xf32, #tpu.memory_space<vmem>>, %arg8: memref<192x384xbf16, #tpu.memory_space<vmem>>, %arg9: memref<384x512xbf16, #tpu.memory_space<vmem>>, %arg10: memref<1x512xf32, #tpu.memory_space<vmem>>, %arg11: memref<1x512xf32, #tpu.memory_space<vmem>>, %arg12: memref<512x768xbf16, #tpu.memory_space<vmem>>, %arg13: memref<384x384xbf16, #tpu.memory_space<vmem>>, %arg14: memref<1x384xf32, #tpu.memory_space<vmem>>, %arg15: memref<1x384xf32, #tpu.memory_space<vmem>>, %arg16: memref<384x1536xbf16, #tpu.memory_space<vmem>>, %arg17: memref<1x1536xf32, #tpu.memory_space<vmem>>, %arg18: memref<1536x384xbf16, #tpu.memory_space<vmem>>, %arg19: memref<1x384xf32, #tpu.memory_space<vmem>>, %arg20: memref<2x16x384xf32, #tpu.memory_space<vmem>>, %arg21: memref<2x16x384xbf16, #tpu.memory_space<vmem>>, %arg22: memref<2x16x384xbf16, #tpu.memory_space<vmem>>) attributes {dimension_semantics = [#tpu.dimension_semantics<parallel>], iteration_bounds = array<i64: 1>, scalar_prefetch = 0 : i64, scratch_operands = 0 : i64, tpu.core_type = #tpu.core_type<tc>, window_params = [{transform_indices = @transform_0, window_bounds = array<i64: 2, 16, 384>}, {pipeline_mode = #tpu.pipeline_mode<synchronous>, transform_indices = @transform_1, window_bounds = array<i64: 16, 16>}, {pipeline_mode = #tpu.pipeline_mode<synchronous>, transform_indices = @transform_2, window_bounds = array<i64: 1, 384>}, {pipeline_mode = #tpu.pipeline_mode<synchronous>, transform_indices = @transform_3, window_bounds = array<i64: 1, 384>}, {pipeline_mode = #tpu.pipeline_mode<synchronous>, transform_indices = @transform_4, window_bounds = array<i64: 384, 192>}, {pipeline_mode = #tpu.pipeline_mode<synchronous>, transform_indices = @transform_5, window_bounds = array<i64: 1, 192>}, {pipeline_mode = #tpu.pipeline_mode<synchronous>, transform_indices = @transform_6, window_bounds = array<i64: 1, 192>}, {pipeline_mode = #tpu.pipeline_mode<synchronous>, transform_indices = @transform_7, window_bounds = array<i64: 192, 384>}, {pipeline_mode = #tpu.pipeline_mode<synchronous>, transform_indices = @transform_8, window_bounds = array<i64: 384, 512>}, {pipeline_mode = #tpu.pipeline_mode<synchronous>, transform_indices = @transform_9, window_bounds = array<i64: 1, 512>}, {pipeline_mode = #tpu.pipeline_mode<synchronous>, transform_indices = @transform_10, window_bounds = array<i64: 1, 512>}, {pipeline_mode = #tpu.pipeline_mode<synchronous>, transform_indices = @transform_11, window_bounds = array<i64: 512, 768>}, {pipeline_mode = #tpu.pipeline_mode<synchronous>, transform_indices = @transform_12, window_bounds = array<i64: 384, 384>}, {pipeline_mode = #tpu.pipeline_mode<synchronous>, transform_indices = @transform_13, window_bounds = array<i64: 1, 384>}, {pipeline_mode = #tpu.pipeline_mode<synchronous>, transform_indices = @transform_14, window_bounds = array<i64: 1, 384>}, {pipeline_mode = #tpu.pipeline_mode<synchronous>, transform_indices = @transform_15, window_bounds = array<i64: 384, 1536>}, {pipeline_mode = #tpu.pipeline_mode<synchronous>, transform_indices = @transform_16, window_bounds = array<i64: 1, 1536>}, {pipeline_mode = #tpu.pipeline_mode<synchronous>, transform_indices = @transform_17, window_bounds = array<i64: 1536, 384>}, {pipeline_mode = #tpu.pipeline_mode<synchronous>, transform_indices = @transform_18, window_bounds = array<i64: 1, 384>}, {transform_indices = @transform_19, window_bounds = array<i64: 2, 16, 384>}, {transform_indices = @transform_20, window_bounds = array<i64: 2, 16, 384>}, {transform_indices = @transform_21, window_bounds = array<i64: 2, 16, 384>}]} {
    %c0 = arith.constant 0 : index
    %c0_0 = arith.constant 0 : index
    %c0_1 = arith.constant 0 : index
    %0 = vector.load %arg1[%c0, %c0_0, %c0_1] : memref<2x16x384xf32, #tpu.memory_space<vmem>>, vector<2x16x384xf32>
    %1 = vector.shape_cast %0 : vector<2x16x384xf32> to vector<32x384xf32>
    %c0_2 = arith.constant 0 : index
    %c0_3 = arith.constant 0 : index
    %2 = vector.load %arg3[%c0_2, %c0_3] : memref<1x384xf32, #tpu.memory_space<vmem>>, vector<1x384xf32>
    %c0_4 = arith.constant 0 : index
    %c0_5 = arith.constant 0 : index
    %3 = vector.load %arg4[%c0_4, %c0_5] : memref<1x384xf32, #tpu.memory_space<vmem>>, vector<1x384xf32>
    %cst = arith.constant dense<0.000000e+00> : vector<32xf32>
    %4 = vector.multi_reduction <add>, %1, %cst [1] : vector<32x384xf32> to vector<32xf32>
    %5 = vector.shape_cast %4 : vector<32xf32> to vector<32x1xf32>
    %cst_6 = arith.constant 3.840000e+02 : f32
    %6 = vector.broadcast %cst_6 : f32 to vector<32x1xf32>
    %7 = arith.divf %5, %6 : vector<32x1xf32>
    %8 = vector.broadcast %7 : vector<32x1xf32> to vector<32x384xf32>
    %9 = arith.subf %1, %8 : vector<32x384xf32>
    %10 = arith.mulf %9, %9 : vector<32x384xf32>
    %cst_7 = arith.constant dense<0.000000e+00> : vector<32xf32>
    %11 = vector.multi_reduction <add>, %10, %cst_7 [1] : vector<32x384xf32> to vector<32xf32>
    %12 = vector.shape_cast %11 : vector<32xf32> to vector<32x1xf32>
    %cst_8 = arith.constant 3.840000e+02 : f32
    %13 = vector.broadcast %cst_8 : f32 to vector<32x1xf32>
    %14 = arith.divf %12, %13 : vector<32x1xf32>
    %15 = vector.broadcast %7 : vector<32x1xf32> to vector<32x384xf32>
    %16 = arith.subf %1, %15 : vector<32x384xf32>
    %cst_9 = arith.constant 9.99999974E-6 : f32
    %17 = vector.broadcast %cst_9 : f32 to vector<32x1xf32>
    %18 = arith.addf %14, %17 : vector<32x1xf32>
    %19 = math.rsqrt %18 : vector<32x1xf32>
    %20 = vector.broadcast %19 : vector<32x1xf32> to vector<32x384xf32>
    %21 = arith.mulf %16, %20 : vector<32x384xf32>
    %22 = vector.broadcast %2 : vector<1x384xf32> to vector<32x384xf32>
    %23 = arith.mulf %21, %22 : vector<32x384xf32>
    %24 = vector.broadcast %3 : vector<1x384xf32> to vector<32x384xf32>
    %25 = arith.addf %23, %24 : vector<32x384xf32>
    %26 = arith.truncf %25 : vector<32x384xf32> to vector<32x384xbf16>
    %c0_10 = arith.constant 0 : index
    %c0_11 = arith.constant 0 : index
    %27 = vector.load %arg5[%c0_10, %c0_11] : memref<384x192xbf16, #tpu.memory_space<vmem>>, vector<384x192xbf16>
    %cst_12 = arith.constant dense<0.000000e+00> : vector<32x192xf32>
    %28 = tpu.matmul %26, %27, %cst_12 {dimension_numbers = #tpu.dot_dimension_numbers<[1], [0], [0], [1], [0, 0, 1, 1], [], []>} : vector<32x384xbf16>, vector<384x192xbf16>, vector<32x192xf32> -> vector<32x192xf32>
    %c0_13 = arith.constant 0 : index
    %c0_14 = arith.constant 0 : index
    %29 = vector.load %arg6[%c0_13, %c0_14] : memref<1x192xf32, #tpu.memory_space<vmem>>, vector<1x192xf32>
    %c0_15 = arith.constant 0 : index
    %c0_16 = arith.constant 0 : index
    %30 = vector.load %arg7[%c0_15, %c0_16] : memref<1x192xf32, #tpu.memory_space<vmem>>, vector<1x192xf32>
    %cst_17 = arith.constant dense<0.000000e+00> : vector<32xf32>
    %31 = vector.multi_reduction <add>, %28, %cst_17 [1] : vector<32x192xf32> to vector<32xf32>
    %32 = vector.shape_cast %31 : vector<32xf32> to vector<32x1xf32>
    %cst_18 = arith.constant 1.920000e+02 : f32
    %33 = vector.broadcast %cst_18 : f32 to vector<32x1xf32>
    %34 = arith.divf %32, %33 : vector<32x1xf32>
    %35 = vector.broadcast %34 : vector<32x1xf32> to vector<32x192xf32>
    %36 = arith.subf %28, %35 : vector<32x192xf32>
    %37 = arith.mulf %36, %36 : vector<32x192xf32>
    %cst_19 = arith.constant dense<0.000000e+00> : vector<32xf32>
    %38 = vector.multi_reduction <add>, %37, %cst_19 [1] : vector<32x192xf32> to vector<32xf32>
    %39 = vector.shape_cast %38 : vector<32xf32> to vector<32x1xf32>
    %cst_20 = arith.constant 1.920000e+02 : f32
    %40 = vector.broadcast %cst_20 : f32 to vector<32x1xf32>
    %41 = arith.divf %39, %40 : vector<32x1xf32>
    %42 = vector.broadcast %34 : vector<32x1xf32> to vector<32x192xf32>
    %43 = arith.subf %28, %42 : vector<32x192xf32>
    %cst_21 = arith.constant 9.99999974E-6 : f32
    %44 = vector.broadcast %cst_21 : f32 to vector<32x1xf32>
    %45 = arith.addf %41, %44 : vector<32x1xf32>
    %46 = math.rsqrt %45 : vector<32x1xf32>
    %47 = vector.broadcast %46 : vector<32x1xf32> to vector<32x192xf32>
    %48 = arith.mulf %43, %47 : vector<32x192xf32>
    %49 = vector.broadcast %29 : vector<1x192xf32> to vector<32x192xf32>
    %50 = arith.mulf %48, %49 : vector<32x192xf32>
    %51 = vector.broadcast %30 : vector<1x192xf32> to vector<32x192xf32>
    %52 = arith.addf %50, %51 : vector<32x192xf32>
    %53 = arith.truncf %52 : vector<32x192xf32> to vector<32x192xbf16>
    %c0_22 = arith.constant 0 : index
    %c0_23 = arith.constant 0 : index
    %54 = vector.load %arg8[%c0_22, %c0_23] : memref<192x384xbf16, #tpu.memory_space<vmem>>, vector<192x384xbf16>
    %cst_24 = arith.constant dense<0.000000e+00> : vector<32x384xf32>
    %55 = tpu.matmul %53, %54, %cst_24 {dimension_numbers = #tpu.dot_dimension_numbers<[1], [0], [0], [1], [0, 0, 1, 1], [], []>} : vector<32x192xbf16>, vector<192x384xbf16>, vector<32x384xf32> -> vector<32x384xf32>
    %c0_25 = arith.constant 0 : index
    %c0_26 = arith.constant 0 : index
    %56 = vector.load %arg9[%c0_25, %c0_26] : memref<384x512xbf16, #tpu.memory_space<vmem>>, vector<384x512xbf16>
    %cst_27 = arith.constant dense<0.000000e+00> : vector<32x512xf32>
    %57 = tpu.matmul %26, %56, %cst_27 {dimension_numbers = #tpu.dot_dimension_numbers<[1], [0], [0], [1], [0, 0, 1, 1], [], []>} : vector<32x384xbf16>, vector<384x512xbf16>, vector<32x512xf32> -> vector<32x512xf32>
    %c0_28 = arith.constant 0 : index
    %c0_29 = arith.constant 0 : index
    %58 = vector.load %arg10[%c0_28, %c0_29] : memref<1x512xf32, #tpu.memory_space<vmem>>, vector<1x512xf32>
    %c0_30 = arith.constant 0 : index
    %c0_31 = arith.constant 0 : index
    %59 = vector.load %arg11[%c0_30, %c0_31] : memref<1x512xf32, #tpu.memory_space<vmem>>, vector<1x512xf32>
    %cst_32 = arith.constant dense<0.000000e+00> : vector<32xf32>
    %60 = vector.multi_reduction <add>, %57, %cst_32 [1] : vector<32x512xf32> to vector<32xf32>
    %61 = vector.shape_cast %60 : vector<32xf32> to vector<32x1xf32>
    %cst_33 = arith.constant 5.120000e+02 : f32
    %62 = vector.broadcast %cst_33 : f32 to vector<32x1xf32>
    %63 = arith.divf %61, %62 : vector<32x1xf32>
    %64 = vector.broadcast %63 : vector<32x1xf32> to vector<32x512xf32>
    %65 = arith.subf %57, %64 : vector<32x512xf32>
    %66 = arith.mulf %65, %65 : vector<32x512xf32>
    %cst_34 = arith.constant dense<0.000000e+00> : vector<32xf32>
    %67 = vector.multi_reduction <add>, %66, %cst_34 [1] : vector<32x512xf32> to vector<32xf32>
    %68 = vector.shape_cast %67 : vector<32xf32> to vector<32x1xf32>
    %cst_35 = arith.constant 5.120000e+02 : f32
    %69 = vector.broadcast %cst_35 : f32 to vector<32x1xf32>
    %70 = arith.divf %68, %69 : vector<32x1xf32>
    %71 = vector.broadcast %63 : vector<32x1xf32> to vector<32x512xf32>
    %72 = arith.subf %57, %71 : vector<32x512xf32>
    %cst_36 = arith.constant 9.99999974E-6 : f32
    %73 = vector.broadcast %cst_36 : f32 to vector<32x1xf32>
    %74 = arith.addf %70, %73 : vector<32x1xf32>
    %75 = math.rsqrt %74 : vector<32x1xf32>
    %76 = vector.broadcast %75 : vector<32x1xf32> to vector<32x512xf32>
    %77 = arith.mulf %72, %76 : vector<32x512xf32>
    %78 = vector.broadcast %58 : vector<1x512xf32> to vector<32x512xf32>
    %79 = arith.mulf %77, %78 : vector<32x512xf32>
    %80 = vector.broadcast %59 : vector<1x512xf32> to vector<32x512xf32>
    %81 = arith.addf %79, %80 : vector<32x512xf32>
    %82 = arith.truncf %81 : vector<32x512xf32> to vector<32x512xbf16>
    %c0_37 = arith.constant 0 : index
    %c0_38 = arith.constant 0 : index
    %83 = vector.load %arg12[%c0_37, %c0_38] : memref<512x768xbf16, #tpu.memory_space<vmem>>, vector<512x768xbf16>
    %cst_39 = arith.constant dense<0.000000e+00> : vector<32x768xf32>
    %84 = tpu.matmul %82, %83, %cst_39 {dimension_numbers = #tpu.dot_dimension_numbers<[1], [0], [0], [1], [0, 0, 1, 1], [], []>} : vector<32x512xbf16>, vector<512x768xbf16>, vector<32x768xf32> -> vector<32x768xf32>
    %85 = vector.extract_strided_slice %84 {offsets = [0, 0], sizes = [32, 384], strides = [1, 1]} : vector<32x768xf32> to vector<32x384xf32>
    %86 = arith.truncf %85 : vector<32x384xf32> to vector<32x384xbf16>
    %87 = vector.extract_strided_slice %84 {offsets = [0, 384], sizes = [32, 384], strides = [1, 1]} : vector<32x768xf32> to vector<32x384xf32>
    %88 = arith.truncf %87 : vector<32x384xf32> to vector<32x384xbf16>
    %89 = vector.shape_cast %86 : vector<32x384xbf16> to vector<2x16x384xbf16>
    %c0_40 = arith.constant 0 : index
    %c0_41 = arith.constant 0 : index
    %c0_42 = arith.constant 0 : index
    %90 = vector.load %arg21[%c0_40, %c0_41, %c0_42] : memref<2x16x384xbf16, #tpu.memory_space<vmem>>, vector<2x16x384xbf16>
    tpu.vector_store %arg21[%c0_40, %c0_41, %c0_42], %89 {strides = array<i32>} : memref<2x16x384xbf16, #tpu.memory_space<vmem>>, vector<2x16x384xbf16>,
    %91 = vector.shape_cast %88 : vector<32x384xbf16> to vector<2x16x384xbf16>
    %c0_43 = arith.constant 0 : index
    %c0_44 = arith.constant 0 : index
    %c0_45 = arith.constant 0 : index
    %92 = vector.load %arg22[%c0_43, %c0_44, %c0_45] : memref<2x16x384xbf16, #tpu.memory_space<vmem>>, vector<2x16x384xbf16>
    tpu.vector_store %arg22[%c0_43, %c0_44, %c0_45], %91 {strides = array<i32>} : memref<2x16x384xbf16, #tpu.memory_space<vmem>>, vector<2x16x384xbf16>,
    %c0_46 = arith.constant 0 : index
    %c0_47 = arith.constant 0 : index
    %93 = vector.load %arg2[%c0_46, %c0_47] : memref<16x16xf32, #tpu.memory_space<vmem>>, vector<16x16xf32>
    %cst_48 = arith.constant 0.0883883461 : f32
    %94 = vector.broadcast %cst_48 : f32 to vector<32x384xf32>
    %95 = arith.mulf %55, %94 : vector<32x384xf32>
    %96 = arith.truncf %95 : vector<32x384xf32> to vector<32x384xbf16>
    %97 = vector.extract_strided_slice %96 {offsets = [0, 0], sizes = [16, 384], strides = [1, 1]} : vector<32x384xbf16> to vector<16x384xbf16>
    %98 = vector.shape_cast %97 : vector<16x384xbf16> to vector<16x3x128xbf16>
    %99 = tpu.transpose %98, [1, 0, 2] : vector<16x3x128xbf16> -> vector<3x16x128xbf16>
    %100 = vector.extract_strided_slice %86 {offsets = [0, 0], sizes = [16, 384], strides = [1, 1]} : vector<32x384xbf16> to vector<16x384xbf16>
    %101 = vector.shape_cast %100 : vector<16x384xbf16> to vector<16x3x128xbf16>
    %102 = tpu.transpose %101, [1, 0, 2] : vector<16x3x128xbf16> -> vector<3x16x128xbf16>
    %103 = vector.extract_strided_slice %88 {offsets = [0, 0], sizes = [16, 384], strides = [1, 1]} : vector<32x384xbf16> to vector<16x384xbf16>
    %104 = vector.shape_cast %103 : vector<16x384xbf16> to vector<16x3x128xbf16>
    %105 = tpu.transpose %104, [1, 0, 2] : vector<16x3x128xbf16> -> vector<3x16x128xbf16>
    "tpu.trace_start"() <{level = 10 : i32, message = "htd,hsd->hts"}> : () -> ()
    %cst_49 = arith.constant dense<0.000000e+00> : vector<3x16x16xf32>
    %106 = tpu.matmul %99, %102, %cst_49 {dimension_numbers = #tpu.dot_dimension_numbers<[2], [2], [1], [1], [0, 0, 0, 1, 1, 1], [0], [0]>} : vector<3x16x128xbf16>, vector<3x16x128xbf16>, vector<3x16x16xf32> -> vector<3x16x16xf32>
    "tpu.trace_stop"() : () -> ()
    %107 = vector.shape_cast %93 : vector<16x16xf32> to vector<1x16x16xf32>
    %108 = vector.broadcast %107 : vector<1x16x16xf32> to vector<3x16x16xf32>
    %109 = arith.addf %106, %108 : vector<3x16x16xf32>
    %cst_50 = arith.constant dense<0xFF800000> : vector<3x16xf32>
    %110 = vector.multi_reduction <maximumf>, %109, %cst_50 [2] : vector<3x16x16xf32> to vector<3x16xf32>
    %111 = vector.shape_cast %110 : vector<3x16xf32> to vector<3x16x1xf32>
    %112 = vector.broadcast %111 : vector<3x16x1xf32> to vector<3x16x16xf32>
    %113 = arith.subf %109, %112 : vector<3x16x16xf32>
    %114 = math.exp %113 : vector<3x16x16xf32>
    %cst_51 = arith.constant dense<0.000000e+00> : vector<3x16xf32>
    %115 = vector.multi_reduction <add>, %114, %cst_51 [2] : vector<3x16x16xf32> to vector<3x16xf32>
    %116 = vector.shape_cast %115 : vector<3x16xf32> to vector<3x16x1xf32>
    %117 = tpu.reciprocal %116 {approx = true} : vector<3x16x1xf32> -> vector<3x16x1xf32>
    %118 = vector.broadcast %117 : vector<3x16x1xf32> to vector<3x16x16xf32>
    %119 = arith.mulf %114, %118 : vector<3x16x16xf32>
    %120 = arith.truncf %119 : vector<3x16x16xf32> to vector<3x16x16xbf16>
    "tpu.trace_start"() <{level = 10 : i32, message = "hts,hsd->htd"}> : () -> ()
    %cst_52 = arith.constant dense<0.000000e+00> : vector<3x16x128xf32>
    %121 = tpu.matmul %120, %105, %cst_52 {dimension_numbers = #tpu.dot_dimension_numbers<[2], [1], [1], [2], [0, 0, 0, 1, 1, 2], [0], [0]>} : vector<3x16x16xbf16>, vector<3x16x128xbf16>, vector<3x16x128xf32> -> vector<3x16x128xf32>
    "tpu.trace_stop"() : () -> ()
    %122 = tpu.transpose %121, [1, 0, 2] : vector<3x16x128xf32> -> vector<16x3x128xf32>
    %123 = vector.shape_cast %122 : vector<16x3x128xf32> to vector<16x384xf32>
    %124 = vector.extract_strided_slice %96 {offsets = [16, 0], sizes = [16, 384], strides = [1, 1]} : vector<32x384xbf16> to vector<16x384xbf16>
    %125 = vector.shape_cast %124 : vector<16x384xbf16> to vector<16x3x128xbf16>
    %126 = tpu.transpose %125, [1, 0, 2] : vector<16x3x128xbf16> -> vector<3x16x128xbf16>
    %127 = vector.extract_strided_slice %86 {offsets = [16, 0], sizes = [16, 384], strides = [1, 1]} : vector<32x384xbf16> to vector<16x384xbf16>
    %128 = vector.shape_cast %127 : vector<16x384xbf16> to vector<16x3x128xbf16>
    %129 = tpu.transpose %128, [1, 0, 2] : vector<16x3x128xbf16> -> vector<3x16x128xbf16>
    %130 = vector.extract_strided_slice %88 {offsets = [16, 0], sizes = [16, 384], strides = [1, 1]} : vector<32x384xbf16> to vector<16x384xbf16>
    %131 = vector.shape_cast %130 : vector<16x384xbf16> to vector<16x3x128xbf16>
    %132 = tpu.transpose %131, [1, 0, 2] : vector<16x3x128xbf16> -> vector<3x16x128xbf16>
    "tpu.trace_start"() <{level = 10 : i32, message = "htd,hsd->hts"}> : () -> ()
    %cst_53 = arith.constant dense<0.000000e+00> : vector<3x16x16xf32>
    %133 = tpu.matmul %126, %129, %cst_53 {dimension_numbers = #tpu.dot_dimension_numbers<[2], [2], [1], [1], [0, 0, 0, 1, 1, 1], [0], [0]>} : vector<3x16x128xbf16>, vector<3x16x128xbf16>, vector<3x16x16xf32> -> vector<3x16x16xf32>
    "tpu.trace_stop"() : () -> ()
    %134 = vector.shape_cast %93 : vector<16x16xf32> to vector<1x16x16xf32>
    %135 = vector.broadcast %134 : vector<1x16x16xf32> to vector<3x16x16xf32>
    %136 = arith.addf %133, %135 : vector<3x16x16xf32>
    %cst_54 = arith.constant dense<0xFF800000> : vector<3x16xf32>
    %137 = vector.multi_reduction <maximumf>, %136, %cst_54 [2] : vector<3x16x16xf32> to vector<3x16xf32>
    %138 = vector.shape_cast %137 : vector<3x16xf32> to vector<3x16x1xf32>
    %139 = vector.broadcast %138 : vector<3x16x1xf32> to vector<3x16x16xf32>
    %140 = arith.subf %136, %139 : vector<3x16x16xf32>
    %141 = math.exp %140 : vector<3x16x16xf32>
    %cst_55 = arith.constant dense<0.000000e+00> : vector<3x16xf32>
    %142 = vector.multi_reduction <add>, %141, %cst_55 [2] : vector<3x16x16xf32> to vector<3x16xf32>
    %143 = vector.shape_cast %142 : vector<3x16xf32> to vector<3x16x1xf32>
    %144 = tpu.reciprocal %143 {approx = true} : vector<3x16x1xf32> -> vector<3x16x1xf32>
    %145 = vector.broadcast %144 : vector<3x16x1xf32> to vector<3x16x16xf32>
    %146 = arith.mulf %141, %145 : vector<3x16x16xf32>
    %147 = arith.truncf %146 : vector<3x16x16xf32> to vector<3x16x16xbf16>
    "tpu.trace_start"() <{level = 10 : i32, message = "hts,hsd->htd"}> : () -> ()
    %cst_56 = arith.constant dense<0.000000e+00> : vector<3x16x128xf32>
    %148 = tpu.matmul %147, %132, %cst_56 {dimension_numbers = #tpu.dot_dimension_numbers<[2], [1], [1], [2], [0, 0, 0, 1, 1, 2], [0], [0]>} : vector<3x16x16xbf16>, vector<3x16x128xbf16>, vector<3x16x128xf32> -> vector<3x16x128xf32>
    "tpu.trace_stop"() : () -> ()
    %149 = tpu.transpose %148, [1, 0, 2] : vector<3x16x128xf32> -> vector<16x3x128xf32>
    %150 = vector.shape_cast %149 : vector<16x3x128xf32> to vector<16x384xf32>
    %151 = tpu.concatenate %123, %150 in 0 : vector<16x384xf32>, vector<16x384xf32> -> vector<32x384xf32>
    %152 = arith.truncf %151 : vector<32x384xf32> to vector<32x384xbf16>
    %c0_57 = arith.constant 0 : index
    %c0_58 = arith.constant 0 : index
    %153 = vector.load %arg13[%c0_57, %c0_58] : memref<384x384xbf16, #tpu.memory_space<vmem>>, vector<384x384xbf16>
    %cst_59 = arith.constant dense<0.000000e+00> : vector<32x384xf32>
    %154 = tpu.matmul %152, %153, %cst_59 {dimension_numbers = #tpu.dot_dimension_numbers<[1], [0], [0], [1], [0, 0, 1, 1], [], []>} : vector<32x384xbf16>, vector<384x384xbf16>, vector<32x384xf32> -> vector<32x384xf32>
    %155 = arith.addf %1, %154 : vector<32x384xf32>
    %c0_60 = arith.constant 0 : index
    %c0_61 = arith.constant 0 : index
    %156 = vector.load %arg14[%c0_60, %c0_61] : memref<1x384xf32, #tpu.memory_space<vmem>>, vector<1x384xf32>
    %c0_62 = arith.constant 0 : index
    %c0_63 = arith.constant 0 : index
    %157 = vector.load %arg15[%c0_62, %c0_63] : memref<1x384xf32, #tpu.memory_space<vmem>>, vector<1x384xf32>
    %cst_64 = arith.constant dense<0.000000e+00> : vector<32xf32>
    %158 = vector.multi_reduction <add>, %155, %cst_64 [1] : vector<32x384xf32> to vector<32xf32>
    %159 = vector.shape_cast %158 : vector<32xf32> to vector<32x1xf32>
    %cst_65 = arith.constant 3.840000e+02 : f32
    %160 = vector.broadcast %cst_65 : f32 to vector<32x1xf32>
    %161 = arith.divf %159, %160 : vector<32x1xf32>
    %162 = vector.broadcast %161 : vector<32x1xf32> to vector<32x384xf32>
    %163 = arith.subf %155, %162 : vector<32x384xf32>
    %164 = arith.mulf %163, %163 : vector<32x384xf32>
    %cst_66 = arith.constant dense<0.000000e+00> : vector<32xf32>
    %165 = vector.multi_reduction <add>, %164, %cst_66 [1] : vector<32x384xf32> to vector<32xf32>
    %166 = vector.shape_cast %165 : vector<32xf32> to vector<32x1xf32>
    %cst_67 = arith.constant 3.840000e+02 : f32
    %167 = vector.broadcast %cst_67 : f32 to vector<32x1xf32>
    %168 = arith.divf %166, %167 : vector<32x1xf32>
    %169 = vector.broadcast %161 : vector<32x1xf32> to vector<32x384xf32>
    %170 = arith.subf %155, %169 : vector<32x384xf32>
    %cst_68 = arith.constant 9.99999974E-6 : f32
    %171 = vector.broadcast %cst_68 : f32 to vector<32x1xf32>
    %172 = arith.addf %168, %171 : vector<32x1xf32>
    %173 = math.rsqrt %172 : vector<32x1xf32>
    %174 = vector.broadcast %173 : vector<32x1xf32> to vector<32x384xf32>
    %175 = arith.mulf %170, %174 : vector<32x384xf32>
    %176 = vector.broadcast %156 : vector<1x384xf32> to vector<32x384xf32>
    %177 = arith.mulf %175, %176 : vector<32x384xf32>
    %178 = vector.broadcast %157 : vector<1x384xf32> to vector<32x384xf32>
    %179 = arith.addf %177, %178 : vector<32x384xf32>
    %180 = arith.truncf %179 : vector<32x384xf32> to vector<32x384xbf16>
    %c0_69 = arith.constant 0 : index
    %c0_70 = arith.constant 0 : index
    %181 = vector.load %arg16[%c0_69, %c0_70] : memref<384x1536xbf16, #tpu.memory_space<vmem>>, vector<384x1536xbf16>
    %cst_71 = arith.constant dense<0.000000e+00> : vector<32x1536xf32>
    %182 = tpu.matmul %180, %181, %cst_71 {dimension_numbers = #tpu.dot_dimension_numbers<[1], [0], [0], [1], [0, 0, 1, 1], [], []>} : vector<32x384xbf16>, vector<384x1536xbf16>, vector<32x1536xf32> -> vector<32x1536xf32>
    %c0_72 = arith.constant 0 : index
    %c0_73 = arith.constant 0 : index
    %183 = vector.load %arg17[%c0_72, %c0_73] : memref<1x1536xf32, #tpu.memory_space<vmem>>, vector<1x1536xf32>
    %184 = vector.broadcast %183 : vector<1x1536xf32> to vector<32x1536xf32>
    %185 = arith.addf %182, %184 : vector<32x1536xf32>
    %cst_74 = arith.constant 5.000000e-01 : f32
    %186 = vector.broadcast %cst_74 : f32 to vector<32x1536xf32>
    %187 = arith.mulf %186, %185 : vector<32x1536xf32>
    %cst_75 = arith.constant 4.471500e-02 : f32
    %188 = vector.broadcast %cst_75 : f32 to vector<32x1536xf32>
    %189 = arith.mulf %188, %185 : vector<32x1536xf32>
    %190 = arith.mulf %189, %185 : vector<32x1536xf32>
    %191 = arith.mulf %190, %185 : vector<32x1536xf32>
    %192 = arith.addf %185, %191 : vector<32x1536xf32>
    %cst_76 = arith.constant 0.797884583 : f32
    %193 = vector.broadcast %cst_76 : f32 to vector<32x1536xf32>
    %194 = arith.mulf %193, %192 : vector<32x1536xf32>
    %195 = math.tanh %194 : vector<32x1536xf32>
    %cst_77 = arith.constant 1.000000e+00 : f32
    %196 = vector.broadcast %cst_77 : f32 to vector<32x1536xf32>
    %197 = arith.addf %196, %195 : vector<32x1536xf32>
    %198 = arith.mulf %187, %197 : vector<32x1536xf32>
    %199 = arith.truncf %198 : vector<32x1536xf32> to vector<32x1536xbf16>
    %c0_78 = arith.constant 0 : index
    %c0_79 = arith.constant 0 : index
    %200 = vector.load %arg18[%c0_78, %c0_79] : memref<1536x384xbf16, #tpu.memory_space<vmem>>, vector<1536x384xbf16>
    %cst_80 = arith.constant dense<0.000000e+00> : vector<32x384xf32>
    %201 = tpu.matmul %199, %200, %cst_80 {dimension_numbers = #tpu.dot_dimension_numbers<[1], [0], [0], [1], [0, 0, 1, 1], [], []>} : vector<32x1536xbf16>, vector<1536x384xbf16>, vector<32x384xf32> -> vector<32x384xf32>
    %c0_81 = arith.constant 0 : index
    %c0_82 = arith.constant 0 : index
    %202 = vector.load %arg19[%c0_81, %c0_82] : memref<1x384xf32, #tpu.memory_space<vmem>>, vector<1x384xf32>
    %203 = vector.broadcast %202 : vector<1x384xf32> to vector<32x384xf32>
    %204 = arith.addf %201, %203 : vector<32x384xf32>
    %205 = arith.addf %155, %204 : vector<32x384xf32>
    %206 = vector.shape_cast %205 : vector<32x384xf32> to vector<2x16x384xf32>
    %c0_83 = arith.constant 0 : index
    %c0_84 = arith.constant 0 : index
    %c0_85 = arith.constant 0 : index
    %207 = vector.load %arg20[%c0_83, %c0_84, %c0_85] : memref<2x16x384xf32, #tpu.memory_space<vmem>>, vector<2x16x384xf32>
    tpu.vector_store %arg20[%c0_83, %c0_84, %c0_85], %206 {strides = array<i32>} : memref<2x16x384xf32, #tpu.memory_space<vmem>>, vector<2x16x384xf32>,
    return
  }
  func.func @transform_0(%arg0: i32) -> (i32, i32, i32) {
    %c0_i32 = arith.constant 0 : i32
    %c0_i32_0 = arith.constant 0 : i32
    %c0_i32_1 = arith.constant 0 : i32
    return %arg0, %c0_i32, %c0_i32_0 : i32, i32, i32
  }
  func.func @transform_1(%arg0: i32) -> (i32, i32) {
    %c0_i32 = arith.constant 0 : i32
    %c0_i32_0 = arith.constant 0 : i32
    %c0_i32_1 = arith.constant 0 : i32
    return %c0_i32, %c0_i32_0 : i32, i32
  }
  func.func @transform_2(%arg0: i32) -> (i32, i32) {
    %c0_i32 = arith.constant 0 : i32
    %c0_i32_0 = arith.constant 0 : i32
    %c0_i32_1 = arith.constant 0 : i32
    return %c0_i32, %c0_i32_0 : i32, i32
  }
  func.func @transform_3(%arg0: i32) -> (i32, i32) {
    %c0_i32 = arith.constant 0 : i32
    %c0_i32_0 = arith.constant 0 : i32
    %c0_i32_1 = arith.constant 0 : i32
    return %c0_i32, %c0_i32_0 : i32, i32
  }
  func.func @transform_4(%arg0: i32) -> (i32, i32) {
    %c0_i32 = arith.constant 0 : i32
    %c0_i32_0 = arith.constant 0 : i32
    %c0_i32_1 = arith.constant 0 : i32
    return %c0_i32, %c0_i32_0 : i32, i32
  }
  func.func @transform_5(%arg0: i32) -> (i32, i32) {
    %c0_i32 = arith.constant 0 : i32
    %c0_i32_0 = arith.constant 0 : i32
    %c0_i32_1 = arith.constant 0 : i32
    return %c0_i32, %c0_i32_0 : i32, i32
  }
  func.func @transform_6(%arg0: i32) -> (i32, i32) {
    %c0_i32 = arith.constant 0 : i32
    %c0_i32_0 = arith.constant 0 : i32
    %c0_i32_1 = arith.constant 0 : i32
    return %c0_i32, %c0_i32_0 : i32, i32
  }
  func.func @transform_7(%arg0: i32) -> (i32, i32) {
    %c0_i32 = arith.constant 0 : i32
    %c0_i32_0 = arith.constant 0 : i32
    %c0_i32_1 = arith.constant 0 : i32
    return %c0_i32, %c0_i32_0 : i32, i32
  }
  func.func @transform_8(%arg0: i32) -> (i32, i32) {
    %c0_i32 = arith.constant 0 : i32
    %c0_i32_0 = arith.constant 0 : i32
    %c0_i32_1 = arith.constant 0 : i32
    return %c0_i32, %c0_i32_0 : i32, i32
  }
  func.func @transform_9(%arg0: i32) -> (i32, i32) {
    %c0_i32 = arith.constant 0 : i32
    %c0_i32_0 = arith.constant 0 : i32
    %c0_i32_1 = arith.constant 0 : i32
    return %c0_i32, %c0_i32_0 : i32, i32
  }
  func.func @transform_10(%arg0: i32) -> (i32, i32) {
    %c0_i32 = arith.constant 0 : i32
    %c0_i32_0 = arith.constant 0 : i32
    %c0_i32_1 = arith.constant 0 : i32
    return %c0_i32, %c0_i32_0 : i32, i32
  }
  func.func @transform_11(%arg0: i32) -> (i32, i32) {
    %c0_i32 = arith.constant 0 : i32
    %c0_i32_0 = arith.constant 0 : i32
    %c0_i32_1 = arith.constant 0 : i32
    return %c0_i32, %c0_i32_0 : i32, i32
  }
  func.func @transform_12(%arg0: i32) -> (i32, i32) {
    %c0_i32 = arith.constant 0 : i32
    %c0_i32_0 = arith.constant 0 : i32
    %c0_i32_1 = arith.constant 0 : i32
    return %c0_i32, %c0_i32_0 : i32, i32
  }
  func.func @transform_13(%arg0: i32) -> (i32, i32) {
    %c0_i32 = arith.constant 0 : i32
    %c0_i32_0 = arith.constant 0 : i32
    %c0_i32_1 = arith.constant 0 : i32
    return %c0_i32, %c0_i32_0 : i32, i32
  }
  func.func @transform_14(%arg0: i32) -> (i32, i32) {
    %c0_i32 = arith.constant 0 : i32
    %c0_i32_0 = arith.constant 0 : i32
    %c0_i32_1 = arith.constant 0 : i32
    return %c0_i32, %c0_i32_0 : i32, i32
  }
  func.func @transform_15(%arg0: i32) -> (i32, i32) {
    %c0_i32 = arith.constant 0 : i32
    %c0_i32_0 = arith.constant 0 : i32
    %c0_i32_1 = arith.constant 0 : i32
    return %c0_i32, %c0_i32_0 : i32, i32
  }
  func.func @transform_16(%arg0: i32) -> (i32, i32) {
    %c0_i32 = arith.constant 0 : i32
    %c0_i32_0 = arith.constant 0 : i32
    %c0_i32_1 = arith.constant 0 : i32
    return %c0_i32, %c0_i32_0 : i32, i32
  }
  func.func @transform_17(%arg0: i32) -> (i32, i32) {
    %c0_i32 = arith.constant 0 : i32
    %c0_i32_0 = arith.constant 0 : i32
    %c0_i32_1 = arith.constant 0 : i32
    return %c0_i32, %c0_i32_0 : i32, i32
  }
  func.func @transform_18(%arg0: i32) -> (i32, i32) {
    %c0_i32 = arith.constant 0 : i32
    %c0_i32_0 = arith.constant 0 : i32
    %c0_i32_1 = arith.constant 0 : i32
    return %c0_i32, %c0_i32_0 : i32, i32
  }
  func.func @transform_19(%arg0: i32) -> (i32, i32, i32) {
    %c0_i32 = arith.constant 0 : i32
    %c0_i32_0 = arith.constant 0 : i32
    %c0_i32_1 = arith.constant 0 : i32
    return %arg0, %c0_i32, %c0_i32_0 : i32, i32, i32
  }
  func.func @transform_20(%arg0: i32) -> (i32, i32, i32) {
    %c0_i32 = arith.constant 0 : i32
    %c0_i32_0 = arith.constant 0 : i32
    %c0_i32_1 = arith.constant 0 : i32
    return %arg0, %c0_i32, %c0_i32_0 : i32, i32, i32
  }
  func.func @transform_21(%arg0: i32) -> (i32, i32, i32) {
    %c0_i32 = arith.constant 0 : i32
    %c0_i32_0 = arith.constant 0 : i32
    %c0_i32_1 = arith.constant 0 : i32
    return %arg0, %c0_i32, %c0_i32_0 : i32, i32, i32
  }
}

</mosaic_0001>

<llo_original>
// kernel: block_forward.1
$region0: #{block_forward.1}
  #allocation0 [shape = 'u32[]', space=smem, size = 0x4, offset = 0x4, fixed_abs, tag = 'smem constant byte address 0x4 - core index']
  #allocation1 [shape = 'u32[144,128]{1,0:T(1,128)}', space=vmem, size = 0x12000, scoped, tag = 'internal scratch']
  %s0 = inlined_call_operand.hbm [shape: f32[2,16,384], index: 0, kind: input, shape index: {}]
  %s1 = inlined_call_operand.vmem [shape: f32[16,16], index: 1, kind: input, shape index: {}]
  %s2 = inlined_call_operand.hbm [shape: f32[1,384], index: 2, kind: input, shape index: {}]
  %s3 = inlined_call_operand.hbm [shape: f32[1,384], index: 3, kind: input, shape index: {}]
  %s4 = inlined_call_operand.vmem [shape: bf16[384,192], index: 4, kind: input, shape index: {}]
  %s5 = inlined_call_operand.hbm [shape: f32[1,192], index: 5, kind: input, shape index: {}]
  %s6 = inlined_call_operand.hbm [shape: f32[1,192], index: 6, kind: input, shape index: {}]
  %s7 = inlined_call_operand.hbm [shape: bf16[192,384], index: 7, kind: input, shape index: {}]
  %s8 = inlined_call_operand.hbm [shape: bf16[384,512], index: 8, kind: input, shape index: {}]
  %s9 = inlined_call_operand.hbm [shape: f32[1,512], index: 9, kind: input, shape index: {}]
  %s10 = inlined_call_operand.hbm [shape: f32[1,512], index: 10, kind: input, shape index: {}]
  %s11 = inlined_call_operand.hbm [shape: bf16[512,768], index: 11, kind: input, shape index: {}]
  %s12 = inlined_call_operand.hbm [shape: bf16[384,384], index: 12, kind: input, shape index: {}]
  %s13 = inlined_call_operand.hbm [shape: f32[1,384], index: 13, kind: input, shape index: {}]
  %s14 = inlined_call_operand.hbm [shape: f32[1,384], index: 14, kind: input, shape index: {}]
  %s15 = inlined_call_operand.hbm [shape: bf16[384,1536], index: 15, kind: input, shape index: {}]
  %s16 = inlined_call_operand.hbm [shape: f32[1,1536], index: 16, kind: input, shape index: {}]
  %s17 = inlined_call_operand.hbm [shape: bf16[1536,384], index: 17, kind: input, shape index: {}]
  %s18 = inlined_call_operand.hbm [shape: f32[1,384], index: 18, kind: input, shape index: {}]
  %s19 = inlined_call_operand.hbm [shape: f32[2,16,384], index: 19, kind: output, shape index: {0}]
  %s20 = inlined_call_operand.vmem [shape: bf16[2,16,384], index: 20, kind: output, shape index: {1}]
  %s21 = inlined_call_operand.vmem [shape: bf16[2,16,384], index: 21, kind: output, shape index: {2}]
  %22 = xla_tuple %s19, %s20, %s21
  %s23 = sld [smem:[#allocation0]]
  $region170: #{block_forward.1} parent=0
    _
  %s25 = ssub.s32 1, %s23
  %s26 = scalar_select 0, %s25, %s23
  $region1: #{block_forward.1} parent=0
    #allocation2 [shape = 'u8[49152]{0}', space=vmem, size = 0xc000, scoped, tag = 'input window, operand 0, single buffered']
    #allocation3 [shape = 's32[1]{0}', space=sflag, size = 0x4, scoped, tag = 'scoped memory for block_forward.1']
    #allocation4 [shape = 's32[1]{0}', space=sflag, size = 0x4, scoped, tag = 'scoped memory for block_forward.1']
    #allocation5 [shape = 'u8[1536]{0}', space=vmem, size = 0x800, scoped, tag = 'input window, operand 2, single buffered']
    #allocation6 [shape = 's32[1]{0}', space=sflag, size = 0x4, scoped, tag = 'scoped memory for block_forward.1']
    #allocation7 [shape = 'u8[1536]{0}', space=vmem, size = 0x800, scoped, tag = 'input window, operand 3, single buffered']
    #allocation8 [shape = 'u8[1024]{0}', space=vmem, size = 0x400, scoped, tag = 'input window, operand 5, single buffered']
    #allocation9 [shape = 's32[1]{0}', space=sflag, size = 0x4, scoped, tag = 'scoped memory for block_forward.1']
    #allocation10 [shape = 'u8[1024]{0}', space=vmem, size = 0x400, scoped, tag = 'input window, operand 6, single buffered']
    #allocation11 [shape = 'u8[147456]{0}', space=vmem, size = 0x24000, scoped, tag = 'input window, operand 7, single buffered']
    #allocation12 [shape = 's32[1]{0}', space=sflag, size = 0x4, scoped, tag = 'scoped memory for block_forward.1']
    #allocation13 [shape = 'u8[393216]{0}', space=vmem, size = 0x60000, scoped, tag = 'input window, operand 8, single buffered']
    #allocation14 [shape = 'u8[2048]{0}', space=vmem, size = 0x800, scoped, tag = 'input window, operand 9, single buffered']
    #allocation15 [shape = 's32[1]{0}', space=sflag, size = 0x4, scoped, tag = 'scoped memory for block_forward.1']
    #allocation16 [shape = 'u8[2048]{0}', space=vmem, size = 0x800, scoped, tag = 'input window, operand 10, single buffered']
    #allocation17 [shape = 'u8[786432]{0}', space=vmem, size = 0xc0000, scoped, tag = 'input window, operand 11, single buffered']
    #allocation18 [shape = 's32[1]{0}', space=sflag, size = 0x4, scoped, tag = 'scoped memory for block_forward.1']
    #allocation19 [shape = 'u8[294912]{0}', space=vmem, size = 0x48000, scoped, tag = 'input window, operand 12, single buffered']
    #allocation20 [shape = 'u8[1536]{0}', space=vmem, size = 0x800, scoped, tag = 'input window, operand 13, single buffered']
    #allocation21 [shape = 's32[1]{0}', space=sflag, size = 0x4, scoped, tag = 'scoped memory for block_forward.1']
    #allocation22 [shape = 'u8[1536]{0}', space=vmem, size = 0x800, scoped, tag = 'input window, operand 14, single buffered']
    #allocation23 [shape = 'u8[1179648]{0}', space=vmem, size = 0x120000, scoped, tag = 'input window, operand 15, single buffered']
    #allocation24 [shape = 's32[1]{0}', space=sflag, size = 0x4, scoped, tag = 'scoped memory for block_forward.1']
    #allocation25 [shape = 'u8[6144]{0}', space=vmem, size = 0x1800, scoped, tag = 'input window, operand 16, single buffered']
    #allocation26 [shape = 'u8[1179648]{0}', space=vmem, size = 0x120000, scoped, tag = 'input window, operand 17, single buffered']
    #allocation27 [shape = 's32[1]{0}', space=sflag, size = 0x4, scoped, tag = 'scoped memory for block_forward.1']
    #allocation28 [shape = 'u8[1536]{0}', space=vmem, size = 0x800, scoped, tag = 'input window, operand 18, single buffered']
    #allocation29 [shape = 'u8[49152]{0}', space=vmem, size = 0xc000, scoped, tag = 'output window, operand 0, single buffered']
    %27 = vsyncpa [#allocation3], 0
    %28 = vsyncpa [#allocation6], 0
    %29 = vsyncpa [#allocation9], 0
    %30 = vsyncpa [#allocation12], 0
    %31 = vsyncpa [#allocation15], 0
    %32 = vsyncpa [#allocation18], 0
    %33 = vsyncpa [#allocation21], 0
    %34 = vsyncpa [#allocation24], 0
    %35 = vsyncpa [#allocation27], 0
    %36 = vsyncpa [#allocation4], 0
    // Predicated region
    $region2: #{block_forward.1} parent=1 // pred_check
      _
    $region3: #{block_forward.1} parent=1 // pred_check_branch
      %38 = sbr.rel (0) target = $region5
    $region4: #{block_forward.1} parent=1 // pred_region
      %s40 = ssub.s32 1536, 1536
      %41 = vsyncadd [#allocation3], %s40
      %s42 = sshll.u32 [#allocation2], 4
      %s43 = int_to_ptr.vmem [resolvable:$true] %s42
      %48 = dma.hbm_to_vmem [thread:$0]  %s0, 1536, %s43, [#allocation3], 384, 384, 24
    $region5: #{block_forward.1} parent=1 // pred_fallthru
      _
    // Predicated region
    $region6: #{block_forward.1} parent=1 // pred_check
      _
    $region7: #{block_forward.1} parent=1 // pred_check_branch
      %50 = sbr.rel (0) target = $region9
    $region8: #{block_forward.1} parent=1 // pred_region
      _
    $region9: #{block_forward.1} parent=1 // pred_fallthru
      _
    // Predicated region
    $region10: #{block_forward.1} parent=1 // pred_check
      _
    $region11: #{block_forward.1} parent=1 // pred_check_branch
      %52 = sbr.rel (0) target = $region13
    $region12: #{block_forward.1} parent=1 // pred_region
      %s54 = ssub.s32 48, 48
      %55 = vsyncadd [#allocation6], %s54
      %s57 = sshll.u32 [#allocation5], 4
      %s58 = int_to_ptr.vmem [resolvable:$true] %s57
      %60 = dma.hbm_to_vmem [thread:$0]  %s2, 48, %s58, [#allocation6]
    $region13: #{block_forward.1} parent=1 // pred_fallthru
      _
    // Predicated region
    $region14: #{block_forward.1} parent=1 // pred_check
      _
    $region15: #{block_forward.1} parent=1 // pred_check_branch
      %62 = sbr.rel (0) target = $region17
    $region16: #{block_forward.1} parent=1 // pred_region
      %s64 = ssub.s32 48, 48
      %65 = vsyncadd [#allocation6], %s64
      %s67 = sshll.u32 [#allocation7], 4
      %s68 = int_to_ptr.vmem [resolvable:$true] %s67
      %70 = dma.hbm_to_vmem [thread:$0]  %s3, 48, %s68, [#allocation6]
    $region17: #{block_forward.1} parent=1 // pred_fallthru
      _
    // Predicated region
    $region18: #{block_forward.1} parent=1 // pred_check
      _
    $region19: #{block_forward.1} parent=1 // pred_check_branch
      %72 = sbr.rel (0) target = $region21
    $region20: #{block_forward.1} parent=1 // pred_region
      _
    $region21: #{block_forward.1} parent=1 // pred_fallthru
      _
    // Predicated region
    $region22: #{block_forward.1} parent=1 // pred_check
      _
    $region23: #{block_forward.1} parent=1 // pred_check_branch
      %74 = sbr.rel (0) target = $region25
    $region24: #{block_forward.1} parent=1 // pred_region
      %s76 = ssub.s32 32, 32
      %77 = vsyncadd [#allocation9], %s76
      %s79 = sshll.u32 [#allocation8], 4
      %s80 = int_to_ptr.vmem [resolvable:$true] %s79
      %82 = dma.hbm_to_vmem [thread:$0]  %s5, 32, %s80, [#allocation9]
    $region25: #{block_forward.1} parent=1 // pred_fallthru
      _
    // Predicated region
    $region26: #{block_forward.1} parent=1 // pred_check
      _
    $region27: #{block_forward.1} parent=1 // pred_check_branch
      %84 = sbr.rel (0) target = $region29
    $region28: #{block_forward.1} parent=1 // pred_region
      %s86 = ssub.s32 32, 32
      %87 = vsyncadd [#allocation9], %s86
      %s89 = sshll.u32 [#allocation10], 4
      %s90 = int_to_ptr.vmem [resolvable:$true] %s89
      %92 = dma.hbm_to_vmem [thread:$0]  %s6, 32, %s90, [#allocation9]
    $region29: #{block_forward.1} parent=1 // pred_fallthru
      _
    // Predicated region
    $region30: #{block_forward.1} parent=1 // pred_check
      _
    $region31: #{block_forward.1} parent=1 // pred_check_branch
      %94 = sbr.rel (0) target = $region33
    $region32: #{block_forward.1} parent=1 // pred_region
      %s96 = ssub.s32 4608, 4608
      %97 = vsyncadd [#allocation12], %s96
      %s98 = sshll.u32 [#allocation11], 4
      %s99 = int_to_ptr.vmem [resolvable:$true] %s98
      %104 = dma.hbm_to_vmem [thread:$0]  %s7, 4608, %s99, [#allocation12], 192, 192, 12
    $region33: #{block_forward.1} parent=1 // pred_fallthru
      _
    // Predicated region
    $region34: #{block_forward.1} parent=1 // pred_check
      _
    $region35: #{block_forward.1} parent=1 // pred_check_branch
      %106 = sbr.rel (0) target = $region37
    $region36: #{block_forward.1} parent=1 // pred_region
      %s108 = ssub.s32 12288, 12288
      %109 = vsyncadd [#allocation12], %s108
      %s110 = sshll.u32 [#allocation13], 4
      %s111 = int_to_ptr.vmem [resolvable:$true] %s110
      %116 = dma.hbm_to_vmem [thread:$0]  %s8, 12288, %s111, [#allocation12], 256, 256, 16
    $region37: #{block_forward.1} parent=1 // pred_fallthru
      _
    // Predicated region
    $region38: #{block_forward.1} parent=1 // pred_check
      _
    $region39: #{block_forward.1} parent=1 // pred_check_branch
      %118 = sbr.rel (0) target = $region41
    $region40: #{block_forward.1} parent=1 // pred_region
      %s120 = ssub.s32 64, 64
      %121 = vsyncadd [#allocation15], %s120
      %s123 = sshll.u32 [#allocation14], 4
      %s124 = int_to_ptr.vmem [resolvable:$true] %s123
      %126 = dma.hbm_to_vmem [thread:$0]  %s9, 64, %s124, [#allocation15]
    $region41: #{block_forward.1} parent=1 // pred_fallthru
      _
    // Predicated region
    $region42: #{block_forward.1} parent=1 // pred_check
      _
    $region43: #{block_forward.1} parent=1 // pred_check_branch
      %128 = sbr.rel (0) target = $region45
    $region44: #{block_forward.1} parent=1 // pred_region
      %s130 = ssub.s32 64, 64
      %131 = vsyncadd [#allocation15], %s130
      %s133 = sshll.u32 [#allocation16], 4
      %s134 = int_to_ptr.vmem [resolvable:$true] %s133
      %136 = dma.hbm_to_vmem [thread:$0]  %s10, 64, %s134, [#allocation15]
    $region45: #{block_forward.1} parent=1 // pred_fallthru
      _
    // Predicated region
    $region46: #{block_forward.1} parent=1 // pred_check
      _
    $region47: #{block_forward.1} parent=1 // pred_check_branch
      %138 = sbr.rel (0) target = $region49
    $region48: #{block_forward.1} parent=1 // pred_region
      %s140 = ssub.s32 24576, 24576
      %141 = vsyncadd [#allocation18], %s140
      %s142 = sshll.u32 [#allocation17], 4
      %s143 = int_to_ptr.vmem [resolvable:$true] %s142
      %148 = dma.hbm_to_vmem [thread:$0]  %s11, 24576, %s143, [#allocation18], 384, 384, 24
    $region49: #{block_forward.1} parent=1 // pred_fallthru
      _
    // Predicated region
    $region50: #{block_forward.1} parent=1 // pred_check
      _
    $region51: #{block_forward.1} parent=1 // pred_check_branch
      %150 = sbr.rel (0) target = $region53
    $region52: #{block_forward.1} parent=1 // pred_region
      %s152 = ssub.s32 9216, 9216
      %153 = vsyncadd [#allocation18], %s152
      %s154 = sshll.u32 [#allocation19], 4
      %s155 = int_to_ptr.vmem [resolvable:$true] %s154
      %160 = dma.hbm_to_vmem [thread:$0]  %s12, 9216, %s155, [#allocation18], 192, 192, 12
    $region53: #{block_forward.1} parent=1 // pred_fallthru
      _
    // Predicated region
    $region54: #{block_forward.1} parent=1 // pred_check
      _
    $region55: #{block_forward.1} parent=1 // pred_check_branch
      %162 = sbr.rel (0) target = $region57
    $region56: #{block_forward.1} parent=1 // pred_region
      %s164 = ssub.s32 48, 48
      %165 = vsyncadd [#allocation21], %s164
      %s167 = sshll.u32 [#allocation20], 4
      %s168 = int_to_ptr.vmem [resolvable:$true] %s167
      %170 = dma.hbm_to_vmem [thread:$0]  %s13, 48, %s168, [#allocation21]
    $region57: #{block_forward.1} parent=1 // pred_fallthru
      _
    // Predicated region
    $region58: #{block_forward.1} parent=1 // pred_check
      _
    $region59: #{block_forward.1} parent=1 // pred_check_branch
      %172 = sbr.rel (0) target = $region61
    $region60: #{block_forward.1} parent=1 // pred_region
      %s174 = ssub.s32 48, 48
      %175 = vsyncadd [#allocation21], %s174
      %s177 = sshll.u32 [#allocation22], 4
      %s178 = int_to_ptr.vmem [resolvable:$true] %s177
      %180 = dma.hbm_to_vmem [thread:$0]  %s14, 48, %s178, [#allocation21]
    $region61: #{block_forward.1} parent=1 // pred_fallthru
      _
    // Predicated region
    $region62: #{block_forward.1} parent=1 // pred_check
      _
    $region63: #{block_forward.1} parent=1 // pred_check_branch
      %182 = sbr.rel (0) target = $region65
    $region64: #{block_forward.1} parent=1 // pred_region
      %s184 = ssub.s32 36864, 36864
      %185 = vsyncadd [#allocation24], %s184
      %s186 = sshll.u32 [#allocation23], 4
      %s187 = int_to_ptr.vmem [resolvable:$true] %s186
      %192 = dma.hbm_to_vmem [thread:$0]  %s15, 36864, %s187, [#allocation24], 768, 768, 48
    $region65: #{block_forward.1} parent=1 // pred_fallthru
      _
    // Predicated region
    $region66: #{block_forward.1} parent=1 // pred_check
      _
    $region67: #{block_forward.1} parent=1 // pred_check_branch
      %194 = sbr.rel (0) target = $region69
    $region68: #{block_forward.1} parent=1 // pred_region
      %s196 = ssub.s32 192, 192
      %197 = vsyncadd [#allocation24], %s196
      %s199 = sshll.u32 [#allocation25], 4
      %s200 = int_to_ptr.vmem [resolvable:$true] %s199
      %202 = dma.hbm_to_vmem [thread:$0]  %s16, 192, %s200, [#allocation24]
    $region69: #{block_forward.1} parent=1 // pred_fallthru
      _
    // Predicated region
    $region70: #{block_forward.1} parent=1 // pred_check
      _
    $region71: #{block_forward.1} parent=1 // pred_check_branch
      %204 = sbr.rel (0) target = $region73
    $region72: #{block_forward.1} parent=1 // pred_region
      %s206 = ssub.s32 36864, 36864
      %207 = vsyncadd [#allocation27], %s206
      %s208 = sshll.u32 [#allocation26], 4
      %s209 = int_to_ptr.vmem [resolvable:$true] %s208
      %214 = dma.hbm_to_vmem [thread:$0]  %s17, 36864, %s209, [#allocation27], 192, 192, 12
    $region73: #{block_forward.1} parent=1 // pred_fallthru
      _
    // Predicated region
    $region74: #{block_forward.1} parent=1 // pred_check
      _
    $region75: #{block_forward.1} parent=1 // pred_check_branch
      %216 = sbr.rel (0) target = $region77
    $region76: #{block_forward.1} parent=1 // pred_region
      %s218 = ssub.s32 48, 48
      %219 = vsyncadd [#allocation27], %s218
      %s221 = sshll.u32 [#allocation28], 4
      %s222 = int_to_ptr.vmem [resolvable:$true] %s221
      %224 = dma.hbm_to_vmem [thread:$0]  %s18, 48, %s222, [#allocation27]
    $region77: #{block_forward.1} parent=1 // pred_fallthru
      _
    // Predicated region
    $region78: #{block_forward.1} parent=1 // pred_check
      _
    $region79: #{block_forward.1} parent=1 // pred_check_branch
      %226 = sbr.rel (0) target = $region81
    $region80: #{block_forward.1} parent=1 // pred_region
      %227 = dma.done [#allocation3], 1536
    $region81: #{block_forward.1} parent=1 // pred_fallthru
      _
    // Predicated region
    $region82: #{block_forward.1} parent=1 // pred_check
      _
    $region83: #{block_forward.1} parent=1 // pred_check_branch
      %229 = sbr.rel (0) target = $region85
    $region84: #{block_forward.1} parent=1 // pred_region
      %230 = dma.done [#allocation6], 48
    $region85: #{block_forward.1} parent=1 // pred_fallthru
      _
    // Predicated region
    $region86: #{block_forward.1} parent=1 // pred_check
      _
    $region87: #{block_forward.1} parent=1 // pred_check_branch
      %232 = sbr.rel (0) target = $region89
    $region88: #{block_forward.1} parent=1 // pred_region
      %233 = dma.done [#allocation6], 48
    $region89: #{block_forward.1} parent=1 // pred_fallthru
      _
    // Predicated region
    $region90: #{block_forward.1} parent=1 // pred_check
      _
    $region91: #{block_forward.1} parent=1 // pred_check_branch
      %235 = sbr.rel (0) target = $region93
    $region92: #{block_forward.1} parent=1 // pred_region
      %236 = dma.done [#allocation9], 32
    $region93: #{block_forward.1} parent=1 // pred_fallthru
      _
    // Predicated region
    $region94: #{block_forward.1} parent=1 // pred_check
      _
    $region95: #{block_forward.1} parent=1 // pred_check_branch
      %238 = sbr.rel (0) target = $region97
    $region96: #{block_forward.1} parent=1 // pred_region
      %239 = dma.done [#allocation9], 32
    $region97: #{block_forward.1} parent=1 // pred_fallthru
      _
    // Predicated region
    $region98: #{block_forward.1} parent=1 // pred_check
      _
    $region99: #{block_forward.1} parent=1 // pred_check_branch
      %241 = sbr.rel (0) target = $region101
    $region100: #{block_forward.1} parent=1 // pred_region
      %242 = dma.done [#allocation12], 4608
    $region101: #{block_forward.1} parent=1 // pred_fallthru
      _
    // Predicated region
    $region102: #{block_forward.1} parent=1 // pred_check
      _
    $region103: #{block_forward.1} parent=1 // pred_check_branch
      %244 = sbr.rel (0) target = $region105
    $region104: #{block_forward.1} parent=1 // pred_region
      %245 = dma.done [#allocation12], 12288
    $region105: #{block_forward.1} parent=1 // pred_fallthru
      _
    // Predicated region
    $region106: #{block_forward.1} parent=1 // pred_check
      _
    $region107: #{block_forward.1} parent=1 // pred_check_branch
      %247 = sbr.rel (0) target = $region109
    $region108: #{block_forward.1} parent=1 // pred_region
      %248 = dma.done [#allocation15], 64
    $region109: #{block_forward.1} parent=1 // pred_fallthru
      _
    // Predicated region
    $region110: #{block_forward.1} parent=1 // pred_check
      _
    $region111: #{block_forward.1} parent=1 // pred_check_branch
      %250 = sbr.rel (0) target = $region113
    $region112: #{block_forward.1} parent=1 // pred_region
      %251 = dma.done [#allocation15], 64
    $region113: #{block_forward.1} parent=1 // pred_fallthru
      _
    // Predicated region
    $region114: #{block_forward.1} parent=1 // pred_check
      _
    $region115: #{block_forward.1} parent=1 // pred_check_branch
      %253 = sbr.rel (0) target = $region117
    $region116: #{block_forward.1} parent=1 // pred_region
      %254 = dma.done [#allocation18], 24576
    $region117: #{block_forward.1} parent=1 // pred_fallthru
      _
    // Predicated region
    $region118: #{block_forward.1} parent=1 // pred_check
      _
    $region119: #{block_forward.1} parent=1 // pred_check_branch
      %256 = sbr.rel (0) target = $region121
    $region120: #{block_forward.1} parent=1 // pred_region
      %257 = dma.done [#allocation18], 9216
    $region121: #{block_forward.1} parent=1 // pred_fallthru
      _
    // Predicated region
    $region122: #{block_forward.1} parent=1 // pred_check
      _
    $region123: #{block_forward.1} parent=1 // pred_check_branch
      %259 = sbr.rel (0) target = $region125
    $region124: #{block_forward.1} parent=1 // pred_region
      %260 = dma.done [#allocation21], 48
    $region125: #{block_forward.1} parent=1 // pred_fallthru
      _
    // Predicated region
    $region126: #{block_forward.1} parent=1 // pred_check
      _
    $region127: #{block_forward.1} parent=1 // pred_check_branch
      %262 = sbr.rel (0) target = $region129
    $region128: #{block_forward.1} parent=1 // pred_region
      %263 = dma.done [#allocation21], 48
    $region129: #{block_forward.1} parent=1 // pred_fallthru
      _
    // Predicated region
    $region130: #{block_forward.1} parent=1 // pred_check
      _
    $region131: #{block_forward.1} parent=1 // pred_check_branch
      %265 = sbr.rel (0) target = $region133
    $region132: #{block_forward.1} parent=1 // pred_region
      %266 = dma.done [#allocation24], 36864
    $region133: #{block_forward.1} parent=1 // pred_fallthru
      _
    // Predicated region
    $region134: #{block_forward.1} parent=1 // pred_check
      _
    $region135: #{block_forward.1} parent=1 // pred_check_branch
      %268 = sbr.rel (0) target = $region137
    $region136: #{block_forward.1} parent=1 // pred_region
      %269 = dma.done [#allocation24], 192
    $region137: #{block_forward.1} parent=1 // pred_fallthru
      _
    // Predicated region
    $region138: #{block_forward.1} parent=1 // pred_check
      _
    $region139: #{block_forward.1} parent=1 // pred_check_branch
      %271 = sbr.rel (0) target = $region141
    $region140: #{block_forward.1} parent=1 // pred_region
      %272 = dma.done [#allocation27], 36864
    $region141: #{block_forward.1} parent=1 // pred_fallthru
      _
    // Predicated region
    $region142: #{block_forward.1} parent=1 // pred_check
      _
    $region143: #{block_forward.1} parent=1 // pred_check_branch
      %274 = sbr.rel (0) target = $region145
    $region144: #{block_forward.1} parent=1 // pred_region
      %275 = dma.done [#allocation27], 48
    $region145: #{block_forward.1} parent=1 // pred_fallthru
      _
    %v277 = vld [vmem:[#allocation2] sm:$0xff]
    %v278 = vld [vmem:[#allocation2 + $0x8] sm:$0xff]
    %v279 = vld [vmem:[#allocation2 + $0x10] sm:$0xff]
    %v280 = vld [vmem:[#allocation2 + $0x18] sm:$0xff]
    %v281 = vld [vmem:[#allocation2 + $0x20] sm:$0xff]
    %v282 = vld [vmem:[#allocation2 + $0x28] sm:$0xff]
    %v283 = vld [vmem:[#allocation2 + $0x30] sm:$0xff]
    %v284 = vld [vmem:[#allocation2 + $0x38] sm:$0xff]
    %v285 = vld [vmem:[#allocation2 + $0x40] sm:$0xff]
    %v286 = vld [vmem:[#allocation2 + $0x48] sm:$0xff]
    %v287 = vld [vmem:[#allocation2 + $0x50] sm:$0xff]
    %v288 = vld [vmem:[#allocation2 + $0x58] sm:$0xff]
    %v289 = vld [vmem:[#allocation5] sm:$0x7]
    %v290 = vld [vmem:[#allocation7] sm:$0x7]
    %v291 = vadd.f32 %v277, %v278
    %v292 = vadd.f32 %v291, %v279
    %293 = vadd.xlane.f32.xlu0 %v292
    %v294 = vpop.xlane.xlu0 %293
    %v295 = vadd.f32 %v280, %v281
    %v296 = vadd.f32 %v295, %v282
    %297 = vadd.xlane.f32.xlu0 %v296
    %v298 = vpop.xlane.xlu0 %297
    %v299 = vadd.f32 %v283, %v284
    %v300 = vadd.f32 %v299, %v285
    %301 = vadd.xlane.f32.xlu0 %v300
    %v302 = vpop.xlane.xlu0 %301
    %v303 = vadd.f32 %v286, %v287
    %v304 = vadd.f32 %v303, %v288
    %305 = vadd.xlane.f32.xlu0 %v304
    %v306 = vpop.xlane.xlu0 %305
    %v307 = vrcp.pop 384.0
    %v308 = vmul.f32 %v294, %v307
    %v309 = vmul.f32 %v298, %v307
    %v310 = vmul.f32 %v302, %v307
    %v311 = vmul.f32 %v306, %v307
    %v312 = vsub.f32 %v277, %v308
    %v313 = vsub.f32 %v278, %v308
    %v314 = vsub.f32 %v279, %v308
    %v315 = vsub.f32 %v280, %v309
    %v316 = vsub.f32 %v281, %v309
    %v317 = vsub.f32 %v282, %v309
    %v318 = vsub.f32 %v283, %v310
    %v319 = vsub.f32 %v284, %v310
    %v320 = vsub.f32 %v285, %v310
    %v321 = vsub.f32 %v286, %v311
    %v322 = vsub.f32 %v287, %v311
    %v323 = vsub.f32 %v288, %v311
    %v324 = vmul.f32 %v312, %v312
    %v325 = vmul.f32 %v313, %v313
    %v326 = vmul.f32 %v314, %v314
    %v327 = vmul.f32 %v315, %v315
    %v328 = vmul.f32 %v316, %v316
    %v329 = vmul.f32 %v317, %v317
    %v330 = vmul.f32 %v318, %v318
    %v331 = vmul.f32 %v319, %v319
    %v332 = vmul.f32 %v320, %v320
    %v333 = vmul.f32 %v321, %v321
    %v334 = vmul.f32 %v322, %v322
    %v335 = vmul.f32 %v323, %v323
    %v336 = vadd.f32 %v324, %v325
    %v337 = vadd.f32 %v336, %v326
    %338 = vadd.xlane.f32.xlu0 %v337
    %v339 = vpop.xlane.xlu0 %338
    %v340 = vadd.f32 %v327, %v328
    %v341 = vadd.f32 %v340, %v329
    %342 = vadd.xlane.f32.xlu0 %v341
    %v343 = vpop.xlane.xlu0 %342
    %v344 = vadd.f32 %v330, %v331
    %v345 = vadd.f32 %v344, %v332
    %346 = vadd.xlane.f32.xlu0 %v345
    %v347 = vpop.xlane.xlu0 %346
    %v348 = vadd.f32 %v333, %v334
    %v349 = vadd.f32 %v348, %v335
    %350 = vadd.xlane.f32.xlu0 %v349
    %v351 = vpop.xlane.xlu0 %350
    %v352 = vmul.f32 %v339, %v307
    %v353 = vmul.f32 %v343, %v307
    %v354 = vmul.f32 %v347, %v307
    %v355 = vmul.f32 %v351, %v307
    %v356 = vadd.f32 %v352, 1e-05
    %v357 = vadd.f32 %v353, 1e-05
    %v358 = vadd.f32 %v354, 1e-05
    %v359 = vadd.f32 %v355, 1e-05
    %v360 = vrsqrt.pop %v356
    %v361 = vrsqrt.pop %v357
    %v362 = vrsqrt.pop %v358
    %v363 = vrsqrt.pop %v359
    %v364 = vmul.f32 %v312, %v360
    %v365 = vmul.f32 %v313, %v360
    %v366 = vmul.f32 %v314, %v360
    %v367 = vmul.f32 %v315, %v361
    %v368 = vmul.f32 %v316, %v361
    %v369 = vmul.f32 %v317, %v361
    %v370 = vmul.f32 %v318, %v362
    %v371 = vmul.f32 %v319, %v362
    %v372 = vmul.f32 %v320, %v362
    %v373 = vmul.f32 %v321, %v363
    %v374 = vmul.f32 %v322, %v363
    %v375 = vmul.f32 %v323, %v363
    %v377 = vlaneseq
    %v378 = vshrl.u32 %v377, 7
    %v379 = vsub.s32 0, %v378
    %v380 = vrot.slane %v289, %v379
    %v381 = vlaneseq
    %v382 = vshrl.u32 %v381, 7
    %v383 = vsub.s32 1, %v382
    %v384 = vrot.slane %v289, %v383
    %v385 = vlaneseq
    %v386 = vshrl.u32 %v385, 7
    %v387 = vsub.s32 2, %v386
    %v388 = vrot.slane %v289, %v387
    %v392 = vmul.f32 %v364, %v380
    %v393 = vmul.f32 %v365, %v384
    %v394 = vmul.f32 %v366, %v388
    %v395 = vmul.f32 %v367, %v380
    %v396 = vmul.f32 %v368, %v384
    %v397 = vmul.f32 %v369, %v388
    %v398 = vmul.f32 %v370, %v380
    %v399 = vmul.f32 %v371, %v384
    %v400 = vmul.f32 %v372, %v388
    %v401 = vmul.f32 %v373, %v380
    %v402 = vmul.f32 %v374, %v384
    %v403 = vmul.f32 %v375, %v388
    %v405 = vlaneseq
    %v406 = vshrl.u32 %v405, 7
    %v407 = vsub.s32 0, %v406
    %v408 = vrot.slane %v290, %v407
    %v409 = vlaneseq
    %v410 = vshrl.u32 %v409, 7
    %v411 = vsub.s32 1, %v410
    %v412 = vrot.slane %v290, %v411
    %v413 = vlaneseq
    %v414 = vshrl.u32 %v413, 7
    %v415 = vsub.s32 2, %v414
    %v416 = vrot.slane %v290, %v415
    %v420 = vadd.f32 %v392, %v408
    %v421 = vadd.f32 %v393, %v412
    %v422 = vadd.f32 %v394, %v416
    %v423 = vadd.f32 %v395, %v408
    %v424 = vadd.f32 %v396, %v412
    %v425 = vadd.f32 %v397, %v416
    %v426 = vadd.f32 %v398, %v408
    %v427 = vadd.f32 %v399, %v412
    %v428 = vadd.f32 %v400, %v416
    %v429 = vadd.f32 %v401, %v408
    %v430 = vadd.f32 %v402, %v412
    %v431 = vadd.f32 %v403, %v416
    %v432 = vpack.c.bf16 %v423, %v420
    %v433 = vpack.c.bf16 %v424, %v421
    %v434 = vpack.c.bf16 %v425, %v422
    %v435 = vpack.c.bf16 %v429, %v426
    %v436 = vpack.c.bf16 %v430, %v427
    %v437 = vpack.c.bf16 %v431, %v428
    %v438 = vld [vmem:[%s4] sm:$0xff]
    %v439 = vld [vmem:[%s4 + $0x8] sm:$0xff]
    %v440 = vld [vmem:[%s4 + $0x10] sm:$0xff]
    %v441 = vld [vmem:[%s4 + $0x18] sm:$0xff]
    %v442 = vld [vmem:[%s4 + $0x20] sm:$0xff]
    %v443 = vld [vmem:[%s4 + $0x28] sm:$0xff]
    %v444 = vld [vmem:[%s4 + $0x30] sm:$0xff]
    %v445 = vld [vmem:[%s4 + $0x38] sm:$0xff]
    %v446 = vld [vmem:[%s4 + $0x40] sm:$0xff]
    %v447 = vld [vmem:[%s4 + $0x48] sm:$0xff]
    %v448 = vld [vmem:[%s4 + $0x50] sm:$0xff]
    %v449 = vld [vmem:[%s4 + $0x58] sm:$0xff]
    %v450 = vld [vmem:[%s4 + $0x60] sm:$0xff]
    %v451 = vld [vmem:[%s4 + $0x68] sm:$0xff]
    %v452 = vld [vmem:[%s4 + $0x70] sm:$0xff]
    %v453 = vld [vmem:[%s4 + $0x78] sm:$0xff]
    %v454 = vld [vmem:[%s4 + $0x80] sm:$0xff]
    %v455 = vld [vmem:[%s4 + $0x88] sm:$0xff]
    %v456 = vld [vmem:[%s4 + $0x90] sm:$0xff]
    %v457 = vld [vmem:[%s4 + $0x98] sm:$0xff]
    %v458 = vld [vmem:[%s4 + $0xa0] sm:$0xff]
    %v459 = vld [vmem:[%s4 + $0xa8] sm:$0xff]
    %v460 = vld [vmem:[%s4 + $0xb0] sm:$0xff]
    %v461 = vld [vmem:[%s4 + $0xb8] sm:$0xff]
    %v462 = vld [vmem:[%s4 + $0xc0] sm:$0xff]
    %v463 = vld [vmem:[%s4 + $0xc8] sm:$0xff]
    %v464 = vld [vmem:[%s4 + $0xd0] sm:$0xff]
    %v465 = vld [vmem:[%s4 + $0xd8] sm:$0xff]
    %v466 = vld [vmem:[%s4 + $0xe0] sm:$0xff]
    %v467 = vld [vmem:[%s4 + $0xe8] sm:$0xff]
    %v468 = vld [vmem:[%s4 + $0xf0] sm:$0xff]
    %v469 = vld [vmem:[%s4 + $0xf8] sm:$0xff]
    %v470 = vld [vmem:[%s4 + $0x100] sm:$0xff]
    %v471 = vld [vmem:[%s4 + $0x108] sm:$0xff]
    %v472 = vld [vmem:[%s4 + $0x110] sm:$0xff]
    %v473 = vld [vmem:[%s4 + $0x118] sm:$0xff]
    %v474 = vld [vmem:[%s4 + $0x120] sm:$0xff]
    %v475 = vld [vmem:[%s4 + $0x128] sm:$0xff]
    %v476 = vld [vmem:[%s4 + $0x130] sm:$0xff]
    %v477 = vld [vmem:[%s4 + $0x138] sm:$0xff]
    %v478 = vld [vmem:[%s4 + $0x140] sm:$0xff]
    %v479 = vld [vmem:[%s4 + $0x148] sm:$0xff]
    %v480 = vld [vmem:[%s4 + $0x150] sm:$0xff]
    %v481 = vld [vmem:[%s4 + $0x158] sm:$0xff]
    %v482 = vld [vmem:[%s4 + $0x160] sm:$0xff]
    %v483 = vld [vmem:[%s4 + $0x168] sm:$0xff]
    %v484 = vld [vmem:[%s4 + $0x170] sm:$0xff]
    %v485 = vld [vmem:[%s4 + $0x178] sm:$0xff]
    %v534 = vunpack.c.l.b16 %v438
    %v535 = vunpack.c.h.b16 %v438
    %v536 = vunpack.c.l.b16 %v439
    %v537 = vunpack.c.h.b16 %v439
    %v538 = vunpack.c.l.b16 %v440
    %v539 = vunpack.c.h.b16 %v440
    %v540 = vunpack.c.l.b16 %v441
    %v541 = vunpack.c.h.b16 %v441
    %v542 = vunpack.c.l.b16 %v442
    %v543 = vunpack.c.h.b16 %v442
    %v544 = vunpack.c.l.b16 %v443
    %v545 = vunpack.c.h.b16 %v443
    %v546 = vunpack.c.l.b16 %v444
    %v547 = vunpack.c.h.b16 %v444
    %v548 = vunpack.c.l.b16 %v445
    %v549 = vunpack.c.h.b16 %v445
    %v550 = vunpack.c.l.b16 %v446
    %v551 = vunpack.c.h.b16 %v446
    %v552 = vunpack.c.l.b16 %v447
    %v553 = vunpack.c.h.b16 %v447
    %v554 = vunpack.c.l.b16 %v448
    %v555 = vunpack.c.h.b16 %v448
    %v556 = vunpack.c.l.b16 %v449
    %v557 = vunpack.c.h.b16 %v449
    %v558 = vunpack.c.l.b16 %v450
    %v559 = vunpack.c.h.b16 %v450
    %v560 = vunpack.c.l.b16 %v451
    %v561 = vunpack.c.h.b16 %v451
    %v562 = vunpack.c.l.b16 %v452
    %v563 = vunpack.c.h.b16 %v452
    %v564 = vunpack.c.l.b16 %v453
    %v565 = vunpack.c.h.b16 %v453
    %v566 = vunpack.c.l.b16 %v454
    %v567 = vunpack.c.h.b16 %v454
    %v568 = vunpack.c.l.b16 %v455
    %v569 = vunpack.c.h.b16 %v455
    %v570 = vunpack.c.l.b16 %v456
    %v571 = vunpack.c.h.b16 %v456
    %v572 = vunpack.c.l.b16 %v457
    %v573 = vunpack.c.h.b16 %v457
    %v574 = vunpack.c.l.b16 %v458
    %v575 = vunpack.c.h.b16 %v458
    %v576 = vunpack.c.l.b16 %v459
    %v577 = vunpack.c.h.b16 %v459
    %v578 = vunpack.c.l.b16 %v460
    %v579 = vunpack.c.h.b16 %v460
    %v580 = vunpack.c.l.b16 %v461
    %v581 = vunpack.c.h.b16 %v461
    %v582 = vunpack.c.l.b16 %v462
    %v583 = vunpack.c.h.b16 %v462
    %v584 = vunpack.c.l.b16 %v463
    %v585 = vunpack.c.h.b16 %v463
    %v586 = vunpack.c.l.b16 %v464
    %v587 = vunpack.c.h.b16 %v464
    %v588 = vunpack.c.l.b16 %v465
    %v589 = vunpack.c.h.b16 %v465
    %v590 = vunpack.c.l.b16 %v466
    %v591 = vunpack.c.h.b16 %v466
    %v592 = vunpack.c.l.b16 %v467
    %v593 = vunpack.c.h.b16 %v467
    %v594 = vunpack.c.l.b16 %v468
    %v595 = vunpack.c.h.b16 %v468
    %v596 = vunpack.c.l.b16 %v469
    %v597 = vunpack.c.h.b16 %v469
    %v598 = vunpack.c.l.b16 %v470
    %v599 = vunpack.c.h.b16 %v470
    %v600 = vunpack.c.l.b16 %v471
    %v601 = vunpack.c.h.b16 %v471
    %v602 = vunpack.c.l.b16 %v472
    %v603 = vunpack.c.h.b16 %v472
    %v604 = vunpack.c.l.b16 %v473
    %v605 = vunpack.c.h.b16 %v473
    %v606 = vunpack.c.l.b16 %v474
    %v607 = vunpack.c.h.b16 %v474
    %v608 = vunpack.c.l.b16 %v475
    %v609 = vunpack.c.h.b16 %v475
    %v610 = vunpack.c.l.b16 %v476
    %v611 = vunpack.c.h.b16 %v476
    %v612 = vunpack.c.l.b16 %v477
    %v613 = vunpack.c.h.b16 %v477
    %v614 = vunpack.c.l.b16 %v478
    %v615 = vunpack.c.h.b16 %v478
    %v616 = vunpack.c.l.b16 %v479
    %v617 = vunpack.c.h.b16 %v479
    %v618 = vunpack.c.l.b16 %v480
    %v619 = vunpack.c.h.b16 %v480
    %v620 = vunpack.c.l.b16 %v481
    %v621 = vunpack.c.h.b16 %v481
    %v622 = vunpack.c.l.b16 %v482
    %v623 = vunpack.c.h.b16 %v482
    %v624 = vunpack.c.l.b16 %v483
    %v625 = vunpack.c.h.b16 %v483
    %v626 = vunpack.c.l.b16 %v484
    %v627 = vunpack.c.h.b16 %v484
    %v628 = vunpack.c.l.b16 %v485
    %v629 = vunpack.c.h.b16 %v485
    %v630 = vpack.c.b16 %v536, %v534
    %v631 = vpack.c.b16 %v537, %v535
    %v632 = vpack.c.b16 %v540, %v538
    %v633 = vpack.c.b16 %v541, %v539
    %v634 = vpack.c.b16 %v544, %v542
    %v635 = vpack.c.b16 %v545, %v543
    %v636 = vpack.c.b16 %v548, %v546
    %v637 = vpack.c.b16 %v549, %v547
    %v638 = vpack.c.b16 %v552, %v550
    %v639 = vpack.c.b16 %v553, %v551
    %v640 = vpack.c.b16 %v556, %v554
    %v641 = vpack.c.b16 %v557, %v555
    %v642 = vpack.c.b16 %v560, %v558
    %v643 = vpack.c.b16 %v561, %v559
    %v644 = vpack.c.b16 %v564, %v562
    %v645 = vpack.c.b16 %v565, %v563
    %v646 = vpack.c.b16 %v568, %v566
    %v647 = vpack.c.b16 %v569, %v567
    %v648 = vpack.c.b16 %v572, %v570
    %v649 = vpack.c.b16 %v573, %v571
    %v650 = vpack.c.b16 %v576, %v574
    %v651 = vpack.c.b16 %v577, %v575
    %v652 = vpack.c.b16 %v580, %v578
    %v653 = vpack.c.b16 %v581, %v579
    %v654 = vpack.c.b16 %v584, %v582
    %v655 = vpack.c.b16 %v585, %v583
    %v656 = vpack.c.b16 %v588, %v586
    %v657 = vpack.c.b16 %v589, %v587
    %v658 = vpack.c.b16 %v592, %v590
    %v659 = vpack.c.b16 %v593, %v591
    %v660 = vpack.c.b16 %v596, %v594
    %v661 = vpack.c.b16 %v597, %v595
    %v662 = vpack.c.b16 %v600, %v598
    %v663 = vpack.c.b16 %v601, %v599
    %v664 = vpack.c.b16 %v604, %v602
    %v665 = vpack.c.b16 %v605, %v603
    %v666 = vpack.c.b16 %v608, %v606
    %v667 = vpack.c.b16 %v609, %v607
    %v668 = vpack.c.b16 %v612, %v610
    %v669 = vpack.c.b16 %v613, %v611
    %v670 = vpack.c.b16 %v616, %v614
    %v671 = vpack.c.b16 %v617, %v615
    %v672 = vpack.c.b16 %v620, %v618
    %v673 = vpack.c.b16 %v621, %v619
    %v674 = vpack.c.b16 %v624, %v622
    %v675 = vpack.c.b16 %v625, %v623
    %v676 = vpack.c.b16 %v628, %v626
    %v677 = vpack.c.b16 %v629, %v627
    %726 = vmatprep.subr.bf16.mxu0 %v631
    %727 = vmatpush1.bf16.msra.mxu0 %v630
    %728 = vmatprep.subr.bf16.mxu0 %v633
    %729 = vmatpush1.bf16.msra.mxu0 %v632
    %730 = vmatprep.subr.bf16.mxu0 %v635
    %731 = vmatpush1.bf16.msra.mxu0 %v634
    %732 = vmatprep.subr.bf16.mxu0 %v637
    %733 = vmatpush1.bf16.msra.mxu0 %v636
    %734 = vmatprep.subr.bf16.mxu0 %v639
    %735 = vmatpush1.bf16.msra.mxu0 %v638
    %736 = vmatprep.subr.bf16.mxu0 %v641
    %737 = vmatpush1.bf16.msra.mxu0 %v640
    %738 = vmatprep.subr.bf16.mxu0 %v643
    %739 = vmatpush1.bf16.msra.mxu0 %v642
    %740 = vmatprep.subr.bf16.mxu0 %v645
    %741 = vmatpush1.bf16.msra.mxu0 %v644
    %742 = vmatprep.subr.bf16.mxu0 %v647
    %743 = vmatpush1.bf16.msra.mxu0 %v646
    %744 = vmatprep.subr.bf16.mxu0 %v649
    %745 = vmatpush1.bf16.msra.mxu0 %v648
    %746 = vmatprep.subr.bf16.mxu0 %v651
    %747 = vmatpush1.bf16.msra.mxu0 %v650
    %748 = vmatprep.subr.bf16.mxu0 %v653
    %749 = vmatpush1.bf16.msra.mxu0 %v652
    %750 = vmatprep.subr.bf16.mxu0 %v655
    %751 = vmatpush1.bf16.msra.mxu0 %v654
    %752 = vmatprep.subr.bf16.mxu0 %v657
    %753 = vmatpush1.bf16.msra.mxu0 %v656
    %754 = vmatprep.subr.bf16.mxu0 %v659
    %755 = vmatpush1.bf16.msra.mxu0 %v658
    %756 = vmatprep.subr.bf16.mxu0 %v661
    %757 = vmatpush1.bf16.msra.mxu0 %v660
    %758 = vmatprep.mubr.bf16.mxu0 %v433
    %759 = vmatmul.mubr.bf16.gmra.mrb[0].mxu0 %v432
    %v760 = vpop.f32.mrb[0].mxu0
    %v761 = vadd.f32 0.0, %v760
    %v762 = vpop.f32.mrb[0].mxu0
    %v763 = vadd.f32 0.0, %v762
    %v764 = vpop.f32.mrb[0].mxu0
    %v765 = vadd.f32 0.0, %v764
    %v766 = vpop.f32.mrb[0].mxu0
    %v767 = vadd.f32 0.0, %v766
    %768 = vmatprep.mubr.bf16.mxu0 %v436
    %769 = vmatmul.mubr.bf16.gmra.mrb[0].mxu0 %v435
    %v770 = vpop.f32.mrb[0].mxu0
    %v771 = vadd.f32 0.0, %v770
    %v772 = vpop.f32.mrb[0].mxu0
    %v773 = vadd.f32 0.0, %v772
    %v774 = vpop.f32.mrb[0].mxu0
    %v775 = vadd.f32 0.0, %v774
    %v776 = vpop.f32.mrb[0].mxu0
    %v777 = vadd.f32 0.0, %v776
    %778 = vdwg.mxu0
    %779 = vmatprep.subr.bf16.mxu0 %v663
    %780 = vmatpush1.bf16.msra.mxu0 %v662
    %781 = vmatprep.subr.bf16.mxu0 %v665
    %782 = vmatpush1.bf16.msra.mxu0 %v664
    %783 = vmatprep.subr.bf16.mxu0 %v667
    %784 = vmatpush1.bf16.msra.mxu0 %v666
    %785 = vmatprep.subr.bf16.mxu0 %v669
    %786 = vmatpush1.bf16.msra.mxu0 %v668
    %787 = vmatprep.subr.bf16.mxu0 %v671
    %788 = vmatpush1.bf16.msra.mxu0 %v670
    %789 = vmatprep.subr.bf16.mxu0 %v673
    %790 = vmatpush1.bf16.msra.mxu0 %v672
    %791 = vmatprep.subr.bf16.mxu0 %v675
    %792 = vmatpush1.bf16.msra.mxu0 %v674
    %793 = vmatprep.subr.bf16.mxu0 %v677
    %794 = vmatpush1.bf16.msra.mxu0 %v676
    %795 = vmatprep.subr.bf16.mxu0 0
    %796 = vmatpush1.bf16.msra.mxu0 0
    %797 = vmatprep.subr.bf16.mxu0 0
    %798 = vmatpush1.bf16.msra.mxu0 0
    %799 = vmatprep.subr.bf16.mxu0 0
    %800 = vmatpush1.bf16.msra.mxu0 0
    %801 = vmatprep.subr.bf16.mxu0 0
    %802 = vmatpush1.bf16.msra.mxu0 0
    %803 = vmatprep.subr.bf16.mxu0 0
    %804 = vmatpush1.bf16.msra.mxu0 0
    %805 = vmatprep.subr.bf16.mxu0 0
    %806 = vmatpush1.bf16.msra.mxu0 0
    %807 = vmatprep.subr.bf16.mxu0 0
    %808 = vmatpush1.bf16.msra.mxu0 0
    %809 = vmatprep.subr.bf16.mxu0 0
    %810 = vmatpush1.bf16.msra.mxu0 0
    %811 = vmatprep.mubr.bf16.mxu0 0
    %812 = vmatmul.mubr.bf16.gmra.mrb[0].mxu0 %v434
    %v813 = vpop.f32.mrb[0].mxu0
    %v814 = vadd.f32 %v761, %v813
    %v815 = vpop.f32.mrb[0].mxu0
    %v816 = vadd.f32 %v763, %v815
    %v817 = vpop.f32.mrb[0].mxu0
    %v818 = vadd.f32 %v765, %v817
    %v819 = vpop.f32.mrb[0].mxu0
    %v820 = vadd.f32 %v767, %v819
    %821 = vmatprep.mubr.bf16.mxu0 0
    %822 = vmatmul.mubr.bf16.gmra.mrb[0].mxu0 %v437
    %v823 = vpop.f32.mrb[0].mxu0
    %v824 = vadd.f32 %v771, %v823
    %v825 = vpop.f32.mrb[0].mxu0
    %v826 = vadd.f32 %v773, %v825
    %v827 = vpop.f32.mrb[0].mxu0
    %v828 = vadd.f32 %v775, %v827
    %v829 = vpop.f32.mrb[0].mxu0
    %v830 = vadd.f32 %v777, %v829
    %831 = vdwg.mxu0
    %v832 = vld [vmem:[#allocation8] sm:$0x3]
    %v833 = vld [vmem:[#allocation10] sm:$0x3]
    %vm834 = vcmask 523264
    %v835 = vsel %vm834, %v816, 0.0
    %v836 = vadd.f32 %v814, %v835
    %837 = vadd.xlane.f32.xlu0 %v836
    %v838 = vpop.xlane.xlu0 %837
    %v839 = vsel %vm834, %v820, 0.0
    %v840 = vadd.f32 %v818, %v839
    %841 = vadd.xlane.f32.xlu0 %v840
    %v842 = vpop.xlane.xlu0 %841
    %v843 = vsel %vm834, %v826, 0.0
    %v844 = vadd.f32 %v824, %v843
    %845 = vadd.xlane.f32.xlu0 %v844
    %v846 = vpop.xlane.xlu0 %845
    %v847 = vsel %vm834, %v830, 0.0
    %v848 = vadd.f32 %v828, %v847
    %849 = vadd.xlane.f32.xlu0 %v848
    %v850 = vpop.xlane.xlu0 %849
    %v851 = vrcp.pop 192.0
    %v852 = vmul.f32 %v838, %v851
    %v853 = vmul.f32 %v842, %v851
    %v854 = vmul.f32 %v846, %v851
    %v855 = vmul.f32 %v850, %v851
    %v856 = vsub.f32 %v814, %v852
    %v857 = vsub.f32 %v816, %v852
    %v858 = vsub.f32 %v818, %v853
    %v859 = vsub.f32 %v820, %v853
    %v860 = vsub.f32 %v824, %v854
    %v861 = vsub.f32 %v826, %v854
    %v862 = vsub.f32 %v828, %v855
    %v863 = vsub.f32 %v830, %v855
    %v864 = vmul.f32 %v856, %v856
    %v865 = vmul.f32 %v857, %v857
    %v866 = vmul.f32 %v858, %v858
    %v867 = vmul.f32 %v859, %v859
    %v868 = vmul.f32 %v860, %v860
    %v869 = vmul.f32 %v861, %v861
    %v870 = vmul.f32 %v862, %v862
    %v871 = vmul.f32 %v863, %v863
    %v872 = vsel %vm834, %v865, 0.0
    %v873 = vadd.f32 %v864, %v872
    %874 = vadd.xlane.f32.xlu0 %v873
    %v875 = vpop.xlane.xlu0 %874
    %v876 = vsel %vm834, %v867, 0.0
    %v877 = vadd.f32 %v866, %v876
    %878 = vadd.xlane.f32.xlu0 %v877
    %v879 = vpop.xlane.xlu0 %878
    %v880 = vsel %vm834, %v869, 0.0
    %v881 = vadd.f32 %v868, %v880
    %882 = vadd.xlane.f32.xlu0 %v881
    %v883 = vpop.xlane.xlu0 %882
    %v884 = vsel %vm834, %v871, 0.0
    %v885 = vadd.f32 %v870, %v884
    %886 = vadd.xlane.f32.xlu0 %v885
    %v887 = vpop.xlane.xlu0 %886
    %v888 = vmul.f32 %v875, %v851
    %v889 = vmul.f32 %v879, %v851
    %v890 = vmul.f32 %v883, %v851
    %v891 = vmul.f32 %v887, %v851
    %v892 = vadd.f32 %v888, 1e-05
    %v893 = vadd.f32 %v889, 1e-05
    %v894 = vadd.f32 %v890, 1e-05
    %v895 = vadd.f32 %v891, 1e-05
    %v896 = vrsqrt.pop %v892
    %v897 = vrsqrt.pop %v893
    %v898 = vrsqrt.pop %v894
    %v899 = vrsqrt.pop %v895
    %v900 = vmul.f32 %v856, %v896
    %v901 = vmul.f32 %v857, %v896
    %v902 = vmul.f32 %v858, %v897
    %v903 = vmul.f32 %v859, %v897
    %v904 = vmul.f32 %v860, %v898
    %v905 = vmul.f32 %v861, %v898
    %v906 = vmul.f32 %v862, %v899
    %v907 = vmul.f32 %v863, %v899
    %v909 = vlaneseq
    %v910 = vshrl.u32 %v909, 7
    %v911 = vsub.s32 0, %v910
    %v912 = vrot.slane %v832, %v911
    %v913 = vlaneseq
    %v914 = vshrl.u32 %v913, 7
    %v915 = vsub.s32 1, %v914
    %v916 = vrot.slane %v832, %v915
    %v919 = vmul.f32 %v900, %v912
    %v920 = vmul.f32 %v901, %v916
    %v921 = vmul.f32 %v902, %v912
    %v922 = vmul.f32 %v903, %v916
    %v923 = vmul.f32 %v904, %v912
    %v924 = vmul.f32 %v905, %v916
    %v925 = vmul.f32 %v906, %v912
    %v926 = vmul.f32 %v907, %v916
    %v928 = vlaneseq
    %v929 = vshrl.u32 %v928, 7
    %v930 = vsub.s32 0, %v929
    %v931 = vrot.slane %v833, %v930
    %v932 = vlaneseq
    %v933 = vshrl.u32 %v932, 7
    %v934 = vsub.s32 1, %v933
    %v935 = vrot.slane %v833, %v934
    %v938 = vadd.f32 %v919, %v931
    %v939 = vadd.f32 %v920, %v935
    %v940 = vadd.f32 %v921, %v931
    %v941 = vadd.f32 %v922, %v935
    %v942 = vadd.f32 %v923, %v931
    %v943 = vadd.f32 %v924, %v935
    %v944 = vadd.f32 %v925, %v931
    %v945 = vadd.f32 %v926, %v935
    %v946 = vpack.c.bf16 %v940, %v938
    %v947 = vpack.c.bf16 %v941, %v939
    %v948 = vpack.c.bf16 %v944, %v942
    %v949 = vpack.c.bf16 %v945, %v943
    %v950 = vld [vmem:[#allocation11] sm:$0xff]
    %v951 = vld [vmem:[#allocation11 + $0x8] sm:$0xf]
    %v952 = vld [vmem:[#allocation11 + $0xc] sm:$0xff]
    %v953 = vld [vmem:[#allocation11 + $0x14] sm:$0xf]
    %v954 = vld [vmem:[#allocation11 + $0x18] sm:$0xff]
    %v955 = vld [vmem:[#allocation11 + $0x20] sm:$0xf]
    %v956 = vld [vmem:[#allocation11 + $0x24] sm:$0xff]
    %v957 = vld [vmem:[#allocation11 + $0x2c] sm:$0xf]
    %v958 = vld [vmem:[#allocation11 + $0x30] sm:$0xff]
    %v959 = vld [vmem:[#allocation11 + $0x38] sm:$0xf]
    %v960 = vld [vmem:[#allocation11 + $0x3c] sm:$0xff]
    %v961 = vld [vmem:[#allocation11 + $0x44] sm:$0xf]
    %v962 = vld [vmem:[#allocation11 + $0x48] sm:$0xff]
    %v963 = vld [vmem:[#allocation11 + $0x50] sm:$0xf]
    %v964 = vld [vmem:[#allocation11 + $0x54] sm:$0xff]
    %v965 = vld [vmem:[#allocation11 + $0x5c] sm:$0xf]
    %v966 = vld [vmem:[#allocation11 + $0x60] sm:$0xff]
    %v967 = vld [vmem:[#allocation11 + $0x68] sm:$0xf]
    %v968 = vld [vmem:[#allocation11 + $0x6c] sm:$0xff]
    %v969 = vld [vmem:[#allocation11 + $0x74] sm:$0xf]
    %v970 = vld [vmem:[#allocation11 + $0x78] sm:$0xff]
    %v971 = vld [vmem:[#allocation11 + $0x80] sm:$0xf]
    %v972 = vld [vmem:[#allocation11 + $0x84] sm:$0xff]
    %v973 = vld [vmem:[#allocation11 + $0x8c] sm:$0xf]
    %v974 = vld [vmem:[#allocation11 + $0x90] sm:$0xff]
    %v975 = vld [vmem:[#allocation11 + $0x98] sm:$0xf]
    %v976 = vld [vmem:[#allocation11 + $0x9c] sm:$0xff]
    %v977 = vld [vmem:[#allocation11 + $0xa4] sm:$0xf]
    %v978 = vld [vmem:[#allocation11 + $0xa8] sm:$0xff]
    %v979 = vld [vmem:[#allocation11 + $0xb0] sm:$0xf]
    %v980 = vld [vmem:[#allocation11 + $0xb4] sm:$0xff]
    %v981 = vld [vmem:[#allocation11 + $0xbc] sm:$0xf]
    %v982 = vld [vmem:[#allocation11 + $0xc0] sm:$0xff]
    %v983 = vld [vmem:[#allocation11 + $0xc8] sm:$0xf]
    %v984 = vld [vmem:[#allocation11 + $0xcc] sm:$0xff]
    %v985 = vld [vmem:[#allocation11 + $0xd4] sm:$0xf]
    %v986 = vld [vmem:[#allocation11 + $0xd8] sm:$0xff]
    %v987 = vld [vmem:[#allocation11 + $0xe0] sm:$0xf]
    %v988 = vld [vmem:[#allocation11 + $0xe4] sm:$0xff]
    %v989 = vld [vmem:[#allocation11 + $0xec] sm:$0xf]
    %v990 = vld [vmem:[#allocation11 + $0xf0] sm:$0xff]
    %v991 = vld [vmem:[#allocation11 + $0xf8] sm:$0xf]
    %v992 = vld [vmem:[#allocation11 + $0xfc] sm:$0xff]
    %v993 = vld [vmem:[#allocation11 + $0x104] sm:$0xf]
    %v994 = vld [vmem:[#allocation11 + $0x108] sm:$0xff]
    %v995 = vld [vmem:[#allocation11 + $0x110] sm:$0xf]
    %v996 = vld [vmem:[#allocation11 + $0x114] sm:$0xff]
    %v997 = vld [vmem:[#allocation11 + $0x11c] sm:$0xf]
    %v1046 = vunpack.c.l.b16 %v950
    %v1047 = vunpack.c.h.b16 %v950
    %v1048 = vunpack.c.l.b16 %v951
    %v1049 = vunpack.c.l.b16 %v952
    %v1050 = vunpack.c.h.b16 %v952
    %v1051 = vunpack.c.l.b16 %v953
    %v1052 = vunpack.c.l.b16 %v954
    %v1053 = vunpack.c.h.b16 %v954
    %v1054 = vunpack.c.l.b16 %v955
    %v1055 = vunpack.c.l.b16 %v956
    %v1056 = vunpack.c.h.b16 %v956
    %v1057 = vunpack.c.l.b16 %v957
    %v1058 = vunpack.c.l.b16 %v958
    %v1059 = vunpack.c.h.b16 %v958
    %v1060 = vunpack.c.l.b16 %v959
    %v1061 = vunpack.c.l.b16 %v960
    %v1062 = vunpack.c.h.b16 %v960
    %v1063 = vunpack.c.l.b16 %v961
    %v1064 = vunpack.c.l.b16 %v962
    %v1065 = vunpack.c.h.b16 %v962
    %v1066 = vunpack.c.l.b16 %v963
    %v1067 = vunpack.c.l.b16 %v964
    %v1068 = vunpack.c.h.b16 %v964
    %v1069 = vunpack.c.l.b16 %v965
    %v1070 = vunpack.c.l.b16 %v966
    %v1071 = vunpack.c.h.b16 %v966
    %v1072 = vunpack.c.l.b16 %v967
    %v1073 = vunpack.c.l.b16 %v968
    %v1074 = vunpack.c.h.b16 %v968
    %v1075 = vunpack.c.l.b16 %v969
    %v1076 = vunpack.c.l.b16 %v970
    %v1077 = vunpack.c.h.b16 %v970
    %v1078 = vunpack.c.l.b16 %v971
    %v1079 = vunpack.c.l.b16 %v972
    %v1080 = vunpack.c.h.b16 %v972
    %v1081 = vunpack.c.l.b16 %v973
    %v1082 = vunpack.c.l.b16 %v974
    %v1083 = vunpack.c.h.b16 %v974
    %v1084 = vunpack.c.l.b16 %v975
    %v1085 = vunpack.c.l.b16 %v976
    %v1086 = vunpack.c.h.b16 %v976
    %v1087 = vunpack.c.l.b16 %v977
    %v1088 = vunpack.c.l.b16 %v978
    %v1089 = vunpack.c.h.b16 %v978
    %v1090 = vunpack.c.l.b16 %v979
    %v1091 = vunpack.c.l.b16 %v980
    %v1092 = vunpack.c.h.b16 %v980
    %v1093 = vunpack.c.l.b16 %v981
    %v1094 = vunpack.c.l.b16 %v982
    %v1095 = vunpack.c.h.b16 %v982
    %v1096 = vunpack.c.l.b16 %v983
    %v1097 = vunpack.c.l.b16 %v984
    %v1098 = vunpack.c.h.b16 %v984
    %v1099 = vunpack.c.l.b16 %v985
    %v1100 = vunpack.c.l.b16 %v986
    %v1101 = vunpack.c.h.b16 %v986
    %v1102 = vunpack.c.l.b16 %v987
    %v1103 = vunpack.c.l.b16 %v988
    %v1104 = vunpack.c.h.b16 %v988
    %v1105 = vunpack.c.l.b16 %v989
    %v1106 = vunpack.c.l.b16 %v990
    %v1107 = vunpack.c.h.b16 %v990
    %v1108 = vunpack.c.l.b16 %v991
    %v1109 = vunpack.c.l.b16 %v992
    %v1110 = vunpack.c.h.b16 %v992
    %v1111 = vunpack.c.l.b16 %v993
    %v1112 = vunpack.c.l.b16 %v994
    %v1113 = vunpack.c.h.b16 %v994
    %v1114 = vunpack.c.l.b16 %v995
    %v1115 = vunpack.c.l.b16 %v996
    %v1116 = vunpack.c.h.b16 %v996
    %v1117 = vunpack.c.l.b16 %v997
    %v1118 = vpack.c.b16 %v1049, %v1046
    %v1119 = vpack.c.b16 %v1050, %v1047
    %v1120 = vpack.c.b16 %v1051, %v1048
    %v1121 = vpack.c.b16 %v1055, %v1052
    %v1122 = vpack.c.b16 %v1056, %v1053
    %v1123 = vpack.c.b16 %v1057, %v1054
    %v1124 = vpack.c.b16 %v1061, %v1058
    %v1125 = vpack.c.b16 %v1062, %v1059
    %v1126 = vpack.c.b16 %v1063, %v1060
    %v1127 = vpack.c.b16 %v1067, %v1064
    %v1128 = vpack.c.b16 %v1068, %v1065
    %v1129 = vpack.c.b16 %v1069, %v1066
    %v1130 = vpack.c.b16 %v1073, %v1070
    %v1131 = vpack.c.b16 %v1074, %v1071
    %v1132 = vpack.c.b16 %v1075, %v1072
    %v1133 = vpack.c.b16 %v1079, %v1076
    %v1134 = vpack.c.b16 %v1080, %v1077
    %v1135 = vpack.c.b16 %v1081, %v1078
    %v1136 = vpack.c.b16 %v1085, %v1082
    %v1137 = vpack.c.b16 %v1086, %v1083
    %v1138 = vpack.c.b16 %v1087, %v1084
    %v1139 = vpack.c.b16 %v1091, %v1088
    %v1140 = vpack.c.b16 %v1092, %v1089
    %v1141 = vpack.c.b16 %v1093, %v1090
    %v1142 = vpack.c.b16 %v1097, %v1094
    %v1143 = vpack.c.b16 %v1098, %v1095
    %v1144 = vpack.c.b16 %v1099, %v1096
    %v1145 = vpack.c.b16 %v1103, %v1100
    %v1146 = vpack.c.b16 %v1104, %v1101
    %v1147 = vpack.c.b16 %v1105, %v1102
    %v1148 = vpack.c.b16 %v1109, %v1106
    %v1149 = vpack.c.b16 %v1110, %v1107
    %v1150 = vpack.c.b16 %v1111, %v1108
    %v1151 = vpack.c.b16 %v1115, %v1112
    %v1152 = vpack.c.b16 %v1116, %v1113
    %v1153 = vpack.c.b16 %v1117, %v1114
    %v1191 = vsel %vm834, %v947, 0
    %v1194 = vsel %vm834, %v949, 0
    %1196 = vmatprep.subr.bf16.mxu0 %v1119
    %1197 = vmatpush1.bf16.msra.mxu0 %v1118
    %1198 = vmatprep.subr.bf16.mxu0 %v1122
    %1199 = vmatpush1.bf16.msra.mxu0 %v1121
    %1200 = vmatprep.subr.bf16.mxu0 %v1125
    %1201 = vmatpush1.bf16.msra.mxu0 %v1124
    %1202 = vmatprep.subr.bf16.mxu0 %v1128
    %1203 = vmatpush1.bf16.msra.mxu0 %v1127
    %1204 = vmatprep.subr.bf16.mxu0 %v1131
    %1205 = vmatpush1.bf16.msra.mxu0 %v1130
    %1206 = vmatprep.subr.bf16.mxu0 %v1134
    %1207 = vmatpush1.bf16.msra.mxu0 %v1133
    %1208 = vmatprep.subr.bf16.mxu0 %v1137
    %1209 = vmatpush1.bf16.msra.mxu0 %v1136
    %1210 = vmatprep.subr.bf16.mxu0 %v1140
    %1211 = vmatpush1.bf16.msra.mxu0 %v1139
    %1212 = vmatprep.subr.bf16.mxu0 %v1143
    %1213 = vmatpush1.bf16.msra.mxu0 %v1142
    %1214 = vmatprep.subr.bf16.mxu0 %v1146
    %1215 = vmatpush1.bf16.msra.mxu0 %v1145
    %1216 = vmatprep.subr.bf16.mxu0 %v1149
    %1217 = vmatpush1.bf16.msra.mxu0 %v1148
    %1218 = vmatprep.subr.bf16.mxu0 %v1152
    %1219 = vmatpush1.bf16.msra.mxu0 %v1151
    %1220 = vmatprep.subr.bf16.mxu0 0
    %1221 = vmatpush1.bf16.msra.mxu0 0
    %1222 = vmatprep.subr.bf16.mxu0 0
    %1223 = vmatpush1.bf16.msra.mxu0 0
    %1224 = vmatprep.subr.bf16.mxu0 0
    %1225 = vmatpush1.bf16.msra.mxu0 0
    %1226 = vmatprep.subr.bf16.mxu0 0
    %1227 = vmatpush1.bf16.msra.mxu0 0
    %1228 = vmatprep.mubr.bf16.mxu0 %v1191
    %1229 = vmatmul.mubr.bf16.gmra.mrb[0].mxu0 %v946
    %v1230 = vpop.f32.mrb[0].mxu0
    %v1231 = vadd.f32 0.0, %v1230
    %v1232 = vpop.f32.mrb[0].mxu0
    %v1233 = vadd.f32 0.0, %v1232
    %v1234 = vpop.f32.mrb[0].mxu0
    %v1235 = vadd.f32 0.0, %v1234
    %v1236 = vpop.f32.mrb[0].mxu0
    %v1237 = vadd.f32 0.0, %v1236
    %1238 = vmatprep.mubr.bf16.mxu0 %v1194
    %1239 = vmatmul.mubr.bf16.gmra.mrb[0].mxu0 %v948
    %v1240 = vpop.f32.mrb[0].mxu0
    %v1241 = vadd.f32 0.0, %v1240
    %v1242 = vpop.f32.mrb[0].mxu0
    %v1243 = vadd.f32 0.0, %v1242
    %v1244 = vpop.f32.mrb[0].mxu0
    %v1245 = vadd.f32 0.0, %v1244
    %v1246 = vpop.f32.mrb[0].mxu0
    %v1247 = vadd.f32 0.0, %v1246
    %1248 = vdwg.mxu0
    %1249 = vmatprep.subr.bf16.mxu0 0
    %1250 = vmatpush1.bf16.msra.mxu0 %v1120
    %1251 = vmatprep.subr.bf16.mxu0 0
    %1252 = vmatpush1.bf16.msra.mxu0 %v1123
    %1253 = vmatprep.subr.bf16.mxu0 0
    %1254 = vmatpush1.bf16.msra.mxu0 %v1126
    %1255 = vmatprep.subr.bf16.mxu0 0
    %1256 = vmatpush1.bf16.msra.mxu0 %v1129
    %1257 = vmatprep.subr.bf16.mxu0 0
    %1258 = vmatpush1.bf16.msra.mxu0 %v1132
    %1259 = vmatprep.subr.bf16.mxu0 0
    %1260 = vmatpush1.bf16.msra.mxu0 %v1135
    %1261 = vmatprep.subr.bf16.mxu0 0
    %1262 = vmatpush1.bf16.msra.mxu0 %v1138
    %1263 = vmatprep.subr.bf16.mxu0 0
    %1264 = vmatpush1.bf16.msra.mxu0 %v1141
    %1265 = vmatprep.subr.bf16.mxu0 0
    %1266 = vmatpush1.bf16.msra.mxu0 %v1144
    %1267 = vmatprep.subr.bf16.mxu0 0
    %1268 = vmatpush1.bf16.msra.mxu0 %v1147
    %1269 = vmatprep.subr.bf16.mxu0 0
    %1270 = vmatpush1.bf16.msra.mxu0 %v1150
    %1271 = vmatprep.subr.bf16.mxu0 0
    %1272 = vmatpush1.bf16.msra.mxu0 %v1153
    %1273 = vmatprep.subr.bf16.mxu0 0
    %1274 = vmatpush1.bf16.msra.mxu0 0
    %1275 = vmatprep.subr.bf16.mxu0 0
    %1276 = vmatpush1.bf16.msra.mxu0 0
    %1277 = vmatprep.subr.bf16.mxu0 0
    %1278 = vmatpush1.bf16.msra.mxu0 0
    %1279 = vmatprep.subr.bf16.mxu0 0
    %1280 = vmatpush1.bf16.msra.mxu0 0
    %1281 = vmatprep.mubr.bf16.mxu0 %v1191
    %1282 = vmatmul.mubr.bf16.gmra.mrb[0].mxu0 %v946
    %v1283 = vpop.f32.mrb[0].mxu0
    %v1284 = vadd.f32 0.0, %v1283
    %v1285 = vpop.f32.mrb[0].mxu0
    %v1286 = vpop.f32.mrb[0].mxu0
    %v1287 = vadd.f32 0.0, %v1286
    %v1288 = vpop.f32.mrb[0].mxu0
    %1289 = vmatprep.mubr.bf16.mxu0 %v1194
    %1290 = vmatmul.mubr.bf16.gmra.mrb[0].mxu0 %v948
    %v1291 = vpop.f32.mrb[0].mxu0
    %v1292 = vadd.f32 0.0, %v1291
    %v1293 = vpop.f32.mrb[0].mxu0
    %v1294 = vpop.f32.mrb[0].mxu0
    %v1295 = vadd.f32 0.0, %v1294
    %v1296 = vpop.f32.mrb[0].mxu0
    %1297 = vdwg.mxu0
    %v1298 = vld [vmem:[#allocation13] sm:$0xff]
    %v1299 = vld [vmem:[#allocation13 + $0x8] sm:$0xff]
    %v1300 = vld [vmem:[#allocation13 + $0x10] sm:$0xff]
    %v1301 = vld [vmem:[#allocation13 + $0x18] sm:$0xff]
    %v1302 = vld [vmem:[#allocation13 + $0x20] sm:$0xff]
    %v1303 = vld [vmem:[#allocation13 + $0x28] sm:$0xff]
    %v1304 = vld [vmem:[#allocation13 + $0x30] sm:$0xff]
    %v1305 = vld [vmem:[#allocation13 + $0x38] sm:$0xff]
    %v1306 = vld [vmem:[#allocation13 + $0x40] sm:$0xff]
    %v1307 = vld [vmem:[#allocation13 + $0x48] sm:$0xff]
    %v1308 = vld [vmem:[#allocation13 + $0x50] sm:$0xff]
    %v1309 = vld [vmem:[#allocation13 + $0x58] sm:$0xff]
    %v1310 = vld [vmem:[#allocation13 + $0x60] sm:$0xff]
    %v1311 = vld [vmem:[#allocation13 + $0x68] sm:$0xff]
    %v1312 = vld [vmem:[#allocation13 + $0x70] sm:$0xff]
    %v1313 = vld [vmem:[#allocation13 + $0x78] sm:$0xff]
    %v1314 = vld [vmem:[#allocation13 + $0x80] sm:$0xff]
    %v1315 = vld [vmem:[#allocation13 + $0x88] sm:$0xff]
    %v1316 = vld [vmem:[#allocation13 + $0x90] sm:$0xff]
    %v1317 = vld [vmem:[#allocation13 + $0x98] sm:$0xff]
    %v1318 = vld [vmem:[#allocation13 + $0xa0] sm:$0xff]
    %v1319 = vld [vmem:[#allocation13 + $0xa8] sm:$0xff]
    %v1320 = vld [vmem:[#allocation13 + $0xb0] sm:$0xff]
    %v1321 = vld [vmem:[#allocation13 + $0xb8] sm:$0xff]
    %v1322 = vld [vmem:[#allocation13 + $0xc0] sm:$0xff]
    %v1323 = vld [vmem:[#allocation13 + $0xc8] sm:$0xff]
    %v1324 = vld [vmem:[#allocation13 + $0xd0] sm:$0xff]
    %v1325 = vld [vmem:[#allocation13 + $0xd8] sm:$0xff]
    %v1326 = vld [vmem:[#allocation13 + $0xe0] sm:$0xff]
    %v1327 = vld [vmem:[#allocation13 + $0xe8] sm:$0xff]
    %v1328 = vld [vmem:[#allocation13 + $0xf0] sm:$0xff]
    %v1329 = vld [vmem:[#allocation13 + $0xf8] sm:$0xff]
    %v1330 = vld [vmem:[#allocation13 + $0x100] sm:$0xff]
    %v1331 = vld [vmem:[#allocation13 + $0x108] sm:$0xff]
    %v1332 = vld [vmem:[#allocation13 + $0x110] sm:$0xff]
    %v1333 = vld [vmem:[#allocation13 + $0x118] sm:$0xff]
    %v1334 = vld [vmem:[#allocation13 + $0x120] sm:$0xff]
    %v1335 = vld [vmem:[#allocation13 + $0x128] sm:$0xff]
    %v1336 = vld [vmem:[#allocation13 + $0x130] sm:$0xff]
    %v1337 = vld [vmem:[#allocation13 + $0x138] sm:$0xff]
    %v1338 = vld [vmem:[#allocation13 + $0x140] sm:$0xff]
    %v1339 = vld [vmem:[#allocation13 + $0x148] sm:$0xff]
    %v1340 = vld [vmem:[#allocation13 + $0x150] sm:$0xff]
    %v1341 = vld [vmem:[#allocation13 + $0x158] sm:$0xff]
    %v1342 = vld [vmem:[#allocation13 + $0x160] sm:$0xff]
    %v1343 = vld [vmem:[#allocation13 + $0x168] sm:$0xff]
    %v1344 = vld [vmem:[#allocation13 + $0x170] sm:$0xff]
    %v1345 = vld [vmem:[#allocation13 + $0x178] sm:$0xff]
    %v1346 = vld [vmem:[#allocation13 + $0x180] sm:$0xff]
    %v1347 = vld [vmem:[#allocation13 + $0x188] sm:$0xff]
    %v1348 = vld [vmem:[#allocation13 + $0x190] sm:$0xff]
    %v1349 = vld [vmem:[#allocation13 + $0x198] sm:$0xff]
    %v1350 = vld [vmem:[#allocation13 + $0x1a0] sm:$0xff]
    %v1351 = vld [vmem:[#allocation13 + $0x1a8] sm:$0xff]
    %v1352 = vld [vmem:[#allocation13 + $0x1b0] sm:$0xff]
    %v1353 = vld [vmem:[#allocation13 + $0x1b8] sm:$0xff]
    %v1354 = vld [vmem:[#allocation13 + $0x1c0] sm:$0xff]
    %v1355 = vld [vmem:[#allocation13 + $0x1c8] sm:$0xff]
    %v1356 = vld [vmem:[#allocation13 + $0x1d0] sm:$0xff]
    %v1357 = vld [vmem:[#allocation13 + $0x1d8] sm:$0xff]
    %v1358 = vld [vmem:[#allocation13 + $0x1e0] sm:$0xff]
    %v1359 = vld [vmem:[#allocation13 + $0x1e8] sm:$0xff]
    %v1360 = vld [vmem:[#allocation13 + $0x1f0] sm:$0xff]
    %v1361 = vld [vmem:[#allocation13 + $0x1f8] sm:$0xff]
    %v1362 = vld [vmem:[#allocation13 + $0x200] sm:$0xff]
    %v1363 = vld [vmem:[#allocation13 + $0x208] sm:$0xff]
    %v1364 = vld [vmem:[#allocation13 + $0x210] sm:$0xff]
    %v1365 = vld [vmem:[#allocation13 + $0x218] sm:$0xff]
    %v1366 = vld [vmem:[#allocation13 + $0x220] sm:$0xff]
    %v1367 = vld [vmem:[#allocation13 + $0x228] sm:$0xff]
    %v1368 = vld [vmem:[#allocation13 + $0x230] sm:$0xff]
    %v1369 = vld [vmem:[#allocation13 + $0x238] sm:$0xff]
    %v1370 = vld [vmem:[#allocation13 + $0x240] sm:$0xff]
    %v1371 = vld [vmem:[#allocation13 + $0x248] sm:$0xff]
    %v1372 = vld [vmem:[#allocation13 + $0x250] sm:$0xff]
    %v1373 = vld [vmem:[#allocation13 + $0x258] sm:$0xff]
    %v1374 = vld [vmem:[#allocation13 + $0x260] sm:$0xff]
    %v1375 = vld [vmem:[#allocation13 + $0x268] sm:$0xff]
    %v1376 = vld [vmem:[#allocation13 + $0x270] sm:$0xff]
    %v1377 = vld [vmem:[#allocation13 + $0x278] sm:$0xff]
    %v1378 = vld [vmem:[#allocation13 + $0x280] sm:$0xff]
    %v1379 = vld [vmem:[#allocation13 + $0x288] sm:$0xff]
    %v1380 = vld [vmem:[#allocation13 + $0x290] sm:$0xff]
    %v1381 = vld [vmem:[#allocation13 + $0x298] sm:$0xff]
    %v1382 = vld [vmem:[#allocation13 + $0x2a0] sm:$0xff]
    %v1383 = vld [vmem:[#allocation13 + $0x2a8] sm:$0xff]
    %v1384 = vld [vmem:[#allocation13 + $0x2b0] sm:$0xff]
    %v1385 = vld [vmem:[#allocation13 + $0x2b8] sm:$0xff]
    %v1386 = vld [vmem:[#allocation13 + $0x2c0] sm:$0xff]
    %v1387 = vld [vmem:[#allocation13 + $0x2c8] sm:$0xff]
    %v1388 = vld [vmem:[#allocation13 + $0x2d0] sm:$0xff]
    %v1389 = vld [vmem:[#allocation13 + $0x2d8] sm:$0xff]
    %v1390 = vld [vmem:[#allocation13 + $0x2e0] sm:$0xff]
    %v1391 = vld [vmem:[#allocation13 + $0x2e8] sm:$0xff]
    %v1392 = vld [vmem:[#allocation13 + $0x2f0] sm:$0xff]
    %v1393 = vld [vmem:[#allocation13 + $0x2f8] sm:$0xff]
    %v1490 = vunpack.c.l.b16 %v1298
    %v1491 = vunpack.c.h.b16 %v1298
    %v1492 = vunpack.c.l.b16 %v1299
    %v1493 = vunpack.c.h.b16 %v1299
    %v1494 = vunpack.c.l.b16 %v1300
    %v1495 = vunpack.c.h.b16 %v1300
    %v1496 = vunpack.c.l.b16 %v1301
    %v1497 = vunpack.c.h.b16 %v1301
    %v1498 = vunpack.c.l.b16 %v1302
    %v1499 = vunpack.c.h.b16 %v1302
    %v1500 = vunpack.c.l.b16 %v1303
    %v1501 = vunpack.c.h.b16 %v1303
    %v1502 = vunpack.c.l.b16 %v1304
    %v1503 = vunpack.c.h.b16 %v1304
    %v1504 = vunpack.c.l.b16 %v1305
    %v1505 = vunpack.c.h.b16 %v1305
    %v1506 = vunpack.c.l.b16 %v1306
    %v1507 = vunpack.c.h.b16 %v1306
    %v1508 = vunpack.c.l.b16 %v1307
    %v1509 = vunpack.c.h.b16 %v1307
    %v1510 = vunpack.c.l.b16 %v1308
    %v1511 = vunpack.c.h.b16 %v1308
    %v1512 = vunpack.c.l.b16 %v1309
    %v1513 = vunpack.c.h.b16 %v1309
    %v1514 = vunpack.c.l.b16 %v1310
    %v1515 = vunpack.c.h.b16 %v1310
    %v1516 = vunpack.c.l.b16 %v1311
    %v1517 = vunpack.c.h.b16 %v1311
    %v1518 = vunpack.c.l.b16 %v1312
    %v1519 = vunpack.c.h.b16 %v1312
    %v1520 = vunpack.c.l.b16 %v1313
    %v1521 = vunpack.c.h.b16 %v1313
    %v1522 = vunpack.c.l.b16 %v1314
    %v1523 = vunpack.c.h.b16 %v1314
    %v1524 = vunpack.c.l.b16 %v1315
    %v1525 = vunpack.c.h.b16 %v1315
    %v1526 = vunpack.c.l.b16 %v1316
    %v1527 = vunpack.c.h.b16 %v1316
    %v1528 = vunpack.c.l.b16 %v1317
    %v1529 = vunpack.c.h.b16 %v1317
    %v1530 = vunpack.c.l.b16 %v1318
    %v1531 = vunpack.c.h.b16 %v1318
    %v1532 = vunpack.c.l.b16 %v1319
    %v1533 = vunpack.c.h.b16 %v1319
    %v1534 = vunpack.c.l.b16 %v1320
    %v1535 = vunpack.c.h.b16 %v1320
    %v1536 = vunpack.c.l.b16 %v1321
    %v1537 = vunpack.c.h.b16 %v1321
    %v1538 = vunpack.c.l.b16 %v1322
    %v1539 = vunpack.c.h.b16 %v1322
    %v1540 = vunpack.c.l.b16 %v1323
    %v1541 = vunpack.c.h.b16 %v1323
    %v1542 = vunpack.c.l.b16 %v1324
    %v1543 = vunpack.c.h.b16 %v1324
    %v1544 = vunpack.c.l.b16 %v1325
    %v1545 = vunpack.c.h.b16 %v1325
    %v1546 = vunpack.c.l.b16 %v1326
    %v1547 = vunpack.c.h.b16 %v1326
    %v1548 = vunpack.c.l.b16 %v1327
    %v1549 = vunpack.c.h.b16 %v1327
    %v1550 = vunpack.c.l.b16 %v1328
    %v1551 = vunpack.c.h.b16 %v1328
    %v1552 = vunpack.c.l.b16 %v1329
    %v1553 = vunpack.c.h.b16 %v1329
    %v1554 = vunpack.c.l.b16 %v1330
    %v1555 = vunpack.c.h.b16 %v1330
    %v1556 = vunpack.c.l.b16 %v1331
    %v1557 = vunpack.c.h.b16 %v1331
    %v1558 = vunpack.c.l.b16 %v1332
    %v1559 = vunpack.c.h.b16 %v1332
    %v1560 = vunpack.c.l.b16 %v1333
    %v1561 = vunpack.c.h.b16 %v1333
    %v1562 = vunpack.c.l.b16 %v1334
    %v1563 = vunpack.c.h.b16 %v1334
    %v1564 = vunpack.c.l.b16 %v1335
    %v1565 = vunpack.c.h.b16 %v1335
    %v1566 = vunpack.c.l.b16 %v1336
    %v1567 = vunpack.c.h.b16 %v1336
    %v1568 = vunpack.c.l.b16 %v1337
    %v1569 = vunpack.c.h.b16 %v1337
    %v1570 = vunpack.c.l.b16 %v1338
    %v1571 = vunpack.c.h.b16 %v1338
    %v1572 = vunpack.c.l.b16 %v1339
    %v1573 = vunpack.c.h.b16 %v1339
    %v1574 = vunpack.c.l.b16 %v1340
    %v1575 = vunpack.c.h.b16 %v1340
    %v1576 = vunpack.c.l.b16 %v1341
    %v1577 = vunpack.c.h.b16 %v1341
    %v1578 = vunpack.c.l.b16 %v1342
    %v1579 = vunpack.c.h.b16 %v1342
    %v1580 = vunpack.c.l.b16 %v1343
    %v1581 = vunpack.c.h.b16 %v1343
    %v1582 = vunpack.c.l.b16 %v1344
    %v1583 = vunpack.c.h.b16 %v1344
    %v1584 = vunpack.c.l.b16 %v1345
    %v1585 = vunpack.c.h.b16 %v1345
    %v1586 = vunpack.c.l.b16 %v1346
    %v1587 = vunpack.c.h.b16 %v1346
    %v1588 = vunpack.c.l.b16 %v1347
    %v1589 = vunpack.c.h.b16 %v1347
    %v1590 = vunpack.c.l.b16 %v1348
    %v1591 = vunpack.c.h.b16 %v1348
    %v1592 = vunpack.c.l.b16 %v1349
    %v1593 = vunpack.c.h.b16 %v1349
    %v1594 = vunpack.c.l.b16 %v1350
    %v1595 = vunpack.c.h.b16 %v1350
    %v1596 = vunpack.c.l.b16 %v1351
    %v1597 = vunpack.c.h.b16 %v1351
    %v1598 = vunpack.c.l.b16 %v1352
    %v1599 = vunpack.c.h.b16 %v1352
    %v1600 = vunpack.c.l.b16 %v1353
    %v1601 = vunpack.c.h.b16 %v1353
    %v1602 = vunpack.c.l.b16 %v1354
    %v1603 = vunpack.c.h.b16 %v1354
    %v1604 = vunpack.c.l.b16 %v1355
    %v1605 = vunpack.c.h.b16 %v1355
    %v1606 = vunpack.c.l.b16 %v1356
    %v1607 = vunpack.c.h.b16 %v1356
    %v1608 = vunpack.c.l.b16 %v1357
    %v1609 = vunpack.c.h.b16 %v1357
    %v1610 = vunpack.c.l.b16 %v1358
    %v1611 = vunpack.c.h.b16 %v1358
    %v1612 = vunpack.c.l.b16 %v1359
    %v1613 = vunpack.c.h.b16 %v1359
    %v1614 = vunpack.c.l.b16 %v1360
    %v1615 = vunpack.c.h.b16 %v1360
    %v1616 = vunpack.c.l.b16 %v1361
    %v1617 = vunpack.c.h.b16 %v1361
    %v1618 = vunpack.c.l.b16 %v1362
    %v1619 = vunpack.c.h.b16 %v1362
    %v1620 = vunpack.c.l.b16 %v1363
    %v1621 = vunpack.c.h.b16 %v1363
    %v1622 = vunpack.c.l.b16 %v1364
    %v1623 = vunpack.c.h.b16 %v1364
    %v1624 = vunpack.c.l.b16 %v1365
    %v1625 = vunpack.c.h.b16 %v1365
    %v1626 = vunpack.c.l.b16 %v1366
    %v1627 = vunpack.c.h.b16 %v1366
    %v1628 = vunpack.c.l.b16 %v1367
    %v1629 = vunpack.c.h.b16 %v1367
    %v1630 = vunpack.c.l.b16 %v1368
    %v1631 = vunpack.c.h.b16 %v1368
    %v1632 = vunpack.c.l.b16 %v1369
    %v1633 = vunpack.c.h.b16 %v1369
    %v1634 = vunpack.c.l.b16 %v1370
    %v1635 = vunpack.c.h.b16 %v1370
    %v1636 = vunpack.c.l.b16 %v1371
    %v1637 = vunpack.c.h.b16 %v1371
    %v1638 = vunpack.c.l.b16 %v1372
    %v1639 = vunpack.c.h.b16 %v1372
    %v1640 = vunpack.c.l.b16 %v1373
    %v1641 = vunpack.c.h.b16 %v1373
    %v1642 = vunpack.c.l.b16 %v1374
    %v1643 = vunpack.c.h.b16 %v1374
    %v1644 = vunpack.c.l.b16 %v1375
    %v1645 = vunpack.c.h.b16 %v1375
    %v1646 = vunpack.c.l.b16 %v1376
    %v1647 = vunpack.c.h.b16 %v1376
    %v1648 = vunpack.c.l.b16 %v1377
    %v1649 = vunpack.c.h.b16 %v1377
    %v1650 = vunpack.c.l.b16 %v1378
    %v1651 = vunpack.c.h.b16 %v1378
    %v1652 = vunpack.c.l.b16 %v1379
    %v1653 = vunpack.c.h.b16 %v1379
    %v1654 = vunpack.c.l.b16 %v1380
    %v1655 = vunpack.c.h.b16 %v1380
    %v1656 = vunpack.c.l.b16 %v1381
    %v1657 = vunpack.c.h.b16 %v1381
    %v1658 = vunpack.c.l.b16 %v1382
    %v1659 = vunpack.c.h.b16 %v1382
    %v1660 = vunpack.c.l.b16 %v1383
    %v1661 = vunpack.c.h.b16 %v1383
    %v1662 = vunpack.c.l.b16 %v1384
    %v1663 = vunpack.c.h.b16 %v1384
    %v1664 = vunpack.c.l.b16 %v1385
    %v1665 = vunpack.c.h.b16 %v1385
    %v1666 = vunpack.c.l.b16 %v1386
    %v1667 = vunpack.c.h.b16 %v1386
    %v1668 = vunpack.c.l.b16 %v1387
    %v1669 = vunpack.c.h.b16 %v1387
    %v1670 = vunpack.c.l.b16 %v1388
    %v1671 = vunpack.c.h.b16 %v1388
    %v1672 = vunpack.c.l.b16 %v1389
    %v1673 = vunpack.c.h.b16 %v1389
    %v1674 = vunpack.c.l.b16 %v1390
    %v1675 = vunpack.c.h.b16 %v1390
    %v1676 = vunpack.c.l.b16 %v1391
    %v1677 = vunpack.c.h.b16 %v1391
    %v1678 = vunpack.c.l.b16 %v1392
    %v1679 = vunpack.c.h.b16 %v1392
    %v1680 = vunpack.c.l.b16 %v1393
    %v1681 = vunpack.c.h.b16 %v1393
    %v1682 = vpack.c.b16 %v1494, %v1490
    %v1683 = vpack.c.b16 %v1495, %v1491
    %v1684 = vpack.c.b16 %v1496, %v1492
    %v1685 = vpack.c.b16 %v1497, %v1493
    %v1686 = vpack.c.b16 %v1502, %v1498
    %v1687 = vpack.c.b16 %v1503, %v1499
    %v1688 = vpack.c.b16 %v1504, %v1500
    %v1689 = vpack.c.b16 %v1505, %v1501
    %v1690 = vpack.c.b16 %v1510, %v1506
    %v1691 = vpack.c.b16 %v1511, %v1507
    %v1692 = vpack.c.b16 %v1512, %v1508
    %v1693 = vpack.c.b16 %v1513, %v1509
    %v1694 = vpack.c.b16 %v1518, %v1514
    %v1695 = vpack.c.b16 %v1519, %v1515
    %v1696 = vpack.c.b16 %v1520, %v1516
    %v1697 = vpack.c.b16 %v1521, %v1517
    %v1698 = vpack.c.b16 %v1526, %v1522
    %v1699 = vpack.c.b16 %v1527, %v1523
    %v1700 = vpack.c.b16 %v1528, %v1524
    %v1701 = vpack.c.b16 %v1529, %v1525
    %v1702 = vpack.c.b16 %v1534, %v1530
    %v1703 = vpack.c.b16 %v1535, %v1531
    %v1704 = vpack.c.b16 %v1536, %v1532
    %v1705 = vpack.c.b16 %v1537, %v1533
    %v1706 = vpack.c.b16 %v1542, %v1538
    %v1707 = vpack.c.b16 %v1543, %v1539
    %v1708 = vpack.c.b16 %v1544, %v1540
    %v1709 = vpack.c.b16 %v1545, %v1541
    %v1710 = vpack.c.b16 %v1550, %v1546
    %v1711 = vpack.c.b16 %v1551, %v1547
    %v1712 = vpack.c.b16 %v1552, %v1548
    %v1713 = vpack.c.b16 %v1553, %v1549
    %v1714 = vpack.c.b16 %v1558, %v1554
    %v1715 = vpack.c.b16 %v1559, %v1555
    %v1716 = vpack.c.b16 %v1560, %v1556
    %v1717 = vpack.c.b16 %v1561, %v1557
    %v1718 = vpack.c.b16 %v1566, %v1562
    %v1719 = vpack.c.b16 %v1567, %v1563
    %v1720 = vpack.c.b16 %v1568, %v1564
    %v1721 = vpack.c.b16 %v1569, %v1565
    %v1722 = vpack.c.b16 %v1574, %v1570
    %v1723 = vpack.c.b16 %v1575, %v1571
    %v1724 = vpack.c.b16 %v1576, %v1572
    %v1725 = vpack.c.b16 %v1577, %v1573
    %v1726 = vpack.c.b16 %v1582, %v1578
    %v1727 = vpack.c.b16 %v1583, %v1579
    %v1728 = vpack.c.b16 %v1584, %v1580
    %v1729 = vpack.c.b16 %v1585, %v1581
    %v1730 = vpack.c.b16 %v1590, %v1586
    %v1731 = vpack.c.b16 %v1591, %v1587
    %v1732 = vpack.c.b16 %v1592, %v1588
    %v1733 = vpack.c.b16 %v1593, %v1589
    %v1734 = vpack.c.b16 %v1598, %v1594
    %v1735 = vpack.c.b16 %v1599, %v1595
    %v1736 = vpack.c.b16 %v1600, %v1596
    %v1737 = vpack.c.b16 %v1601, %v1597
    %v1738 = vpack.c.b16 %v1606, %v1602
    %v1739 = vpack.c.b16 %v1607, %v1603
    %v1740 = vpack.c.b16 %v1608, %v1604
    %v1741 = vpack.c.b16 %v1609, %v1605
    %v1742 = vpack.c.b16 %v1614, %v1610
    %v1743 = vpack.c.b16 %v1615, %v1611
    %v1744 = vpack.c.b16 %v1616, %v1612
    %v1745 = vpack.c.b16 %v1617, %v1613
    %v1746 = vpack.c.b16 %v1622, %v1618
    %v1747 = vpack.c.b16 %v1623, %v1619
    %v1748 = vpack.c.b16 %v1624, %v1620
    %v1749 = vpack.c.b16 %v1625, %v1621
    %v1750 = vpack.c.b16 %v1630, %v1626
    %v1751 = vpack.c.b16 %v1631, %v1627
    %v1752 = vpack.c.b16 %v1632, %v1628
    %v1753 = vpack.c.b16 %v1633, %v1629
    %v1754 = vpack.c.b16 %v1638, %v1634
    %v1755 = vpack.c.b16 %v1639, %v1635
    %v1756 = vpack.c.b16 %v1640, %v1636
    %v1757 = vpack.c.b16 %v1641, %v1637
    %v1758 = vpack.c.b16 %v1646, %v1642
    %v1759 = vpack.c.b16 %v1647, %v1643
    %v1760 = vpack.c.b16 %v1648, %v1644
    %v1761 = vpack.c.b16 %v1649, %v1645
    %v1762 = vpack.c.b16 %v1654, %v1650
    %v1763 = vpack.c.b16 %v1655, %v1651
    %v1764 = vpack.c.b16 %v1656, %v1652
    %v1765 = vpack.c.b16 %v1657, %v1653
    %v1766 = vpack.c.b16 %v1662, %v1658
    %v1767 = vpack.c.b16 %v1663, %v1659
    %v1768 = vpack.c.b16 %v1664, %v1660
    %v1769 = vpack.c.b16 %v1665, %v1661
    %v1770 = vpack.c.b16 %v1670, %v1666
    %v1771 = vpack.c.b16 %v1671, %v1667
    %v1772 = vpack.c.b16 %v1672, %v1668
    %v1773 = vpack.c.b16 %v1673, %v1669
    %v1774 = vpack.c.b16 %v1678, %v1674
    %v1775 = vpack.c.b16 %v1679, %v1675
    %v1776 = vpack.c.b16 %v1680, %v1676
    %v1777 = vpack.c.b16 %v1681, %v1677
    %1874 = vmatprep.subr.bf16.mxu0 %v1683
    %1875 = vmatpush1.bf16.msra.mxu0 %v1682
    %1876 = vmatprep.subr.bf16.mxu0 %v1687
    %1877 = vmatpush1.bf16.msra.mxu0 %v1686
    %1878 = vmatprep.subr.bf16.mxu0 %v1691
    %1879 = vmatpush1.bf16.msra.mxu0 %v1690
    %1880 = vmatprep.subr.bf16.mxu0 %v1695
    %1881 = vmatpush1.bf16.msra.mxu0 %v1694
    %1882 = vmatprep.subr.bf16.mxu0 %v1699
    %1883 = vmatpush1.bf16.msra.mxu0 %v1698
    %1884 = vmatprep.subr.bf16.mxu0 %v1703
    %1885 = vmatpush1.bf16.msra.mxu0 %v1702
    %1886 = vmatprep.subr.bf16.mxu0 %v1707
    %1887 = vmatpush1.bf16.msra.mxu0 %v1706
    %1888 = vmatprep.subr.bf16.mxu0 %v1711
    %1889 = vmatpush1.bf16.msra.mxu0 %v1710
    %1890 = vmatprep.subr.bf16.mxu0 %v1715
    %1891 = vmatpush1.bf16.msra.mxu0 %v1714
    %1892 = vmatprep.subr.bf16.mxu0 %v1719
    %1893 = vmatpush1.bf16.msra.mxu0 %v1718
    %1894 = vmatprep.subr.bf16.mxu0 %v1723
    %1895 = vmatpush1.bf16.msra.mxu0 %v1722
    %1896 = vmatprep.subr.bf16.mxu0 %v1727
    %1897 = vmatpush1.bf16.msra.mxu0 %v1726
    %1898 = vmatprep.subr.bf16.mxu0 %v1731
    %1899 = vmatpush1.bf16.msra.mxu0 %v1730
    %1900 = vmatprep.subr.bf16.mxu0 %v1735
    %1901 = vmatpush1.bf16.msra.mxu0 %v1734
    %1902 = vmatprep.subr.bf16.mxu0 %v1739
    %1903 = vmatpush1.bf16.msra.mxu0 %v1738
    %1904 = vmatprep.subr.bf16.mxu0 %v1743
    %1905 = vmatpush1.bf16.msra.mxu0 %v1742
    %1906 = vmatprep.mubr.bf16.mxu0 %v433
    %1907 = vmatmul.mubr.bf16.gmra.mrb[0].mxu0 %v432
    %v1908 = vpop.f32.mrb[0].mxu0
    %v1909 = vadd.f32 0.0, %v1908
    %v1910 = vpop.f32.mrb[0].mxu0
    %v1911 = vadd.f32 0.0, %v1910
    %v1912 = vpop.f32.mrb[0].mxu0
    %v1913 = vadd.f32 0.0, %v1912
    %v1914 = vpop.f32.mrb[0].mxu0
    %v1915 = vadd.f32 0.0, %v1914
    %1916 = vmatprep.mubr.bf16.mxu0 %v436
    %1917 = vmatmul.mubr.bf16.gmra.mrb[0].mxu0 %v435
    %v1918 = vpop.f32.mrb[0].mxu0
    %v1919 = vadd.f32 0.0, %v1918
    %v1920 = vpop.f32.mrb[0].mxu0
    %v1921 = vadd.f32 0.0, %v1920
    %v1922 = vpop.f32.mrb[0].mxu0
    %v1923 = vadd.f32 0.0, %v1922
    %v1924 = vpop.f32.mrb[0].mxu0
    %v1925 = vadd.f32 0.0, %v1924
    %1926 = vdwg.mxu0
    %1927 = vmatprep.subr.bf16.mxu0 %v1747
    %1928 = vmatpush1.bf16.msra.mxu0 %v1746
    %1929 = vmatprep.subr.bf16.mxu0 %v1751
    %1930 = vmatpush1.bf16.msra.mxu0 %v1750
    %1931 = vmatprep.subr.bf16.mxu0 %v1755
    %1932 = vmatpush1.bf16.msra.mxu0 %v1754
    %1933 = vmatprep.subr.bf16.mxu0 %v1759
    %1934 = vmatpush1.bf16.msra.mxu0 %v1758
    %1935 = vmatprep.subr.bf16.mxu0 %v1763
    %1936 = vmatpush1.bf16.msra.mxu0 %v1762
    %1937 = vmatprep.subr.bf16.mxu0 %v1767
    %1938 = vmatpush1.bf16.msra.mxu0 %v1766
    %1939 = vmatprep.subr.bf16.mxu0 %v1771
    %1940 = vmatpush1.bf16.msra.mxu0 %v1770
    %1941 = vmatprep.subr.bf16.mxu0 %v1775
    %1942 = vmatpush1.bf16.msra.mxu0 %v1774
    %1943 = vmatprep.subr.bf16.mxu0 0
    %1944 = vmatpush1.bf16.msra.mxu0 0
    %1945 = vmatprep.subr.bf16.mxu0 0
    %1946 = vmatpush1.bf16.msra.mxu0 0
    %1947 = vmatprep.subr.bf16.mxu0 0
    %1948 = vmatpush1.bf16.msra.mxu0 0
    %1949 = vmatprep.subr.bf16.mxu0 0
    %1950 = vmatpush1.bf16.msra.mxu0 0
    %1951 = vmatprep.subr.bf16.mxu0 0
    %1952 = vmatpush1.bf16.msra.mxu0 0
    %1953 = vmatprep.subr.bf16.mxu0 0
    %1954 = vmatpush1.bf16.msra.mxu0 0
    %1955 = vmatprep.subr.bf16.mxu0 0
    %1956 = vmatpush1.bf16.msra.mxu0 0
    %1957 = vmatprep.subr.bf16.mxu0 0
    %1958 = vmatpush1.bf16.msra.mxu0 0
    %1959 = vmatprep.mubr.bf16.mxu0 0
    %1960 = vmatmul.mubr.bf16.gmra.mrb[0].mxu0 %v434
    %v1961 = vpop.f32.mrb[0].mxu0
    %v1962 = vadd.f32 %v1909, %v1961
    %v1963 = vpop.f32.mrb[0].mxu0
    %v1964 = vadd.f32 %v1911, %v1963
    %v1965 = vpop.f32.mrb[0].mxu0
    %v1966 = vadd.f32 %v1913, %v1965
    %v1967 = vpop.f32.mrb[0].mxu0
    %v1968 = vadd.f32 %v1915, %v1967
    %1969 = vmatprep.mubr.bf16.mxu0 0
    %1970 = vmatmul.mubr.bf16.gmra.mrb[0].mxu0 %v437
    %v1971 = vpop.f32.mrb[0].mxu0
    %v1972 = vadd.f32 %v1919, %v1971
    %v1973 = vpop.f32.mrb[0].mxu0
    %v1974 = vadd.f32 %v1921, %v1973
    %v1975 = vpop.f32.mrb[0].mxu0
    %v1976 = vadd.f32 %v1923, %v1975
    %v1977 = vpop.f32.mrb[0].mxu0
    %v1978 = vadd.f32 %v1925, %v1977
    %1979 = vdwg.mxu0
    %1980 = vmatprep.subr.bf16.mxu0 %v1685
    %1981 = vmatpush1.bf16.msra.mxu0 %v1684
    %1982 = vmatprep.subr.bf16.mxu0 %v1689
    %1983 = vmatpush1.bf16.msra.mxu0 %v1688
    %1984 = vmatprep.subr.bf16.mxu0 %v1693
    %1985 = vmatpush1.bf16.msra.mxu0 %v1692
    %1986 = vmatprep.subr.bf16.mxu0 %v1697
    %1987 = vmatpush1.bf16.msra.mxu0 %v1696
    %1988 = vmatprep.subr.bf16.mxu0 %v1701
    %1989 = vmatpush1.bf16.msra.mxu0 %v1700
    %1990 = vmatprep.subr.bf16.mxu0 %v1705
    %1991 = vmatpush1.bf16.msra.mxu0 %v1704
    %1992 = vmatprep.subr.bf16.mxu0 %v1709
    %1993 = vmatpush1.bf16.msra.mxu0 %v1708
    %1994 = vmatprep.subr.bf16.mxu0 %v1713
    %1995 = vmatpush1.bf16.msra.mxu0 %v1712
    %1996 = vmatprep.subr.bf16.mxu0 %v1717
    %1997 = vmatpush1.bf16.msra.mxu0 %v1716
    %1998 = vmatprep.subr.bf16.mxu0 %v1721
    %1999 = vmatpush1.bf16.msra.mxu0 %v1720
    %2000 = vmatprep.subr.bf16.mxu0 %v1725
    %2001 = vmatpush1.bf16.msra.mxu0 %v1724
    %2002 = vmatprep.subr.bf16.mxu0 %v1729
    %2003 = vmatpush1.bf16.msra.mxu0 %v1728
    %2004 = vmatprep.subr.bf16.mxu0 %v1733
    %2005 = vmatpush1.bf16.msra.mxu0 %v1732
    %2006 = vmatprep.subr.bf16.mxu0 %v1737
    %2007 = vmatpush1.bf16.msra.mxu0 %v1736
    %2008 = vmatprep.subr.bf16.mxu0 %v1741
    %2009 = vmatpush1.bf16.msra.mxu0 %v1740
    %2010 = vmatprep.subr.bf16.mxu0 %v1745
    %2011 = vmatpush1.bf16.msra.mxu0 %v1744
    %2012 = vmatprep.mubr.bf16.mxu0 %v433
    %2013 = vmatmul.mubr.bf16.gmra.mrb[0].mxu0 %v432
    %v2014 = vpop.f32.mrb[0].mxu0
    %v2015 = vadd.f32 0.0, %v2014
    %v2016 = vpop.f32.mrb[0].mxu0
    %v2017 = vadd.f32 0.0, %v2016
    %v2018 = vpop.f32.mrb[0].mxu0
    %v2019 = vadd.f32 0.0, %v2018
    %v2020 = vpop.f32.mrb[0].mxu0
    %v2021 = vadd.f32 0.0, %v2020
    %2022 = vmatprep.mubr.bf16.mxu0 %v436
    %2023 = vmatmul.mubr.bf16.gmra.mrb[0].mxu0 %v435
    %v2024 = vpop.f32.mrb[0].mxu0
    %v2025 = vadd.f32 0.0, %v2024
    %v2026 = vpop.f32.mrb[0].mxu0
    %v2027 = vadd.f32 0.0, %v2026
    %v2028 = vpop.f32.mrb[0].mxu0
    %v2029 = vadd.f32 0.0, %v2028
    %v2030 = vpop.f32.mrb[0].mxu0
    %v2031 = vadd.f32 0.0, %v2030
    %2032 = vdwg.mxu0
    %2033 = vmatprep.subr.bf16.mxu0 %v1749
    %2034 = vmatpush1.bf16.msra.mxu0 %v1748
    %2035 = vmatprep.subr.bf16.mxu0 %v1753
    %2036 = vmatpush1.bf16.msra.mxu0 %v1752
    %2037 = vmatprep.subr.bf16.mxu0 %v1757
    %2038 = vmatpush1.bf16.msra.mxu0 %v1756
    %2039 = vmatprep.subr.bf16.mxu0 %v1761
    %2040 = vmatpush1.bf16.msra.mxu0 %v1760
    %2041 = vmatprep.subr.bf16.mxu0 %v1765
    %2042 = vmatpush1.bf16.msra.mxu0 %v1764
    %2043 = vmatprep.subr.bf16.mxu0 %v1769
    %2044 = vmatpush1.bf16.msra.mxu0 %v1768
    %2045 = vmatprep.subr.bf16.mxu0 %v1773
    %2046 = vmatpush1.bf16.msra.mxu0 %v1772
    %2047 = vmatprep.subr.bf16.mxu0 %v1777
    %2048 = vmatpush1.bf16.msra.mxu0 %v1776
    %2049 = vmatprep.subr.bf16.mxu0 0
    %2050 = vmatpush1.bf16.msra.mxu0 0
    %2051 = vmatprep.subr.bf16.mxu0 0
    %2052 = vmatpush1.bf16.msra.mxu0 0
    %2053 = vmatprep.subr.bf16.mxu0 0
    %2054 = vmatpush1.bf16.msra.mxu0 0
    %2055 = vmatprep.subr.bf16.mxu0 0
    %2056 = vmatpush1.bf16.msra.mxu0 0
    %2057 = vmatprep.subr.bf16.mxu0 0
    %2058 = vmatpush1.bf16.msra.mxu0 0
    %2059 = vmatprep.subr.bf16.mxu0 0
    %2060 = vmatpush1.bf16.msra.mxu0 0
    %2061 = vmatprep.subr.bf16.mxu0 0
    %2062 = vmatpush1.bf16.msra.mxu0 0
    %2063 = vmatprep.subr.bf16.mxu0 0
    %2064 = vmatpush1.bf16.msra.mxu0 0
    %2065 = vmatprep.mubr.bf16.mxu0 0
    %2066 = vmatmul.mubr.bf16.gmra.mrb[0].mxu0 %v434
    %v2067 = vpop.f32.mrb[0].mxu0
    %v2068 = vadd.f32 %v2015, %v2067
    %v2069 = vpop.f32.mrb[0].mxu0
    %v2070 = vadd.f32 %v2017, %v2069
    %v2071 = vpop.f32.mrb[0].mxu0
    %v2072 = vadd.f32 %v2019, %v2071
    %v2073 = vpop.f32.mrb[0].mxu0
    %v2074 = vadd.f32 %v2021, %v2073
    %2075 = vmatprep.mubr.bf16.mxu0 0
    %2076 = vmatmul.mubr.bf16.gmra.mrb[0].mxu0 %v437
    %v2077 = vpop.f32.mrb[0].mxu0
    %v2078 = vadd.f32 %v2025, %v2077
    %v2079 = vpop.f32.mrb[0].mxu0
    %v2080 = vadd.f32 %v2027, %v2079
    %v2081 = vpop.f32.mrb[0].mxu0
    %v2082 = vadd.f32 %v2029, %v2081
    %v2083 = vpop.f32.mrb[0].mxu0
    %v2084 = vadd.f32 %v2031, %v2083
    %2085 = vdwg.mxu0
    %v2086 = vld [vmem:[#allocation14] sm:$0xf]
    %v2087 = vld [vmem:[#allocation16] sm:$0xf]
    %v2088 = vadd.f32 %v1962, %v1964
    %v2089 = vadd.f32 %v2088, %v2068
    %v2090 = vadd.f32 %v2089, %v2070
    %2091 = vadd.xlane.f32.xlu0 %v2090
    %v2092 = vpop.xlane.xlu0 %2091
    %v2093 = vadd.f32 %v1966, %v1968
    %v2094 = vadd.f32 %v2093, %v2072
    %v2095 = vadd.f32 %v2094, %v2074
    %2096 = vadd.xlane.f32.xlu0 %v2095
    %v2097 = vpop.xlane.xlu0 %2096
    %v2098 = vadd.f32 %v1972, %v1974
    %v2099 = vadd.f32 %v2098, %v2078
    %v2100 = vadd.f32 %v2099, %v2080
    %2101 = vadd.xlane.f32.xlu0 %v2100
    %v2102 = vpop.xlane.xlu0 %2101
    %v2103 = vadd.f32 %v1976, %v1978
    %v2104 = vadd.f32 %v2103, %v2082
    %v2105 = vadd.f32 %v2104, %v2084
    %2106 = vadd.xlane.f32.xlu0 %v2105
    %v2107 = vpop.xlane.xlu0 %2106
    %v2108 = vrcp.pop 512.0
    %v2109 = vmul.f32 %v2092, %v2108
    %v2110 = vmul.f32 %v2097, %v2108
    %v2111 = vmul.f32 %v2102, %v2108
    %v2112 = vmul.f32 %v2107, %v2108
    %v2113 = vsub.f32 %v1962, %v2109
    %v2114 = vsub.f32 %v1964, %v2109
    %v2115 = vsub.f32 %v2068, %v2109
    %v2116 = vsub.f32 %v2070, %v2109
    %v2117 = vsub.f32 %v1966, %v2110
    %v2118 = vsub.f32 %v1968, %v2110
    %v2119 = vsub.f32 %v2072, %v2110
    %v2120 = vsub.f32 %v2074, %v2110
    %v2121 = vsub.f32 %v1972, %v2111
    %v2122 = vsub.f32 %v1974, %v2111
    %v2123 = vsub.f32 %v2078, %v2111
    %v2124 = vsub.f32 %v2080, %v2111
    %v2125 = vsub.f32 %v1976, %v2112
    %v2126 = vsub.f32 %v1978, %v2112
    %v2127 = vsub.f32 %v2082, %v2112
    %v2128 = vsub.f32 %v2084, %v2112
    %v2129 = vmul.f32 %v2113, %v2113
    %v2130 = vmul.f32 %v2114, %v2114
    %v2131 = vmul.f32 %v2115, %v2115
    %v2132 = vmul.f32 %v2116, %v2116
    %v2133 = vmul.f32 %v2117, %v2117
    %v2134 = vmul.f32 %v2118, %v2118
    %v2135 = vmul.f32 %v2119, %v2119
    %v2136 = vmul.f32 %v2120, %v2120
    %v2137 = vmul.f32 %v2121, %v2121
    %v2138 = vmul.f32 %v2122, %v2122
    %v2139 = vmul.f32 %v2123, %v2123
    %v2140 = vmul.f32 %v2124, %v2124
    %v2141 = vmul.f32 %v2125, %v2125
    %v2142 = vmul.f32 %v2126, %v2126
    %v2143 = vmul.f32 %v2127, %v2127
    %v2144 = vmul.f32 %v2128, %v2128
    %v2145 = vadd.f32 %v2129, %v2130
    %v2146 = vadd.f32 %v2145, %v2131
    %v2147 = vadd.f32 %v2146, %v2132
    %2148 = vadd.xlane.f32.xlu0 %v2147
    %v2149 = vpop.xlane.xlu0 %2148
    %v2150 = vadd.f32 %v2133, %v2134
    %v2151 = vadd.f32 %v2150, %v2135
    %v2152 = vadd.f32 %v2151, %v2136
    %2153 = vadd.xlane.f32.xlu0 %v2152
    %v2154 = vpop.xlane.xlu0 %2153
    %v2155 = vadd.f32 %v2137, %v2138
    %v2156 = vadd.f32 %v2155, %v2139
    %v2157 = vadd.f32 %v2156, %v2140
    %2158 = vadd.xlane.f32.xlu0 %v2157
    %v2159 = vpop.xlane.xlu0 %2158
    %v2160 = vadd.f32 %v2141, %v2142
    %v2161 = vadd.f32 %v2160, %v2143
    %v2162 = vadd.f32 %v2161, %v2144
    %2163 = vadd.xlane.f32.xlu0 %v2162
    %v2164 = vpop.xlane.xlu0 %2163
    %v2165 = vmul.f32 %v2149, %v2108
    %v2166 = vmul.f32 %v2154, %v2108
    %v2167 = vmul.f32 %v2159, %v2108
    %v2168 = vmul.f32 %v2164, %v2108
    %v2169 = vadd.f32 %v2165, 1e-05
    %v2170 = vadd.f32 %v2166, 1e-05
    %v2171 = vadd.f32 %v2167, 1e-05
    %v2172 = vadd.f32 %v2168, 1e-05
    %v2173 = vrsqrt.pop %v2169
    %v2174 = vrsqrt.pop %v2170
    %v2175 = vrsqrt.pop %v2171
    %v2176 = vrsqrt.pop %v2172
    %v2177 = vmul.f32 %v2113, %v2173
    %v2178 = vmul.f32 %v2114, %v2173
    %v2179 = vmul.f32 %v2115, %v2173
    %v2180 = vmul.f32 %v2116, %v2173
    %v2181 = vmul.f32 %v2117, %v2174
    %v2182 = vmul.f32 %v2118, %v2174
    %v2183 = vmul.f32 %v2119, %v2174
    %v2184 = vmul.f32 %v2120, %v2174
    %v2185 = vmul.f32 %v2121, %v2175
    %v2186 = vmul.f32 %v2122, %v2175
    %v2187 = vmul.f32 %v2123, %v2175
    %v2188 = vmul.f32 %v2124, %v2175
    %v2189 = vmul.f32 %v2125, %v2176
    %v2190 = vmul.f32 %v2126, %v2176
    %v2191 = vmul.f32 %v2127, %v2176
    %v2192 = vmul.f32 %v2128, %v2176
    %v2194 = vlaneseq
    %v2195 = vshrl.u32 %v2194, 7
    %v2196 = vsub.s32 0, %v2195
    %v2197 = vrot.slane %v2086, %v2196
    %v2198 = vlaneseq
    %v2199 = vshrl.u32 %v2198, 7
    %v2200 = vsub.s32 1, %v2199
    %v2201 = vrot.slane %v2086, %v2200
    %v2202 = vlaneseq
    %v2203 = vshrl.u32 %v2202, 7
    %v2204 = vsub.s32 2, %v2203
    %v2205 = vrot.slane %v2086, %v2204
    %v2206 = vlaneseq
    %v2207 = vshrl.u32 %v2206, 7
    %v2208 = vsub.s32 3, %v2207
    %v2209 = vrot.slane %v2086, %v2208
    %v2214 = vmul.f32 %v2177, %v2197
    %v2215 = vmul.f32 %v2178, %v2201
    %v2216 = vmul.f32 %v2179, %v2205
    %v2217 = vmul.f32 %v2180, %v2209
    %v2218 = vmul.f32 %v2181, %v2197
    %v2219 = vmul.f32 %v2182, %v2201
    %v2220 = vmul.f32 %v2183, %v2205
    %v2221 = vmul.f32 %v2184, %v2209
    %v2222 = vmul.f32 %v2185, %v2197
    %v2223 = vmul.f32 %v2186, %v2201
    %v2224 = vmul.f32 %v2187, %v2205
    %v2225 = vmul.f32 %v2188, %v2209
    %v2226 = vmul.f32 %v2189, %v2197
    %v2227 = vmul.f32 %v2190, %v2201
    %v2228 = vmul.f32 %v2191, %v2205
    %v2229 = vmul.f32 %v2192, %v2209
    %v2231 = vlaneseq
    %v2232 = vshrl.u32 %v2231, 7
    %v2233 = vsub.s32 0, %v2232
    %v2234 = vrot.slane %v2087, %v2233
    %v2235 = vlaneseq
    %v2236 = vshrl.u32 %v2235, 7
    %v2237 = vsub.s32 1, %v2236
    %v2238 = vrot.slane %v2087, %v2237
    %v2239 = vlaneseq
    %v2240 = vshrl.u32 %v2239, 7
    %v2241 = vsub.s32 2, %v2240
    %v2242 = vrot.slane %v2087, %v2241
    %v2243 = vlaneseq
    %v2244 = vshrl.u32 %v2243, 7
    %v2245 = vsub.s32 3, %v2244
    %v2246 = vrot.slane %v2087, %v2245
    %v2251 = vadd.f32 %v2214, %v2234
    %v2252 = vadd.f32 %v2215, %v2238
    %v2253 = vadd.f32 %v2216, %v2242
    %v2254 = vadd.f32 %v2217, %v2246
    %v2255 = vadd.f32 %v2218, %v2234
    %v2256 = vadd.f32 %v2219, %v2238
    %v2257 = vadd.f32 %v2220, %v2242
    %v2258 = vadd.f32 %v2221, %v2246
    %v2259 = vadd.f32 %v2222, %v2234
    %v2260 = vadd.f32 %v2223, %v2238
    %v2261 = vadd.f32 %v2224, %v2242
    %v2262 = vadd.f32 %v2225, %v2246
    %v2263 = vadd.f32 %v2226, %v2234
    %v2264 = vadd.f32 %v2227, %v2238
    %v2265 = vadd.f32 %v2228, %v2242
    %v2266 = vadd.f32 %v2229, %v2246
    %v2267 = vpack.c.bf16 %v2255, %v2251
    %v2268 = vpack.c.bf16 %v2256, %v2252
    %v2269 = vpack.c.bf16 %v2257, %v2253
    %v2270 = vpack.c.bf16 %v2258, %v2254
    %v2271 = vpack.c.bf16 %v2263, %v2259
    %v2272 = vpack.c.bf16 %v2264, %v2260
    %v2273 = vpack.c.bf16 %v2265, %v2261
    %v2274 = vpack.c.bf16 %v2266, %v2262
    %v2275 = vld [vmem:[#allocation17] sm:$0xff]
    %v2276 = vld [vmem:[#allocation17 + $0x8] sm:$0xff]
    %v2277 = vld [vmem:[#allocation17 + $0x10] sm:$0xff]
    %v2278 = vld [vmem:[#allocation17 + $0x18] sm:$0xff]
    %v2279 = vld [vmem:[#allocation17 + $0x20] sm:$0xff]
    %v2280 = vld [vmem:[#allocation17 + $0x28] sm:$0xff]
    %v2281 = vld [vmem:[#allocation17 + $0x30] sm:$0xff]
    %v2282 = vld [vmem:[#allocation17 + $0x38] sm:$0xff]
    %v2283 = vld [vmem:[#allocation17 + $0x40] sm:$0xff]
    %v2284 = vld [vmem:[#allocation17 + $0x48] sm:$0xff]
    %v2285 = vld [vmem:[#allocation17 + $0x50] sm:$0xff]
    %v2286 = vld [vmem:[#allocation17 + $0x58] sm:$0xff]
    %v2287 = vld [vmem:[#allocation17 + $0x60] sm:$0xff]
    %v2288 = vld [vmem:[#allocation17 + $0x68] sm:$0xff]
    %v2289 = vld [vmem:[#allocation17 + $0x70] sm:$0xff]
    %v2290 = vld [vmem:[#allocation17 + $0x78] sm:$0xff]
    %v2291 = vld [vmem:[#allocation17 + $0x80] sm:$0xff]
    %v2292 = vld [vmem:[#allocation17 + $0x88] sm:$0xff]
    %v2293 = vld [vmem:[#allocation17 + $0x90] sm:$0xff]
    %v2294 = vld [vmem:[#allocation17 + $0x98] sm:$0xff]
    %v2295 = vld [vmem:[#allocation17 + $0xa0] sm:$0xff]
    %v2296 = vld [vmem:[#allocation17 + $0xa8] sm:$0xff]
    %v2297 = vld [vmem:[#allocation17 + $0xb0] sm:$0xff]
    %v2298 = vld [vmem:[#allocation17 + $0xb8] sm:$0xff]
    %v2299 = vld [vmem:[#allocation17 + $0xc0] sm:$0xff]
    %v2300 = vld [vmem:[#allocation17 + $0xc8] sm:$0xff]
    %v2301 = vld [vmem:[#allocation17 + $0xd0] sm:$0xff]
    %v2302 = vld [vmem:[#allocation17 + $0xd8] sm:$0xff]
    %v2303 = vld [vmem:[#allocation17 + $0xe0] sm:$0xff]
    %v2304 = vld [vmem:[#allocation17 + $0xe8] sm:$0xff]
    %v2305 = vld [vmem:[#allocation17 + $0xf0] sm:$0xff]
    %v2306 = vld [vmem:[#allocation17 + $0xf8] sm:$0xff]
    %v2307 = vld [vmem:[#allocation17 + $0x100] sm:$0xff]
    %v2308 = vld [vmem:[#allocation17 + $0x108] sm:$0xff]
    %v2309 = vld [vmem:[#allocation17 + $0x110] sm:$0xff]
    %v2310 = vld [vmem:[#allocation17 + $0x118] sm:$0xff]
    %v2311 = vld [vmem:[#allocation17 + $0x120] sm:$0xff]
    %v2312 = vld [vmem:[#allocation17 + $0x128] sm:$0xff]
    %v2313 = vld [vmem:[#allocation17 + $0x130] sm:$0xff]
    %v2314 = vld [vmem:[#allocation17 + $0x138] sm:$0xff]
    %v2315 = vld [vmem:[#allocation17 + $0x140] sm:$0xff]
    %v2316 = vld [vmem:[#allocation17 + $0x148] sm:$0xff]
    %v2317 = vld [vmem:[#allocation17 + $0x150] sm:$0xff]
    %v2318 = vld [vmem:[#allocation17 + $0x158] sm:$0xff]
    %v2319 = vld [vmem:[#allocation17 + $0x160] sm:$0xff]
    %v2320 = vld [vmem:[#allocation17 + $0x168] sm:$0xff]
    %v2321 = vld [vmem:[#allocation17 + $0x170] sm:$0xff]
    %v2322 = vld [vmem:[#allocation17 + $0x178] sm:$0xff]
    %v2323 = vld [vmem:[#allocation17 + $0x180] sm:$0xff]
    %v2324 = vld [vmem:[#allocation17 + $0x188] sm:$0xff]
    %v2325 = vld [vmem:[#allocation17 + $0x190] sm:$0xff]
    %v2326 = vld [vmem:[#allocation17 + $0x198] sm:$0xff]
    %v2327 = vld [vmem:[#allocation17 + $0x1a0] sm:$0xff]
    %v2328 = vld [vmem:[#allocation17 + $0x1a8] sm:$0xff]
    %v2329 = vld [vmem:[#allocation17 + $0x1b0] sm:$0xff]
    %v2330 = vld [vmem:[#allocation17 + $0x1b8] sm:$0xff]
    %v2331 = vld [vmem:[#allocation17 + $0x1c0] sm:$0xff]
    %v2332 = vld [vmem:[#allocation17 + $0x1c8] sm:$0xff]
    %v2333 = vld [vmem:[#allocation17 + $0x1d0] sm:$0xff]
    %v2334 = vld [vmem:[#allocation17 + $0x1d8] sm:$0xff]
    %v2335 = vld [vmem:[#allocation17 + $0x1e0] sm:$0xff]
    %v2336 = vld [vmem:[#allocation17 + $0x1e8] sm:$0xff]
    %v2337 = vld [vmem:[#allocation17 + $0x1f0] sm:$0xff]
    %v2338 = vld [vmem:[#allocation17 + $0x1f8] sm:$0xff]
    %v2339 = vld [vmem:[#allocation17 + $0x200] sm:$0xff]
    %v2340 = vld [vmem:[#allocation17 + $0x208] sm:$0xff]
    %v2341 = vld [vmem:[#allocation17 + $0x210] sm:$0xff]
    %v2342 = vld [vmem:[#allocation17 + $0x218] sm:$0xff]
    %v2343 = vld [vmem:[#allocation17 + $0x220] sm:$0xff]
    %v2344 = vld [vmem:[#allocation17 + $0x228] sm:$0xff]
    %v2345 = vld [vmem:[#allocation17 + $0x230] sm:$0xff]
    %v2346 = vld [vmem:[#allocation17 + $0x238] sm:$0xff]
    %v2347 = vld [vmem:[#allocation17 + $0x240] sm:$0xff]
    %v2348 = vld [vmem:[#allocation17 + $0x248] sm:$0xff]
    %v2349 = vld [vmem:[#allocation17 + $0x250] sm:$0xff]
    %v2350 = vld [vmem:[#allocation17 + $0x258] sm:$0xff]
    %v2351 = vld [vmem:[#allocation17 + $0x260] sm:$0xff]
    %v2352 = vld [vmem:[#allocation17 + $0x268] sm:$0xff]
    %v2353 = vld [vmem:[#allocation17 + $0x270] sm:$0xff]
    %v2354 = vld [vmem:[#allocation17 + $0x278] sm:$0xff]
    %v2355 = vld [vmem:[#allocation17 + $0x280] sm:$0xff]
    %v2356 = vld [vmem:[#allocation17 + $0x288] sm:$0xff]
    %v2357 = vld [vmem:[#allocation17 + $0x290] sm:$0xff]
    %v2358 = vld [vmem:[#allocation17 + $0x298] sm:$0xff]
    %v2359 = vld [vmem:[#allocation17 + $0x2a0] sm:$0xff]
    %v2360 = vld [vmem:[#allocation17 + $0x2a8] sm:$0xff]
    %v2361 = vld [vmem:[#allocation17 + $0x2b0] sm:$0xff]
    %v2362 = vld [vmem:[#allocation17 + $0x2b8] sm:$0xff]
    %v2363 = vld [vmem:[#allocation17 + $0x2c0] sm:$0xff]
    %v2364 = vld [vmem:[#allocation17 + $0x2c8] sm:$0xff]
    %v2365 = vld [vmem:[#allocation17 + $0x2d0] sm:$0xff]
    %v2366 = vld [vmem:[#allocation17 + $0x2d8] sm:$0xff]
    %v2367 = vld [vmem:[#allocation17 + $0x2e0] sm:$0xff]
    %v2368 = vld [vmem:[#allocation17 + $0x2e8] sm:$0xff]
    %v2369 = vld [vmem:[#allocation17 + $0x2f0] sm:$0xff]
    %v2370 = vld [vmem:[#allocation17 + $0x2f8] sm:$0xff]
    %v2371 = vld [vmem:[#allocation17 + $0x300] sm:$0xff]
    %v2372 = vld [vmem:[#allocation17 + $0x308] sm:$0xff]
    %v2373 = vld [vmem:[#allocation17 + $0x310] sm:$0xff]
    %v2374 = vld [vmem:[#allocation17 + $0x318] sm:$0xff]
    %v2375 = vld [vmem:[#allocation17 + $0x320] sm:$0xff]
    %v2376 = vld [vmem:[#allocation17 + $0x328] sm:$0xff]
    %v2377 = vld [vmem:[#allocation17 + $0x330] sm:$0xff]
    %v2378 = vld [vmem:[#allocation17 + $0x338] sm:$0xff]
    %v2379 = vld [vmem:[#allocation17 + $0x340] sm:$0xff]
    %v2380 = vld [vmem:[#allocation17 + $0x348] sm:$0xff]
    %v2381 = vld [vmem:[#allocation17 + $0x350] sm:$0xff]
    %v2382 = vld [vmem:[#allocation17 + $0x358] sm:$0xff]
    %v2383 = vld [vmem:[#allocation17 + $0x360] sm:$0xff]
    %v2384 = vld [vmem:[#allocation17 + $0x368] sm:$0xff]
    %v2385 = vld [vmem:[#allocation17 + $0x370] sm:$0xff]
    %v2386 = vld [vmem:[#allocation17 + $0x378] sm:$0xff]
    %v2387 = vld [vmem:[#allocation17 + $0x380] sm:$0xff]
    %v2388 = vld [vmem:[#allocation17 + $0x388] sm:$0xff]
    %v2389 = vld [vmem:[#allocation17 + $0x390] sm:$0xff]
    %v2390 = vld [vmem:[#allocation17 + $0x398] sm:$0xff]
    %v2391 = vld [vmem:[#allocation17 + $0x3a0] sm:$0xff]
    %v2392 = vld [vmem:[#allocation17 + $0x3a8] sm:$0xff]
    %v2393 = vld [vmem:[#allocation17 + $0x3b0] sm:$0xff]
    %v2394 = vld [vmem:[#allocation17 + $0x3b8] sm:$0xff]
    %v2395 = vld [vmem:[#allocation17 + $0x3c0] sm:$0xff]
    %v2396 = vld [vmem:[#allocation17 + $0x3c8] sm:$0xff]
    %v2397 = vld [vmem:[#allocation17 + $0x3d0] sm:$0xff]
    %v2398 = vld [vmem:[#allocation17 + $0x3d8] sm:$0xff]
    %v2399 = vld [vmem:[#allocation17 + $0x3e0] sm:$0xff]
    %v2400 = vld [vmem:[#allocation17 + $0x3e8] sm:$0xff]
    %v2401 = vld [vmem:[#allocation17 + $0x3f0] sm:$0xff]
    %v2402 = vld [vmem:[#allocation17 + $0x3f8] sm:$0xff]
    %v2403 = vld [vmem:[#allocation17 + $0x400] sm:$0xff]
    %v2404 = vld [vmem:[#allocation17 + $0x408] sm:$0xff]
    %v2405 = vld [vmem:[#allocation17 + $0x410] sm:$0xff]
    %v2406 = vld [vmem:[#allocation17 + $0x418] sm:$0xff]
    %v2407 = vld [vmem:[#allocation17 + $0x420] sm:$0xff]
    %v2408 = vld [vmem:[#allocation17 + $0x428] sm:$0xff]
    %v2409 = vld [vmem:[#allocation17 + $0x430] sm:$0xff]
    %v2410 = vld [vmem:[#allocation17 + $0x438] sm:$0xff]
    %v2411 = vld [vmem:[#allocation17 + $0x440] sm:$0xff]
    %v2412 = vld [vmem:[#allocation17 + $0x448] sm:$0xff]
    %v2413 = vld [vmem:[#allocation17 + $0x450] sm:$0xff]
    %v2414 = vld [vmem:[#allocation17 + $0x458] sm:$0xff]
    %v2415 = vld [vmem:[#allocation17 + $0x460] sm:$0xff]
    %v2416 = vld [vmem:[#allocation17 + $0x468] sm:$0xff]
    %v2417 = vld [vmem:[#allocation17 + $0x470] sm:$0xff]
    %v2418 = vld [vmem:[#allocation17 + $0x478] sm:$0xff]
    %v2419 = vld [vmem:[#allocation17 + $0x480] sm:$0xff]
    %v2420 = vld [vmem:[#allocation17 + $0x488] sm:$0xff]
    %v2421 = vld [vmem:[#allocation17 + $0x490] sm:$0xff]
    %v2422 = vld [vmem:[#allocation17 + $0x498] sm:$0xff]
    %v2423 = vld [vmem:[#allocation17 + $0x4a0] sm:$0xff]
    %v2424 = vld [vmem:[#allocation17 + $0x4a8] sm:$0xff]
    %v2425 = vld [vmem:[#allocation17 + $0x4b0] sm:$0xff]
    %v2426 = vld [vmem:[#allocation17 + $0x4b8] sm:$0xff]
    %v2427 = vld [vmem:[#allocation17 + $0x4c0] sm:$0xff]
    %v2428 = vld [vmem:[#allocation17 + $0x4c8] sm:$0xff]
    %v2429 = vld [vmem:[#allocation17 + $0x4d0] sm:$0xff]
    %v2430 = vld [vmem:[#allocation17 + $0x4d8] sm:$0xff]
    %v2431 = vld [vmem:[#allocation17 + $0x4e0] sm:$0xff]
    %v2432 = vld [vmem:[#allocation17 + $0x4e8] sm:$0xff]
    %v2433 = vld [vmem:[#allocation17 + $0x4f0] sm:$0xff]
    %v2434 = vld [vmem:[#allocation17 + $0x4f8] sm:$0xff]
    %v2435 = vld [vmem:[#allocation17 + $0x500] sm:$0xff]
    %v2436 = vld [vmem:[#allocation17 + $0x508] sm:$0xff]
    %v2437 = vld [vmem:[#allocation17 + $0x510] sm:$0xff]
    %v2438 = vld [vmem:[#allocation17 + $0x518] sm:$0xff]
    %v2439 = vld [vmem:[#allocation17 + $0x520] sm:$0xff]
    %v2440 = vld [vmem:[#allocation17 + $0x528] sm:$0xff]
    %v2441 = vld [vmem:[#allocation17 + $0x530] sm:$0xff]
    %v2442 = vld [vmem:[#allocation17 + $0x538] sm:$0xff]
    %v2443 = vld [vmem:[#allocation17 + $0x540] sm:$0xff]
    %v2444 = vld [vmem:[#allocation17 + $0x548] sm:$0xff]
    %v2445 = vld [vmem:[#allocation17 + $0x550] sm:$0xff]
    %v2446 = vld [vmem:[#allocation17 + $0x558] sm:$0xff]
    %v2447 = vld [vmem:[#allocation17 + $0x560] sm:$0xff]
    %v2448 = vld [vmem:[#allocation17 + $0x568] sm:$0xff]
    %v2449 = vld [vmem:[#allocation17 + $0x570] sm:$0xff]
    %v2450 = vld [vmem:[#allocation17 + $0x578] sm:$0xff]
    %v2451 = vld [vmem:[#allocation17 + $0x580] sm:$0xff]
    %v2452 = vld [vmem:[#allocation17 + $0x588] sm:$0xff]
    %v2453 = vld [vmem:[#allocation17 + $0x590] sm:$0xff]
    %v2454 = vld [vmem:[#allocation17 + $0x598] sm:$0xff]
    %v2455 = vld [vmem:[#allocation17 + $0x5a0] sm:$0xff]
    %v2456 = vld [vmem:[#allocation17 + $0x5a8] sm:$0xff]
    %v2457 = vld [vmem:[#allocation17 + $0x5b0] sm:$0xff]
    %v2458 = vld [vmem:[#allocation17 + $0x5b8] sm:$0xff]
    %v2459 = vld [vmem:[#allocation17 + $0x5c0] sm:$0xff]
    %v2460 = vld [vmem:[#allocation17 + $0x5c8] sm:$0xff]
    %v2461 = vld [vmem:[#allocation17 + $0x5d0] sm:$0xff]
    %v2462 = vld [vmem:[#allocation17 + $0x5d8] sm:$0xff]
    %v2463 = vld [vmem:[#allocation17 + $0x5e0] sm:$0xff]
    %v2464 = vld [vmem:[#allocation17 + $0x5e8] sm:$0xff]
    %v2465 = vld [vmem:[#allocation17 + $0x5f0] sm:$0xff]
    %v2466 = vld [vmem:[#allocation17 + $0x5f8] sm:$0xff]
    %v2659 = vunpack.c.l.b16 %v2275
    %v2660 = vunpack.c.h.b16 %v2275
    %v2661 = vunpack.c.l.b16 %v2276
    %v2662 = vunpack.c.h.b16 %v2276
    %v2663 = vunpack.c.l.b16 %v2277
    %v2664 = vunpack.c.h.b16 %v2277
    %v2665 = vunpack.c.l.b16 %v2278
    %v2666 = vunpack.c.h.b16 %v2278
    %v2667 = vunpack.c.l.b16 %v2279
    %v2668 = vunpack.c.h.b16 %v2279
    %v2669 = vunpack.c.l.b16 %v2280
    %v2670 = vunpack.c.h.b16 %v2280
    %v2671 = vunpack.c.l.b16 %v2281
    %v2672 = vunpack.c.h.b16 %v2281
    %v2673 = vunpack.c.l.b16 %v2282
    %v2674 = vunpack.c.h.b16 %v2282
    %v2675 = vunpack.c.l.b16 %v2283
    %v2676 = vunpack.c.h.b16 %v2283
    %v2677 = vunpack.c.l.b16 %v2284
    %v2678 = vunpack.c.h.b16 %v2284
    %v2679 = vunpack.c.l.b16 %v2285
    %v2680 = vunpack.c.h.b16 %v2285
    %v2681 = vunpack.c.l.b16 %v2286
    %v2682 = vunpack.c.h.b16 %v2286
    %v2683 = vunpack.c.l.b16 %v2287
    %v2684 = vunpack.c.h.b16 %v2287
    %v2685 = vunpack.c.l.b16 %v2288
    %v2686 = vunpack.c.h.b16 %v2288
    %v2687 = vunpack.c.l.b16 %v2289
    %v2688 = vunpack.c.h.b16 %v2289
    %v2689 = vunpack.c.l.b16 %v2290
    %v2690 = vunpack.c.h.b16 %v2290
    %v2691 = vunpack.c.l.b16 %v2291
    %v2692 = vunpack.c.h.b16 %v2291
    %v2693 = vunpack.c.l.b16 %v2292
    %v2694 = vunpack.c.h.b16 %v2292
    %v2695 = vunpack.c.l.b16 %v2293
    %v2696 = vunpack.c.h.b16 %v2293
    %v2697 = vunpack.c.l.b16 %v2294
    %v2698 = vunpack.c.h.b16 %v2294
    %v2699 = vunpack.c.l.b16 %v2295
    %v2700 = vunpack.c.h.b16 %v2295
    %v2701 = vunpack.c.l.b16 %v2296
    %v2702 = vunpack.c.h.b16 %v2296
    %v2703 = vunpack.c.l.b16 %v2297
    %v2704 = vunpack.c.h.b16 %v2297
    %v2705 = vunpack.c.l.b16 %v2298
    %v2706 = vunpack.c.h.b16 %v2298
    %v2707 = vunpack.c.l.b16 %v2299
    %v2708 = vunpack.c.h.b16 %v2299
    %v2709 = vunpack.c.l.b16 %v2300
    %v2710 = vunpack.c.h.b16 %v2300
    %v2711 = vunpack.c.l.b16 %v2301
    %v2712 = vunpack.c.h.b16 %v2301
    %v2713 = vunpack.c.l.b16 %v2302
    %v2714 = vunpack.c.h.b16 %v2302
    %v2715 = vunpack.c.l.b16 %v2303
    %v2716 = vunpack.c.h.b16 %v2303
    %v2717 = vunpack.c.l.b16 %v2304
    %v2718 = vunpack.c.h.b16 %v2304
    %v2719 = vunpack.c.l.b16 %v2305
    %v2720 = vunpack.c.h.b16 %v2305
    %v2721 = vunpack.c.l.b16 %v2306
    %v2722 = vunpack.c.h.b16 %v2306
    %v2723 = vunpack.c.l.b16 %v2307
    %v2724 = vunpack.c.h.b16 %v2307
    %v2725 = vunpack.c.l.b16 %v2308
    %v2726 = vunpack.c.h.b16 %v2308
    %v2727 = vunpack.c.l.b16 %v2309
    %v2728 = vunpack.c.h.b16 %v2309
    %v2729 = vunpack.c.l.b16 %v2310
    %v2730 = vunpack.c.h.b16 %v2310
    %v2731 = vunpack.c.l.b16 %v2311
    %v2732 = vunpack.c.h.b16 %v2311
    %v2733 = vunpack.c.l.b16 %v2312
    %v2734 = vunpack.c.h.b16 %v2312
    %v2735 = vunpack.c.l.b16 %v2313
    %v2736 = vunpack.c.h.b16 %v2313
    %v2737 = vunpack.c.l.b16 %v2314
    %v2738 = vunpack.c.h.b16 %v2314
    %v2739 = vunpack.c.l.b16 %v2315
    %v2740 = vunpack.c.h.b16 %v2315
    %v2741 = vunpack.c.l.b16 %v2316
    %v2742 = vunpack.c.h.b16 %v2316
    %v2743 = vunpack.c.l.b16 %v2317
    %v2744 = vunpack.c.h.b16 %v2317
    %v2745 = vunpack.c.l.b16 %v2318
    %v2746 = vunpack.c.h.b16 %v2318
    %v2747 = vunpack.c.l.b16 %v2319
    %v2748 = vunpack.c.h.b16 %v2319
    %v2749 = vunpack.c.l.b16 %v2320
    %v2750 = vunpack.c.h.b16 %v2320
    %v2751 = vunpack.c.l.b16 %v2321
    %v2752 = vunpack.c.h.b16 %v2321
    %v2753 = vunpack.c.l.b16 %v2322
    %v2754 = vunpack.c.h.b16 %v2322
    %v2755 = vunpack.c.l.b16 %v2323
    %v2756 = vunpack.c.h.b16 %v2323
    %v2757 = vunpack.c.l.b16 %v2324
    %v2758 = vunpack.c.h.b16 %v2324
    %v2759 = vunpack.c.l.b16 %v2325
    %v2760 = vunpack.c.h.b16 %v2325
    %v2761 = vunpack.c.l.b16 %v2326
    %v2762 = vunpack.c.h.b16 %v2326
    %v2763 = vunpack.c.l.b16 %v2327
    %v2764 = vunpack.c.h.b16 %v2327
    %v2765 = vunpack.c.l.b16 %v2328
    %v2766 = vunpack.c.h.b16 %v2328
    %v2767 = vunpack.c.l.b16 %v2329
    %v2768 = vunpack.c.h.b16 %v2329
    %v2769 = vunpack.c.l.b16 %v2330
    %v2770 = vunpack.c.h.b16 %v2330
    %v2771 = vunpack.c.l.b16 %v2331
    %v2772 = vunpack.c.h.b16 %v2331
    %v2773 = vunpack.c.l.b16 %v2332
    %v2774 = vunpack.c.h.b16 %v2332
    %v2775 = vunpack.c.l.b16 %v2333
    %v2776 = vunpack.c.h.b16 %v2333
    %v2777 = vunpack.c.l.b16 %v2334
    %v2778 = vunpack.c.h.b16 %v2334
    %v2779 = vunpack.c.l.b16 %v2335
    %v2780 = vunpack.c.h.b16 %v2335
    %v2781 = vunpack.c.l.b16 %v2336
    %v2782 = vunpack.c.h.b16 %v2336
    %v2783 = vunpack.c.l.b16 %v2337
    %v2784 = vunpack.c.h.b16 %v2337
    %v2785 = vunpack.c.l.b16 %v2338
    %v2786 = vunpack.c.h.b16 %v2338
    %v2787 = vunpack.c.l.b16 %v2339
    %v2788 = vunpack.c.h.b16 %v2339
    %v2789 = vunpack.c.l.b16 %v2340
    %v2790 = vunpack.c.h.b16 %v2340
    %v2791 = vunpack.c.l.b16 %v2341
    %v2792 = vunpack.c.h.b16 %v2341
    %v2793 = vunpack.c.l.b16 %v2342
    %v2794 = vunpack.c.h.b16 %v2342
    %v2795 = vunpack.c.l.b16 %v2343
    %v2796 = vunpack.c.h.b16 %v2343
    %v2797 = vunpack.c.l.b16 %v2344
    %v2798 = vunpack.c.h.b16 %v2344
    %v2799 = vunpack.c.l.b16 %v2345
    %v2800 = vunpack.c.h.b16 %v2345
    %v2801 = vunpack.c.l.b16 %v2346
    %v2802 = vunpack.c.h.b16 %v2346
    %v2803 = vunpack.c.l.b16 %v2347
    %v2804 = vunpack.c.h.b16 %v2347
    %v2805 = vunpack.c.l.b16 %v2348
    %v2806 = vunpack.c.h.b16 %v2348
    %v2807 = vunpack.c.l.b16 %v2349
    %v2808 = vunpack.c.h.b16 %v2349
    %v2809 = vunpack.c.l.b16 %v2350
    %v2810 = vunpack.c.h.b16 %v2350
    %v2811 = vunpack.c.l.b16 %v2351
    %v2812 = vunpack.c.h.b16 %v2351
    %v2813 = vunpack.c.l.b16 %v2352
    %v2814 = vunpack.c.h.b16 %v2352
    %v2815 = vunpack.c.l.b16 %v2353
    %v2816 = vunpack.c.h.b16 %v2353
    %v2817 = vunpack.c.l.b16 %v2354
    %v2818 = vunpack.c.h.b16 %v2354
    %v2819 = vunpack.c.l.b16 %v2355
    %v2820 = vunpack.c.h.b16 %v2355
    %v2821 = vunpack.c.l.b16 %v2356
    %v2822 = vunpack.c.h.b16 %v2356
    %v2823 = vunpack.c.l.b16 %v2357
    %v2824 = vunpack.c.h.b16 %v2357
    %v2825 = vunpack.c.l.b16 %v2358
    %v2826 = vunpack.c.h.b16 %v2358
    %v2827 = vunpack.c.l.b16 %v2359
    %v2828 = vunpack.c.h.b16 %v2359
    %v2829 = vunpack.c.l.b16 %v2360
    %v2830 = vunpack.c.h.b16 %v2360
    %v2831 = vunpack.c.l.b16 %v2361
    %v2832 = vunpack.c.h.b16 %v2361
    %v2833 = vunpack.c.l.b16 %v2362
    %v2834 = vunpack.c.h.b16 %v2362
    %v2835 = vunpack.c.l.b16 %v2363
    %v2836 = vunpack.c.h.b16 %v2363
    %v2837 = vunpack.c.l.b16 %v2364
    %v2838 = vunpack.c.h.b16 %v2364
    %v2839 = vunpack.c.l.b16 %v2365
    %v2840 = vunpack.c.h.b16 %v2365
    %v2841 = vunpack.c.l.b16 %v2366
    %v2842 = vunpack.c.h.b16 %v2366
    %v2843 = vunpack.c.l.b16 %v2367
    %v2844 = vunpack.c.h.b16 %v2367
    %v2845 = vunpack.c.l.b16 %v2368
    %v2846 = vunpack.c.h.b16 %v2368
    %v2847 = vunpack.c.l.b16 %v2369
    %v2848 = vunpack.c.h.b16 %v2369
    %v2849 = vunpack.c.l.b16 %v2370
    %v2850 = vunpack.c.h.b16 %v2370
    %v2851 = vunpack.c.l.b16 %v2371
    %v2852 = vunpack.c.h.b16 %v2371
    %v2853 = vunpack.c.l.b16 %v2372
    %v2854 = vunpack.c.h.b16 %v2372
    %v2855 = vunpack.c.l.b16 %v2373
    %v2856 = vunpack.c.h.b16 %v2373
    %v2857 = vunpack.c.l.b16 %v2374
    %v2858 = vunpack.c.h.b16 %v2374
    %v2859 = vunpack.c.l.b16 %v2375
    %v2860 = vunpack.c.h.b16 %v2375
    %v2861 = vunpack.c.l.b16 %v2376
    %v2862 = vunpack.c.h.b16 %v2376
    %v2863 = vunpack.c.l.b16 %v2377
    %v2864 = vunpack.c.h.b16 %v2377
    %v2865 = vunpack.c.l.b16 %v2378
    %v2866 = vunpack.c.h.b16 %v2378
    %v2867 = vunpack.c.l.b16 %v2379
    %v2868 = vunpack.c.h.b16 %v2379
    %v2869 = vunpack.c.l.b16 %v2380
    %v2870 = vunpack.c.h.b16 %v2380
    %v2871 = vunpack.c.l.b16 %v2381
    %v2872 = vunpack.c.h.b16 %v2381
    %v2873 = vunpack.c.l.b16 %v2382
    %v2874 = vunpack.c.h.b16 %v2382
    %v2875 = vunpack.c.l.b16 %v2383
    %v2876 = vunpack.c.h.b16 %v2383
    %v2877 = vunpack.c.l.b16 %v2384
    %v2878 = vunpack.c.h.b16 %v2384
    %v2879 = vunpack.c.l.b16 %v2385
    %v2880 = vunpack.c.h.b16 %v2385
    %v2881 = vunpack.c.l.b16 %v2386
    %v2882 = vunpack.c.h.b16 %v2386
    %v2883 = vunpack.c.l.b16 %v2387
    %v2884 = vunpack.c.h.b16 %v2387
    %v2885 = vunpack.c.l.b16 %v2388
    %v2886 = vunpack.c.h.b16 %v2388
    %v2887 = vunpack.c.l.b16 %v2389
    %v2888 = vunpack.c.h.b16 %v2389
    %v2889 = vunpack.c.l.b16 %v2390
    %v2890 = vunpack.c.h.b16 %v2390
    %v2891 = vunpack.c.l.b16 %v2391
    %v2892 = vunpack.c.h.b16 %v2391
    %v2893 = vunpack.c.l.b16 %v2392
    %v2894 = vunpack.c.h.b16 %v2392
    %v2895 = vunpack.c.l.b16 %v2393
    %v2896 = vunpack.c.h.b16 %v2393
    %v2897 = vunpack.c.l.b16 %v2394
    %v2898 = vunpack.c.h.b16 %v2394
    %v2899 = vunpack.c.l.b16 %v2395
    %v2900 = vunpack.c.h.b16 %v2395
    %v2901 = vunpack.c.l.b16 %v2396
    %v2902 = vunpack.c.h.b16 %v2396
    %v2903 = vunpack.c.l.b16 %v2397
    %v2904 = vunpack.c.h.b16 %v2397
    %v2905 = vunpack.c.l.b16 %v2398
    %v2906 = vunpack.c.h.b16 %v2398
    %v2907 = vunpack.c.l.b16 %v2399
    %v2908 = vunpack.c.h.b16 %v2399
    %v2909 = vunpack.c.l.b16 %v2400
    %v2910 = vunpack.c.h.b16 %v2400
    %v2911 = vunpack.c.l.b16 %v2401
    %v2912 = vunpack.c.h.b16 %v2401
    %v2913 = vunpack.c.l.b16 %v2402
    %v2914 = vunpack.c.h.b16 %v2402
    %v2915 = vunpack.c.l.b16 %v2403
    %v2916 = vunpack.c.h.b16 %v2403
    %v2917 = vunpack.c.l.b16 %v2404
    %v2918 = vunpack.c.h.b16 %v2404
    %v2919 = vunpack.c.l.b16 %v2405
    %v2920 = vunpack.c.h.b16 %v2405
    %v2921 = vunpack.c.l.b16 %v2406
    %v2922 = vunpack.c.h.b16 %v2406
    %v2923 = vunpack.c.l.b16 %v2407
    %v2924 = vunpack.c.h.b16 %v2407
    %v2925 = vunpack.c.l.b16 %v2408
    %v2926 = vunpack.c.h.b16 %v2408
    %v2927 = vunpack.c.l.b16 %v2409
    %v2928 = vunpack.c.h.b16 %v2409
    %v2929 = vunpack.c.l.b16 %v2410
    %v2930 = vunpack.c.h.b16 %v2410
    %v2931 = vunpack.c.l.b16 %v2411
    %v2932 = vunpack.c.h.b16 %v2411
    %v2933 = vunpack.c.l.b16 %v2412
    %v2934 = vunpack.c.h.b16 %v2412
    %v2935 = vunpack.c.l.b16 %v2413
    %v2936 = vunpack.c.h.b16 %v2413
    %v2937 = vunpack.c.l.b16 %v2414
    %v2938 = vunpack.c.h.b16 %v2414
    %v2939 = vunpack.c.l.b16 %v2415
    %v2940 = vunpack.c.h.b16 %v2415
    %v2941 = vunpack.c.l.b16 %v2416
    %v2942 = vunpack.c.h.b16 %v2416
    %v2943 = vunpack.c.l.b16 %v2417
    %v2944 = vunpack.c.h.b16 %v2417
    %v2945 = vunpack.c.l.b16 %v2418
    %v2946 = vunpack.c.h.b16 %v2418
    %v2947 = vunpack.c.l.b16 %v2419
    %v2948 = vunpack.c.h.b16 %v2419
    %v2949 = vunpack.c.l.b16 %v2420
    %v2950 = vunpack.c.h.b16 %v2420
    %v2951 = vunpack.c.l.b16 %v2421
    %v2952 = vunpack.c.h.b16 %v2421
    %v2953 = vunpack.c.l.b16 %v2422
    %v2954 = vunpack.c.h.b16 %v2422
    %v2955 = vunpack.c.l.b16 %v2423
    %v2956 = vunpack.c.h.b16 %v2423
    %v2957 = vunpack.c.l.b16 %v2424
    %v2958 = vunpack.c.h.b16 %v2424
    %v2959 = vunpack.c.l.b16 %v2425
    %v2960 = vunpack.c.h.b16 %v2425
    %v2961 = vunpack.c.l.b16 %v2426
    %v2962 = vunpack.c.h.b16 %v2426
    %v2963 = vunpack.c.l.b16 %v2427
    %v2964 = vunpack.c.h.b16 %v2427
    %v2965 = vunpack.c.l.b16 %v2428
    %v2966 = vunpack.c.h.b16 %v2428
    %v2967 = vunpack.c.l.b16 %v2429
    %v2968 = vunpack.c.h.b16 %v2429
    %v2969 = vunpack.c.l.b16 %v2430
    %v2970 = vunpack.c.h.b16 %v2430
    %v2971 = vunpack.c.l.b16 %v2431
    %v2972 = vunpack.c.h.b16 %v2431
    %v2973 = vunpack.c.l.b16 %v2432
    %v2974 = vunpack.c.h.b16 %v2432
    %v2975 = vunpack.c.l.b16 %v2433
    %v2976 = vunpack.c.h.b16 %v2433
    %v2977 = vunpack.c.l.b16 %v2434
    %v2978 = vunpack.c.h.b16 %v2434
    %v2979 = vunpack.c.l.b16 %v2435
    %v2980 = vunpack.c.h.b16 %v2435
    %v2981 = vunpack.c.l.b16 %v2436
    %v2982 = vunpack.c.h.b16 %v2436
    %v2983 = vunpack.c.l.b16 %v2437
    %v2984 = vunpack.c.h.b16 %v2437
    %v2985 = vunpack.c.l.b16 %v2438
    %v2986 = vunpack.c.h.b16 %v2438
    %v2987 = vunpack.c.l.b16 %v2439
    %v2988 = vunpack.c.h.b16 %v2439
    %v2989 = vunpack.c.l.b16 %v2440
    %v2990 = vunpack.c.h.b16 %v2440
    %v2991 = vunpack.c.l.b16 %v2441
    %v2992 = vunpack.c.h.b16 %v2441
    %v2993 = vunpack.c.l.b16 %v2442
    %v2994 = vunpack.c.h.b16 %v2442
    %v2995 = vunpack.c.l.b16 %v2443
    %v2996 = vunpack.c.h.b16 %v2443
    %v2997 = vunpack.c.l.b16 %v2444
    %v2998 = vunpack.c.h.b16 %v2444
    %v2999 = vunpack.c.l.b16 %v2445
    %v3000 = vunpack.c.h.b16 %v2445
    %v3001 = vunpack.c.l.b16 %v2446
    %v3002 = vunpack.c.h.b16 %v2446
    %v3003 = vunpack.c.l.b16 %v2447
    %v3004 = vunpack.c.h.b16 %v2447
    %v3005 = vunpack.c.l.b16 %v2448
    %v3006 = vunpack.c.h.b16 %v2448
    %v3007 = vunpack.c.l.b16 %v2449
    %v3008 = vunpack.c.h.b16 %v2449
    %v3009 = vunpack.c.l.b16 %v2450
    %v3010 = vunpack.c.h.b16 %v2450
    %v3011 = vunpack.c.l.b16 %v2451
    %v3012 = vunpack.c.h.b16 %v2451
    %v3013 = vunpack.c.l.b16 %v2452
    %v3014 = vunpack.c.h.b16 %v2452
    %v3015 = vunpack.c.l.b16 %v2453
    %v3016 = vunpack.c.h.b16 %v2453
    %v3017 = vunpack.c.l.b16 %v2454
    %v3018 = vunpack.c.h.b16 %v2454
    %v3019 = vunpack.c.l.b16 %v2455
    %v3020 = vunpack.c.h.b16 %v2455
    %v3021 = vunpack.c.l.b16 %v2456
    %v3022 = vunpack.c.h.b16 %v2456
    %v3023 = vunpack.c.l.b16 %v2457
    %v3024 = vunpack.c.h.b16 %v2457
    %v3025 = vunpack.c.l.b16 %v2458
    %v3026 = vunpack.c.h.b16 %v2458
    %v3027 = vunpack.c.l.b16 %v2459
    %v3028 = vunpack.c.h.b16 %v2459
    %v3029 = vunpack.c.l.b16 %v2460
    %v3030 = vunpack.c.h.b16 %v2460
    %v3031 = vunpack.c.l.b16 %v2461
    %v3032 = vunpack.c.h.b16 %v2461
    %v3033 = vunpack.c.l.b16 %v2462
    %v3034 = vunpack.c.h.b16 %v2462
    %v3035 = vunpack.c.l.b16 %v2463
    %v3036 = vunpack.c.h.b16 %v2463
    %v3037 = vunpack.c.l.b16 %v2464
    %v3038 = vunpack.c.h.b16 %v2464
    %v3039 = vunpack.c.l.b16 %v2465
    %v3040 = vunpack.c.h.b16 %v2465
    %v3041 = vunpack.c.l.b16 %v2466
    %v3042 = vunpack.c.h.b16 %v2466
    %v3043 = vpack.c.b16 %v2665, %v2659
    %v3044 = vpack.c.b16 %v2666, %v2660
    %v3045 = vpack.c.b16 %v2667, %v2661
    %v3046 = vpack.c.b16 %v2668, %v2662
    %v3047 = vpack.c.b16 %v2669, %v2663
    %v3048 = vpack.c.b16 %v2670, %v2664
    %v3049 = vpack.c.b16 %v2677, %v2671
    %v3050 = vpack.c.b16 %v2678, %v2672
    %v3051 = vpack.c.b16 %v2679, %v2673
    %v3052 = vpack.c.b16 %v2680, %v2674
    %v3053 = vpack.c.b16 %v2681, %v2675
    %v3054 = vpack.c.b16 %v2682, %v2676
    %v3055 = vpack.c.b16 %v2689, %v2683
    %v3056 = vpack.c.b16 %v2690, %v2684
    %v3057 = vpack.c.b16 %v2691, %v2685
    %v3058 = vpack.c.b16 %v2692, %v2686
    %v3059 = vpack.c.b16 %v2693, %v2687
    %v3060 = vpack.c.b16 %v2694, %v2688
    %v3061 = vpack.c.b16 %v2701, %v2695
    %v3062 = vpack.c.b16 %v2702, %v2696
    %v3063 = vpack.c.b16 %v2703, %v2697
    %v3064 = vpack.c.b16 %v2704, %v2698
    %v3065 = vpack.c.b16 %v2705, %v2699
    %v3066 = vpack.c.b16 %v2706, %v2700
    %v3067 = vpack.c.b16 %v2713, %v2707
    %v3068 = vpack.c.b16 %v2714, %v2708
    %v3069 = vpack.c.b16 %v2715, %v2709
    %v3070 = vpack.c.b16 %v2716, %v2710
    %v3071 = vpack.c.b16 %v2717, %v2711
    %v3072 = vpack.c.b16 %v2718, %v2712
    %v3073 = vpack.c.b16 %v2725, %v2719
    %v3074 = vpack.c.b16 %v2726, %v2720
    %v3075 = vpack.c.b16 %v2727, %v2721
    %v3076 = vpack.c.b16 %v2728, %v2722
    %v3077 = vpack.c.b16 %v2729, %v2723
    %v3078 = vpack.c.b16 %v2730, %v2724
    %v3079 = vpack.c.b16 %v2737, %v2731
    %v3080 = vpack.c.b16 %v2738, %v2732
    %v3081 = vpack.c.b16 %v2739, %v2733
    %v3082 = vpack.c.b16 %v2740, %v2734
    %v3083 = vpack.c.b16 %v2741, %v2735
    %v3084 = vpack.c.b16 %v2742, %v2736
    %v3085 = vpack.c.b16 %v2749, %v2743
    %v3086 = vpack.c.b16 %v2750, %v2744
    %v3087 = vpack.c.b16 %v2751, %v2745
    %v3088 = vpack.c.b16 %v2752, %v2746
    %v3089 = vpack.c.b16 %v2753, %v2747
    %v3090 = vpack.c.b16 %v2754, %v2748
    %v3091 = vpack.c.b16 %v2761, %v2755
    %v3092 = vpack.c.b16 %v2762, %v2756
    %v3093 = vpack.c.b16 %v2763, %v2757
    %v3094 = vpack.c.b16 %v2764, %v2758
    %v3095 = vpack.c.b16 %v2765, %v2759
    %v3096 = vpack.c.b16 %v2766, %v2760
    %v3097 = vpack.c.b16 %v2773, %v2767
    %v3098 = vpack.c.b16 %v2774, %v2768
    %v3099 = vpack.c.b16 %v2775, %v2769
    %v3100 = vpack.c.b16 %v2776, %v2770
    %v3101 = vpack.c.b16 %v2777, %v2771
    %v3102 = vpack.c.b16 %v2778, %v2772
    %v3103 = vpack.c.b16 %v2785, %v2779
    %v3104 = vpack.c.b16 %v2786, %v2780
    %v3105 = vpack.c.b16 %v2787, %v2781
    %v3106 = vpack.c.b16 %v2788, %v2782
    %v3107 = vpack.c.b16 %v2789, %v2783
    %v3108 = vpack.c.b16 %v2790, %v2784
    %v3109 = vpack.c.b16 %v2797, %v2791
    %v3110 = vpack.c.b16 %v2798, %v2792
    %v3111 = vpack.c.b16 %v2799, %v2793
    %v3112 = vpack.c.b16 %v2800, %v2794
    %v3113 = vpack.c.b16 %v2801, %v2795
    %v3114 = vpack.c.b16 %v2802, %v2796
    %v3115 = vpack.c.b16 %v2809, %v2803
    %v3116 = vpack.c.b16 %v2810, %v2804
    %v3117 = vpack.c.b16 %v2811, %v2805
    %v3118 = vpack.c.b16 %v2812, %v2806
    %v3119 = vpack.c.b16 %v2813, %v2807
    %v3120 = vpack.c.b16 %v2814, %v2808
    %v3121 = vpack.c.b16 %v2821, %v2815
    %v3122 = vpack.c.b16 %v2822, %v2816
    %v3123 = vpack.c.b16 %v2823, %v2817
    %v3124 = vpack.c.b16 %v2824, %v2818
    %v3125 = vpack.c.b16 %v2825, %v2819
    %v3126 = vpack.c.b16 %v2826, %v2820
    %v3127 = vpack.c.b16 %v2833, %v2827
    %v3128 = vpack.c.b16 %v2834, %v2828
    %v3129 = vpack.c.b16 %v2835, %v2829
    %v3130 = vpack.c.b16 %v2836, %v2830
    %v3131 = vpack.c.b16 %v2837, %v2831
    %v3132 = vpack.c.b16 %v2838, %v2832
    %v3133 = vpack.c.b16 %v2845, %v2839
    %v3134 = vpack.c.b16 %v2846, %v2840
    %v3135 = vpack.c.b16 %v2847, %v2841
    %v3136 = vpack.c.b16 %v2848, %v2842
    %v3137 = vpack.c.b16 %v2849, %v2843
    %v3138 = vpack.c.b16 %v2850, %v2844
    %v3139 = vpack.c.b16 %v2857, %v2851
    %v3140 = vpack.c.b16 %v2858, %v2852
    %v3141 = vpack.c.b16 %v2859, %v2853
    %v3142 = vpack.c.b16 %v2860, %v2854
    %v3143 = vpack.c.b16 %v2861, %v2855
    %v3144 = vpack.c.b16 %v2862, %v2856
    %v3145 = vpack.c.b16 %v2869, %v2863
    %v3146 = vpack.c.b16 %v2870, %v2864
    %v3147 = vpack.c.b16 %v2871, %v2865
    %v3148 = vpack.c.b16 %v2872, %v2866
    %v3149 = vpack.c.b16 %v2873, %v2867
    %v3150 = vpack.c.b16 %v2874, %v2868
    %v3151 = vpack.c.b16 %v2881, %v2875
    %v3152 = vpack.c.b16 %v2882, %v2876
    %v3153 = vpack.c.b16 %v2883, %v2877
    %v3154 = vpack.c.b16 %v2884, %v2878
    %v3155 = vpack.c.b16 %v2885, %v2879
    %v3156 = vpack.c.b16 %v2886, %v2880
    %v3157 = vpack.c.b16 %v2893, %v2887
    %v3158 = vpack.c.b16 %v2894, %v2888
    %v3159 = vpack.c.b16 %v2895, %v2889
    %v3160 = vpack.c.b16 %v2896, %v2890
    %v3161 = vpack.c.b16 %v2897, %v2891
    %v3162 = vpack.c.b16 %v2898, %v2892
    %v3163 = vpack.c.b16 %v2905, %v2899
    %v3164 = vpack.c.b16 %v2906, %v2900
    %v3165 = vpack.c.b16 %v2907, %v2901
    %v3166 = vpack.c.b16 %v2908, %v2902
    %v3167 = vpack.c.b16 %v2909, %v2903
    %v3168 = vpack.c.b16 %v2910, %v2904
    %v3169 = vpack.c.b16 %v2917, %v2911
    %v3170 = vpack.c.b16 %v2918, %v2912
    %v3171 = vpack.c.b16 %v2919, %v2913
    %v3172 = vpack.c.b16 %v2920, %v2914
    %v3173 = vpack.c.b16 %v2921, %v2915
    %v3174 = vpack.c.b16 %v2922, %v2916
    %v3175 = vpack.c.b16 %v2929, %v2923
    %v3176 = vpack.c.b16 %v2930, %v2924
    %v3177 = vpack.c.b16 %v2931, %v2925
    %v3178 = vpack.c.b16 %v2932, %v2926
    %v3179 = vpack.c.b16 %v2933, %v2927
    %v3180 = vpack.c.b16 %v2934, %v2928
    %v3181 = vpack.c.b16 %v2941, %v2935
    %v3182 = vpack.c.b16 %v2942, %v2936
    %v3183 = vpack.c.b16 %v2943, %v2937
    %v3184 = vpack.c.b16 %v2944, %v2938
    %v3185 = vpack.c.b16 %v2945, %v2939
    %v3186 = vpack.c.b16 %v2946, %v2940
    %v3187 = vpack.c.b16 %v2953, %v2947
    %v3188 = vpack.c.b16 %v2954, %v2948
    %v3189 = vpack.c.b16 %v2955, %v2949
    %v3190 = vpack.c.b16 %v2956, %v2950
    %v3191 = vpack.c.b16 %v2957, %v2951
    %v3192 = vpack.c.b16 %v2958, %v2952
    %v3193 = vpack.c.b16 %v2965, %v2959
    %v3194 = vpack.c.b16 %v2966, %v2960
    %v3195 = vpack.c.b16 %v2967, %v2961
    %v3196 = vpack.c.b16 %v2968, %v2962
    %v3197 = vpack.c.b16 %v2969, %v2963
    %v3198 = vpack.c.b16 %v2970, %v2964
    %v3199 = vpack.c.b16 %v2977, %v2971
    %v3200 = vpack.c.b16 %v2978, %v2972
    %v3201 = vpack.c.b16 %v2979, %v2973
    %v3202 = vpack.c.b16 %v2980, %v2974
    %v3203 = vpack.c.b16 %v2981, %v2975
    %v3204 = vpack.c.b16 %v2982, %v2976
    %v3205 = vpack.c.b16 %v2989, %v2983
    %v3206 = vpack.c.b16 %v2990, %v2984
    %v3207 = vpack.c.b16 %v2991, %v2985
    %v3208 = vpack.c.b16 %v2992, %v2986
    %v3209 = vpack.c.b16 %v2993, %v2987
    %v3210 = vpack.c.b16 %v2994, %v2988
    %v3211 = vpack.c.b16 %v3001, %v2995
    %v3212 = vpack.c.b16 %v3002, %v2996
    %v3213 = vpack.c.b16 %v3003, %v2997
    %v3214 = vpack.c.b16 %v3004, %v2998
    %v3215 = vpack.c.b16 %v3005, %v2999
    %v3216 = vpack.c.b16 %v3006, %v3000
    %v3217 = vpack.c.b16 %v3013, %v3007
    %v3218 = vpack.c.b16 %v3014, %v3008
    %v3219 = vpack.c.b16 %v3015, %v3009
    %v3220 = vpack.c.b16 %v3016, %v3010
    %v3221 = vpack.c.b16 %v3017, %v3011
    %v3222 = vpack.c.b16 %v3018, %v3012
    %v3223 = vpack.c.b16 %v3025, %v3019
    %v3224 = vpack.c.b16 %v3026, %v3020
    %v3225 = vpack.c.b16 %v3027, %v3021
    %v3226 = vpack.c.b16 %v3028, %v3022
    %v3227 = vpack.c.b16 %v3029, %v3023
    %v3228 = vpack.c.b16 %v3030, %v3024
    %v3229 = vpack.c.b16 %v3037, %v3031
    %v3230 = vpack.c.b16 %v3038, %v3032
    %v3231 = vpack.c.b16 %v3039, %v3033
    %v3232 = vpack.c.b16 %v3040, %v3034
    %v3233 = vpack.c.b16 %v3041, %v3035
    %v3234 = vpack.c.b16 %v3042, %v3036
    %3427 = vmatprep.subr.bf16.mxu0 %v3044
    %3428 = vmatpush1.bf16.msra.mxu0 %v3043
    %3429 = vmatprep.subr.bf16.mxu0 %v3050
    %3430 = vmatpush1.bf16.msra.mxu0 %v3049
    %3431 = vmatprep.subr.bf16.mxu0 %v3056
    %3432 = vmatpush1.bf16.msra.mxu0 %v3055
    %3433 = vmatprep.subr.bf16.mxu0 %v3062
    %3434 = vmatpush1.bf16.msra.mxu0 %v3061
    %3435 = vmatprep.subr.bf16.mxu0 %v3068
    %3436 = vmatpush1.bf16.msra.mxu0 %v3067
    %3437 = vmatprep.subr.bf16.mxu0 %v3074
    %3438 = vmatpush1.bf16.msra.mxu0 %v3073
    %3439 = vmatprep.subr.bf16.mxu0 %v3080
    %3440 = vmatpush1.bf16.msra.mxu0 %v3079
    %3441 = vmatprep.subr.bf16.mxu0 %v3086
    %3442 = vmatpush1.bf16.msra.mxu0 %v3085
    %3443 = vmatprep.subr.bf16.mxu0 %v3092
    %3444 = vmatpush1.bf16.msra.mxu0 %v3091
    %3445 = vmatprep.subr.bf16.mxu0 %v3098
    %3446 = vmatpush1.bf16.msra.mxu0 %v3097
    %3447 = vmatprep.subr.bf16.mxu0 %v3104
    %3448 = vmatpush1.bf16.msra.mxu0 %v3103
    %3449 = vmatprep.subr.bf16.mxu0 %v3110
    %3450 = vmatpush1.bf16.msra.mxu0 %v3109
    %3451 = vmatprep.subr.bf16.mxu0 %v3116
    %3452 = vmatpush1.bf16.msra.mxu0 %v3115
    %3453 = vmatprep.subr.bf16.mxu0 %v3122
    %3454 = vmatpush1.bf16.msra.mxu0 %v3121
    %3455 = vmatprep.subr.bf16.mxu0 %v3128
    %3456 = vmatpush1.bf16.msra.mxu0 %v3127
    %3457 = vmatprep.subr.bf16.mxu0 %v3134
    %3458 = vmatpush1.bf16.msra.mxu0 %v3133
    %3459 = vmatprep.mubr.bf16.mxu0 %v2268
    %3460 = vmatmul.mubr.bf16.gmra.mrb[0].mxu0 %v2267
    %v3461 = vpop.f32.mrb[0].mxu0
    %v3462 = vadd.f32 0.0, %v3461
    %v3463 = vpop.f32.mrb[0].mxu0
    %v3464 = vadd.f32 0.0, %v3463
    %v3465 = vpop.f32.mrb[0].mxu0
    %v3466 = vadd.f32 0.0, %v3465
    %v3467 = vpop.f32.mrb[0].mxu0
    %v3468 = vadd.f32 0.0, %v3467
    %3469 = vmatprep.mubr.bf16.mxu0 %v2272
    %3470 = vmatmul.mubr.bf16.gmra.mrb[0].mxu0 %v2271
    %v3471 = vpop.f32.mrb[0].mxu0
    %v3472 = vadd.f32 0.0, %v3471
    %v3473 = vpop.f32.mrb[0].mxu0
    %v3474 = vadd.f32 0.0, %v3473
    %v3475 = vpop.f32.mrb[0].mxu0
    %v3476 = vadd.f32 0.0, %v3475
    %v3477 = vpop.f32.mrb[0].mxu0
    %v3478 = vadd.f32 0.0, %v3477
    %3479 = vdwg.mxu0
    %3480 = vmatprep.subr.bf16.mxu0 %v3140
    %3481 = vmatpush1.bf16.msra.mxu0 %v3139
    %3482 = vmatprep.subr.bf16.mxu0 %v3146
    %3483 = vmatpush1.bf16.msra.mxu0 %v3145
    %3484 = vmatprep.subr.bf16.mxu0 %v3152
    %3485 = vmatpush1.bf16.msra.mxu0 %v3151
    %3486 = vmatprep.subr.bf16.mxu0 %v3158
    %3487 = vmatpush1.bf16.msra.mxu0 %v3157
    %3488 = vmatprep.subr.bf16.mxu0 %v3164
    %3489 = vmatpush1.bf16.msra.mxu0 %v3163
    %3490 = vmatprep.subr.bf16.mxu0 %v3170
    %3491 = vmatpush1.bf16.msra.mxu0 %v3169
    %3492 = vmatprep.subr.bf16.mxu0 %v3176
    %3493 = vmatpush1.bf16.msra.mxu0 %v3175
    %3494 = vmatprep.subr.bf16.mxu0 %v3182
    %3495 = vmatpush1.bf16.msra.mxu0 %v3181
    %3496 = vmatprep.subr.bf16.mxu0 %v3188
    %3497 = vmatpush1.bf16.msra.mxu0 %v3187
    %3498 = vmatprep.subr.bf16.mxu0 %v3194
    %3499 = vmatpush1.bf16.msra.mxu0 %v3193
    %3500 = vmatprep.subr.bf16.mxu0 %v3200
    %3501 = vmatpush1.bf16.msra.mxu0 %v3199
    %3502 = vmatprep.subr.bf16.mxu0 %v3206
    %3503 = vmatpush1.bf16.msra.mxu0 %v3205
    %3504 = vmatprep.subr.bf16.mxu0 %v3212
    %3505 = vmatpush1.bf16.msra.mxu0 %v3211
    %3506 = vmatprep.subr.bf16.mxu0 %v3218
    %3507 = vmatpush1.bf16.msra.mxu0 %v3217
    %3508 = vmatprep.subr.bf16.mxu0 %v3224
    %3509 = vmatpush1.bf16.msra.mxu0 %v3223
    %3510 = vmatprep.subr.bf16.mxu0 %v3230
    %3511 = vmatpush1.bf16.msra.mxu0 %v3229
    %3512 = vmatprep.mubr.bf16.mxu0 %v2270
    %3513 = vmatmul.mubr.bf16.gmra.mrb[0].mxu0 %v2269
    %v3514 = vpop.f32.mrb[0].mxu0
    %v3515 = vadd.f32 %v3462, %v3514
    %v3516 = vpop.f32.mrb[0].mxu0
    %v3517 = vadd.f32 %v3464, %v3516
    %v3518 = vpop.f32.mrb[0].mxu0
    %v3519 = vadd.f32 %v3466, %v3518
    %v3520 = vpop.f32.mrb[0].mxu0
    %v3521 = vadd.f32 %v3468, %v3520
    %3522 = vmatprep.mubr.bf16.mxu0 %v2274
    %3523 = vmatmul.mubr.bf16.gmra.mrb[0].mxu0 %v2273
    %v3524 = vpop.f32.mrb[0].mxu0
    %v3525 = vadd.f32 %v3472, %v3524
    %v3526 = vpop.f32.mrb[0].mxu0
    %v3527 = vadd.f32 %v3474, %v3526
    %v3528 = vpop.f32.mrb[0].mxu0
    %v3529 = vadd.f32 %v3476, %v3528
    %v3530 = vpop.f32.mrb[0].mxu0
    %v3531 = vadd.f32 %v3478, %v3530
    %3532 = vdwg.mxu0
    %3533 = vmatprep.subr.bf16.mxu0 %v3046
    %3534 = vmatpush1.bf16.msra.mxu0 %v3045
    %3535 = vmatprep.subr.bf16.mxu0 %v3052
    %3536 = vmatpush1.bf16.msra.mxu0 %v3051
    %3537 = vmatprep.subr.bf16.mxu0 %v3058
    %3538 = vmatpush1.bf16.msra.mxu0 %v3057
    %3539 = vmatprep.subr.bf16.mxu0 %v3064
    %3540 = vmatpush1.bf16.msra.mxu0 %v3063
    %3541 = vmatprep.subr.bf16.mxu0 %v3070
    %3542 = vmatpush1.bf16.msra.mxu0 %v3069
    %3543 = vmatprep.subr.bf16.mxu0 %v3076
    %3544 = vmatpush1.bf16.msra.mxu0 %v3075
    %3545 = vmatprep.subr.bf16.mxu0 %v3082
    %3546 = vmatpush1.bf16.msra.mxu0 %v3081
    %3547 = vmatprep.subr.bf16.mxu0 %v3088
    %3548 = vmatpush1.bf16.msra.mxu0 %v3087
    %3549 = vmatprep.subr.bf16.mxu0 %v3094
    %3550 = vmatpush1.bf16.msra.mxu0 %v3093
    %3551 = vmatprep.subr.bf16.mxu0 %v3100
    %3552 = vmatpush1.bf16.msra.mxu0 %v3099
    %3553 = vmatprep.subr.bf16.mxu0 %v3106
    %3554 = vmatpush1.bf16.msra.mxu0 %v3105
    %3555 = vmatprep.subr.bf16.mxu0 %v3112
    %3556 = vmatpush1.bf16.msra.mxu0 %v3111
    %3557 = vmatprep.subr.bf16.mxu0 %v3118
    %3558 = vmatpush1.bf16.msra.mxu0 %v3117
    %3559 = vmatprep.subr.bf16.mxu0 %v3124
    %3560 = vmatpush1.bf16.msra.mxu0 %v3123
    %3561 = vmatprep.subr.bf16.mxu0 %v3130
    %3562 = vmatpush1.bf16.msra.mxu0 %v3129
    %3563 = vmatprep.subr.bf16.mxu0 %v3136
    %3564 = vmatpush1.bf16.msra.mxu0 %v3135
    %3565 = vmatprep.mubr.bf16.mxu0 %v2268
    %3566 = vmatmul.mubr.bf16.gmra.mrb[0].mxu0 %v2267
    %v3567 = vpop.f32.mrb[0].mxu0
    %v3568 = vadd.f32 0.0, %v3567
    %v3569 = vpop.f32.mrb[0].mxu0
    %v3570 = vadd.f32 0.0, %v3569
    %v3571 = vpop.f32.mrb[0].mxu0
    %v3572 = vadd.f32 0.0, %v3571
    %v3573 = vpop.f32.mrb[0].mxu0
    %v3574 = vadd.f32 0.0, %v3573
    %3575 = vmatprep.mubr.bf16.mxu0 %v2272
    %3576 = vmatmul.mubr.bf16.gmra.mrb[0].mxu0 %v2271
    %v3577 = vpop.f32.mrb[0].mxu0
    %v3578 = vadd.f32 0.0, %v3577
    %v3579 = vpop.f32.mrb[0].mxu0
    %v3580 = vadd.f32 0.0, %v3579
    %v3581 = vpop.f32.mrb[0].mxu0
    %v3582 = vadd.f32 0.0, %v3581
    %v3583 = vpop.f32.mrb[0].mxu0
    %v3584 = vadd.f32 0.0, %v3583
    %3585 = vdwg.mxu0
    %3586 = vmatprep.subr.bf16.mxu0 %v3142
    %3587 = vmatpush1.bf16.msra.mxu0 %v3141
    %3588 = vmatprep.subr.bf16.mxu0 %v3148
    %3589 = vmatpush1.bf16.msra.mxu0 %v3147
    %3590 = vmatprep.subr.bf16.mxu0 %v3154
    %3591 = vmatpush1.bf16.msra.mxu0 %v3153
    %3592 = vmatprep.subr.bf16.mxu0 %v3160
    %3593 = vmatpush1.bf16.msra.mxu0 %v3159
    %3594 = vmatprep.subr.bf16.mxu0 %v3166
    %3595 = vmatpush1.bf16.msra.mxu0 %v3165
    %3596 = vmatprep.subr.bf16.mxu0 %v3172
    %3597 = vmatpush1.bf16.msra.mxu0 %v3171
    %3598 = vmatprep.subr.bf16.mxu0 %v3178
    %3599 = vmatpush1.bf16.msra.mxu0 %v3177
    %3600 = vmatprep.subr.bf16.mxu0 %v3184
    %3601 = vmatpush1.bf16.msra.mxu0 %v3183
    %3602 = vmatprep.subr.bf16.mxu0 %v3190
    %3603 = vmatpush1.bf16.msra.mxu0 %v3189
    %3604 = vmatprep.subr.bf16.mxu0 %v3196
    %3605 = vmatpush1.bf16.msra.mxu0 %v3195
    %3606 = vmatprep.subr.bf16.mxu0 %v3202
    %3607 = vmatpush1.bf16.msra.mxu0 %v3201
    %3608 = vmatprep.subr.bf16.mxu0 %v3208
    %3609 = vmatpush1.bf16.msra.mxu0 %v3207
    %3610 = vmatprep.subr.bf16.mxu0 %v3214
    %3611 = vmatpush1.bf16.msra.mxu0 %v3213
    %3612 = vmatprep.subr.bf16.mxu0 %v3220
    %3613 = vmatpush1.bf16.msra.mxu0 %v3219
    %3614 = vmatprep.subr.bf16.mxu0 %v3226
    %3615 = vmatpush1.bf16.msra.mxu0 %v3225
    %3616 = vmatprep.subr.bf16.mxu0 %v3232
    %3617 = vmatpush1.bf16.msra.mxu0 %v3231
    %3618 = vmatprep.mubr.bf16.mxu0 %v2270
    %3619 = vmatmul.mubr.bf16.gmra.mrb[0].mxu0 %v2269
    %v3620 = vpop.f32.mrb[0].mxu0
    %v3621 = vadd.f32 %v3568, %v3620
    %v3622 = vpop.f32.mrb[0].mxu0
    %v3623 = vadd.f32 %v3570, %v3622
    %v3624 = vpop.f32.mrb[0].mxu0
    %v3625 = vadd.f32 %v3572, %v3624
    %v3626 = vpop.f32.mrb[0].mxu0
    %v3627 = vadd.f32 %v3574, %v3626
    %3628 = vmatprep.mubr.bf16.mxu0 %v2274
    %3629 = vmatmul.mubr.bf16.gmra.mrb[0].mxu0 %v2273
    %v3630 = vpop.f32.mrb[0].mxu0
    %v3631 = vadd.f32 %v3578, %v3630
    %v3632 = vpop.f32.mrb[0].mxu0
    %v3633 = vadd.f32 %v3580, %v3632
    %v3634 = vpop.f32.mrb[0].mxu0
    %v3635 = vadd.f32 %v3582, %v3634
    %v3636 = vpop.f32.mrb[0].mxu0
    %v3637 = vadd.f32 %v3584, %v3636
    %3638 = vdwg.mxu0
    %3639 = vmatprep.subr.bf16.mxu0 %v3048
    %3640 = vmatpush1.bf16.msra.mxu0 %v3047
    %3641 = vmatprep.subr.bf16.mxu0 %v3054
    %3642 = vmatpush1.bf16.msra.mxu0 %v3053
    %3643 = vmatprep.subr.bf16.mxu0 %v3060
    %3644 = vmatpush1.bf16.msra.mxu0 %v3059
    %3645 = vmatprep.subr.bf16.mxu0 %v3066
    %3646 = vmatpush1.bf16.msra.mxu0 %v3065
    %3647 = vmatprep.subr.bf16.mxu0 %v3072
    %3648 = vmatpush1.bf16.msra.mxu0 %v3071
    %3649 = vmatprep.subr.bf16.mxu0 %v3078
    %3650 = vmatpush1.bf16.msra.mxu0 %v3077
    %3651 = vmatprep.subr.bf16.mxu0 %v3084
    %3652 = vmatpush1.bf16.msra.mxu0 %v3083
    %3653 = vmatprep.subr.bf16.mxu0 %v3090
    %3654 = vmatpush1.bf16.msra.mxu0 %v3089
    %3655 = vmatprep.subr.bf16.mxu0 %v3096
    %3656 = vmatpush1.bf16.msra.mxu0 %v3095
    %3657 = vmatprep.subr.bf16.mxu0 %v3102
    %3658 = vmatpush1.bf16.msra.mxu0 %v3101
    %3659 = vmatprep.subr.bf16.mxu0 %v3108
    %3660 = vmatpush1.bf16.msra.mxu0 %v3107
    %3661 = vmatprep.subr.bf16.mxu0 %v3114
    %3662 = vmatpush1.bf16.msra.mxu0 %v3113
    %3663 = vmatprep.subr.bf16.mxu0 %v3120
    %3664 = vmatpush1.bf16.msra.mxu0 %v3119
    %3665 = vmatprep.subr.bf16.mxu0 %v3126
    %3666 = vmatpush1.bf16.msra.mxu0 %v3125
    %3667 = vmatprep.subr.bf16.mxu0 %v3132
    %3668 = vmatpush1.bf16.msra.mxu0 %v3131
    %3669 = vmatprep.subr.bf16.mxu0 %v3138
    %3670 = vmatpush1.bf16.msra.mxu0 %v3137
    %3671 = vmatprep.mubr.bf16.mxu0 %v2268
    %3672 = vmatmul.mubr.bf16.gmra.mrb[0].mxu0 %v2267
    %v3673 = vpop.f32.mrb[0].mxu0
    %v3674 = vadd.f32 0.0, %v3673
    %v3675 = vpop.f32.mrb[0].mxu0
    %v3676 = vadd.f32 0.0, %v3675
    %v3677 = vpop.f32.mrb[0].mxu0
    %v3678 = vadd.f32 0.0, %v3677
    %v3679 = vpop.f32.mrb[0].mxu0
    %v3680 = vadd.f32 0.0, %v3679
    %3681 = vmatprep.mubr.bf16.mxu0 %v2272
    %3682 = vmatmul.mubr.bf16.gmra.mrb[0].mxu0 %v2271
    %v3683 = vpop.f32.mrb[0].mxu0
    %v3684 = vadd.f32 0.0, %v3683
    %v3685 = vpop.f32.mrb[0].mxu0
    %v3686 = vadd.f32 0.0, %v3685
    %v3687 = vpop.f32.mrb[0].mxu0
    %v3688 = vadd.f32 0.0, %v3687
    %v3689 = vpop.f32.mrb[0].mxu0
    %v3690 = vadd.f32 0.0, %v3689
    %3691 = vdwg.mxu0
    %3692 = vmatprep.subr.bf16.mxu0 %v3144
    %3693 = vmatpush1.bf16.msra.mxu0 %v3143
    %3694 = vmatprep.subr.bf16.mxu0 %v3150
    %3695 = vmatpush1.bf16.msra.mxu0 %v3149
    %3696 = vmatprep.subr.bf16.mxu0 %v3156
    %3697 = vmatpush1.bf16.msra.mxu0 %v3155
    %3698 = vmatprep.subr.bf16.mxu0 %v3162
    %3699 = vmatpush1.bf16.msra.mxu0 %v3161
    %3700 = vmatprep.subr.bf16.mxu0 %v3168
    %3701 = vmatpush1.bf16.msra.mxu0 %v3167
    %3702 = vmatprep.subr.bf16.mxu0 %v3174
    %3703 = vmatpush1.bf16.msra.mxu0 %v3173
    %3704 = vmatprep.subr.bf16.mxu0 %v3180
    %3705 = vmatpush1.bf16.msra.mxu0 %v3179
    %3706 = vmatprep.subr.bf16.mxu0 %v3186
    %3707 = vmatpush1.bf16.msra.mxu0 %v3185
    %3708 = vmatprep.subr.bf16.mxu0 %v3192
    %3709 = vmatpush1.bf16.msra.mxu0 %v3191
    %3710 = vmatprep.subr.bf16.mxu0 %v3198
    %3711 = vmatpush1.bf16.msra.mxu0 %v3197
    %3712 = vmatprep.subr.bf16.mxu0 %v3204
    %3713 = vmatpush1.bf16.msra.mxu0 %v3203
    %3714 = vmatprep.subr.bf16.mxu0 %v3210
    %3715 = vmatpush1.bf16.msra.mxu0 %v3209
    %3716 = vmatprep.subr.bf16.mxu0 %v3216
    %3717 = vmatpush1.bf16.msra.mxu0 %v3215
    %3718 = vmatprep.subr.bf16.mxu0 %v3222
    %3719 = vmatpush1.bf16.msra.mxu0 %v3221
    %3720 = vmatprep.subr.bf16.mxu0 %v3228
    %3721 = vmatpush1.bf16.msra.mxu0 %v3227
    %3722 = vmatprep.subr.bf16.mxu0 %v3234
    %3723 = vmatpush1.bf16.msra.mxu0 %v3233
    %3724 = vmatprep.mubr.bf16.mxu0 %v2270
    %3725 = vmatmul.mubr.bf16.gmra.mrb[0].mxu0 %v2269
    %v3726 = vpop.f32.mrb[0].mxu0
    %v3727 = vadd.f32 %v3674, %v3726
    %v3728 = vpop.f32.mrb[0].mxu0
    %v3729 = vadd.f32 %v3676, %v3728
    %v3730 = vpop.f32.mrb[0].mxu0
    %v3731 = vadd.f32 %v3678, %v3730
    %v3732 = vpop.f32.mrb[0].mxu0
    %v3733 = vadd.f32 %v3680, %v3732
    %3734 = vmatprep.mubr.bf16.mxu0 %v2274
    %3735 = vmatmul.mubr.bf16.gmra.mrb[0].mxu0 %v2273
    %v3736 = vpop.f32.mrb[0].mxu0
    %v3737 = vadd.f32 %v3684, %v3736
    %v3738 = vpop.f32.mrb[0].mxu0
    %v3739 = vadd.f32 %v3686, %v3738
    %v3740 = vpop.f32.mrb[0].mxu0
    %v3741 = vadd.f32 %v3688, %v3740
    %v3742 = vpop.f32.mrb[0].mxu0
    %v3743 = vadd.f32 %v3690, %v3742
    %3744 = vdwg.mxu0
    %v3745 = vpack.c.bf16 %v3519, %v3515
    %v3746 = vpack.c.bf16 %v3521, %v3517
    %v3747 = vpack.c.bf16 %v3625, %v3621
    %v3748 = vpack.c.bf16 %v3529, %v3525
    %v3749 = vpack.c.bf16 %v3531, %v3527
    %v3750 = vpack.c.bf16 %v3635, %v3631
    %v3751 = vpack.c.bf16 %v3627, %v3623
    %v3752 = vpack.c.bf16 %v3731, %v3727
    %v3753 = vpack.c.bf16 %v3733, %v3729
    %v3754 = vpack.c.bf16 %v3637, %v3633
    %v3755 = vpack.c.bf16 %v3741, %v3737
    %v3756 = vpack.c.bf16 %v3743, %v3739
    %v3763 = vunpack.c.l.b16 %v3745
    %v3764 = vunpack.c.l.b16 %v3746
    %v3765 = vunpack.c.l.b16 %v3747
    %v3766 = vunpack.c.h.b16 %v3745
    %v3767 = vunpack.c.h.b16 %v3746
    %v3768 = vunpack.c.h.b16 %v3747
    %v3769 = vunpack.c.l.b16 %v3748
    %v3770 = vunpack.c.l.b16 %v3749
    %v3771 = vunpack.c.l.b16 %v3750
    %v3772 = vunpack.c.h.b16 %v3748
    %v3773 = vunpack.c.h.b16 %v3749
    %v3774 = vunpack.c.h.b16 %v3750
    %v3775 = vpack.c.b16 %v3764, %v3763
    %v3776 = vpack.c.b16 %v3765, %v3765
    %v3777 = vpack.c.b16 %v3767, %v3766
    %v3778 = vpack.c.b16 %v3768, %v3768
    %v3779 = vpack.c.b16 %v3770, %v3769
    %v3780 = vpack.c.b16 %v3771, %v3771
    %v3781 = vpack.c.b16 %v3773, %v3772
    %v3782 = vpack.c.b16 %v3774, %v3774
    %3791 = vst [vmem:[%s20] sm:$0xff] %v3775
    %3792 = vst [vmem:[%s20 + $0x8] sm:$0xf] %v3776
    %3793 = vst [vmem:[%s20 + $0xc] sm:$0xff] %v3777
    %3794 = vst [vmem:[%s20 + $0x14] sm:$0xf] %v3778
    %3795 = vst [vmem:[%s20 + $0x18] sm:$0xff] %v3779
    %3796 = vst [vmem:[%s20 + $0x20] sm:$0xf] %v3780
    %3797 = vst [vmem:[%s20 + $0x24] sm:$0xff] %v3781
    %3798 = vst [vmem:[%s20 + $0x2c] sm:$0xf] %v3782
    %v3805 = vunpack.c.l.b16 %v3751
    %v3806 = vunpack.c.l.b16 %v3752
    %v3807 = vunpack.c.l.b16 %v3753
    %v3808 = vunpack.c.h.b16 %v3751
    %v3809 = vunpack.c.h.b16 %v3752
    %v3810 = vunpack.c.h.b16 %v3753
    %v3811 = vunpack.c.l.b16 %v3754
    %v3812 = vunpack.c.l.b16 %v3755
    %v3813 = vunpack.c.l.b16 %v3756
    %v3814 = vunpack.c.h.b16 %v3754
    %v3815 = vunpack.c.h.b16 %v3755
    %v3816 = vunpack.c.h.b16 %v3756
    %v3817 = vpack.c.b16 %v3806, %v3805
    %v3818 = vpack.c.b16 %v3807, %v3807
    %v3819 = vpack.c.b16 %v3809, %v3808
    %v3820 = vpack.c.b16 %v3810, %v3810
    %v3821 = vpack.c.b16 %v3812, %v3811
    %v3822 = vpack.c.b16 %v3813, %v3813
    %v3823 = vpack.c.b16 %v3815, %v3814
    %v3824 = vpack.c.b16 %v3816, %v3816
    %3833 = vst [vmem:[%s21] sm:$0xff] %v3817
    %3834 = vst [vmem:[%s21 + $0x8] sm:$0xf] %v3818
    %3835 = vst [vmem:[%s21 + $0xc] sm:$0xff] %v3819
    %3836 = vst [vmem:[%s21 + $0x14] sm:$0xf] %v3820
    %3837 = vst [vmem:[%s21 + $0x18] sm:$0xff] %v3821
    %3838 = vst [vmem:[%s21 + $0x20] sm:$0xf] %v3822
    %3839 = vst [vmem:[%s21 + $0x24] sm:$0xff] %v3823
    %3840 = vst [vmem:[%s21 + $0x2c] sm:$0xf] %v3824
    %v3841 = vld [vmem:[%s1] sm:$0xff]
    %v3842 = vld [vmem:[%s1 + $0x8] sm:$0xff]
    %v3843 = vmul.f32 %v1231, 0.088388346
    %v3844 = vmul.f32 %v1233, 0.088388346
    %v3845 = vmul.f32 %v1284, 0.088388346
    %v3846 = vmul.f32 %v1235, 0.088388346
    %v3847 = vmul.f32 %v1237, 0.088388346
    %v3848 = vmul.f32 %v1287, 0.088388346
    %v3849 = vmul.f32 %v1241, 0.088388346
    %v3850 = vmul.f32 %v1243, 0.088388346
    %v3851 = vmul.f32 %v1292, 0.088388346
    %v3852 = vmul.f32 %v1245, 0.088388346
    %v3853 = vmul.f32 %v1247, 0.088388346
    %v3854 = vmul.f32 %v1295, 0.088388346
    %v3855 = vpack.c.bf16 %v3846, %v3843
    %v3856 = vpack.c.bf16 %v3847, %v3844
    %v3857 = vpack.c.bf16 %v3848, %v3845
    %v3858 = vpack.c.bf16 %v3852, %v3849
    %v3859 = vpack.c.bf16 %v3853, %v3850
    %v3860 = vpack.c.bf16 %v3854, %v3851
    %v3863 = vpack.i.b16 %v3856, %v3855
    %v3865 = vshrl.u32 %v3855, 16
    %v3866 = vshrl.u32 %v3856, 16
    %v3867 = vpack.i.b16 %v3866, %v3865
    %v3871 = vpack.i.b16 0, %v3857
    %v3873 = vshrl.u32 %v3857, 16
    %v3874 = vshrl.u32 0, 16
    %v3875 = vpack.i.b16 %v3874, %v3873
    %v3877 = vpack.i.b16 0, 0
    %v3879 = vpack.i.b16 %v3874, %v3874
    %v3881 = vcombine.high %v3863, %v3877
    %v3883 = vunpack.c.l.s4 1983009808
    %v3884 = vunpack.c.0.s8 %v3883
    %v3885 = vlaneseq
    %v3886 = vshrl.u32 %v3885, 7
    %v3887 = vsub.s32 %v3884, %v3886
    %v3888 = vrot.slane %v3863, %v3887
    %v3890 = vunpack.c.l.s4 1983009808
    %v3891 = vunpack.c.0.s8 %v3890
    %v3892 = vlaneseq
    %v3893 = vshrl.u32 %v3892, 7
    %v3894 = vsub.s32 %v3891, %v3893
    %v3895 = vrot.slane %v3881, %v3894
    %v3896 = vcombine.high %v3871, %v3877
    %v3898 = vunpack.c.l.s4 1983009808
    %v3899 = vunpack.c.0.s8 %v3898
    %v3900 = vlaneseq
    %v3901 = vshrl.u32 %v3900, 7
    %v3902 = vsub.s32 %v3899, %v3901
    %v3903 = vrot.slane %v3871, %v3902
    %v3905 = vunpack.c.l.s4 1983009808
    %v3906 = vunpack.c.0.s8 %v3905
    %v3907 = vlaneseq
    %v3908 = vshrl.u32 %v3907, 7
    %v3909 = vsub.s32 %v3906, %v3908
    %v3910 = vrot.slane %v3896, %v3909
    %v3911 = vcombine.low %v3888, %v3903
    %v3912 = vcombine.high %v3888, %v3903
    %v3914 = vunpack.c.l.s4 1934713408
    %v3915 = vunpack.c.0.s8 %v3914
    %v3916 = vlaneseq
    %v3917 = vshrl.u32 %v3916, 7
    %v3918 = vsub.s32 %v3915, %v3917
    %v3919 = vrot.slane %v3911, %v3918
    %v3921 = vunpack.c.l.s4 1934713408
    %v3922 = vunpack.c.0.s8 %v3921
    %v3923 = vlaneseq
    %v3924 = vshrl.u32 %v3923, 7
    %v3925 = vsub.s32 %v3922, %v3924
    %v3926 = vrot.slane %v3912, %v3925
    %v3927 = vcombine.low %v3895, %v3910
    %v3928 = vcombine.high %v3895, %v3910
    %v3930 = vunpack.c.l.s4 1934713408
    %v3931 = vunpack.c.0.s8 %v3930
    %v3932 = vlaneseq
    %v3933 = vshrl.u32 %v3932, 7
    %v3934 = vsub.s32 %v3931, %v3933
    %v3935 = vrot.slane %v3927, %v3934
    %v3937 = vunpack.c.l.s4 1934713408
    %v3938 = vunpack.c.0.s8 %v3937
    %v3939 = vlaneseq
    %v3940 = vshrl.u32 %v3939, 7
    %v3941 = vsub.s32 %v3938, %v3940
    %v3942 = vrot.slane %v3928, %v3941
    %v3943 = vcombine.high %v3919, 0
    %v3944 = vcombine.high %v3926, 0
    %v3945 = vcombine.high %v3935, 0
    %v3946 = vcombine.high %v3942, 0
    %v3947 = vcombine.high %v3867, %v3879
    %v3949 = vunpack.c.l.s4 1983009808
    %v3950 = vunpack.c.0.s8 %v3949
    %v3951 = vlaneseq
    %v3952 = vshrl.u32 %v3951, 7
    %v3953 = vsub.s32 %v3950, %v3952
    %v3954 = vrot.slane %v3867, %v3953
    %v3956 = vunpack.c.l.s4 1983009808
    %v3957 = vunpack.c.0.s8 %v3956
    %v3958 = vlaneseq
    %v3959 = vshrl.u32 %v3958, 7
    %v3960 = vsub.s32 %v3957, %v3959
    %v3961 = vrot.slane %v3947, %v3960
    %v3962 = vcombine.high %v3875, %v3879
    %v3964 = vunpack.c.l.s4 1983009808
    %v3965 = vunpack.c.0.s8 %v3964
    %v3966 = vlaneseq
    %v3967 = vshrl.u32 %v3966, 7
    %v3968 = vsub.s32 %v3965, %v3967
    %v3969 = vrot.slane %v3875, %v3968
    %v3971 = vunpack.c.l.s4 1983009808
    %v3972 = vunpack.c.0.s8 %v3971
    %v3973 = vlaneseq
    %v3974 = vshrl.u32 %v3973, 7
    %v3975 = vsub.s32 %v3972, %v3974
    %v3976 = vrot.slane %v3962, %v3975
    %v3977 = vcombine.low %v3954, %v3969
    %v3978 = vcombine.high %v3954, %v3969
    %v3980 = vunpack.c.l.s4 1934713408
    %v3981 = vunpack.c.0.s8 %v3980
    %v3982 = vlaneseq
    %v3983 = vshrl.u32 %v3982, 7
    %v3984 = vsub.s32 %v3981, %v3983
    %v3985 = vrot.slane %v3977, %v3984
    %v3987 = vunpack.c.l.s4 1934713408
    %v3988 = vunpack.c.0.s8 %v3987
    %v3989 = vlaneseq
    %v3990 = vshrl.u32 %v3989, 7
    %v3991 = vsub.s32 %v3988, %v3990
    %v3992 = vrot.slane %v3978, %v3991
    %v3993 = vcombine.low %v3961, %v3976
    %v3994 = vcombine.high %v3961, %v3976
    %v3996 = vunpack.c.l.s4 1934713408
    %v3997 = vunpack.c.0.s8 %v3996
    %v3998 = vlaneseq
    %v3999 = vshrl.u32 %v3998, 7
    %v4000 = vsub.s32 %v3997, %v3999
    %v4001 = vrot.slane %v3993, %v4000
    %v4003 = vunpack.c.l.s4 1934713408
    %v4004 = vunpack.c.0.s8 %v4003
    %v4005 = vlaneseq
    %v4006 = vshrl.u32 %v4005, 7
    %v4007 = vsub.s32 %v4004, %v4006
    %v4008 = vrot.slane %v3994, %v4007
    %v4009 = vcombine.high %v3985, 0
    %v4010 = vcombine.high %v3992, 0
    %v4011 = vcombine.high %v4001, 0
    %v4012 = vcombine.high %v4008, 0
    %v4013 = vcombine.low %v3919, %v3926
    %v4015 = vunpack.c.l.s4 1983009808
    %v4016 = vunpack.c.0.s8 %v4015
    %v4017 = vlaneseq
    %v4018 = vshrl.u32 %v4017, 7
    %v4019 = vsub.s32 %v4016, %v4018
    %v4020 = vrot.slane %v4013, %v4019
    %v4021 = vcombine.low %v3943, %v3944
    %v4023 = vunpack.c.l.s4 1983009808
    %v4024 = vunpack.c.0.s8 %v4023
    %v4025 = vlaneseq
    %v4026 = vshrl.u32 %v4025, 7
    %v4027 = vsub.s32 %v4024, %v4026
    %v4028 = vrot.slane %v4021, %v4027
    %v4029 = vcombine.low %v3935, %v3942
    %v4031 = vunpack.c.l.s4 1983009808
    %v4032 = vunpack.c.0.s8 %v4031
    %v4033 = vlaneseq
    %v4034 = vshrl.u32 %v4033, 7
    %v4035 = vsub.s32 %v4032, %v4034
    %v4036 = vrot.slane %v4029, %v4035
    %v4037 = vcombine.low %v3945, %v3946
    %v4039 = vunpack.c.l.s4 1983009808
    %v4040 = vunpack.c.0.s8 %v4039
    %v4041 = vlaneseq
    %v4042 = vshrl.u32 %v4041, 7
    %v4043 = vsub.s32 %v4040, %v4042
    %v4044 = vrot.slane %v4037, %v4043
    %v4045 = vcombine.low %v4020, %v4028
    %v4047 = vunpack.c.l.s4 1934713408
    %v4048 = vunpack.c.0.s8 %v4047
    %v4049 = vlaneseq
    %v4050 = vshrl.u32 %v4049, 7
    %v4051 = vsub.s32 %v4048, %v4050
    %v4052 = vrot.slane %v4045, %v4051
    %v4053 = vcombine.low %v4036, %v4044
    %v4055 = vunpack.c.l.s4 1934713408
    %v4056 = vunpack.c.0.s8 %v4055
    %v4057 = vlaneseq
    %v4058 = vshrl.u32 %v4057, 7
    %v4059 = vsub.s32 %v4056, %v4058
    %v4060 = vrot.slane %v4053, %v4059
    %v4061 = vcombine.low %v4052, %v4060
    %v4062 = vcombine.high %v4052, %v4060
    %v4063 = vcombine.low %v3985, %v3992
    %v4065 = vunpack.c.l.s4 1983009808
    %v4066 = vunpack.c.0.s8 %v4065
    %v4067 = vlaneseq
    %v4068 = vshrl.u32 %v4067, 7
    %v4069 = vsub.s32 %v4066, %v4068
    %v4070 = vrot.slane %v4063, %v4069
    %v4071 = vcombine.low %v4009, %v4010
    %v4073 = vunpack.c.l.s4 1983009808
    %v4074 = vunpack.c.0.s8 %v4073
    %v4075 = vlaneseq
    %v4076 = vshrl.u32 %v4075, 7
    %v4077 = vsub.s32 %v4074, %v4076
    %v4078 = vrot.slane %v4071, %v4077
    %v4079 = vcombine.low %v4001, %v4008
    %v4081 = vunpack.c.l.s4 1983009808
    %v4082 = vunpack.c.0.s8 %v4081
    %v4083 = vlaneseq
    %v4084 = vshrl.u32 %v4083, 7
    %v4085 = vsub.s32 %v4082, %v4084
    %v4086 = vrot.slane %v4079, %v4085
    %v4087 = vcombine.low %v4011, %v4012
    %v4089 = vunpack.c.l.s4 1983009808
    %v4090 = vunpack.c.0.s8 %v4089
    %v4091 = vlaneseq
    %v4092 = vshrl.u32 %v4091, 7
    %v4093 = vsub.s32 %v4090, %v4092
    %v4094 = vrot.slane %v4087, %v4093
    %v4095 = vcombine.low %v4070, %v4078
    %v4097 = vunpack.c.l.s4 1934713408
    %v4098 = vunpack.c.0.s8 %v4097
    %v4099 = vlaneseq
    %v4100 = vshrl.u32 %v4099, 7
    %v4101 = vsub.s32 %v4098, %v4100
    %v4102 = vrot.slane %v4095, %v4101
    %v4103 = vcombine.low %v4086, %v4094
    %v4105 = vunpack.c.l.s4 1934713408
    %v4106 = vunpack.c.0.s8 %v4105
    %v4107 = vlaneseq
    %v4108 = vshrl.u32 %v4107, 7
    %v4109 = vsub.s32 %v4106, %v4108
    %v4110 = vrot.slane %v4103, %v4109
    %v4111 = vcombine.low %v4102, %v4110
    %v4112 = vcombine.high %v4102, %v4110
    %v4115 = vpack.i.b16 %v4111, %v4061
    %v4117 = vshrl.u32 %v4061, 16
    %v4118 = vshrl.u32 %v4111, 16
    %v4119 = vpack.i.b16 %v4118, %v4117
    %v4123 = vpack.i.b16 %v4112, %v4062
    %v4127 = vpack.i.b16 %v3746, %v3745
    %v4129 = vshrl.u32 %v3745, 16
    %v4130 = vshrl.u32 %v3746, 16
    %v4131 = vpack.i.b16 %v4130, %v4129
    %v4134 = vpack.i.b16 0, %v3747
    %v4136 = vshrl.u32 %v3747, 16
    %v4137 = vpack.i.b16 %v3874, %v4136
    %v4139 = vcombine.high %v4127, %v3877
    %v4141 = vunpack.c.l.s4 1983009808
    %v4142 = vunpack.c.0.s8 %v4141
    %v4143 = vlaneseq
    %v4144 = vshrl.u32 %v4143, 7
    %v4145 = vsub.s32 %v4142, %v4144
    %v4146 = vrot.slane %v4127, %v4145
    %v4148 = vunpack.c.l.s4 1983009808
    %v4149 = vunpack.c.0.s8 %v4148
    %v4150 = vlaneseq
    %v4151 = vshrl.u32 %v4150, 7
    %v4152 = vsub.s32 %v4149, %v4151
    %v4153 = vrot.slane %v4139, %v4152
    %v4154 = vcombine.high %v4134, %v3877
    %v4156 = vunpack.c.l.s4 1983009808
    %v4157 = vunpack.c.0.s8 %v4156
    %v4158 = vlaneseq
    %v4159 = vshrl.u32 %v4158, 7
    %v4160 = vsub.s32 %v4157, %v4159
    %v4161 = vrot.slane %v4134, %v4160
    %v4163 = vunpack.c.l.s4 1983009808
    %v4164 = vunpack.c.0.s8 %v4163
    %v4165 = vlaneseq
    %v4166 = vshrl.u32 %v4165, 7
    %v4167 = vsub.s32 %v4164, %v4166
    %v4168 = vrot.slane %v4154, %v4167
    %v4169 = vcombine.low %v4146, %v4161
    %v4170 = vcombine.high %v4146, %v4161
    %v4172 = vunpack.c.l.s4 1934713408
    %v4173 = vunpack.c.0.s8 %v4172
    %v4174 = vlaneseq
    %v4175 = vshrl.u32 %v4174, 7
    %v4176 = vsub.s32 %v4173, %v4175
    %v4177 = vrot.slane %v4169, %v4176
    %v4179 = vunpack.c.l.s4 1934713408
    %v4180 = vunpack.c.0.s8 %v4179
    %v4181 = vlaneseq
    %v4182 = vshrl.u32 %v4181, 7
    %v4183 = vsub.s32 %v4180, %v4182
    %v4184 = vrot.slane %v4170, %v4183
    %v4185 = vcombine.low %v4153, %v4168
    %v4186 = vcombine.high %v4153, %v4168
    %v4188 = vunpack.c.l.s4 1934713408
    %v4189 = vunpack.c.0.s8 %v4188
    %v4190 = vlaneseq
    %v4191 = vshrl.u32 %v4190, 7
    %v4192 = vsub.s32 %v4189, %v4191
    %v4193 = vrot.slane %v4185, %v4192
    %v4195 = vunpack.c.l.s4 1934713408
    %v4196 = vunpack.c.0.s8 %v4195
    %v4197 = vlaneseq
    %v4198 = vshrl.u32 %v4197, 7
    %v4199 = vsub.s32 %v4196, %v4198
    %v4200 = vrot.slane %v4186, %v4199
    %v4201 = vcombine.high %v4177, 0
    %v4202 = vcombine.high %v4184, 0
    %v4203 = vcombine.high %v4193, 0
    %v4204 = vcombine.high %v4200, 0
    %v4205 = vcombine.high %v4131, %v3879
    %v4207 = vunpack.c.l.s4 1983009808
    %v4208 = vunpack.c.0.s8 %v4207
    %v4209 = vlaneseq
    %v4210 = vshrl.u32 %v4209, 7
    %v4211 = vsub.s32 %v4208, %v4210
    %v4212 = vrot.slane %v4131, %v4211
    %v4214 = vunpack.c.l.s4 1983009808
    %v4215 = vunpack.c.0.s8 %v4214
    %v4216 = vlaneseq
    %v4217 = vshrl.u32 %v4216, 7
    %v4218 = vsub.s32 %v4215, %v4217
    %v4219 = vrot.slane %v4205, %v4218
    %v4220 = vcombine.high %v4137, %v3879
    %v4222 = vunpack.c.l.s4 1983009808
    %v4223 = vunpack.c.0.s8 %v4222
    %v4224 = vlaneseq
    %v4225 = vshrl.u32 %v4224, 7
    %v4226 = vsub.s32 %v4223, %v4225
    %v4227 = vrot.slane %v4137, %v4226
    %v4229 = vunpack.c.l.s4 1983009808
    %v4230 = vunpack.c.0.s8 %v4229
    %v4231 = vlaneseq
    %v4232 = vshrl.u32 %v4231, 7
    %v4233 = vsub.s32 %v4230, %v4232
    %v4234 = vrot.slane %v4220, %v4233
    %v4235 = vcombine.low %v4212, %v4227
    %v4236 = vcombine.high %v4212, %v4227
    %v4238 = vunpack.c.l.s4 1934713408
    %v4239 = vunpack.c.0.s8 %v4238
    %v4240 = vlaneseq
    %v4241 = vshrl.u32 %v4240, 7
    %v4242 = vsub.s32 %v4239, %v4241
    %v4243 = vrot.slane %v4235, %v4242
    %v4245 = vunpack.c.l.s4 1934713408
    %v4246 = vunpack.c.0.s8 %v4245
    %v4247 = vlaneseq
    %v4248 = vshrl.u32 %v4247, 7
    %v4249 = vsub.s32 %v4246, %v4248
    %v4250 = vrot.slane %v4236, %v4249
    %v4251 = vcombine.low %v4219, %v4234
    %v4252 = vcombine.high %v4219, %v4234
    %v4254 = vunpack.c.l.s4 1934713408
    %v4255 = vunpack.c.0.s8 %v4254
    %v4256 = vlaneseq
    %v4257 = vshrl.u32 %v4256, 7
    %v4258 = vsub.s32 %v4255, %v4257
    %v4259 = vrot.slane %v4251, %v4258
    %v4261 = vunpack.c.l.s4 1934713408
    %v4262 = vunpack.c.0.s8 %v4261
    %v4263 = vlaneseq
    %v4264 = vshrl.u32 %v4263, 7
    %v4265 = vsub.s32 %v4262, %v4264
    %v4266 = vrot.slane %v4252, %v4265
    %v4267 = vcombine.high %v4243, 0
    %v4268 = vcombine.high %v4250, 0
    %v4269 = vcombine.high %v4259, 0
    %v4270 = vcombine.high %v4266, 0
    %v4271 = vcombine.low %v4177, %v4184
    %v4273 = vunpack.c.l.s4 1983009808
    %v4274 = vunpack.c.0.s8 %v4273
    %v4275 = vlaneseq
    %v4276 = vshrl.u32 %v4275, 7
    %v4277 = vsub.s32 %v4274, %v4276
    %v4278 = vrot.slane %v4271, %v4277
    %v4279 = vcombine.low %v4201, %v4202
    %v4281 = vunpack.c.l.s4 1983009808
    %v4282 = vunpack.c.0.s8 %v4281
    %v4283 = vlaneseq
    %v4284 = vshrl.u32 %v4283, 7
    %v4285 = vsub.s32 %v4282, %v4284
    %v4286 = vrot.slane %v4279, %v4285
    %v4287 = vcombine.low %v4193, %v4200
    %v4289 = vunpack.c.l.s4 1983009808
    %v4290 = vunpack.c.0.s8 %v4289
    %v4291 = vlaneseq
    %v4292 = vshrl.u32 %v4291, 7
    %v4293 = vsub.s32 %v4290, %v4292
    %v4294 = vrot.slane %v4287, %v4293
    %v4295 = vcombine.low %v4203, %v4204
    %v4297 = vunpack.c.l.s4 1983009808
    %v4298 = vunpack.c.0.s8 %v4297
    %v4299 = vlaneseq
    %v4300 = vshrl.u32 %v4299, 7
    %v4301 = vsub.s32 %v4298, %v4300
    %v4302 = vrot.slane %v4295, %v4301
    %v4303 = vcombine.low %v4278, %v4286
    %v4305 = vunpack.c.l.s4 1934713408
    %v4306 = vunpack.c.0.s8 %v4305
    %v4307 = vlaneseq
    %v4308 = vshrl.u32 %v4307, 7
    %v4309 = vsub.s32 %v4306, %v4308
    %v4310 = vrot.slane %v4303, %v4309
    %v4311 = vcombine.low %v4294, %v4302
    %v4313 = vunpack.c.l.s4 1934713408
    %v4314 = vunpack.c.0.s8 %v4313
    %v4315 = vlaneseq
    %v4316 = vshrl.u32 %v4315, 7
    %v4317 = vsub.s32 %v4314, %v4316
    %v4318 = vrot.slane %v4311, %v4317
    %v4319 = vcombine.low %v4310, %v4318
    %v4320 = vcombine.high %v4310, %v4318
    %v4321 = vcombine.low %v4243, %v4250
    %v4323 = vunpack.c.l.s4 1983009808
    %v4324 = vunpack.c.0.s8 %v4323
    %v4325 = vlaneseq
    %v4326 = vshrl.u32 %v4325, 7
    %v4327 = vsub.s32 %v4324, %v4326
    %v4328 = vrot.slane %v4321, %v4327
    %v4329 = vcombine.low %v4267, %v4268
    %v4331 = vunpack.c.l.s4 1983009808
    %v4332 = vunpack.c.0.s8 %v4331
    %v4333 = vlaneseq
    %v4334 = vshrl.u32 %v4333, 7
    %v4335 = vsub.s32 %v4332, %v4334
    %v4336 = vrot.slane %v4329, %v4335
    %v4337 = vcombine.low %v4259, %v4266
    %v4339 = vunpack.c.l.s4 1983009808
    %v4340 = vunpack.c.0.s8 %v4339
    %v4341 = vlaneseq
    %v4342 = vshrl.u32 %v4341, 7
    %v4343 = vsub.s32 %v4340, %v4342
    %v4344 = vrot.slane %v4337, %v4343
    %v4345 = vcombine.low %v4269, %v4270
    %v4347 = vunpack.c.l.s4 1983009808
    %v4348 = vunpack.c.0.s8 %v4347
    %v4349 = vlaneseq
    %v4350 = vshrl.u32 %v4349, 7
    %v4351 = vsub.s32 %v4348, %v4350
    %v4352 = vrot.slane %v4345, %v4351
    %v4353 = vcombine.low %v4328, %v4336
    %v4355 = vunpack.c.l.s4 1934713408
    %v4356 = vunpack.c.0.s8 %v4355
    %v4357 = vlaneseq
    %v4358 = vshrl.u32 %v4357, 7
    %v4359 = vsub.s32 %v4356, %v4358
    %v4360 = vrot.slane %v4353, %v4359
    %v4361 = vcombine.low %v4344, %v4352
    %v4363 = vunpack.c.l.s4 1934713408
    %v4364 = vunpack.c.0.s8 %v4363
    %v4365 = vlaneseq
    %v4366 = vshrl.u32 %v4365, 7
    %v4367 = vsub.s32 %v4364, %v4366
    %v4368 = vrot.slane %v4361, %v4367
    %v4369 = vcombine.low %v4360, %v4368
    %v4370 = vcombine.high %v4360, %v4368
    %v4373 = vpack.i.b16 %v4369, %v4319
    %v4375 = vshrl.u32 %v4319, 16
    %v4376 = vshrl.u32 %v4369, 16
    %v4377 = vpack.i.b16 %v4376, %v4375
    %v4381 = vpack.i.b16 %v4370, %v4320
    %v4385 = vpack.i.b16 %v3752, %v3751
    %v4387 = vshrl.u32 %v3751, 16
    %v4388 = vshrl.u32 %v3752, 16
    %v4389 = vpack.i.b16 %v4388, %v4387
    %v4392 = vpack.i.b16 0, %v3753
    %v4394 = vshrl.u32 %v3753, 16
    %v4395 = vpack.i.b16 %v3874, %v4394
    %v4397 = vcombine.high %v4385, %v3877
    %v4399 = vunpack.c.l.s4 1983009808
    %v4400 = vunpack.c.0.s8 %v4399
    %v4401 = vlaneseq
    %v4402 = vshrl.u32 %v4401, 7
    %v4403 = vsub.s32 %v4400, %v4402
    %v4404 = vrot.slane %v4385, %v4403
    %v4406 = vunpack.c.l.s4 1983009808
    %v4407 = vunpack.c.0.s8 %v4406
    %v4408 = vlaneseq
    %v4409 = vshrl.u32 %v4408, 7
    %v4410 = vsub.s32 %v4407, %v4409
    %v4411 = vrot.slane %v4397, %v4410
    %v4412 = vcombine.high %v4392, %v3877
    %v4414 = vunpack.c.l.s4 1983009808
    %v4415 = vunpack.c.0.s8 %v4414
    %v4416 = vlaneseq
    %v4417 = vshrl.u32 %v4416, 7
    %v4418 = vsub.s32 %v4415, %v4417
    %v4419 = vrot.slane %v4392, %v4418
    %v4421 = vunpack.c.l.s4 1983009808
    %v4422 = vunpack.c.0.s8 %v4421
    %v4423 = vlaneseq
    %v4424 = vshrl.u32 %v4423, 7
    %v4425 = vsub.s32 %v4422, %v4424
    %v4426 = vrot.slane %v4412, %v4425
    %v4427 = vcombine.low %v4404, %v4419
    %v4428 = vcombine.high %v4404, %v4419
    %v4430 = vunpack.c.l.s4 1934713408
    %v4431 = vunpack.c.0.s8 %v4430
    %v4432 = vlaneseq
    %v4433 = vshrl.u32 %v4432, 7
    %v4434 = vsub.s32 %v4431, %v4433
    %v4435 = vrot.slane %v4427, %v4434
    %v4437 = vunpack.c.l.s4 1934713408
    %v4438 = vunpack.c.0.s8 %v4437
    %v4439 = vlaneseq
    %v4440 = vshrl.u32 %v4439, 7
    %v4441 = vsub.s32 %v4438, %v4440
    %v4442 = vrot.slane %v4428, %v4441
    %v4443 = vcombine.low %v4411, %v4426
    %v4444 = vcombine.high %v4411, %v4426
    %v4446 = vunpack.c.l.s4 1934713408
    %v4447 = vunpack.c.0.s8 %v4446
    %v4448 = vlaneseq
    %v4449 = vshrl.u32 %v4448, 7
    %v4450 = vsub.s32 %v4447, %v4449
    %v4451 = vrot.slane %v4443, %v4450
    %v4453 = vunpack.c.l.s4 1934713408
    %v4454 = vunpack.c.0.s8 %v4453
    %v4455 = vlaneseq
    %v4456 = vshrl.u32 %v4455, 7
    %v4457 = vsub.s32 %v4454, %v4456
    %v4458 = vrot.slane %v4444, %v4457
    %v4459 = vcombine.high %v4435, 0
    %v4460 = vcombine.high %v4442, 0
    %v4461 = vcombine.high %v4451, 0
    %v4462 = vcombine.high %v4458, 0
    %v4463 = vcombine.high %v4389, %v3879
    %v4465 = vunpack.c.l.s4 1983009808
    %v4466 = vunpack.c.0.s8 %v4465
    %v4467 = vlaneseq
    %v4468 = vshrl.u32 %v4467, 7
    %v4469 = vsub.s32 %v4466, %v4468
    %v4470 = vrot.slane %v4389, %v4469
    %v4472 = vunpack.c.l.s4 1983009808
    %v4473 = vunpack.c.0.s8 %v4472
    %v4474 = vlaneseq
    %v4475 = vshrl.u32 %v4474, 7
    %v4476 = vsub.s32 %v4473, %v4475
    %v4477 = vrot.slane %v4463, %v4476
    %v4478 = vcombine.high %v4395, %v3879
    %v4480 = vunpack.c.l.s4 1983009808
    %v4481 = vunpack.c.0.s8 %v4480
    %v4482 = vlaneseq
    %v4483 = vshrl.u32 %v4482, 7
    %v4484 = vsub.s32 %v4481, %v4483
    %v4485 = vrot.slane %v4395, %v4484
    %v4487 = vunpack.c.l.s4 1983009808
    %v4488 = vunpack.c.0.s8 %v4487
    %v4489 = vlaneseq
    %v4490 = vshrl.u32 %v4489, 7
    %v4491 = vsub.s32 %v4488, %v4490
    %v4492 = vrot.slane %v4478, %v4491
    %v4493 = vcombine.low %v4470, %v4485
    %v4494 = vcombine.high %v4470, %v4485
    %v4496 = vunpack.c.l.s4 1934713408
    %v4497 = vunpack.c.0.s8 %v4496
    %v4498 = vlaneseq
    %v4499 = vshrl.u32 %v4498, 7
    %v4500 = vsub.s32 %v4497, %v4499
    %v4501 = vrot.slane %v4493, %v4500
    %v4503 = vunpack.c.l.s4 1934713408
    %v4504 = vunpack.c.0.s8 %v4503
    %v4505 = vlaneseq
    %v4506 = vshrl.u32 %v4505, 7
    %v4507 = vsub.s32 %v4504, %v4506
    %v4508 = vrot.slane %v4494, %v4507
    %v4509 = vcombine.low %v4477, %v4492
    %v4510 = vcombine.high %v4477, %v4492
    %v4512 = vunpack.c.l.s4 1934713408
    %v4513 = vunpack.c.0.s8 %v4512
    %v4514 = vlaneseq
    %v4515 = vshrl.u32 %v4514, 7
    %v4516 = vsub.s32 %v4513, %v4515
    %v4517 = vrot.slane %v4509, %v4516
    %v4519 = vunpack.c.l.s4 1934713408
    %v4520 = vunpack.c.0.s8 %v4519
    %v4521 = vlaneseq
    %v4522 = vshrl.u32 %v4521, 7
    %v4523 = vsub.s32 %v4520, %v4522
    %v4524 = vrot.slane %v4510, %v4523
    %v4525 = vcombine.high %v4501, 0
    %v4526 = vcombine.high %v4508, 0
    %v4527 = vcombine.high %v4517, 0
    %v4528 = vcombine.high %v4524, 0
    %v4529 = vcombine.low %v4435, %v4442
    %v4531 = vunpack.c.l.s4 1983009808
    %v4532 = vunpack.c.0.s8 %v4531
    %v4533 = vlaneseq
    %v4534 = vshrl.u32 %v4533, 7
    %v4535 = vsub.s32 %v4532, %v4534
    %v4536 = vrot.slane %v4529, %v4535
    %v4537 = vcombine.low %v4459, %v4460
    %v4539 = vunpack.c.l.s4 1983009808
    %v4540 = vunpack.c.0.s8 %v4539
    %v4541 = vlaneseq
    %v4542 = vshrl.u32 %v4541, 7
    %v4543 = vsub.s32 %v4540, %v4542
    %v4544 = vrot.slane %v4537, %v4543
    %v4545 = vcombine.low %v4451, %v4458
    %v4547 = vunpack.c.l.s4 1983009808
    %v4548 = vunpack.c.0.s8 %v4547
    %v4549 = vlaneseq
    %v4550 = vshrl.u32 %v4549, 7
    %v4551 = vsub.s32 %v4548, %v4550
    %v4552 = vrot.slane %v4545, %v4551
    %v4553 = vcombine.low %v4461, %v4462
    %v4555 = vunpack.c.l.s4 1983009808
    %v4556 = vunpack.c.0.s8 %v4555
    %v4557 = vlaneseq
    %v4558 = vshrl.u32 %v4557, 7
    %v4559 = vsub.s32 %v4556, %v4558
    %v4560 = vrot.slane %v4553, %v4559
    %v4561 = vcombine.low %v4536, %v4544
    %v4563 = vunpack.c.l.s4 1934713408
    %v4564 = vunpack.c.0.s8 %v4563
    %v4565 = vlaneseq
    %v4566 = vshrl.u32 %v4565, 7
    %v4567 = vsub.s32 %v4564, %v4566
    %v4568 = vrot.slane %v4561, %v4567
    %v4569 = vcombine.low %v4552, %v4560
    %v4571 = vunpack.c.l.s4 1934713408
    %v4572 = vunpack.c.0.s8 %v4571
    %v4573 = vlaneseq
    %v4574 = vshrl.u32 %v4573, 7
    %v4575 = vsub.s32 %v4572, %v4574
    %v4576 = vrot.slane %v4569, %v4575
    %v4577 = vcombine.low %v4568, %v4576
    %v4578 = vcombine.high %v4568, %v4576
    %v4579 = vcombine.low %v4501, %v4508
    %v4581 = vunpack.c.l.s4 1983009808
    %v4582 = vunpack.c.0.s8 %v4581
    %v4583 = vlaneseq
    %v4584 = vshrl.u32 %v4583, 7
    %v4585 = vsub.s32 %v4582, %v4584
    %v4586 = vrot.slane %v4579, %v4585
    %v4587 = vcombine.low %v4525, %v4526
    %v4589 = vunpack.c.l.s4 1983009808
    %v4590 = vunpack.c.0.s8 %v4589
    %v4591 = vlaneseq
    %v4592 = vshrl.u32 %v4591, 7
    %v4593 = vsub.s32 %v4590, %v4592
    %v4594 = vrot.slane %v4587, %v4593
    %v4595 = vcombine.low %v4517, %v4524
    %v4597 = vunpack.c.l.s4 1983009808
    %v4598 = vunpack.c.0.s8 %v4597
    %v4599 = vlaneseq
    %v4600 = vshrl.u32 %v4599, 7
    %v4601 = vsub.s32 %v4598, %v4600
    %v4602 = vrot.slane %v4595, %v4601
    %v4603 = vcombine.low %v4527, %v4528
    %v4605 = vunpack.c.l.s4 1983009808
    %v4606 = vunpack.c.0.s8 %v4605
    %v4607 = vlaneseq
    %v4608 = vshrl.u32 %v4607, 7
    %v4609 = vsub.s32 %v4606, %v4608
    %v4610 = vrot.slane %v4603, %v4609
    %v4611 = vcombine.low %v4586, %v4594
    %v4613 = vunpack.c.l.s4 1934713408
    %v4614 = vunpack.c.0.s8 %v4613
    %v4615 = vlaneseq
    %v4616 = vshrl.u32 %v4615, 7
    %v4617 = vsub.s32 %v4614, %v4616
    %v4618 = vrot.slane %v4611, %v4617
    %v4619 = vcombine.low %v4602, %v4610
    %v4621 = vunpack.c.l.s4 1934713408
    %v4622 = vunpack.c.0.s8 %v4621
    %v4623 = vlaneseq
    %v4624 = vshrl.u32 %v4623, 7
    %v4625 = vsub.s32 %v4622, %v4624
    %v4626 = vrot.slane %v4619, %v4625
    %v4627 = vcombine.low %v4618, %v4626
    %v4628 = vcombine.high %v4618, %v4626
    %v4631 = vpack.i.b16 %v4627, %v4577
    %v4633 = vshrl.u32 %v4577, 16
    %v4634 = vshrl.u32 %v4627, 16
    %v4635 = vpack.i.b16 %v4634, %v4633
    %v4639 = vpack.i.b16 %v4628, %v4578
    %4641 = vmatprep.subr.bf16.mxu0 0
    %4642 = vmatpush1.bf16.xpose.msra.mxu0 %v4373
    %4643 = vmatprep.subr.bf16.mxu0 0
    %4644 = vmatpush1.bf16.xpose.msra.mxu0 0
    %4645 = vmatprep.subr.bf16.mxu0 0
    %4646 = vmatpush1.bf16.xpose.msra.mxu0 0
    %4647 = vmatprep.subr.bf16.mxu0 0
    %4648 = vmatpush1.bf16.xpose.msra.mxu0 0
    %4649 = vmatprep.subr.bf16.mxu0 0
    %4650 = vmatpush1.bf16.xpose.msra.mxu0 0
    %4651 = vmatprep.subr.bf16.mxu0 0
    %4652 = vmatpush1.bf16.xpose.msra.mxu0 0
    %4653 = vmatprep.subr.bf16.mxu0 0
    %4654 = vmatpush1.bf16.xpose.msra.mxu0 0
    %4655 = vmatprep.subr.bf16.mxu0 0
    %4656 = vmatpush1.bf16.xpose.msra.mxu0 0
    %4657 = vmatprep.subr.bf16.mxu0 0
    %4658 = vmatpush1.bf16.xpose.msra.mxu0 0
    %4659 = vmatprep.subr.bf16.mxu0 0
    %4660 = vmatpush1.bf16.xpose.msra.mxu0 0
    %4661 = vmatprep.subr.bf16.mxu0 0
    %4662 = vmatpush1.bf16.xpose.msra.mxu0 0
    %4663 = vmatprep.subr.bf16.mxu0 0
    %4664 = vmatpush1.bf16.xpose.msra.mxu0 0
    %4665 = vmatprep.subr.bf16.mxu0 0
    %4666 = vmatpush1.bf16.xpose.msra.mxu0 0
    %4667 = vmatprep.subr.bf16.mxu0 0
    %4668 = vmatpush1.bf16.xpose.msra.mxu0 0
    %4669 = vmatprep.subr.bf16.mxu0 0
    %4670 = vmatpush1.bf16.xpose.msra.mxu0 0
    %4671 = vmatprep.subr.bf16.mxu0 0
    %4672 = vmatpush1.bf16.xpose.msra.mxu0 0
    %4673 = vmatprep.mubr.bf16.mxu0 0
    %4674 = vmatmul.mubr.bf16.gmra.mrb[0].mxu0 %v4115
    %v4675 = vpop.f32.mrb[0].mxu0
    %v4676 = vadd.f32 %v3841, %v4675
    %v4677 = vpop.f32.mrb[0].mxu0
    %v4678 = vpop.f32.mrb[0].mxu0
    %v4679 = vadd.f32 %v3842, %v4678
    %v4680 = vpop.f32.mrb[0].mxu0
    %4681 = vdwg.mxu0
    %4682 = vmatprep.subr.bf16.mxu0 0
    %4683 = vmatpush1.bf16.xpose.msra.mxu0 %v4377
    %4684 = vmatprep.subr.bf16.mxu0 0
    %4685 = vmatpush1.bf16.xpose.msra.mxu0 0
    %4686 = vmatprep.subr.bf16.mxu0 0
    %4687 = vmatpush1.bf16.xpose.msra.mxu0 0
    %4688 = vmatprep.subr.bf16.mxu0 0
    %4689 = vmatpush1.bf16.xpose.msra.mxu0 0
    %4690 = vmatprep.subr.bf16.mxu0 0
    %4691 = vmatpush1.bf16.xpose.msra.mxu0 0
    %4692 = vmatprep.subr.bf16.mxu0 0
    %4693 = vmatpush1.bf16.xpose.msra.mxu0 0
    %4694 = vmatprep.subr.bf16.mxu0 0
    %4695 = vmatpush1.bf16.xpose.msra.mxu0 0
    %4696 = vmatprep.subr.bf16.mxu0 0
    %4697 = vmatpush1.bf16.xpose.msra.mxu0 0
    %4698 = vmatprep.subr.bf16.mxu0 0
    %4699 = vmatpush1.bf16.xpose.msra.mxu0 0
    %4700 = vmatprep.subr.bf16.mxu0 0
    %4701 = vmatpush1.bf16.xpose.msra.mxu0 0
    %4702 = vmatprep.subr.bf16.mxu0 0
    %4703 = vmatpush1.bf16.xpose.msra.mxu0 0
    %4704 = vmatprep.subr.bf16.mxu0 0
    %4705 = vmatpush1.bf16.xpose.msra.mxu0 0
    %4706 = vmatprep.subr.bf16.mxu0 0
    %4707 = vmatpush1.bf16.xpose.msra.mxu0 0
    %4708 = vmatprep.subr.bf16.mxu0 0
    %4709 = vmatpush1.bf16.xpose.msra.mxu0 0
    %4710 = vmatprep.subr.bf16.mxu0 0
    %4711 = vmatpush1.bf16.xpose.msra.mxu0 0
    %4712 = vmatprep.subr.bf16.mxu0 0
    %4713 = vmatpush1.bf16.xpose.msra.mxu0 0
    %4714 = vmatprep.mubr.bf16.mxu0 0
    %4715 = vmatmul.mubr.bf16.gmra.mrb[0].mxu0 %v4119
    %v4716 = vpop.f32.mrb[0].mxu0
    %v4717 = vadd.f32 %v3841, %v4716
    %v4718 = vpop.f32.mrb[0].mxu0
    %v4719 = vpop.f32.mrb[0].mxu0
    %v4720 = vadd.f32 %v3842, %v4719
    %v4721 = vpop.f32.mrb[0].mxu0
    %4722 = vdwg.mxu0
    %4723 = vmatprep.subr.bf16.mxu0 0
    %4724 = vmatpush1.bf16.xpose.msra.mxu0 %v4381
    %4725 = vmatprep.subr.bf16.mxu0 0
    %4726 = vmatpush1.bf16.xpose.msra.mxu0 0
    %4727 = vmatprep.subr.bf16.mxu0 0
    %4728 = vmatpush1.bf16.xpose.msra.mxu0 0
    %4729 = vmatprep.subr.bf16.mxu0 0
    %4730 = vmatpush1.bf16.xpose.msra.mxu0 0
    %4731 = vmatprep.subr.bf16.mxu0 0
    %4732 = vmatpush1.bf16.xpose.msra.mxu0 0
    %4733 = vmatprep.subr.bf16.mxu0 0
    %4734 = vmatpush1.bf16.xpose.msra.mxu0 0
    %4735 = vmatprep.subr.bf16.mxu0 0
    %4736 = vmatpush1.bf16.xpose.msra.mxu0 0
    %4737 = vmatprep.subr.bf16.mxu0 0
    %4738 = vmatpush1.bf16.xpose.msra.mxu0 0
    %4739 = vmatprep.subr.bf16.mxu0 0
    %4740 = vmatpush1.bf16.xpose.msra.mxu0 0
    %4741 = vmatprep.subr.bf16.mxu0 0
    %4742 = vmatpush1.bf16.xpose.msra.mxu0 0
    %4743 = vmatprep.subr.bf16.mxu0 0
    %4744 = vmatpush1.bf16.xpose.msra.mxu0 0
    %4745 = vmatprep.subr.bf16.mxu0 0
    %4746 = vmatpush1.bf16.xpose.msra.mxu0 0
    %4747 = vmatprep.subr.bf16.mxu0 0
    %4748 = vmatpush1.bf16.xpose.msra.mxu0 0
    %4749 = vmatprep.subr.bf16.mxu0 0
    %4750 = vmatpush1.bf16.xpose.msra.mxu0 0
    %4751 = vmatprep.subr.bf16.mxu0 0
    %4752 = vmatpush1.bf16.xpose.msra.mxu0 0
    %4753 = vmatprep.subr.bf16.mxu0 0
    %4754 = vmatpush1.bf16.xpose.msra.mxu0 0
    %4755 = vmatprep.mubr.bf16.mxu0 0
    %4756 = vmatmul.mubr.bf16.gmra.mrb[0].mxu0 %v4123
    %v4757 = vpop.f32.mrb[0].mxu0
    %v4758 = vadd.f32 %v3841, %v4757
    %v4759 = vpop.f32.mrb[0].mxu0
    %v4760 = vpop.f32.mrb[0].mxu0
    %v4761 = vadd.f32 %v3842, %v4760
    %v4762 = vpop.f32.mrb[0].mxu0
    %4763 = vdwg.mxu0
    %vm4764 = vcmask 130048
    %v4765 = vsel %vm4764, %v4676, -inf
    %4766 = vmax.xlane.f32.xlu0 %v4765
    %v4767 = vpop.xlane.xlu0 %4766
    %v4768 = vsel %vm4764, %v4679, -inf
    %4769 = vmax.xlane.f32.xlu0 %v4768
    %v4770 = vpop.xlane.xlu0 %4769
    %v4771 = vsel %vm4764, %v4717, -inf
    %4772 = vmax.xlane.f32.xlu0 %v4771
    %v4773 = vpop.xlane.xlu0 %4772
    %v4774 = vsel %vm4764, %v4720, -inf
    %4775 = vmax.xlane.f32.xlu0 %v4774
    %v4776 = vpop.xlane.xlu0 %4775
    %v4777 = vsel %vm4764, %v4758, -inf
    %4778 = vmax.xlane.f32.xlu0 %v4777
    %v4779 = vpop.xlane.xlu0 %4778
    %v4780 = vsel %vm4764, %v4761, -inf
    %4781 = vmax.xlane.f32.xlu0 %v4780
    %v4782 = vpop.xlane.xlu0 %4781
    %v4783 = vsub.f32 %v4676, %v4767
    %v4784 = vsub.f32 %v4679, %v4770
    %v4785 = vsub.f32 %v4717, %v4773
    %v4786 = vsub.f32 %v4720, %v4776
    %v4787 = vsub.f32 %v4758, %v4779
    %v4788 = vsub.f32 %v4761, %v4782
    %v4789 = vmul.f32 %v4783, 1.442695
    %v4790 = vpow.pop %v4789
    %v4791 = vmul.f32 %v4784, 1.442695
    %v4792 = vpow.pop %v4791
    %v4793 = vmul.f32 %v4785, 1.442695
    %v4794 = vpow.pop %v4793
    %v4795 = vmul.f32 %v4786, 1.442695
    %v4796 = vpow.pop %v4795
    %v4797 = vmul.f32 %v4787, 1.442695
    %v4798 = vpow.pop %v4797
    %v4799 = vmul.f32 %v4788, 1.442695
    %v4800 = vpow.pop %v4799
    %v4801 = vsel %vm4764, %v4790, 0.0
    %4802 = vadd.xlane.f32.xlu0 %v4801
    %v4803 = vpop.xlane.xlu0 %4802
    %v4804 = vsel %vm4764, %v4792, 0.0
    %4805 = vadd.xlane.f32.xlu0 %v4804
    %v4806 = vpop.xlane.xlu0 %4805
    %v4807 = vsel %vm4764, %v4794, 0.0
    %4808 = vadd.xlane.f32.xlu0 %v4807
    %v4809 = vpop.xlane.xlu0 %4808
    %v4810 = vsel %vm4764, %v4796, 0.0
    %4811 = vadd.xlane.f32.xlu0 %v4810
    %v4812 = vpop.xlane.xlu0 %4811
    %v4813 = vsel %vm4764, %v4798, 0.0
    %4814 = vadd.xlane.f32.xlu0 %v4813
    %v4815 = vpop.xlane.xlu0 %4814
    %v4816 = vsel %vm4764, %v4800, 0.0
    %4817 = vadd.xlane.f32.xlu0 %v4816
    %v4818 = vpop.xlane.xlu0 %4817
    %v4819 = vrcp.pop %v4803
    %v4820 = vrcp.pop %v4806
    %v4821 = vrcp.pop %v4809
    %v4822 = vrcp.pop %v4812
    %v4823 = vrcp.pop %v4815
    %v4824 = vrcp.pop %v4818
    %v4825 = vmul.f32 %v4790, %v4819
    %v4826 = vmul.f32 %v4792, %v4820
    %v4827 = vmul.f32 %v4794, %v4821
    %v4828 = vmul.f32 %v4796, %v4822
    %v4829 = vmul.f32 %v4798, %v4823
    %v4830 = vmul.f32 %v4800, %v4824
    %v4831 = vpack.c.bf16 %v4826, %v4825
    %v4832 = vpack.c.bf16 %v4828, %v4827
    %v4833 = vpack.c.bf16 %v4830, %v4829
    %v4835 = vsel %vm4764, %v4831, 0
    %4837 = vmatprep.subr.bf16.mxu0 0
    %4838 = vmatpush1.bf16.msra.mxu0 %v4631
    %4839 = vmatprep.subr.bf16.mxu0 0
    %4840 = vmatpush1.bf16.msra.mxu0 0
    %4841 = vmatprep.subr.bf16.mxu0 0
    %4842 = vmatpush1.bf16.msra.mxu0 0
    %4843 = vmatprep.subr.bf16.mxu0 0
    %4844 = vmatpush1.bf16.msra.mxu0 0
    %4845 = vmatprep.subr.bf16.mxu0 0
    %4846 = vmatpush1.bf16.msra.mxu0 0
    %4847 = vmatprep.subr.bf16.mxu0 0
    %4848 = vmatpush1.bf16.msra.mxu0 0
    %4849 = vmatprep.subr.bf16.mxu0 0
    %4850 = vmatpush1.bf16.msra.mxu0 0
    %4851 = vmatprep.subr.bf16.mxu0 0
    %4852 = vmatpush1.bf16.msra.mxu0 0
    %4853 = vmatprep.subr.bf16.mxu0 0
    %4854 = vmatpush1.bf16.msra.mxu0 0
    %4855 = vmatprep.subr.bf16.mxu0 0
    %4856 = vmatpush1.bf16.msra.mxu0 0
    %4857 = vmatprep.subr.bf16.mxu0 0
    %4858 = vmatpush1.bf16.msra.mxu0 0
    %4859 = vmatprep.subr.bf16.mxu0 0
    %4860 = vmatpush1.bf16.msra.mxu0 0
    %4861 = vmatprep.subr.bf16.mxu0 0
    %4862 = vmatpush1.bf16.msra.mxu0 0
    %4863 = vmatprep.subr.bf16.mxu0 0
    %4864 = vmatpush1.bf16.msra.mxu0 0
    %4865 = vmatprep.subr.bf16.mxu0 0
    %4866 = vmatpush1.bf16.msra.mxu0 0
    %4867 = vmatprep.subr.bf16.mxu0 0
    %4868 = vmatpush1.bf16.msra.mxu0 0
    %4869 = vmatprep.mubr.bf16.mxu0 0
    %4870 = vmatmul.mubr.bf16.gmra.mrb[0].mxu0 %v4835
    %v4871 = vpop.f32.mrb[0].mxu0
    %v4872 = vadd.f32 0.0, %v4871
    %v4873 = vpop.f32.mrb[0].mxu0
    %v4874 = vpop.f32.mrb[0].mxu0
    %v4875 = vadd.f32 0.0, %v4874
    %v4876 = vpop.f32.mrb[0].mxu0
    %4877 = vdwg.mxu0
    %v4879 = vsel %vm4764, %v4832, 0
    %4881 = vmatprep.subr.bf16.mxu0 0
    %4882 = vmatpush1.bf16.msra.mxu0 %v4635
    %4883 = vmatprep.subr.bf16.mxu0 0
    %4884 = vmatpush1.bf16.msra.mxu0 0
    %4885 = vmatprep.subr.bf16.mxu0 0
    %4886 = vmatpush1.bf16.msra.mxu0 0
    %4887 = vmatprep.subr.bf16.mxu0 0
    %4888 = vmatpush1.bf16.msra.mxu0 0
    %4889 = vmatprep.subr.bf16.mxu0 0
    %4890 = vmatpush1.bf16.msra.mxu0 0
    %4891 = vmatprep.subr.bf16.mxu0 0
    %4892 = vmatpush1.bf16.msra.mxu0 0
    %4893 = vmatprep.subr.bf16.mxu0 0
    %4894 = vmatpush1.bf16.msra.mxu0 0
    %4895 = vmatprep.subr.bf16.mxu0 0
    %4896 = vmatpush1.bf16.msra.mxu0 0
    %4897 = vmatprep.subr.bf16.mxu0 0
    %4898 = vmatpush1.bf16.msra.mxu0 0
    %4899 = vmatprep.subr.bf16.mxu0 0
    %4900 = vmatpush1.bf16.msra.mxu0 0
    %4901 = vmatprep.subr.bf16.mxu0 0
    %4902 = vmatpush1.bf16.msra.mxu0 0
    %4903 = vmatprep.subr.bf16.mxu0 0
    %4904 = vmatpush1.bf16.msra.mxu0 0
    %4905 = vmatprep.subr.bf16.mxu0 0
    %4906 = vmatpush1.bf16.msra.mxu0 0
    %4907 = vmatprep.subr.bf16.mxu0 0
    %4908 = vmatpush1.bf16.msra.mxu0 0
    %4909 = vmatprep.subr.bf16.mxu0 0
    %4910 = vmatpush1.bf16.msra.mxu0 0
    %4911 = vmatprep.subr.bf16.mxu0 0
    %4912 = vmatpush1.bf16.msra.mxu0 0
    %4913 = vmatprep.mubr.bf16.mxu0 0
    %4914 = vmatmul.mubr.bf16.gmra.mrb[0].mxu0 %v4879
    %v4915 = vpop.f32.mrb[0].mxu0
    %v4916 = vadd.f32 0.0, %v4915
    %v4917 = vpop.f32.mrb[0].mxu0
    %v4918 = vpop.f32.mrb[0].mxu0
    %v4919 = vadd.f32 0.0, %v4918
    %v4920 = vpop.f32.mrb[0].mxu0
    %4921 = vdwg.mxu0
    %v4923 = vsel %vm4764, %v4833, 0
    %4925 = vmatprep.subr.bf16.mxu0 0
    %4926 = vmatpush1.bf16.msra.mxu0 %v4639
    %4927 = vmatprep.subr.bf16.mxu0 0
    %4928 = vmatpush1.bf16.msra.mxu0 0
    %4929 = vmatprep.subr.bf16.mxu0 0
    %4930 = vmatpush1.bf16.msra.mxu0 0
    %4931 = vmatprep.subr.bf16.mxu0 0
    %4932 = vmatpush1.bf16.msra.mxu0 0
    %4933 = vmatprep.subr.bf16.mxu0 0
    %4934 = vmatpush1.bf16.msra.mxu0 0
    %4935 = vmatprep.subr.bf16.mxu0 0
    %4936 = vmatpush1.bf16.msra.mxu0 0
    %4937 = vmatprep.subr.bf16.mxu0 0
    %4938 = vmatpush1.bf16.msra.mxu0 0
    %4939 = vmatprep.subr.bf16.mxu0 0
    %4940 = vmatpush1.bf16.msra.mxu0 0
    %4941 = vmatprep.subr.bf16.mxu0 0
    %4942 = vmatpush1.bf16.msra.mxu0 0
    %4943 = vmatprep.subr.bf16.mxu0 0
    %4944 = vmatpush1.bf16.msra.mxu0 0
    %4945 = vmatprep.subr.bf16.mxu0 0
    %4946 = vmatpush1.bf16.msra.mxu0 0
    %4947 = vmatprep.subr.bf16.mxu0 0
    %4948 = vmatpush1.bf16.msra.mxu0 0
    %4949 = vmatprep.subr.bf16.mxu0 0
    %4950 = vmatpush1.bf16.msra.mxu0 0
    %4951 = vmatprep.subr.bf16.mxu0 0
    %4952 = vmatpush1.bf16.msra.mxu0 0
    %4953 = vmatprep.subr.bf16.mxu0 0
    %4954 = vmatpush1.bf16.msra.mxu0 0
    %4955 = vmatprep.subr.bf16.mxu0 0
    %4956 = vmatpush1.bf16.msra.mxu0 0
    %4957 = vmatprep.mubr.bf16.mxu0 0
    %4958 = vmatmul.mubr.bf16.gmra.mrb[0].mxu0 %v4923
    %v4959 = vpop.f32.mrb[0].mxu0
    %v4960 = vadd.f32 0.0, %v4959
    %v4961 = vpop.f32.mrb[0].mxu0
    %v4962 = vpop.f32.mrb[0].mxu0
    %v4963 = vadd.f32 0.0, %v4962
    %v4964 = vpop.f32.mrb[0].mxu0
    %4965 = vdwg.mxu0
    %v4966 = vcombine.low %v4872, %v4960
    %v4967 = vcombine.high %v4872, %v4960
    %v4969 = vunpack.c.l.s4 1983009808
    %v4970 = vunpack.c.0.s8 %v4969
    %v4971 = vlaneseq
    %v4972 = vshrl.u32 %v4971, 7
    %v4973 = vsub.s32 %v4970, %v4972
    %v4974 = vrot.slane %v4966, %v4973
    %v4976 = vunpack.c.l.s4 1983009808
    %v4977 = vunpack.c.0.s8 %v4976
    %v4978 = vlaneseq
    %v4979 = vshrl.u32 %v4978, 7
    %v4980 = vsub.s32 %v4977, %v4979
    %v4981 = vrot.slane %v4967, %v4980
    %v4982 = vcombine.high %v4916, 0.0
    %v4984 = vunpack.c.l.s4 1983009808
    %v4985 = vunpack.c.0.s8 %v4984
    %v4986 = vlaneseq
    %v4987 = vshrl.u32 %v4986, 7
    %v4988 = vsub.s32 %v4985, %v4987
    %v4989 = vrot.slane %v4916, %v4988
    %v4991 = vunpack.c.l.s4 1983009808
    %v4992 = vunpack.c.0.s8 %v4991
    %v4993 = vlaneseq
    %v4994 = vshrl.u32 %v4993, 7
    %v4995 = vsub.s32 %v4992, %v4994
    %v4996 = vrot.slane %v4982, %v4995
    %v4997 = vcombine.low %v4974, %v4989
    %v4998 = vcombine.high %v4974, %v4989
    %v5000 = vunpack.c.l.s4 1934713408
    %v5001 = vunpack.c.0.s8 %v5000
    %v5002 = vlaneseq
    %v5003 = vshrl.u32 %v5002, 7
    %v5004 = vsub.s32 %v5001, %v5003
    %v5005 = vrot.slane %v4997, %v5004
    %v5007 = vunpack.c.l.s4 1934713408
    %v5008 = vunpack.c.0.s8 %v5007
    %v5009 = vlaneseq
    %v5010 = vshrl.u32 %v5009, 7
    %v5011 = vsub.s32 %v5008, %v5010
    %v5012 = vrot.slane %v4998, %v5011
    %v5013 = vcombine.low %v4981, %v4996
    %v5014 = vcombine.high %v4981, %v4996
    %v5016 = vunpack.c.l.s4 1934713408
    %v5017 = vunpack.c.0.s8 %v5016
    %v5018 = vlaneseq
    %v5019 = vshrl.u32 %v5018, 7
    %v5020 = vsub.s32 %v5017, %v5019
    %v5021 = vrot.slane %v5013, %v5020
    %v5023 = vunpack.c.l.s4 1934713408
    %v5024 = vunpack.c.0.s8 %v5023
    %v5025 = vlaneseq
    %v5026 = vshrl.u32 %v5025, 7
    %v5027 = vsub.s32 %v5024, %v5026
    %v5028 = vrot.slane %v5014, %v5027
    %v5029 = vcombine.high %v5005, 0.0
    %v5030 = vcombine.high %v5012, 0.0
    %v5031 = vcombine.high %v5021, 0.0
    %v5032 = vcombine.high %v5028, 0.0
    %v5033 = vcombine.low %v4875, %v4963
    %v5034 = vcombine.high %v4875, %v4963
    %v5036 = vunpack.c.l.s4 1983009808
    %v5037 = vunpack.c.0.s8 %v5036
    %v5038 = vlaneseq
    %v5039 = vshrl.u32 %v5038, 7
    %v5040 = vsub.s32 %v5037, %v5039
    %v5041 = vrot.slane %v5033, %v5040
    %v5043 = vunpack.c.l.s4 1983009808
    %v5044 = vunpack.c.0.s8 %v5043
    %v5045 = vlaneseq
    %v5046 = vshrl.u32 %v5045, 7
    %v5047 = vsub.s32 %v5044, %v5046
    %v5048 = vrot.slane %v5034, %v5047
    %v5049 = vcombine.high %v4919, 0.0
    %v5051 = vunpack.c.l.s4 1983009808
    %v5052 = vunpack.c.0.s8 %v5051
    %v5053 = vlaneseq
    %v5054 = vshrl.u32 %v5053, 7
    %v5055 = vsub.s32 %v5052, %v5054
    %v5056 = vrot.slane %v4919, %v5055
    %v5058 = vunpack.c.l.s4 1983009808
    %v5059 = vunpack.c.0.s8 %v5058
    %v5060 = vlaneseq
    %v5061 = vshrl.u32 %v5060, 7
    %v5062 = vsub.s32 %v5059, %v5061
    %v5063 = vrot.slane %v5049, %v5062
    %v5064 = vcombine.low %v5041, %v5056
    %v5065 = vcombine.high %v5041, %v5056
    %v5067 = vunpack.c.l.s4 1934713408
    %v5068 = vunpack.c.0.s8 %v5067
    %v5069 = vlaneseq
    %v5070 = vshrl.u32 %v5069, 7
    %v5071 = vsub.s32 %v5068, %v5070
    %v5072 = vrot.slane %v5064, %v5071
    %v5074 = vunpack.c.l.s4 1934713408
    %v5075 = vunpack.c.0.s8 %v5074
    %v5076 = vlaneseq
    %v5077 = vshrl.u32 %v5076, 7
    %v5078 = vsub.s32 %v5075, %v5077
    %v5079 = vrot.slane %v5065, %v5078
    %v5080 = vcombine.low %v5048, %v5063
    %v5081 = vcombine.high %v5048, %v5063
    %v5083 = vunpack.c.l.s4 1934713408
    %v5084 = vunpack.c.0.s8 %v5083
    %v5085 = vlaneseq
    %v5086 = vshrl.u32 %v5085, 7
    %v5087 = vsub.s32 %v5084, %v5086
    %v5088 = vrot.slane %v5080, %v5087
    %v5090 = vunpack.c.l.s4 1934713408
    %v5091 = vunpack.c.0.s8 %v5090
    %v5092 = vlaneseq
    %v5093 = vshrl.u32 %v5092, 7
    %v5094 = vsub.s32 %v5091, %v5093
    %v5095 = vrot.slane %v5081, %v5094
    %v5096 = vcombine.high %v5072, 0.0
    %v5097 = vcombine.high %v5079, 0.0
    %v5098 = vcombine.high %v5088, 0.0
    %v5099 = vcombine.high %v5095, 0.0
    %v5100 = vcombine.low %v5005, %v5012
    %v5102 = vunpack.c.l.s4 1983009808
    %v5103 = vunpack.c.0.s8 %v5102
    %v5104 = vlaneseq
    %v5105 = vshrl.u32 %v5104, 7
    %v5106 = vsub.s32 %v5103, %v5105
    %v5107 = vrot.slane %v5100, %v5106
    %v5108 = vcombine.low %v5029, %v5030
    %v5110 = vunpack.c.l.s4 1983009808
    %v5111 = vunpack.c.0.s8 %v5110
    %v5112 = vlaneseq
    %v5113 = vshrl.u32 %v5112, 7
    %v5114 = vsub.s32 %v5111, %v5113
    %v5115 = vrot.slane %v5108, %v5114
    %v5116 = vcombine.low %v5021, %v5028
    %v5118 = vunpack.c.l.s4 1983009808
    %v5119 = vunpack.c.0.s8 %v5118
    %v5120 = vlaneseq
    %v5121 = vshrl.u32 %v5120, 7
    %v5122 = vsub.s32 %v5119, %v5121
    %v5123 = vrot.slane %v5116, %v5122
    %v5124 = vcombine.low %v5031, %v5032
    %v5126 = vunpack.c.l.s4 1983009808
    %v5127 = vunpack.c.0.s8 %v5126
    %v5128 = vlaneseq
    %v5129 = vshrl.u32 %v5128, 7
    %v5130 = vsub.s32 %v5127, %v5129
    %v5131 = vrot.slane %v5124, %v5130
    %v5132 = vcombine.low %v5107, %v5115
    %v5133 = vcombine.high %v5107, %v5115
    %v5135 = vunpack.c.l.s4 1934713408
    %v5136 = vunpack.c.0.s8 %v5135
    %v5137 = vlaneseq
    %v5138 = vshrl.u32 %v5137, 7
    %v5139 = vsub.s32 %v5136, %v5138
    %v5140 = vrot.slane %v5132, %v5139
    %v5142 = vunpack.c.l.s4 1934713408
    %v5143 = vunpack.c.0.s8 %v5142
    %v5144 = vlaneseq
    %v5145 = vshrl.u32 %v5144, 7
    %v5146 = vsub.s32 %v5143, %v5145
    %v5147 = vrot.slane %v5133, %v5146
    %v5148 = vcombine.low %v5123, %v5131
    %v5149 = vcombine.high %v5123, %v5131
    %v5151 = vunpack.c.l.s4 1934713408
    %v5152 = vunpack.c.0.s8 %v5151
    %v5153 = vlaneseq
    %v5154 = vshrl.u32 %v5153, 7
    %v5155 = vsub.s32 %v5152, %v5154
    %v5156 = vrot.slane %v5148, %v5155
    %v5158 = vunpack.c.l.s4 1934713408
    %v5159 = vunpack.c.0.s8 %v5158
    %v5160 = vlaneseq
    %v5161 = vshrl.u32 %v5160, 7
    %v5162 = vsub.s32 %v5159, %v5161
    %v5163 = vrot.slane %v5149, %v5162
    %v5164 = vcombine.low %v5140, %v5156
    %v5165 = vcombine.high %v5140, %v5156
    %v5166 = vcombine.low %v5147, %v5163
    %v5167 = vcombine.low %v5072, %v5079
    %v5169 = vunpack.c.l.s4 1983009808
    %v5170 = vunpack.c.0.s8 %v5169
    %v5171 = vlaneseq
    %v5172 = vshrl.u32 %v5171, 7
    %v5173 = vsub.s32 %v5170, %v5172
    %v5174 = vrot.slane %v5167, %v5173
    %v5175 = vcombine.low %v5096, %v5097
    %v5177 = vunpack.c.l.s4 1983009808
    %v5178 = vunpack.c.0.s8 %v5177
    %v5179 = vlaneseq
    %v5180 = vshrl.u32 %v5179, 7
    %v5181 = vsub.s32 %v5178, %v5180
    %v5182 = vrot.slane %v5175, %v5181
    %v5183 = vcombine.low %v5088, %v5095
    %v5185 = vunpack.c.l.s4 1983009808
    %v5186 = vunpack.c.0.s8 %v5185
    %v5187 = vlaneseq
    %v5188 = vshrl.u32 %v5187, 7
    %v5189 = vsub.s32 %v5186, %v5188
    %v5190 = vrot.slane %v5183, %v5189
    %v5191 = vcombine.low %v5098, %v5099
    %v5193 = vunpack.c.l.s4 1983009808
    %v5194 = vunpack.c.0.s8 %v5193
    %v5195 = vlaneseq
    %v5196 = vshrl.u32 %v5195, 7
    %v5197 = vsub.s32 %v5194, %v5196
    %v5198 = vrot.slane %v5191, %v5197
    %v5199 = vcombine.low %v5174, %v5182
    %v5200 = vcombine.high %v5174, %v5182
    %v5202 = vunpack.c.l.s4 1934713408
    %v5203 = vunpack.c.0.s8 %v5202
    %v5204 = vlaneseq
    %v5205 = vshrl.u32 %v5204, 7
    %v5206 = vsub.s32 %v5203, %v5205
    %v5207 = vrot.slane %v5199, %v5206
    %v5209 = vunpack.c.l.s4 1934713408
    %v5210 = vunpack.c.0.s8 %v5209
    %v5211 = vlaneseq
    %v5212 = vshrl.u32 %v5211, 7
    %v5213 = vsub.s32 %v5210, %v5212
    %v5214 = vrot.slane %v5200, %v5213
    %v5215 = vcombine.low %v5190, %v5198
    %v5216 = vcombine.high %v5190, %v5198
    %v5218 = vunpack.c.l.s4 1934713408
    %v5219 = vunpack.c.0.s8 %v5218
    %v5220 = vlaneseq
    %v5221 = vshrl.u32 %v5220, 7
    %v5222 = vsub.s32 %v5219, %v5221
    %v5223 = vrot.slane %v5215, %v5222
    %v5225 = vunpack.c.l.s4 1934713408
    %v5226 = vunpack.c.0.s8 %v5225
    %v5227 = vlaneseq
    %v5228 = vshrl.u32 %v5227, 7
    %v5229 = vsub.s32 %v5226, %v5228
    %v5230 = vrot.slane %v5216, %v5229
    %v5231 = vcombine.low %v5207, %v5223
    %v5232 = vcombine.high %v5207, %v5223
    %v5233 = vcombine.low %v5214, %v5230
    %v5236 = vpack.i.b16 %v3859, %v3858
    %v5238 = vshrl.u32 %v3858, 16
    %v5239 = vshrl.u32 %v3859, 16
    %v5240 = vpack.i.b16 %v5239, %v5238
    %v5243 = vpack.i.b16 0, %v3860
    %v5245 = vshrl.u32 %v3860, 16
    %v5246 = vpack.i.b16 %v3874, %v5245
    %v5248 = vcombine.high %v5236, %v3877
    %v5250 = vunpack.c.l.s4 1983009808
    %v5251 = vunpack.c.0.s8 %v5250
    %v5252 = vlaneseq
    %v5253 = vshrl.u32 %v5252, 7
    %v5254 = vsub.s32 %v5251, %v5253
    %v5255 = vrot.slane %v5236, %v5254
    %v5257 = vunpack.c.l.s4 1983009808
    %v5258 = vunpack.c.0.s8 %v5257
    %v5259 = vlaneseq
    %v5260 = vshrl.u32 %v5259, 7
    %v5261 = vsub.s32 %v5258, %v5260
    %v5262 = vrot.slane %v5248, %v5261
    %v5263 = vcombine.high %v5243, %v3877
    %v5265 = vunpack.c.l.s4 1983009808
    %v5266 = vunpack.c.0.s8 %v5265
    %v5267 = vlaneseq
    %v5268 = vshrl.u32 %v5267, 7
    %v5269 = vsub.s32 %v5266, %v5268
    %v5270 = vrot.slane %v5243, %v5269
    %v5272 = vunpack.c.l.s4 1983009808
    %v5273 = vunpack.c.0.s8 %v5272
    %v5274 = vlaneseq
    %v5275 = vshrl.u32 %v5274, 7
    %v5276 = vsub.s32 %v5273, %v5275
    %v5277 = vrot.slane %v5263, %v5276
    %v5278 = vcombine.low %v5255, %v5270
    %v5279 = vcombine.high %v5255, %v5270
    %v5281 = vunpack.c.l.s4 1934713408
    %v5282 = vunpack.c.0.s8 %v5281
    %v5283 = vlaneseq
    %v5284 = vshrl.u32 %v5283, 7
    %v5285 = vsub.s32 %v5282, %v5284
    %v5286 = vrot.slane %v5278, %v5285
    %v5288 = vunpack.c.l.s4 1934713408
    %v5289 = vunpack.c.0.s8 %v5288
    %v5290 = vlaneseq
    %v5291 = vshrl.u32 %v5290, 7
    %v5292 = vsub.s32 %v5289, %v5291
    %v5293 = vrot.slane %v5279, %v5292
    %v5294 = vcombine.low %v5262, %v5277
    %v5295 = vcombine.high %v5262, %v5277
    %v5297 = vunpack.c.l.s4 1934713408
    %v5298 = vunpack.c.0.s8 %v5297
    %v5299 = vlaneseq
    %v5300 = vshrl.u32 %v5299, 7
    %v5301 = vsub.s32 %v5298, %v5300
    %v5302 = vrot.slane %v5294, %v5301
    %v5304 = vunpack.c.l.s4 1934713408
    %v5305 = vunpack.c.0.s8 %v5304
    %v5306 = vlaneseq
    %v5307 = vshrl.u32 %v5306, 7
    %v5308 = vsub.s32 %v5305, %v5307
    %v5309 = vrot.slane %v5295, %v5308
    %v5310 = vcombine.high %v5286, 0
    %v5311 = vcombine.high %v5293, 0
    %v5312 = vcombine.high %v5302, 0
    %v5313 = vcombine.high %v5309, 0
    %v5314 = vcombine.high %v5240, %v3879
    %v5316 = vunpack.c.l.s4 1983009808
    %v5317 = vunpack.c.0.s8 %v5316
    %v5318 = vlaneseq
    %v5319 = vshrl.u32 %v5318, 7
    %v5320 = vsub.s32 %v5317, %v5319
    %v5321 = vrot.slane %v5240, %v5320
    %v5323 = vunpack.c.l.s4 1983009808
    %v5324 = vunpack.c.0.s8 %v5323
    %v5325 = vlaneseq
    %v5326 = vshrl.u32 %v5325, 7
    %v5327 = vsub.s32 %v5324, %v5326
    %v5328 = vrot.slane %v5314, %v5327
    %v5329 = vcombine.high %v5246, %v3879
    %v5331 = vunpack.c.l.s4 1983009808
    %v5332 = vunpack.c.0.s8 %v5331
    %v5333 = vlaneseq
    %v5334 = vshrl.u32 %v5333, 7
    %v5335 = vsub.s32 %v5332, %v5334
    %v5336 = vrot.slane %v5246, %v5335
    %v5338 = vunpack.c.l.s4 1983009808
    %v5339 = vunpack.c.0.s8 %v5338
    %v5340 = vlaneseq
    %v5341 = vshrl.u32 %v5340, 7
    %v5342 = vsub.s32 %v5339, %v5341
    %v5343 = vrot.slane %v5329, %v5342
    %v5344 = vcombine.low %v5321, %v5336
    %v5345 = vcombine.high %v5321, %v5336
    %v5347 = vunpack.c.l.s4 1934713408
    %v5348 = vunpack.c.0.s8 %v5347
    %v5349 = vlaneseq
    %v5350 = vshrl.u32 %v5349, 7
    %v5351 = vsub.s32 %v5348, %v5350
    %v5352 = vrot.slane %v5344, %v5351
    %v5354 = vunpack.c.l.s4 1934713408
    %v5355 = vunpack.c.0.s8 %v5354
    %v5356 = vlaneseq
    %v5357 = vshrl.u32 %v5356, 7
    %v5358 = vsub.s32 %v5355, %v5357
    %v5359 = vrot.slane %v5345, %v5358
    %v5360 = vcombine.low %v5328, %v5343
    %v5361 = vcombine.high %v5328, %v5343
    %v5363 = vunpack.c.l.s4 1934713408
    %v5364 = vunpack.c.0.s8 %v5363
    %v5365 = vlaneseq
    %v5366 = vshrl.u32 %v5365, 7
    %v5367 = vsub.s32 %v5364, %v5366
    %v5368 = vrot.slane %v5360, %v5367
    %v5370 = vunpack.c.l.s4 1934713408
    %v5371 = vunpack.c.0.s8 %v5370
    %v5372 = vlaneseq
    %v5373 = vshrl.u32 %v5372, 7
    %v5374 = vsub.s32 %v5371, %v5373
    %v5375 = vrot.slane %v5361, %v5374
    %v5376 = vcombine.high %v5352, 0
    %v5377 = vcombine.high %v5359, 0
    %v5378 = vcombine.high %v5368, 0
    %v5379 = vcombine.high %v5375, 0
    %v5380 = vcombine.low %v5286, %v5293
    %v5382 = vunpack.c.l.s4 1983009808
    %v5383 = vunpack.c.0.s8 %v5382
    %v5384 = vlaneseq
    %v5385 = vshrl.u32 %v5384, 7
    %v5386 = vsub.s32 %v5383, %v5385
    %v5387 = vrot.slane %v5380, %v5386
    %v5388 = vcombine.low %v5310, %v5311
    %v5390 = vunpack.c.l.s4 1983009808
    %v5391 = vunpack.c.0.s8 %v5390
    %v5392 = vlaneseq
    %v5393 = vshrl.u32 %v5392, 7
    %v5394 = vsub.s32 %v5391, %v5393
    %v5395 = vrot.slane %v5388, %v5394
    %v5396 = vcombine.low %v5302, %v5309
    %v5398 = vunpack.c.l.s4 1983009808
    %v5399 = vunpack.c.0.s8 %v5398
    %v5400 = vlaneseq
    %v5401 = vshrl.u32 %v5400, 7
    %v5402 = vsub.s32 %v5399, %v5401
    %v5403 = vrot.slane %v5396, %v5402
    %v5404 = vcombine.low %v5312, %v5313
    %v5406 = vunpack.c.l.s4 1983009808
    %v5407 = vunpack.c.0.s8 %v5406
    %v5408 = vlaneseq
    %v5409 = vshrl.u32 %v5408, 7
    %v5410 = vsub.s32 %v5407, %v5409
    %v5411 = vrot.slane %v5404, %v5410
    %v5412 = vcombine.low %v5387, %v5395
    %v5414 = vunpack.c.l.s4 1934713408
    %v5415 = vunpack.c.0.s8 %v5414
    %v5416 = vlaneseq
    %v5417 = vshrl.u32 %v5416, 7
    %v5418 = vsub.s32 %v5415, %v5417
    %v5419 = vrot.slane %v5412, %v5418
    %v5420 = vcombine.low %v5403, %v5411
    %v5422 = vunpack.c.l.s4 1934713408
    %v5423 = vunpack.c.0.s8 %v5422
    %v5424 = vlaneseq
    %v5425 = vshrl.u32 %v5424, 7
    %v5426 = vsub.s32 %v5423, %v5425
    %v5427 = vrot.slane %v5420, %v5426
    %v5428 = vcombine.low %v5419, %v5427
    %v5429 = vcombine.high %v5419, %v5427
    %v5430 = vcombine.low %v5352, %v5359
    %v5432 = vunpack.c.l.s4 1983009808
    %v5433 = vunpack.c.0.s8 %v5432
    %v5434 = vlaneseq
    %v5435 = vshrl.u32 %v5434, 7
    %v5436 = vsub.s32 %v5433, %v5435
    %v5437 = vrot.slane %v5430, %v5436
    %v5438 = vcombine.low %v5376, %v5377
    %v5440 = vunpack.c.l.s4 1983009808
    %v5441 = vunpack.c.0.s8 %v5440
    %v5442 = vlaneseq
    %v5443 = vshrl.u32 %v5442, 7
    %v5444 = vsub.s32 %v5441, %v5443
    %v5445 = vrot.slane %v5438, %v5444
    %v5446 = vcombine.low %v5368, %v5375
    %v5448 = vunpack.c.l.s4 1983009808
    %v5449 = vunpack.c.0.s8 %v5448
    %v5450 = vlaneseq
    %v5451 = vshrl.u32 %v5450, 7
    %v5452 = vsub.s32 %v5449, %v5451
    %v5453 = vrot.slane %v5446, %v5452
    %v5454 = vcombine.low %v5378, %v5379
    %v5456 = vunpack.c.l.s4 1983009808
    %v5457 = vunpack.c.0.s8 %v5456
    %v5458 = vlaneseq
    %v5459 = vshrl.u32 %v5458, 7
    %v5460 = vsub.s32 %v5457, %v5459
    %v5461 = vrot.slane %v5454, %v5460
    %v5462 = vcombine.low %v5437, %v5445
    %v5464 = vunpack.c.l.s4 1934713408
    %v5465 = vunpack.c.0.s8 %v5464
    %v5466 = vlaneseq
    %v5467 = vshrl.u32 %v5466, 7
    %v5468 = vsub.s32 %v5465, %v5467
    %v5469 = vrot.slane %v5462, %v5468
    %v5470 = vcombine.low %v5453, %v5461
    %v5472 = vunpack.c.l.s4 1934713408
    %v5473 = vunpack.c.0.s8 %v5472
    %v5474 = vlaneseq
    %v5475 = vshrl.u32 %v5474, 7
    %v5476 = vsub.s32 %v5473, %v5475
    %v5477 = vrot.slane %v5470, %v5476
    %v5478 = vcombine.low %v5469, %v5477
    %v5479 = vcombine.high %v5469, %v5477
    %v5482 = vpack.i.b16 %v5478, %v5428
    %v5484 = vshrl.u32 %v5428, 16
    %v5485 = vshrl.u32 %v5478, 16
    %v5486 = vpack.i.b16 %v5485, %v5484
    %v5490 = vpack.i.b16 %v5479, %v5429
    %v5494 = vpack.i.b16 %v3749, %v3748
    %v5496 = vshrl.u32 %v3748, 16
    %v5497 = vshrl.u32 %v3749, 16
    %v5498 = vpack.i.b16 %v5497, %v5496
    %v5501 = vpack.i.b16 0, %v3750
    %v5503 = vshrl.u32 %v3750, 16
    %v5504 = vpack.i.b16 %v3874, %v5503
    %v5506 = vcombine.high %v5494, %v3877
    %v5508 = vunpack.c.l.s4 1983009808
    %v5509 = vunpack.c.0.s8 %v5508
    %v5510 = vlaneseq
    %v5511 = vshrl.u32 %v5510, 7
    %v5512 = vsub.s32 %v5509, %v5511
    %v5513 = vrot.slane %v5494, %v5512
    %v5515 = vunpack.c.l.s4 1983009808
    %v5516 = vunpack.c.0.s8 %v5515
    %v5517 = vlaneseq
    %v5518 = vshrl.u32 %v5517, 7
    %v5519 = vsub.s32 %v5516, %v5518
    %v5520 = vrot.slane %v5506, %v5519
    %v5521 = vcombine.high %v5501, %v3877
    %v5523 = vunpack.c.l.s4 1983009808
    %v5524 = vunpack.c.0.s8 %v5523
    %v5525 = vlaneseq
    %v5526 = vshrl.u32 %v5525, 7
    %v5527 = vsub.s32 %v5524, %v5526
    %v5528 = vrot.slane %v5501, %v5527
    %v5530 = vunpack.c.l.s4 1983009808
    %v5531 = vunpack.c.0.s8 %v5530
    %v5532 = vlaneseq
    %v5533 = vshrl.u32 %v5532, 7
    %v5534 = vsub.s32 %v5531, %v5533
    %v5535 = vrot.slane %v5521, %v5534
    %v5536 = vcombine.low %v5513, %v5528
    %v5537 = vcombine.high %v5513, %v5528
    %v5539 = vunpack.c.l.s4 1934713408
    %v5540 = vunpack.c.0.s8 %v5539
    %v5541 = vlaneseq
    %v5542 = vshrl.u32 %v5541, 7
    %v5543 = vsub.s32 %v5540, %v5542
    %v5544 = vrot.slane %v5536, %v5543
    %v5546 = vunpack.c.l.s4 1934713408
    %v5547 = vunpack.c.0.s8 %v5546
    %v5548 = vlaneseq
    %v5549 = vshrl.u32 %v5548, 7
    %v5550 = vsub.s32 %v5547, %v5549
    %v5551 = vrot.slane %v5537, %v5550
    %v5552 = vcombine.low %v5520, %v5535
    %v5553 = vcombine.high %v5520, %v5535
    %v5555 = vunpack.c.l.s4 1934713408
    %v5556 = vunpack.c.0.s8 %v5555
    %v5557 = vlaneseq
    %v5558 = vshrl.u32 %v5557, 7
    %v5559 = vsub.s32 %v5556, %v5558
    %v5560 = vrot.slane %v5552, %v5559
    %v5562 = vunpack.c.l.s4 1934713408
    %v5563 = vunpack.c.0.s8 %v5562
    %v5564 = vlaneseq
    %v5565 = vshrl.u32 %v5564, 7
    %v5566 = vsub.s32 %v5563, %v5565
    %v5567 = vrot.slane %v5553, %v5566
    %v5568 = vcombine.high %v5544, 0
    %v5569 = vcombine.high %v5551, 0
    %v5570 = vcombine.high %v5560, 0
    %v5571 = vcombine.high %v5567, 0
    %v5572 = vcombine.high %v5498, %v3879
    %v5574 = vunpack.c.l.s4 1983009808
    %v5575 = vunpack.c.0.s8 %v5574
    %v5576 = vlaneseq
    %v5577 = vshrl.u32 %v5576, 7
    %v5578 = vsub.s32 %v5575, %v5577
    %v5579 = vrot.slane %v5498, %v5578
    %v5581 = vunpack.c.l.s4 1983009808
    %v5582 = vunpack.c.0.s8 %v5581
    %v5583 = vlaneseq
    %v5584 = vshrl.u32 %v5583, 7
    %v5585 = vsub.s32 %v5582, %v5584
    %v5586 = vrot.slane %v5572, %v5585
    %v5587 = vcombine.high %v5504, %v3879
    %v5589 = vunpack.c.l.s4 1983009808
    %v5590 = vunpack.c.0.s8 %v5589
    %v5591 = vlaneseq
    %v5592 = vshrl.u32 %v5591, 7
    %v5593 = vsub.s32 %v5590, %v5592
    %v5594 = vrot.slane %v5504, %v5593
    %v5596 = vunpack.c.l.s4 1983009808
    %v5597 = vunpack.c.0.s8 %v5596
    %v5598 = vlaneseq
    %v5599 = vshrl.u32 %v5598, 7
    %v5600 = vsub.s32 %v5597, %v5599
    %v5601 = vrot.slane %v5587, %v5600
    %v5602 = vcombine.low %v5579, %v5594
    %v5603 = vcombine.high %v5579, %v5594
    %v5605 = vunpack.c.l.s4 1934713408
    %v5606 = vunpack.c.0.s8 %v5605
    %v5607 = vlaneseq
    %v5608 = vshrl.u32 %v5607, 7
    %v5609 = vsub.s32 %v5606, %v5608
    %v5610 = vrot.slane %v5602, %v5609
    %v5612 = vunpack.c.l.s4 1934713408
    %v5613 = vunpack.c.0.s8 %v5612
    %v5614 = vlaneseq
    %v5615 = vshrl.u32 %v5614, 7
    %v5616 = vsub.s32 %v5613, %v5615
    %v5617 = vrot.slane %v5603, %v5616
    %v5618 = vcombine.low %v5586, %v5601
    %v5619 = vcombine.high %v5586, %v5601
    %v5621 = vunpack.c.l.s4 1934713408
    %v5622 = vunpack.c.0.s8 %v5621
    %v5623 = vlaneseq
    %v5624 = vshrl.u32 %v5623, 7
    %v5625 = vsub.s32 %v5622, %v5624
    %v5626 = vrot.slane %v5618, %v5625
    %v5628 = vunpack.c.l.s4 1934713408
    %v5629 = vunpack.c.0.s8 %v5628
    %v5630 = vlaneseq
    %v5631 = vshrl.u32 %v5630, 7
    %v5632 = vsub.s32 %v5629, %v5631
    %v5633 = vrot.slane %v5619, %v5632
    %v5634 = vcombine.high %v5610, 0
    %v5635 = vcombine.high %v5617, 0
    %v5636 = vcombine.high %v5626, 0
    %v5637 = vcombine.high %v5633, 0
    %v5638 = vcombine.low %v5544, %v5551
    %v5640 = vunpack.c.l.s4 1983009808
    %v5641 = vunpack.c.0.s8 %v5640
    %v5642 = vlaneseq
    %v5643 = vshrl.u32 %v5642, 7
    %v5644 = vsub.s32 %v5641, %v5643
    %v5645 = vrot.slane %v5638, %v5644
    %v5646 = vcombine.low %v5568, %v5569
    %v5648 = vunpack.c.l.s4 1983009808
    %v5649 = vunpack.c.0.s8 %v5648
    %v5650 = vlaneseq
    %v5651 = vshrl.u32 %v5650, 7
    %v5652 = vsub.s32 %v5649, %v5651
    %v5653 = vrot.slane %v5646, %v5652
    %v5654 = vcombine.low %v5560, %v5567
    %v5656 = vunpack.c.l.s4 1983009808
    %v5657 = vunpack.c.0.s8 %v5656
    %v5658 = vlaneseq
    %v5659 = vshrl.u32 %v5658, 7
    %v5660 = vsub.s32 %v5657, %v5659
    %v5661 = vrot.slane %v5654, %v5660
    %v5662 = vcombine.low %v5570, %v5571
    %v5664 = vunpack.c.l.s4 1983009808
    %v5665 = vunpack.c.0.s8 %v5664
    %v5666 = vlaneseq
    %v5667 = vshrl.u32 %v5666, 7
    %v5668 = vsub.s32 %v5665, %v5667
    %v5669 = vrot.slane %v5662, %v5668
    %v5670 = vcombine.low %v5645, %v5653
    %v5672 = vunpack.c.l.s4 1934713408
    %v5673 = vunpack.c.0.s8 %v5672
    %v5674 = vlaneseq
    %v5675 = vshrl.u32 %v5674, 7
    %v5676 = vsub.s32 %v5673, %v5675
    %v5677 = vrot.slane %v5670, %v5676
    %v5678 = vcombine.low %v5661, %v5669
    %v5680 = vunpack.c.l.s4 1934713408
    %v5681 = vunpack.c.0.s8 %v5680
    %v5682 = vlaneseq
    %v5683 = vshrl.u32 %v5682, 7
    %v5684 = vsub.s32 %v5681, %v5683
    %v5685 = vrot.slane %v5678, %v5684
    %v5686 = vcombine.low %v5677, %v5685
    %v5687 = vcombine.high %v5677, %v5685
    %v5688 = vcombine.low %v5610, %v5617
    %v5690 = vunpack.c.l.s4 1983009808
    %v5691 = vunpack.c.0.s8 %v5690
    %v5692 = vlaneseq
    %v5693 = vshrl.u32 %v5692, 7
    %v5694 = vsub.s32 %v5691, %v5693
    %v5695 = vrot.slane %v5688, %v5694
    %v5696 = vcombine.low %v5634, %v5635
    %v5698 = vunpack.c.l.s4 1983009808
    %v5699 = vunpack.c.0.s8 %v5698
    %v5700 = vlaneseq
    %v5701 = vshrl.u32 %v5700, 7
    %v5702 = vsub.s32 %v5699, %v5701
    %v5703 = vrot.slane %v5696, %v5702
    %v5704 = vcombine.low %v5626, %v5633
    %v5706 = vunpack.c.l.s4 1983009808
    %v5707 = vunpack.c.0.s8 %v5706
    %v5708 = vlaneseq
    %v5709 = vshrl.u32 %v5708, 7
    %v5710 = vsub.s32 %v5707, %v5709
    %v5711 = vrot.slane %v5704, %v5710
    %v5712 = vcombine.low %v5636, %v5637
    %v5714 = vunpack.c.l.s4 1983009808
    %v5715 = vunpack.c.0.s8 %v5714
    %v5716 = vlaneseq
    %v5717 = vshrl.u32 %v5716, 7
    %v5718 = vsub.s32 %v5715, %v5717
    %v5719 = vrot.slane %v5712, %v5718
    %v5720 = vcombine.low %v5695, %v5703
    %v5722 = vunpack.c.l.s4 1934713408
    %v5723 = vunpack.c.0.s8 %v5722
    %v5724 = vlaneseq
    %v5725 = vshrl.u32 %v5724, 7
    %v5726 = vsub.s32 %v5723, %v5725
    %v5727 = vrot.slane %v5720, %v5726
    %v5728 = vcombine.low %v5711, %v5719
    %v5730 = vunpack.c.l.s4 1934713408
    %v5731 = vunpack.c.0.s8 %v5730
    %v5732 = vlaneseq
    %v5733 = vshrl.u32 %v5732, 7
    %v5734 = vsub.s32 %v5731, %v5733
    %v5735 = vrot.slane %v5728, %v5734
    %v5736 = vcombine.low %v5727, %v5735
    %v5737 = vcombine.high %v5727, %v5735
    %v5740 = vpack.i.b16 %v5736, %v5686
    %v5742 = vshrl.u32 %v5686, 16
    %v5743 = vshrl.u32 %v5736, 16
    %v5744 = vpack.i.b16 %v5743, %v5742
    %v5748 = vpack.i.b16 %v5737, %v5687
    %v5752 = vpack.i.b16 %v3755, %v3754
    %v5754 = vshrl.u32 %v3754, 16
    %v5755 = vshrl.u32 %v3755, 16
    %v5756 = vpack.i.b16 %v5755, %v5754
    %v5759 = vpack.i.b16 0, %v3756
    %v5761 = vshrl.u32 %v3756, 16
    %v5762 = vpack.i.b16 %v3874, %v5761
    %v5764 = vcombine.high %v5752, %v3877
    %v5766 = vunpack.c.l.s4 1983009808
    %v5767 = vunpack.c.0.s8 %v5766
    %v5768 = vlaneseq
    %v5769 = vshrl.u32 %v5768, 7
    %v5770 = vsub.s32 %v5767, %v5769
    %v5771 = vrot.slane %v5752, %v5770
    %v5773 = vunpack.c.l.s4 1983009808
    %v5774 = vunpack.c.0.s8 %v5773
    %v5775 = vlaneseq
    %v5776 = vshrl.u32 %v5775, 7
    %v5777 = vsub.s32 %v5774, %v5776
    %v5778 = vrot.slane %v5764, %v5777
    %v5779 = vcombine.high %v5759, %v3877
    %v5781 = vunpack.c.l.s4 1983009808
    %v5782 = vunpack.c.0.s8 %v5781
    %v5783 = vlaneseq
    %v5784 = vshrl.u32 %v5783, 7
    %v5785 = vsub.s32 %v5782, %v5784
    %v5786 = vrot.slane %v5759, %v5785
    %v5788 = vunpack.c.l.s4 1983009808
    %v5789 = vunpack.c.0.s8 %v5788
    %v5790 = vlaneseq
    %v5791 = vshrl.u32 %v5790, 7
    %v5792 = vsub.s32 %v5789, %v5791
    %v5793 = vrot.slane %v5779, %v5792
    %v5794 = vcombine.low %v5771, %v5786
    %v5795 = vcombine.high %v5771, %v5786
    %v5797 = vunpack.c.l.s4 1934713408
    %v5798 = vunpack.c.0.s8 %v5797
    %v5799 = vlaneseq
    %v5800 = vshrl.u32 %v5799, 7
    %v5801 = vsub.s32 %v5798, %v5800
    %v5802 = vrot.slane %v5794, %v5801
    %v5804 = vunpack.c.l.s4 1934713408
    %v5805 = vunpack.c.0.s8 %v5804
    %v5806 = vlaneseq
    %v5807 = vshrl.u32 %v5806, 7
    %v5808 = vsub.s32 %v5805, %v5807
    %v5809 = vrot.slane %v5795, %v5808
    %v5810 = vcombine.low %v5778, %v5793
    %v5811 = vcombine.high %v5778, %v5793
    %v5813 = vunpack.c.l.s4 1934713408
    %v5814 = vunpack.c.0.s8 %v5813
    %v5815 = vlaneseq
    %v5816 = vshrl.u32 %v5815, 7
    %v5817 = vsub.s32 %v5814, %v5816
    %v5818 = vrot.slane %v5810, %v5817
    %v5820 = vunpack.c.l.s4 1934713408
    %v5821 = vunpack.c.0.s8 %v5820
    %v5822 = vlaneseq
    %v5823 = vshrl.u32 %v5822, 7
    %v5824 = vsub.s32 %v5821, %v5823
    %v5825 = vrot.slane %v5811, %v5824
    %v5826 = vcombine.high %v5802, 0
    %v5827 = vcombine.high %v5809, 0
    %v5828 = vcombine.high %v5818, 0
    %v5829 = vcombine.high %v5825, 0
    %v5830 = vcombine.high %v5756, %v3879
    %v5832 = vunpack.c.l.s4 1983009808
    %v5833 = vunpack.c.0.s8 %v5832
    %v5834 = vlaneseq
    %v5835 = vshrl.u32 %v5834, 7
    %v5836 = vsub.s32 %v5833, %v5835
    %v5837 = vrot.slane %v5756, %v5836
    %v5839 = vunpack.c.l.s4 1983009808
    %v5840 = vunpack.c.0.s8 %v5839
    %v5841 = vlaneseq
    %v5842 = vshrl.u32 %v5841, 7
    %v5843 = vsub.s32 %v5840, %v5842
    %v5844 = vrot.slane %v5830, %v5843
    %v5845 = vcombine.high %v5762, %v3879
    %v5847 = vunpack.c.l.s4 1983009808
    %v5848 = vunpack.c.0.s8 %v5847
    %v5849 = vlaneseq
    %v5850 = vshrl.u32 %v5849, 7
    %v5851 = vsub.s32 %v5848, %v5850
    %v5852 = vrot.slane %v5762, %v5851
    %v5854 = vunpack.c.l.s4 1983009808
    %v5855 = vunpack.c.0.s8 %v5854
    %v5856 = vlaneseq
    %v5857 = vshrl.u32 %v5856, 7
    %v5858 = vsub.s32 %v5855, %v5857
    %v5859 = vrot.slane %v5845, %v5858
    %v5860 = vcombine.low %v5837, %v5852
    %v5861 = vcombine.high %v5837, %v5852
    %v5863 = vunpack.c.l.s4 1934713408
    %v5864 = vunpack.c.0.s8 %v5863
    %v5865 = vlaneseq
    %v5866 = vshrl.u32 %v5865, 7
    %v5867 = vsub.s32 %v5864, %v5866
    %v5868 = vrot.slane %v5860, %v5867
    %v5870 = vunpack.c.l.s4 1934713408
    %v5871 = vunpack.c.0.s8 %v5870
    %v5872 = vlaneseq
    %v5873 = vshrl.u32 %v5872, 7
    %v5874 = vsub.s32 %v5871, %v5873
    %v5875 = vrot.slane %v5861, %v5874
    %v5876 = vcombine.low %v5844, %v5859
    %v5877 = vcombine.high %v5844, %v5859
    %v5879 = vunpack.c.l.s4 1934713408
    %v5880 = vunpack.c.0.s8 %v5879
    %v5881 = vlaneseq
    %v5882 = vshrl.u32 %v5881, 7
    %v5883 = vsub.s32 %v5880, %v5882
    %v5884 = vrot.slane %v5876, %v5883
    %v5886 = vunpack.c.l.s4 1934713408
    %v5887 = vunpack.c.0.s8 %v5886
    %v5888 = vlaneseq
    %v5889 = vshrl.u32 %v5888, 7
    %v5890 = vsub.s32 %v5887, %v5889
    %v5891 = vrot.slane %v5877, %v5890
    %v5892 = vcombine.high %v5868, 0
    %v5893 = vcombine.high %v5875, 0
    %v5894 = vcombine.high %v5884, 0
    %v5895 = vcombine.high %v5891, 0
    %v5896 = vcombine.low %v5802, %v5809
    %v5898 = vunpack.c.l.s4 1983009808
    %v5899 = vunpack.c.0.s8 %v5898
    %v5900 = vlaneseq
    %v5901 = vshrl.u32 %v5900, 7
    %v5902 = vsub.s32 %v5899, %v5901
    %v5903 = vrot.slane %v5896, %v5902
    %v5904 = vcombine.low %v5826, %v5827
    %v5906 = vunpack.c.l.s4 1983009808
    %v5907 = vunpack.c.0.s8 %v5906
    %v5908 = vlaneseq
    %v5909 = vshrl.u32 %v5908, 7
    %v5910 = vsub.s32 %v5907, %v5909
    %v5911 = vrot.slane %v5904, %v5910
    %v5912 = vcombine.low %v5818, %v5825
    %v5914 = vunpack.c.l.s4 1983009808
    %v5915 = vunpack.c.0.s8 %v5914
    %v5916 = vlaneseq
    %v5917 = vshrl.u32 %v5916, 7
    %v5918 = vsub.s32 %v5915, %v5917
    %v5919 = vrot.slane %v5912, %v5918
    %v5920 = vcombine.low %v5828, %v5829
    %v5922 = vunpack.c.l.s4 1983009808
    %v5923 = vunpack.c.0.s8 %v5922
    %v5924 = vlaneseq
    %v5925 = vshrl.u32 %v5924, 7
    %v5926 = vsub.s32 %v5923, %v5925
    %v5927 = vrot.slane %v5920, %v5926
    %v5928 = vcombine.low %v5903, %v5911
    %v5930 = vunpack.c.l.s4 1934713408
    %v5931 = vunpack.c.0.s8 %v5930
    %v5932 = vlaneseq
    %v5933 = vshrl.u32 %v5932, 7
    %v5934 = vsub.s32 %v5931, %v5933
    %v5935 = vrot.slane %v5928, %v5934
    %v5936 = vcombine.low %v5919, %v5927
    %v5938 = vunpack.c.l.s4 1934713408
    %v5939 = vunpack.c.0.s8 %v5938
    %v5940 = vlaneseq
    %v5941 = vshrl.u32 %v5940, 7
    %v5942 = vsub.s32 %v5939, %v5941
    %v5943 = vrot.slane %v5936, %v5942
    %v5944 = vcombine.low %v5935, %v5943
    %v5945 = vcombine.high %v5935, %v5943
    %v5946 = vcombine.low %v5868, %v5875
    %v5948 = vunpack.c.l.s4 1983009808
    %v5949 = vunpack.c.0.s8 %v5948
    %v5950 = vlaneseq
    %v5951 = vshrl.u32 %v5950, 7
    %v5952 = vsub.s32 %v5949, %v5951
    %v5953 = vrot.slane %v5946, %v5952
    %v5954 = vcombine.low %v5892, %v5893
    %v5956 = vunpack.c.l.s4 1983009808
    %v5957 = vunpack.c.0.s8 %v5956
    %v5958 = vlaneseq
    %v5959 = vshrl.u32 %v5958, 7
    %v5960 = vsub.s32 %v5957, %v5959
    %v5961 = vrot.slane %v5954, %v5960
    %v5962 = vcombine.low %v5884, %v5891
    %v5964 = vunpack.c.l.s4 1983009808
    %v5965 = vunpack.c.0.s8 %v5964
    %v5966 = vlaneseq
    %v5967 = vshrl.u32 %v5966, 7
    %v5968 = vsub.s32 %v5965, %v5967
    %v5969 = vrot.slane %v5962, %v5968
    %v5970 = vcombine.low %v5894, %v5895
    %v5972 = vunpack.c.l.s4 1983009808
    %v5973 = vunpack.c.0.s8 %v5972
    %v5974 = vlaneseq
    %v5975 = vshrl.u32 %v5974, 7
    %v5976 = vsub.s32 %v5973, %v5975
    %v5977 = vrot.slane %v5970, %v5976
    %v5978 = vcombine.low %v5953, %v5961
    %v5980 = vunpack.c.l.s4 1934713408
    %v5981 = vunpack.c.0.s8 %v5980
    %v5982 = vlaneseq
    %v5983 = vshrl.u32 %v5982, 7
    %v5984 = vsub.s32 %v5981, %v5983
    %v5985 = vrot.slane %v5978, %v5984
    %v5986 = vcombine.low %v5969, %v5977
    %v5988 = vunpack.c.l.s4 1934713408
    %v5989 = vunpack.c.0.s8 %v5988
    %v5990 = vlaneseq
    %v5991 = vshrl.u32 %v5990, 7
    %v5992 = vsub.s32 %v5989, %v5991
    %v5993 = vrot.slane %v5986, %v5992
    %v5994 = vcombine.low %v5985, %v5993
    %v5995 = vcombine.high %v5985, %v5993
    %v5998 = vpack.i.b16 %v5994, %v5944
    %v6000 = vshrl.u32 %v5944, 16
    %v6001 = vshrl.u32 %v5994, 16
    %v6002 = vpack.i.b16 %v6001, %v6000
    %v6006 = vpack.i.b16 %v5995, %v5945
    %6008 = vmatprep.subr.bf16.mxu0 0
    %6009 = vmatpush1.bf16.xpose.msra.mxu0 %v5740
    %6010 = vmatprep.subr.bf16.mxu0 0
    %6011 = vmatpush1.bf16.xpose.msra.mxu0 0
    %6012 = vmatprep.subr.bf16.mxu0 0
    %6013 = vmatpush1.bf16.xpose.msra.mxu0 0
    %6014 = vmatprep.subr.bf16.mxu0 0
    %6015 = vmatpush1.bf16.xpose.msra.mxu0 0
    %6016 = vmatprep.subr.bf16.mxu0 0
    %6017 = vmatpush1.bf16.xpose.msra.mxu0 0
    %6018 = vmatprep.subr.bf16.mxu0 0
    %6019 = vmatpush1.bf16.xpose.msra.mxu0 0
    %6020 = vmatprep.subr.bf16.mxu0 0
    %6021 = vmatpush1.bf16.xpose.msra.mxu0 0
    %6022 = vmatprep.subr.bf16.mxu0 0
    %6023 = vmatpush1.bf16.xpose.msra.mxu0 0
    %6024 = vmatprep.subr.bf16.mxu0 0
    %6025 = vmatpush1.bf16.xpose.msra.mxu0 0
    %6026 = vmatprep.subr.bf16.mxu0 0
    %6027 = vmatpush1.bf16.xpose.msra.mxu0 0
    %6028 = vmatprep.subr.bf16.mxu0 0
    %6029 = vmatpush1.bf16.xpose.msra.mxu0 0
    %6030 = vmatprep.subr.bf16.mxu0 0
    %6031 = vmatpush1.bf16.xpose.msra.mxu0 0
    %6032 = vmatprep.subr.bf16.mxu0 0
    %6033 = vmatpush1.bf16.xpose.msra.mxu0 0
    %6034 = vmatprep.subr.bf16.mxu0 0
    %6035 = vmatpush1.bf16.xpose.msra.mxu0 0
    %6036 = vmatprep.subr.bf16.mxu0 0
    %6037 = vmatpush1.bf16.xpose.msra.mxu0 0
    %6038 = vmatprep.subr.bf16.mxu0 0
    %6039 = vmatpush1.bf16.xpose.msra.mxu0 0
    %6040 = vmatprep.mubr.bf16.mxu0 0
    %6041 = vmatmul.mubr.bf16.gmra.mrb[0].mxu0 %v5482
    %v6042 = vpop.f32.mrb[0].mxu0
    %v6043 = vadd.f32 %v3841, %v6042
    %v6044 = vpop.f32.mrb[0].mxu0
    %v6045 = vpop.f32.mrb[0].mxu0
    %v6046 = vadd.f32 %v3842, %v6045
    %v6047 = vpop.f32.mrb[0].mxu0
    %6048 = vdwg.mxu0
    %6049 = vmatprep.subr.bf16.mxu0 0
    %6050 = vmatpush1.bf16.xpose.msra.mxu0 %v5744
    %6051 = vmatprep.subr.bf16.mxu0 0
    %6052 = vmatpush1.bf16.xpose.msra.mxu0 0
    %6053 = vmatprep.subr.bf16.mxu0 0
    %6054 = vmatpush1.bf16.xpose.msra.mxu0 0
    %6055 = vmatprep.subr.bf16.mxu0 0
    %6056 = vmatpush1.bf16.xpose.msra.mxu0 0
    %6057 = vmatprep.subr.bf16.mxu0 0
    %6058 = vmatpush1.bf16.xpose.msra.mxu0 0
    %6059 = vmatprep.subr.bf16.mxu0 0
    %6060 = vmatpush1.bf16.xpose.msra.mxu0 0
    %6061 = vmatprep.subr.bf16.mxu0 0
    %6062 = vmatpush1.bf16.xpose.msra.mxu0 0
    %6063 = vmatprep.subr.bf16.mxu0 0
    %6064 = vmatpush1.bf16.xpose.msra.mxu0 0
    %6065 = vmatprep.subr.bf16.mxu0 0
    %6066 = vmatpush1.bf16.xpose.msra.mxu0 0
    %6067 = vmatprep.subr.bf16.mxu0 0
    %6068 = vmatpush1.bf16.xpose.msra.mxu0 0
    %6069 = vmatprep.subr.bf16.mxu0 0
    %6070 = vmatpush1.bf16.xpose.msra.mxu0 0
    %6071 = vmatprep.subr.bf16.mxu0 0
    %6072 = vmatpush1.bf16.xpose.msra.mxu0 0
    %6073 = vmatprep.subr.bf16.mxu0 0
    %6074 = vmatpush1.bf16.xpose.msra.mxu0 0
    %6075 = vmatprep.subr.bf16.mxu0 0
    %6076 = vmatpush1.bf16.xpose.msra.mxu0 0
    %6077 = vmatprep.subr.bf16.mxu0 0
    %6078 = vmatpush1.bf16.xpose.msra.mxu0 0
    %6079 = vmatprep.subr.bf16.mxu0 0
    %6080 = vmatpush1.bf16.xpose.msra.mxu0 0
    %6081 = vmatprep.mubr.bf16.mxu0 0
    %6082 = vmatmul.mubr.bf16.gmra.mrb[0].mxu0 %v5486
    %v6083 = vpop.f32.mrb[0].mxu0
    %v6084 = vadd.f32 %v3841, %v6083
    %v6085 = vpop.f32.mrb[0].mxu0
    %v6086 = vpop.f32.mrb[0].mxu0
    %v6087 = vadd.f32 %v3842, %v6086
    %v6088 = vpop.f32.mrb[0].mxu0
    %6089 = vdwg.mxu0
    %6090 = vmatprep.subr.bf16.mxu0 0
    %6091 = vmatpush1.bf16.xpose.msra.mxu0 %v5748
    %6092 = vmatprep.subr.bf16.mxu0 0
    %6093 = vmatpush1.bf16.xpose.msra.mxu0 0
    %6094 = vmatprep.subr.bf16.mxu0 0
    %6095 = vmatpush1.bf16.xpose.msra.mxu0 0
    %6096 = vmatprep.subr.bf16.mxu0 0
    %6097 = vmatpush1.bf16.xpose.msra.mxu0 0
    %6098 = vmatprep.subr.bf16.mxu0 0
    %6099 = vmatpush1.bf16.xpose.msra.mxu0 0
    %6100 = vmatprep.subr.bf16.mxu0 0
    %6101 = vmatpush1.bf16.xpose.msra.mxu0 0
    %6102 = vmatprep.subr.bf16.mxu0 0
    %6103 = vmatpush1.bf16.xpose.msra.mxu0 0
    %6104 = vmatprep.subr.bf16.mxu0 0
    %6105 = vmatpush1.bf16.xpose.msra.mxu0 0
    %6106 = vmatprep.subr.bf16.mxu0 0
    %6107 = vmatpush1.bf16.xpose.msra.mxu0 0
    %6108 = vmatprep.subr.bf16.mxu0 0
    %6109 = vmatpush1.bf16.xpose.msra.mxu0 0
    %6110 = vmatprep.subr.bf16.mxu0 0
    %6111 = vmatpush1.bf16.xpose.msra.mxu0 0
    %6112 = vmatprep.subr.bf16.mxu0 0
    %6113 = vmatpush1.bf16.xpose.msra.mxu0 0
    %6114 = vmatprep.subr.bf16.mxu0 0
    %6115 = vmatpush1.bf16.xpose.msra.mxu0 0
    %6116 = vmatprep.subr.bf16.mxu0 0
    %6117 = vmatpush1.bf16.xpose.msra.mxu0 0
    %6118 = vmatprep.subr.bf16.mxu0 0
    %6119 = vmatpush1.bf16.xpose.msra.mxu0 0
    %6120 = vmatprep.subr.bf16.mxu0 0
    %6121 = vmatpush1.bf16.xpose.msra.mxu0 0
    %6122 = vmatprep.mubr.bf16.mxu0 0
    %6123 = vmatmul.mubr.bf16.gmra.mrb[0].mxu0 %v5490
    %v6124 = vpop.f32.mrb[0].mxu0
    %v6125 = vadd.f32 %v3841, %v6124
    %v6126 = vpop.f32.mrb[0].mxu0
    %v6127 = vpop.f32.mrb[0].mxu0
    %v6128 = vadd.f32 %v3842, %v6127
    %v6129 = vpop.f32.mrb[0].mxu0
    %6130 = vdwg.mxu0
    %v6131 = vsel %vm4764, %v6043, -inf
    %6132 = vmax.xlane.f32.xlu0 %v6131
    %v6133 = vpop.xlane.xlu0 %6132
    %v6134 = vsel %vm4764, %v6046, -inf
    %6135 = vmax.xlane.f32.xlu0 %v6134
    %v6136 = vpop.xlane.xlu0 %6135
    %v6137 = vsel %vm4764, %v6084, -inf
    %6138 = vmax.xlane.f32.xlu0 %v6137
    %v6139 = vpop.xlane.xlu0 %6138
    %v6140 = vsel %vm4764, %v6087, -inf
    %6141 = vmax.xlane.f32.xlu0 %v6140
    %v6142 = vpop.xlane.xlu0 %6141
    %v6143 = vsel %vm4764, %v6125, -inf
    %6144 = vmax.xlane.f32.xlu0 %v6143
    %v6145 = vpop.xlane.xlu0 %6144
    %v6146 = vsel %vm4764, %v6128, -inf
    %6147 = vmax.xlane.f32.xlu0 %v6146
    %v6148 = vpop.xlane.xlu0 %6147
    %v6149 = vsub.f32 %v6043, %v6133
    %v6150 = vsub.f32 %v6046, %v6136
    %v6151 = vsub.f32 %v6084, %v6139
    %v6152 = vsub.f32 %v6087, %v6142
    %v6153 = vsub.f32 %v6125, %v6145
    %v6154 = vsub.f32 %v6128, %v6148
    %v6155 = vmul.f32 %v6149, 1.442695
    %v6156 = vpow.pop %v6155
    %v6157 = vmul.f32 %v6150, 1.442695
    %v6158 = vpow.pop %v6157
    %v6159 = vmul.f32 %v6151, 1.442695
    %v6160 = vpow.pop %v6159
    %v6161 = vmul.f32 %v6152, 1.442695
    %v6162 = vpow.pop %v6161
    %v6163 = vmul.f32 %v6153, 1.442695
    %v6164 = vpow.pop %v6163
    %v6165 = vmul.f32 %v6154, 1.442695
    %v6166 = vpow.pop %v6165
    %v6167 = vsel %vm4764, %v6156, 0.0
    %6168 = vadd.xlane.f32.xlu0 %v6167
    %v6169 = vpop.xlane.xlu0 %6168
    %v6170 = vsel %vm4764, %v6158, 0.0
    %6171 = vadd.xlane.f32.xlu0 %v6170
    %v6172 = vpop.xlane.xlu0 %6171
    %v6173 = vsel %vm4764, %v6160, 0.0
    %6174 = vadd.xlane.f32.xlu0 %v6173
    %v6175 = vpop.xlane.xlu0 %6174
    %v6176 = vsel %vm4764, %v6162, 0.0
    %6177 = vadd.xlane.f32.xlu0 %v6176
    %v6178 = vpop.xlane.xlu0 %6177
    %v6179 = vsel %vm4764, %v6164, 0.0
    %6180 = vadd.xlane.f32.xlu0 %v6179
    %v6181 = vpop.xlane.xlu0 %6180
    %v6182 = vsel %vm4764, %v6166, 0.0
    %6183 = vadd.xlane.f32.xlu0 %v6182
    %v6184 = vpop.xlane.xlu0 %6183
    %v6185 = vrcp.pop %v6169
    %v6186 = vrcp.pop %v6172
    %v6187 = vrcp.pop %v6175
    %v6188 = vrcp.pop %v6178
    %v6189 = vrcp.pop %v6181
    %v6190 = vrcp.pop %v6184
    %v6191 = vmul.f32 %v6156, %v6185
    %v6192 = vmul.f32 %v6158, %v6186
    %v6193 = vmul.f32 %v6160, %v6187
    %v6194 = vmul.f32 %v6162, %v6188
    %v6195 = vmul.f32 %v6164, %v6189
    %v6196 = vmul.f32 %v6166, %v6190
    %v6197 = vpack.c.bf16 %v6192, %v6191
    %v6198 = vpack.c.bf16 %v6194, %v6193
    %v6199 = vpack.c.bf16 %v6196, %v6195
    %v6201 = vsel %vm4764, %v6197, 0
    %6203 = vmatprep.subr.bf16.mxu0 0
    %6204 = vmatpush1.bf16.msra.mxu0 %v5998
    %6205 = vmatprep.subr.bf16.mxu0 0
    %6206 = vmatpush1.bf16.msra.mxu0 0
    %6207 = vmatprep.subr.bf16.mxu0 0
    %6208 = vmatpush1.bf16.msra.mxu0 0
    %6209 = vmatprep.subr.bf16.mxu0 0
    %6210 = vmatpush1.bf16.msra.mxu0 0
    %6211 = vmatprep.subr.bf16.mxu0 0
    %6212 = vmatpush1.bf16.msra.mxu0 0
    %6213 = vmatprep.subr.bf16.mxu0 0
    %6214 = vmatpush1.bf16.msra.mxu0 0
    %6215 = vmatprep.subr.bf16.mxu0 0
    %6216 = vmatpush1.bf16.msra.mxu0 0
    %6217 = vmatprep.subr.bf16.mxu0 0
    %6218 = vmatpush1.bf16.msra.mxu0 0
    %6219 = vmatprep.subr.bf16.mxu0 0
    %6220 = vmatpush1.bf16.msra.mxu0 0
    %6221 = vmatprep.subr.bf16.mxu0 0
    %6222 = vmatpush1.bf16.msra.mxu0 0
    %6223 = vmatprep.subr.bf16.mxu0 0
    %6224 = vmatpush1.bf16.msra.mxu0 0
    %6225 = vmatprep.subr.bf16.mxu0 0
    %6226 = vmatpush1.bf16.msra.mxu0 0
    %6227 = vmatprep.subr.bf16.mxu0 0
    %6228 = vmatpush1.bf16.msra.mxu0 0
    %6229 = vmatprep.subr.bf16.mxu0 0
    %6230 = vmatpush1.bf16.msra.mxu0 0
    %6231 = vmatprep.subr.bf16.mxu0 0
    %6232 = vmatpush1.bf16.msra.mxu0 0
    %6233 = vmatprep.subr.bf16.mxu0 0
    %6234 = vmatpush1.bf16.msra.mxu0 0
    %6235 = vmatprep.mubr.bf16.mxu0 0
    %6236 = vmatmul.mubr.bf16.gmra.mrb[0].mxu0 %v6201
    %v6237 = vpop.f32.mrb[0].mxu0
    %v6238 = vadd.f32 0.0, %v6237
    %v6239 = vpop.f32.mrb[0].mxu0
    %v6240 = vpop.f32.mrb[0].mxu0
    %v6241 = vadd.f32 0.0, %v6240
    %v6242 = vpop.f32.mrb[0].mxu0
    %6243 = vdwg.mxu0
    %v6245 = vsel %vm4764, %v6198, 0
    %6247 = vmatprep.subr.bf16.mxu0 0
    %6248 = vmatpush1.bf16.msra.mxu0 %v6002
    %6249 = vmatprep.subr.bf16.mxu0 0
    %6250 = vmatpush1.bf16.msra.mxu0 0
    %6251 = vmatprep.subr.bf16.mxu0 0
    %6252 = vmatpush1.bf16.msra.mxu0 0
    %6253 = vmatprep.subr.bf16.mxu0 0
    %6254 = vmatpush1.bf16.msra.mxu0 0
    %6255 = vmatprep.subr.bf16.mxu0 0
    %6256 = vmatpush1.bf16.msra.mxu0 0
    %6257 = vmatprep.subr.bf16.mxu0 0
    %6258 = vmatpush1.bf16.msra.mxu0 0
    %6259 = vmatprep.subr.bf16.mxu0 0
    %6260 = vmatpush1.bf16.msra.mxu0 0
    %6261 = vmatprep.subr.bf16.mxu0 0
    %6262 = vmatpush1.bf16.msra.mxu0 0
    %6263 = vmatprep.subr.bf16.mxu0 0
    %6264 = vmatpush1.bf16.msra.mxu0 0
    %6265 = vmatprep.subr.bf16.mxu0 0
    %6266 = vmatpush1.bf16.msra.mxu0 0
    %6267 = vmatprep.subr.bf16.mxu0 0
    %6268 = vmatpush1.bf16.msra.mxu0 0
    %6269 = vmatprep.subr.bf16.mxu0 0
    %6270 = vmatpush1.bf16.msra.mxu0 0
    %6271 = vmatprep.subr.bf16.mxu0 0
    %6272 = vmatpush1.bf16.msra.mxu0 0
    %6273 = vmatprep.subr.bf16.mxu0 0
    %6274 = vmatpush1.bf16.msra.mxu0 0
    %6275 = vmatprep.subr.bf16.mxu0 0
    %6276 = vmatpush1.bf16.msra.mxu0 0
    %6277 = vmatprep.subr.bf16.mxu0 0
    %6278 = vmatpush1.bf16.msra.mxu0 0
    %6279 = vmatprep.mubr.bf16.mxu0 0
    %6280 = vmatmul.mubr.bf16.gmra.mrb[0].mxu0 %v6245
    %v6281 = vpop.f32.mrb[0].mxu0
    %v6282 = vadd.f32 0.0, %v6281
    %v6283 = vpop.f32.mrb[0].mxu0
    %v6284 = vpop.f32.mrb[0].mxu0
    %v6285 = vadd.f32 0.0, %v6284
    %v6286 = vpop.f32.mrb[0].mxu0
    %6287 = vdwg.mxu0
    %v6289 = vsel %vm4764, %v6199, 0
    %6291 = vmatprep.subr.bf16.mxu0 0
    %6292 = vmatpush1.bf16.msra.mxu0 %v6006
    %6293 = vmatprep.subr.bf16.mxu0 0
    %6294 = vmatpush1.bf16.msra.mxu0 0
    %6295 = vmatprep.subr.bf16.mxu0 0
    %6296 = vmatpush1.bf16.msra.mxu0 0
    %6297 = vmatprep.subr.bf16.mxu0 0
    %6298 = vmatpush1.bf16.msra.mxu0 0
    %6299 = vmatprep.subr.bf16.mxu0 0
    %6300 = vmatpush1.bf16.msra.mxu0 0
    %6301 = vmatprep.subr.bf16.mxu0 0
    %6302 = vmatpush1.bf16.msra.mxu0 0
    %6303 = vmatprep.subr.bf16.mxu0 0
    %6304 = vmatpush1.bf16.msra.mxu0 0
    %6305 = vmatprep.subr.bf16.mxu0 0
    %6306 = vmatpush1.bf16.msra.mxu0 0
    %6307 = vmatprep.subr.bf16.mxu0 0
    %6308 = vmatpush1.bf16.msra.mxu0 0
    %6309 = vmatprep.subr.bf16.mxu0 0
    %6310 = vmatpush1.bf16.msra.mxu0 0
    %6311 = vmatprep.subr.bf16.mxu0 0
    %6312 = vmatpush1.bf16.msra.mxu0 0
    %6313 = vmatprep.subr.bf16.mxu0 0
    %6314 = vmatpush1.bf16.msra.mxu0 0
    %6315 = vmatprep.subr.bf16.mxu0 0
    %6316 = vmatpush1.bf16.msra.mxu0 0
    %6317 = vmatprep.subr.bf16.mxu0 0
    %6318 = vmatpush1.bf16.msra.mxu0 0
    %6319 = vmatprep.subr.bf16.mxu0 0
    %6320 = vmatpush1.bf16.msra.mxu0 0
    %6321 = vmatprep.subr.bf16.mxu0 0
    %6322 = vmatpush1.bf16.msra.mxu0 0
    %6323 = vmatprep.mubr.bf16.mxu0 0
    %6324 = vmatmul.mubr.bf16.gmra.mrb[0].mxu0 %v6289
    %v6325 = vpop.f32.mrb[0].mxu0
    %v6326 = vadd.f32 0.0, %v6325
    %v6327 = vpop.f32.mrb[0].mxu0
    %v6328 = vpop.f32.mrb[0].mxu0
    %v6329 = vadd.f32 0.0, %v6328
    %v6330 = vpop.f32.mrb[0].mxu0
    %6331 = vdwg.mxu0
    %v6332 = vcombine.low %v6238, %v6326
    %v6333 = vcombine.high %v6238, %v6326
    %v6335 = vunpack.c.l.s4 1983009808
    %v6336 = vunpack.c.0.s8 %v6335
    %v6337 = vlaneseq
    %v6338 = vshrl.u32 %v6337, 7
    %v6339 = vsub.s32 %v6336, %v6338
    %v6340 = vrot.slane %v6332, %v6339
    %v6342 = vunpack.c.l.s4 1983009808
    %v6343 = vunpack.c.0.s8 %v6342
    %v6344 = vlaneseq
    %v6345 = vshrl.u32 %v6344, 7
    %v6346 = vsub.s32 %v6343, %v6345
    %v6347 = vrot.slane %v6333, %v6346
    %v6348 = vcombine.high %v6282, 0.0
    %v6350 = vunpack.c.l.s4 1983009808
    %v6351 = vunpack.c.0.s8 %v6350
    %v6352 = vlaneseq
    %v6353 = vshrl.u32 %v6352, 7
    %v6354 = vsub.s32 %v6351, %v6353
    %v6355 = vrot.slane %v6282, %v6354
    %v6357 = vunpack.c.l.s4 1983009808
    %v6358 = vunpack.c.0.s8 %v6357
    %v6359 = vlaneseq
    %v6360 = vshrl.u32 %v6359, 7
    %v6361 = vsub.s32 %v6358, %v6360
    %v6362 = vrot.slane %v6348, %v6361
    %v6363 = vcombine.low %v6340, %v6355
    %v6364 = vcombine.high %v6340, %v6355
    %v6366 = vunpack.c.l.s4 1934713408
    %v6367 = vunpack.c.0.s8 %v6366
    %v6368 = vlaneseq
    %v6369 = vshrl.u32 %v6368, 7
    %v6370 = vsub.s32 %v6367, %v6369
    %v6371 = vrot.slane %v6363, %v6370
    %v6373 = vunpack.c.l.s4 1934713408
    %v6374 = vunpack.c.0.s8 %v6373
    %v6375 = vlaneseq
    %v6376 = vshrl.u32 %v6375, 7
    %v6377 = vsub.s32 %v6374, %v6376
    %v6378 = vrot.slane %v6364, %v6377
    %v6379 = vcombine.low %v6347, %v6362
    %v6380 = vcombine.high %v6347, %v6362
    %v6382 = vunpack.c.l.s4 1934713408
    %v6383 = vunpack.c.0.s8 %v6382
    %v6384 = vlaneseq
    %v6385 = vshrl.u32 %v6384, 7
    %v6386 = vsub.s32 %v6383, %v6385
    %v6387 = vrot.slane %v6379, %v6386
    %v6389 = vunpack.c.l.s4 1934713408
    %v6390 = vunpack.c.0.s8 %v6389
    %v6391 = vlaneseq
    %v6392 = vshrl.u32 %v6391, 7
    %v6393 = vsub.s32 %v6390, %v6392
    %v6394 = vrot.slane %v6380, %v6393
    %v6395 = vcombine.high %v6371, 0.0
    %v6396 = vcombine.high %v6378, 0.0
    %v6397 = vcombine.high %v6387, 0.0
    %v6398 = vcombine.high %v6394, 0.0
    %v6399 = vcombine.low %v6241, %v6329
    %v6400 = vcombine.high %v6241, %v6329
    %v6402 = vunpack.c.l.s4 1983009808
    %v6403 = vunpack.c.0.s8 %v6402
    %v6404 = vlaneseq
    %v6405 = vshrl.u32 %v6404, 7
    %v6406 = vsub.s32 %v6403, %v6405
    %v6407 = vrot.slane %v6399, %v6406
    %v6409 = vunpack.c.l.s4 1983009808
    %v6410 = vunpack.c.0.s8 %v6409
    %v6411 = vlaneseq
    %v6412 = vshrl.u32 %v6411, 7
    %v6413 = vsub.s32 %v6410, %v6412
    %v6414 = vrot.slane %v6400, %v6413
    %v6415 = vcombine.high %v6285, 0.0
    %v6417 = vunpack.c.l.s4 1983009808
    %v6418 = vunpack.c.0.s8 %v6417
    %v6419 = vlaneseq
    %v6420 = vshrl.u32 %v6419, 7
    %v6421 = vsub.s32 %v6418, %v6420
    %v6422 = vrot.slane %v6285, %v6421
    %v6424 = vunpack.c.l.s4 1983009808
    %v6425 = vunpack.c.0.s8 %v6424
    %v6426 = vlaneseq
    %v6427 = vshrl.u32 %v6426, 7
    %v6428 = vsub.s32 %v6425, %v6427
    %v6429 = vrot.slane %v6415, %v6428
    %v6430 = vcombine.low %v6407, %v6422
    %v6431 = vcombine.high %v6407, %v6422
    %v6433 = vunpack.c.l.s4 1934713408
    %v6434 = vunpack.c.0.s8 %v6433
    %v6435 = vlaneseq
    %v6436 = vshrl.u32 %v6435, 7
    %v6437 = vsub.s32 %v6434, %v6436
    %v6438 = vrot.slane %v6430, %v6437
    %v6440 = vunpack.c.l.s4 1934713408
    %v6441 = vunpack.c.0.s8 %v6440
    %v6442 = vlaneseq
    %v6443 = vshrl.u32 %v6442, 7
    %v6444 = vsub.s32 %v6441, %v6443
    %v6445 = vrot.slane %v6431, %v6444
    %v6446 = vcombine.low %v6414, %v6429
    %v6447 = vcombine.high %v6414, %v6429
    %v6449 = vunpack.c.l.s4 1934713408
    %v6450 = vunpack.c.0.s8 %v6449
    %v6451 = vlaneseq
    %v6452 = vshrl.u32 %v6451, 7
    %v6453 = vsub.s32 %v6450, %v6452
    %v6454 = vrot.slane %v6446, %v6453
    %v6456 = vunpack.c.l.s4 1934713408
    %v6457 = vunpack.c.0.s8 %v6456
    %v6458 = vlaneseq
    %v6459 = vshrl.u32 %v6458, 7
    %v6460 = vsub.s32 %v6457, %v6459
    %v6461 = vrot.slane %v6447, %v6460
    %v6462 = vcombine.high %v6438, 0.0
    %v6463 = vcombine.high %v6445, 0.0
    %v6464 = vcombine.high %v6454, 0.0
    %v6465 = vcombine.high %v6461, 0.0
    %v6466 = vcombine.low %v6371, %v6378
    %v6468 = vunpack.c.l.s4 1983009808
    %v6469 = vunpack.c.0.s8 %v6468
    %v6470 = vlaneseq
    %v6471 = vshrl.u32 %v6470, 7
    %v6472 = vsub.s32 %v6469, %v6471
    %v6473 = vrot.slane %v6466, %v6472
    %v6474 = vcombine.low %v6395, %v6396
    %v6476 = vunpack.c.l.s4 1983009808
    %v6477 = vunpack.c.0.s8 %v6476
    %v6478 = vlaneseq
    %v6479 = vshrl.u32 %v6478, 7
    %v6480 = vsub.s32 %v6477, %v6479
    %v6481 = vrot.slane %v6474, %v6480
    %v6482 = vcombine.low %v6387, %v6394
    %v6484 = vunpack.c.l.s4 1983009808
    %v6485 = vunpack.c.0.s8 %v6484
    %v6486 = vlaneseq
    %v6487 = vshrl.u32 %v6486, 7
    %v6488 = vsub.s32 %v6485, %v6487
    %v6489 = vrot.slane %v6482, %v6488
    %v6490 = vcombine.low %v6397, %v6398
    %v6492 = vunpack.c.l.s4 1983009808
    %v6493 = vunpack.c.0.s8 %v6492
    %v6494 = vlaneseq
    %v6495 = vshrl.u32 %v6494, 7
    %v6496 = vsub.s32 %v6493, %v6495
    %v6497 = vrot.slane %v6490, %v6496
    %v6498 = vcombine.low %v6473, %v6481
    %v6499 = vcombine.high %v6473, %v6481
    %v6501 = vunpack.c.l.s4 1934713408
    %v6502 = vunpack.c.0.s8 %v6501
    %v6503 = vlaneseq
    %v6504 = vshrl.u32 %v6503, 7
    %v6505 = vsub.s32 %v6502, %v6504
    %v6506 = vrot.slane %v6498, %v6505
    %v6508 = vunpack.c.l.s4 1934713408
    %v6509 = vunpack.c.0.s8 %v6508
    %v6510 = vlaneseq
    %v6511 = vshrl.u32 %v6510, 7
    %v6512 = vsub.s32 %v6509, %v6511
    %v6513 = vrot.slane %v6499, %v6512
    %v6514 = vcombine.low %v6489, %v6497
    %v6515 = vcombine.high %v6489, %v6497
    %v6517 = vunpack.c.l.s4 1934713408
    %v6518 = vunpack.c.0.s8 %v6517
    %v6519 = vlaneseq
    %v6520 = vshrl.u32 %v6519, 7
    %v6521 = vsub.s32 %v6518, %v6520
    %v6522 = vrot.slane %v6514, %v6521
    %v6524 = vunpack.c.l.s4 1934713408
    %v6525 = vunpack.c.0.s8 %v6524
    %v6526 = vlaneseq
    %v6527 = vshrl.u32 %v6526, 7
    %v6528 = vsub.s32 %v6525, %v6527
    %v6529 = vrot.slane %v6515, %v6528
    %v6530 = vcombine.low %v6506, %v6522
    %v6531 = vcombine.high %v6506, %v6522
    %v6532 = vcombine.low %v6513, %v6529
    %v6533 = vcombine.low %v6438, %v6445
    %v6535 = vunpack.c.l.s4 1983009808
    %v6536 = vunpack.c.0.s8 %v6535
    %v6537 = vlaneseq
    %v6538 = vshrl.u32 %v6537, 7
    %v6539 = vsub.s32 %v6536, %v6538
    %v6540 = vrot.slane %v6533, %v6539
    %v6541 = vcombine.low %v6462, %v6463
    %v6543 = vunpack.c.l.s4 1983009808
    %v6544 = vunpack.c.0.s8 %v6543
    %v6545 = vlaneseq
    %v6546 = vshrl.u32 %v6545, 7
    %v6547 = vsub.s32 %v6544, %v6546
    %v6548 = vrot.slane %v6541, %v6547
    %v6549 = vcombine.low %v6454, %v6461
    %v6551 = vunpack.c.l.s4 1983009808
    %v6552 = vunpack.c.0.s8 %v6551
    %v6553 = vlaneseq
    %v6554 = vshrl.u32 %v6553, 7
    %v6555 = vsub.s32 %v6552, %v6554
    %v6556 = vrot.slane %v6549, %v6555
    %v6557 = vcombine.low %v6464, %v6465
    %v6559 = vunpack.c.l.s4 1983009808
    %v6560 = vunpack.c.0.s8 %v6559
    %v6561 = vlaneseq
    %v6562 = vshrl.u32 %v6561, 7
    %v6563 = vsub.s32 %v6560, %v6562
    %v6564 = vrot.slane %v6557, %v6563
    %v6565 = vcombine.low %v6540, %v6548
    %v6566 = vcombine.high %v6540, %v6548
    %v6568 = vunpack.c.l.s4 1934713408
    %v6569 = vunpack.c.0.s8 %v6568
    %v6570 = vlaneseq
    %v6571 = vshrl.u32 %v6570, 7
    %v6572 = vsub.s32 %v6569, %v6571
    %v6573 = vrot.slane %v6565, %v6572
    %v6575 = vunpack.c.l.s4 1934713408
    %v6576 = vunpack.c.0.s8 %v6575
    %v6577 = vlaneseq
    %v6578 = vshrl.u32 %v6577, 7
    %v6579 = vsub.s32 %v6576, %v6578
    %v6580 = vrot.slane %v6566, %v6579
    %v6581 = vcombine.low %v6556, %v6564
    %v6582 = vcombine.high %v6556, %v6564
    %v6584 = vunpack.c.l.s4 1934713408
    %v6585 = vunpack.c.0.s8 %v6584
    %v6586 = vlaneseq
    %v6587 = vshrl.u32 %v6586, 7
    %v6588 = vsub.s32 %v6585, %v6587
    %v6589 = vrot.slane %v6581, %v6588
    %v6591 = vunpack.c.l.s4 1934713408
    %v6592 = vunpack.c.0.s8 %v6591
    %v6593 = vlaneseq
    %v6594 = vshrl.u32 %v6593, 7
    %v6595 = vsub.s32 %v6592, %v6594
    %v6596 = vrot.slane %v6582, %v6595
    %v6597 = vcombine.low %v6573, %v6589
    %v6598 = vcombine.high %v6573, %v6589
    %v6599 = vcombine.low %v6580, %v6596
    %v6600 = vpack.c.bf16 %v5231, %v5164
    %v6601 = vpack.c.bf16 %v5232, %v5165
    %v6602 = vpack.c.bf16 %v5233, %v5166
    %v6603 = vpack.c.bf16 %v6597, %v6530
    %v6604 = vpack.c.bf16 %v6598, %v6531
    %v6605 = vpack.c.bf16 %v6599, %v6532
    %v6606 = vld [vmem:[#allocation19] sm:$0xff]
    %v6607 = vld [vmem:[#allocation19 + $0x8] sm:$0xf]
    %v6608 = vld [vmem:[#allocation19 + $0xc] sm:$0xff]
    %v6609 = vld [vmem:[#allocation19 + $0x14] sm:$0xf]
    %v6610 = vld [vmem:[#allocation19 + $0x18] sm:$0xff]
    %v6611 = vld [vmem:[#allocation19 + $0x20] sm:$0xf]
    %v6612 = vld [vmem:[#allocation19 + $0x24] sm:$0xff]
    %v6613 = vld [vmem:[#allocation19 + $0x2c] sm:$0xf]
    %v6614 = vld [vmem:[#allocation19 + $0x30] sm:$0xff]
    %v6615 = vld [vmem:[#allocation19 + $0x38] sm:$0xf]
    %v6616 = vld [vmem:[#allocation19 + $0x3c] sm:$0xff]
    %v6617 = vld [vmem:[#allocation19 + $0x44] sm:$0xf]
    %v6618 = vld [vmem:[#allocation19 + $0x48] sm:$0xff]
    %v6619 = vld [vmem:[#allocation19 + $0x50] sm:$0xf]
    %v6620 = vld [vmem:[#allocation19 + $0x54] sm:$0xff]
    %v6621 = vld [vmem:[#allocation19 + $0x5c] sm:$0xf]
    %v6622 = vld [vmem:[#allocation19 + $0x60] sm:$0xff]
    %v6623 = vld [vmem:[#allocation19 + $0x68] sm:$0xf]
    %v6624 = vld [vmem:[#allocation19 + $0x6c] sm:$0xff]
    %v6625 = vld [vmem:[#allocation19 + $0x74] sm:$0xf]
    %v6626 = vld [vmem:[#allocation19 + $0x78] sm:$0xff]
    %v6627 = vld [vmem:[#allocation19 + $0x80] sm:$0xf]
    %v6628 = vld [vmem:[#allocation19 + $0x84] sm:$0xff]
    %v6629 = vld [vmem:[#allocation19 + $0x8c] sm:$0xf]
    %v6630 = vld [vmem:[#allocation19 + $0x90] sm:$0xff]
    %v6631 = vld [vmem:[#allocation19 + $0x98] sm:$0xf]
    %v6632 = vld [vmem:[#allocation19 + $0x9c] sm:$0xff]
    %v6633 = vld [vmem:[#allocation19 + $0xa4] sm:$0xf]
    %v6634 = vld [vmem:[#allocation19 + $0xa8] sm:$0xff]
    %v6635 = vld [vmem:[#allocation19 + $0xb0] sm:$0xf]
    %v6636 = vld [vmem:[#allocation19 + $0xb4] sm:$0xff]
    %v6637 = vld [vmem:[#allocation19 + $0xbc] sm:$0xf]
    %v6638 = vld [vmem:[#allocation19 + $0xc0] sm:$0xff]
    %v6639 = vld [vmem:[#allocation19 + $0xc8] sm:$0xf]
    %v6640 = vld [vmem:[#allocation19 + $0xcc] sm:$0xff]
    %v6641 = vld [vmem:[#allocation19 + $0xd4] sm:$0xf]
    %v6642 = vld [vmem:[#allocation19 + $0xd8] sm:$0xff]
    %v6643 = vld [vmem:[#allocation19 + $0xe0] sm:$0xf]
    %v6644 = vld [vmem:[#allocation19 + $0xe4] sm:$0xff]
    %v6645 = vld [vmem:[#allocation19 + $0xec] sm:$0xf]
    %v6646 = vld [vmem:[#allocation19 + $0xf0] sm:$0xff]
    %v6647 = vld [vmem:[#allocation19 + $0xf8] sm:$0xf]
    %v6648 = vld [vmem:[#allocation19 + $0xfc] sm:$0xff]
    %v6649 = vld [vmem:[#allocation19 + $0x104] sm:$0xf]
    %v6650 = vld [vmem:[#allocation19 + $0x108] sm:$0xff]
    %v6651 = vld [vmem:[#allocation19 + $0x110] sm:$0xf]
    %v6652 = vld [vmem:[#allocation19 + $0x114] sm:$0xff]
    %v6653 = vld [vmem:[#allocation19 + $0x11c] sm:$0xf]
    %v6654 = vld [vmem:[#allocation19 + $0x120] sm:$0xff]
    %v6655 = vld [vmem:[#allocation19 + $0x128] sm:$0xf]
    %v6656 = vld [vmem:[#allocation19 + $0x12c] sm:$0xff]
    %v6657 = vld [vmem:[#allocation19 + $0x134] sm:$0xf]
    %v6658 = vld [vmem:[#allocation19 + $0x138] sm:$0xff]
    %v6659 = vld [vmem:[#allocation19 + $0x140] sm:$0xf]
    %v6660 = vld [vmem:[#allocation19 + $0x144] sm:$0xff]
    %v6661 = vld [vmem:[#allocation19 + $0x14c] sm:$0xf]
    %v6662 = vld [vmem:[#allocation19 + $0x150] sm:$0xff]
    %v6663 = vld [vmem:[#allocation19 + $0x158] sm:$0xf]
    %v6664 = vld [vmem:[#allocation19 + $0x15c] sm:$0xff]
    %v6665 = vld [vmem:[#allocation19 + $0x164] sm:$0xf]
    %v6666 = vld [vmem:[#allocation19 + $0x168] sm:$0xff]
    %v6667 = vld [vmem:[#allocation19 + $0x170] sm:$0xf]
    %v6668 = vld [vmem:[#allocation19 + $0x174] sm:$0xff]
    %v6669 = vld [vmem:[#allocation19 + $0x17c] sm:$0xf]
    %v6670 = vld [vmem:[#allocation19 + $0x180] sm:$0xff]
    %v6671 = vld [vmem:[#allocation19 + $0x188] sm:$0xf]
    %v6672 = vld [vmem:[#allocation19 + $0x18c] sm:$0xff]
    %v6673 = vld [vmem:[#allocation19 + $0x194] sm:$0xf]
    %v6674 = vld [vmem:[#allocation19 + $0x198] sm:$0xff]
    %v6675 = vld [vmem:[#allocation19 + $0x1a0] sm:$0xf]
    %v6676 = vld [vmem:[#allocation19 + $0x1a4] sm:$0xff]
    %v6677 = vld [vmem:[#allocation19 + $0x1ac] sm:$0xf]
    %v6678 = vld [vmem:[#allocation19 + $0x1b0] sm:$0xff]
    %v6679 = vld [vmem:[#allocation19 + $0x1b8] sm:$0xf]
    %v6680 = vld [vmem:[#allocation19 + $0x1bc] sm:$0xff]
    %v6681 = vld [vmem:[#allocation19 + $0x1c4] sm:$0xf]
    %v6682 = vld [vmem:[#allocation19 + $0x1c8] sm:$0xff]
    %v6683 = vld [vmem:[#allocation19 + $0x1d0] sm:$0xf]
    %v6684 = vld [vmem:[#allocation19 + $0x1d4] sm:$0xff]
    %v6685 = vld [vmem:[#allocation19 + $0x1dc] sm:$0xf]
    %v6686 = vld [vmem:[#allocation19 + $0x1e0] sm:$0xff]
    %v6687 = vld [vmem:[#allocation19 + $0x1e8] sm:$0xf]
    %v6688 = vld [vmem:[#allocation19 + $0x1ec] sm:$0xff]
    %v6689 = vld [vmem:[#allocation19 + $0x1f4] sm:$0xf]
    %v6690 = vld [vmem:[#allocation19 + $0x1f8] sm:$0xff]
    %v6691 = vld [vmem:[#allocation19 + $0x200] sm:$0xf]
    %v6692 = vld [vmem:[#allocation19 + $0x204] sm:$0xff]
    %v6693 = vld [vmem:[#allocation19 + $0x20c] sm:$0xf]
    %v6694 = vld [vmem:[#allocation19 + $0x210] sm:$0xff]
    %v6695 = vld [vmem:[#allocation19 + $0x218] sm:$0xf]
    %v6696 = vld [vmem:[#allocation19 + $0x21c] sm:$0xff]
    %v6697 = vld [vmem:[#allocation19 + $0x224] sm:$0xf]
    %v6698 = vld [vmem:[#allocation19 + $0x228] sm:$0xff]
    %v6699 = vld [vmem:[#allocation19 + $0x230] sm:$0xf]
    %v6700 = vld [vmem:[#allocation19 + $0x234] sm:$0xff]
    %v6701 = vld [vmem:[#allocation19 + $0x23c] sm:$0xf]
    %v6798 = vunpack.c.l.b16 %v6606
    %v6799 = vunpack.c.h.b16 %v6606
    %v6800 = vunpack.c.l.b16 %v6607
    %v6801 = vunpack.c.l.b16 %v6608
    %v6802 = vunpack.c.h.b16 %v6608
    %v6803 = vunpack.c.l.b16 %v6609
    %v6804 = vunpack.c.l.b16 %v6610
    %v6805 = vunpack.c.h.b16 %v6610
    %v6806 = vunpack.c.l.b16 %v6611
    %v6807 = vunpack.c.l.b16 %v6612
    %v6808 = vunpack.c.h.b16 %v6612
    %v6809 = vunpack.c.l.b16 %v6613
    %v6810 = vunpack.c.l.b16 %v6614
    %v6811 = vunpack.c.h.b16 %v6614
    %v6812 = vunpack.c.l.b16 %v6615
    %v6813 = vunpack.c.l.b16 %v6616
    %v6814 = vunpack.c.h.b16 %v6616
    %v6815 = vunpack.c.l.b16 %v6617
    %v6816 = vunpack.c.l.b16 %v6618
    %v6817 = vunpack.c.h.b16 %v6618
    %v6818 = vunpack.c.l.b16 %v6619
    %v6819 = vunpack.c.l.b16 %v6620
    %v6820 = vunpack.c.h.b16 %v6620
    %v6821 = vunpack.c.l.b16 %v6621
    %v6822 = vunpack.c.l.b16 %v6622
    %v6823 = vunpack.c.h.b16 %v6622
    %v6824 = vunpack.c.l.b16 %v6623
    %v6825 = vunpack.c.l.b16 %v6624
    %v6826 = vunpack.c.h.b16 %v6624
    %v6827 = vunpack.c.l.b16 %v6625
    %v6828 = vunpack.c.l.b16 %v6626
    %v6829 = vunpack.c.h.b16 %v6626
    %v6830 = vunpack.c.l.b16 %v6627
    %v6831 = vunpack.c.l.b16 %v6628
    %v6832 = vunpack.c.h.b16 %v6628
    %v6833 = vunpack.c.l.b16 %v6629
    %v6834 = vunpack.c.l.b16 %v6630
    %v6835 = vunpack.c.h.b16 %v6630
    %v6836 = vunpack.c.l.b16 %v6631
    %v6837 = vunpack.c.l.b16 %v6632
    %v6838 = vunpack.c.h.b16 %v6632
    %v6839 = vunpack.c.l.b16 %v6633
    %v6840 = vunpack.c.l.b16 %v6634
    %v6841 = vunpack.c.h.b16 %v6634
    %v6842 = vunpack.c.l.b16 %v6635
    %v6843 = vunpack.c.l.b16 %v6636
    %v6844 = vunpack.c.h.b16 %v6636
    %v6845 = vunpack.c.l.b16 %v6637
    %v6846 = vunpack.c.l.b16 %v6638
    %v6847 = vunpack.c.h.b16 %v6638
    %v6848 = vunpack.c.l.b16 %v6639
    %v6849 = vunpack.c.l.b16 %v6640
    %v6850 = vunpack.c.h.b16 %v6640
    %v6851 = vunpack.c.l.b16 %v6641
    %v6852 = vunpack.c.l.b16 %v6642
    %v6853 = vunpack.c.h.b16 %v6642
    %v6854 = vunpack.c.l.b16 %v6643
    %v6855 = vunpack.c.l.b16 %v6644
    %v6856 = vunpack.c.h.b16 %v6644
    %v6857 = vunpack.c.l.b16 %v6645
    %v6858 = vunpack.c.l.b16 %v6646
    %v6859 = vunpack.c.h.b16 %v6646
    %v6860 = vunpack.c.l.b16 %v6647
    %v6861 = vunpack.c.l.b16 %v6648
    %v6862 = vunpack.c.h.b16 %v6648
    %v6863 = vunpack.c.l.b16 %v6649
    %v6864 = vunpack.c.l.b16 %v6650
    %v6865 = vunpack.c.h.b16 %v6650
    %v6866 = vunpack.c.l.b16 %v6651
    %v6867 = vunpack.c.l.b16 %v6652
    %v6868 = vunpack.c.h.b16 %v6652
    %v6869 = vunpack.c.l.b16 %v6653
    %v6870 = vunpack.c.l.b16 %v6654
    %v6871 = vunpack.c.h.b16 %v6654
    %v6872 = vunpack.c.l.b16 %v6655
    %v6873 = vunpack.c.l.b16 %v6656
    %v6874 = vunpack.c.h.b16 %v6656
    %v6875 = vunpack.c.l.b16 %v6657
    %v6876 = vunpack.c.l.b16 %v6658
    %v6877 = vunpack.c.h.b16 %v6658
    %v6878 = vunpack.c.l.b16 %v6659
    %v6879 = vunpack.c.l.b16 %v6660
    %v6880 = vunpack.c.h.b16 %v6660
    %v6881 = vunpack.c.l.b16 %v6661
    %v6882 = vunpack.c.l.b16 %v6662
    %v6883 = vunpack.c.h.b16 %v6662
    %v6884 = vunpack.c.l.b16 %v6663
    %v6885 = vunpack.c.l.b16 %v6664
    %v6886 = vunpack.c.h.b16 %v6664
    %v6887 = vunpack.c.l.b16 %v6665
    %v6888 = vunpack.c.l.b16 %v6666
    %v6889 = vunpack.c.h.b16 %v6666
    %v6890 = vunpack.c.l.b16 %v6667
    %v6891 = vunpack.c.l.b16 %v6668
    %v6892 = vunpack.c.h.b16 %v6668
    %v6893 = vunpack.c.l.b16 %v6669
    %v6894 = vunpack.c.l.b16 %v6670
    %v6895 = vunpack.c.h.b16 %v6670
    %v6896 = vunpack.c.l.b16 %v6671
    %v6897 = vunpack.c.l.b16 %v6672
    %v6898 = vunpack.c.h.b16 %v6672
    %v6899 = vunpack.c.l.b16 %v6673
    %v6900 = vunpack.c.l.b16 %v6674
    %v6901 = vunpack.c.h.b16 %v6674
    %v6902 = vunpack.c.l.b16 %v6675
    %v6903 = vunpack.c.l.b16 %v6676
    %v6904 = vunpack.c.h.b16 %v6676
    %v6905 = vunpack.c.l.b16 %v6677
    %v6906 = vunpack.c.l.b16 %v6678
    %v6907 = vunpack.c.h.b16 %v6678
    %v6908 = vunpack.c.l.b16 %v6679
    %v6909 = vunpack.c.l.b16 %v6680
    %v6910 = vunpack.c.h.b16 %v6680
    %v6911 = vunpack.c.l.b16 %v6681
    %v6912 = vunpack.c.l.b16 %v6682
    %v6913 = vunpack.c.h.b16 %v6682
    %v6914 = vunpack.c.l.b16 %v6683
    %v6915 = vunpack.c.l.b16 %v6684
    %v6916 = vunpack.c.h.b16 %v6684
    %v6917 = vunpack.c.l.b16 %v6685
    %v6918 = vunpack.c.l.b16 %v6686
    %v6919 = vunpack.c.h.b16 %v6686
    %v6920 = vunpack.c.l.b16 %v6687
    %v6921 = vunpack.c.l.b16 %v6688
    %v6922 = vunpack.c.h.b16 %v6688
    %v6923 = vunpack.c.l.b16 %v6689
    %v6924 = vunpack.c.l.b16 %v6690
    %v6925 = vunpack.c.h.b16 %v6690
    %v6926 = vunpack.c.l.b16 %v6691
    %v6927 = vunpack.c.l.b16 %v6692
    %v6928 = vunpack.c.h.b16 %v6692
    %v6929 = vunpack.c.l.b16 %v6693
    %v6930 = vunpack.c.l.b16 %v6694
    %v6931 = vunpack.c.h.b16 %v6694
    %v6932 = vunpack.c.l.b16 %v6695
    %v6933 = vunpack.c.l.b16 %v6696
    %v6934 = vunpack.c.h.b16 %v6696
    %v6935 = vunpack.c.l.b16 %v6697
    %v6936 = vunpack.c.l.b16 %v6698
    %v6937 = vunpack.c.h.b16 %v6698
    %v6938 = vunpack.c.l.b16 %v6699
    %v6939 = vunpack.c.l.b16 %v6700
    %v6940 = vunpack.c.h.b16 %v6700
    %v6941 = vunpack.c.l.b16 %v6701
    %v6942 = vpack.c.b16 %v6801, %v6798
    %v6943 = vpack.c.b16 %v6802, %v6799
    %v6944 = vpack.c.b16 %v6803, %v6800
    %v6945 = vpack.c.b16 %v6807, %v6804
    %v6946 = vpack.c.b16 %v6808, %v6805
    %v6947 = vpack.c.b16 %v6809, %v6806
    %v6948 = vpack.c.b16 %v6813, %v6810
    %v6949 = vpack.c.b16 %v6814, %v6811
    %v6950 = vpack.c.b16 %v6815, %v6812
    %v6951 = vpack.c.b16 %v6819, %v6816
    %v6952 = vpack.c.b16 %v6820, %v6817
    %v6953 = vpack.c.b16 %v6821, %v6818
    %v6954 = vpack.c.b16 %v6825, %v6822
    %v6955 = vpack.c.b16 %v6826, %v6823
    %v6956 = vpack.c.b16 %v6827, %v6824
    %v6957 = vpack.c.b16 %v6831, %v6828
    %v6958 = vpack.c.b16 %v6832, %v6829
    %v6959 = vpack.c.b16 %v6833, %v6830
    %v6960 = vpack.c.b16 %v6837, %v6834
    %v6961 = vpack.c.b16 %v6838, %v6835
    %v6962 = vpack.c.b16 %v6839, %v6836
    %v6963 = vpack.c.b16 %v6843, %v6840
    %v6964 = vpack.c.b16 %v6844, %v6841
    %v6965 = vpack.c.b16 %v6845, %v6842
    %v6966 = vpack.c.b16 %v6849, %v6846
    %v6967 = vpack.c.b16 %v6850, %v6847
    %v6968 = vpack.c.b16 %v6851, %v6848
    %v6969 = vpack.c.b16 %v6855, %v6852
    %v6970 = vpack.c.b16 %v6856, %v6853
    %v6971 = vpack.c.b16 %v6857, %v6854
    %v6972 = vpack.c.b16 %v6861, %v6858
    %v6973 = vpack.c.b16 %v6862, %v6859
    %v6974 = vpack.c.b16 %v6863, %v6860
    %v6975 = vpack.c.b16 %v6867, %v6864
    %v6976 = vpack.c.b16 %v6868, %v6865
    %v6977 = vpack.c.b16 %v6869, %v6866
    %v6978 = vpack.c.b16 %v6873, %v6870
    %v6979 = vpack.c.b16 %v6874, %v6871
    %v6980 = vpack.c.b16 %v6875, %v6872
    %v6981 = vpack.c.b16 %v6879, %v6876
    %v6982 = vpack.c.b16 %v6880, %v6877
    %v6983 = vpack.c.b16 %v6881, %v6878
    %v6984 = vpack.c.b16 %v6885, %v6882
    %v6985 = vpack.c.b16 %v6886, %v6883
    %v6986 = vpack.c.b16 %v6887, %v6884
    %v6987 = vpack.c.b16 %v6891, %v6888
    %v6988 = vpack.c.b16 %v6892, %v6889
    %v6989 = vpack.c.b16 %v6893, %v6890
    %v6990 = vpack.c.b16 %v6897, %v6894
    %v6991 = vpack.c.b16 %v6898, %v6895
    %v6992 = vpack.c.b16 %v6899, %v6896
    %v6993 = vpack.c.b16 %v6903, %v6900
    %v6994 = vpack.c.b16 %v6904, %v6901
    %v6995 = vpack.c.b16 %v6905, %v6902
    %v6996 = vpack.c.b16 %v6909, %v6906
    %v6997 = vpack.c.b16 %v6910, %v6907
    %v6998 = vpack.c.b16 %v6911, %v6908
    %v6999 = vpack.c.b16 %v6915, %v6912
    %v7000 = vpack.c.b16 %v6916, %v6913
    %v7001 = vpack.c.b16 %v6917, %v6914
    %v7002 = vpack.c.b16 %v6921, %v6918
    %v7003 = vpack.c.b16 %v6922, %v6919
    %v7004 = vpack.c.b16 %v6923, %v6920
    %v7005 = vpack.c.b16 %v6927, %v6924
    %v7006 = vpack.c.b16 %v6928, %v6925
    %v7007 = vpack.c.b16 %v6929, %v6926
    %v7008 = vpack.c.b16 %v6933, %v6930
    %v7009 = vpack.c.b16 %v6934, %v6931
    %v7010 = vpack.c.b16 %v6935, %v6932
    %v7011 = vpack.c.b16 %v6939, %v6936
    %v7012 = vpack.c.b16 %v6940, %v6937
    %v7013 = vpack.c.b16 %v6941, %v6938
    %7086 = vmatprep.subr.bf16.mxu0 %v6943
    %7087 = vmatpush1.bf16.msra.mxu0 %v6942
    %7088 = vmatprep.subr.bf16.mxu0 %v6946
    %7089 = vmatpush1.bf16.msra.mxu0 %v6945
    %7090 = vmatprep.subr.bf16.mxu0 %v6949
    %7091 = vmatpush1.bf16.msra.mxu0 %v6948
    %7092 = vmatprep.subr.bf16.mxu0 %v6952
    %7093 = vmatpush1.bf16.msra.mxu0 %v6951
    %7094 = vmatprep.subr.bf16.mxu0 %v6955
    %7095 = vmatpush1.bf16.msra.mxu0 %v6954
    %7096 = vmatprep.subr.bf16.mxu0 %v6958
    %7097 = vmatpush1.bf16.msra.mxu0 %v6957
    %7098 = vmatprep.subr.bf16.mxu0 %v6961
    %7099 = vmatpush1.bf16.msra.mxu0 %v6960
    %7100 = vmatprep.subr.bf16.mxu0 %v6964
    %7101 = vmatpush1.bf16.msra.mxu0 %v6963
    %7102 = vmatprep.subr.bf16.mxu0 %v6967
    %7103 = vmatpush1.bf16.msra.mxu0 %v6966
    %7104 = vmatprep.subr.bf16.mxu0 %v6970
    %7105 = vmatpush1.bf16.msra.mxu0 %v6969
    %7106 = vmatprep.subr.bf16.mxu0 %v6973
    %7107 = vmatpush1.bf16.msra.mxu0 %v6972
    %7108 = vmatprep.subr.bf16.mxu0 %v6976
    %7109 = vmatpush1.bf16.msra.mxu0 %v6975
    %7110 = vmatprep.subr.bf16.mxu0 %v6979
    %7111 = vmatpush1.bf16.msra.mxu0 %v6978
    %7112 = vmatprep.subr.bf16.mxu0 %v6982
    %7113 = vmatpush1.bf16.msra.mxu0 %v6981
    %7114 = vmatprep.subr.bf16.mxu0 %v6985
    %7115 = vmatpush1.bf16.msra.mxu0 %v6984
    %7116 = vmatprep.subr.bf16.mxu0 %v6988
    %7117 = vmatpush1.bf16.msra.mxu0 %v6987
    %7118 = vmatprep.mubr.bf16.mxu0 %v6601
    %7119 = vmatmul.mubr.bf16.gmra.mrb[0].mxu0 %v6600
    %v7120 = vpop.f32.mrb[0].mxu0
    %v7121 = vadd.f32 0.0, %v7120
    %v7122 = vpop.f32.mrb[0].mxu0
    %v7123 = vadd.f32 0.0, %v7122
    %v7124 = vpop.f32.mrb[0].mxu0
    %v7125 = vadd.f32 0.0, %v7124
    %v7126 = vpop.f32.mrb[0].mxu0
    %v7127 = vadd.f32 0.0, %v7126
    %7128 = vmatprep.mubr.bf16.mxu0 %v6604
    %7129 = vmatmul.mubr.bf16.gmra.mrb[0].mxu0 %v6603
    %v7130 = vpop.f32.mrb[0].mxu0
    %v7131 = vadd.f32 0.0, %v7130
    %v7132 = vpop.f32.mrb[0].mxu0
    %v7133 = vadd.f32 0.0, %v7132
    %v7134 = vpop.f32.mrb[0].mxu0
    %v7135 = vadd.f32 0.0, %v7134
    %v7136 = vpop.f32.mrb[0].mxu0
    %v7137 = vadd.f32 0.0, %v7136
    %7138 = vdwg.mxu0
    %7139 = vmatprep.subr.bf16.mxu0 %v6991
    %7140 = vmatpush1.bf16.msra.mxu0 %v6990
    %7141 = vmatprep.subr.bf16.mxu0 %v6994
    %7142 = vmatpush1.bf16.msra.mxu0 %v6993
    %7143 = vmatprep.subr.bf16.mxu0 %v6997
    %7144 = vmatpush1.bf16.msra.mxu0 %v6996
    %7145 = vmatprep.subr.bf16.mxu0 %v7000
    %7146 = vmatpush1.bf16.msra.mxu0 %v6999
    %7147 = vmatprep.subr.bf16.mxu0 %v7003
    %7148 = vmatpush1.bf16.msra.mxu0 %v7002
    %7149 = vmatprep.subr.bf16.mxu0 %v7006
    %7150 = vmatpush1.bf16.msra.mxu0 %v7005
    %7151 = vmatprep.subr.bf16.mxu0 %v7009
    %7152 = vmatpush1.bf16.msra.mxu0 %v7008
    %7153 = vmatprep.subr.bf16.mxu0 %v7012
    %7154 = vmatpush1.bf16.msra.mxu0 %v7011
    %7155 = vmatprep.subr.bf16.mxu0 0
    %7156 = vmatpush1.bf16.msra.mxu0 0
    %7157 = vmatprep.subr.bf16.mxu0 0
    %7158 = vmatpush1.bf16.msra.mxu0 0
    %7159 = vmatprep.subr.bf16.mxu0 0
    %7160 = vmatpush1.bf16.msra.mxu0 0
    %7161 = vmatprep.subr.bf16.mxu0 0
    %7162 = vmatpush1.bf16.msra.mxu0 0
    %7163 = vmatprep.subr.bf16.mxu0 0
    %7164 = vmatpush1.bf16.msra.mxu0 0
    %7165 = vmatprep.subr.bf16.mxu0 0
    %7166 = vmatpush1.bf16.msra.mxu0 0
    %7167 = vmatprep.subr.bf16.mxu0 0
    %7168 = vmatpush1.bf16.msra.mxu0 0
    %7169 = vmatprep.subr.bf16.mxu0 0
    %7170 = vmatpush1.bf16.msra.mxu0 0
    %7171 = vmatprep.mubr.bf16.mxu0 0
    %7172 = vmatmul.mubr.bf16.gmra.mrb[0].mxu0 %v6602
    %v7173 = vpop.f32.mrb[0].mxu0
    %v7174 = vadd.f32 %v7121, %v7173
    %v7175 = vpop.f32.mrb[0].mxu0
    %v7176 = vadd.f32 %v7123, %v7175
    %v7177 = vpop.f32.mrb[0].mxu0
    %v7178 = vadd.f32 %v7125, %v7177
    %v7179 = vpop.f32.mrb[0].mxu0
    %v7180 = vadd.f32 %v7127, %v7179
    %7181 = vmatprep.mubr.bf16.mxu0 0
    %7182 = vmatmul.mubr.bf16.gmra.mrb[0].mxu0 %v6605
    %v7183 = vpop.f32.mrb[0].mxu0
    %v7184 = vadd.f32 %v7131, %v7183
    %v7185 = vpop.f32.mrb[0].mxu0
    %v7186 = vadd.f32 %v7133, %v7185
    %v7187 = vpop.f32.mrb[0].mxu0
    %v7188 = vadd.f32 %v7135, %v7187
    %v7189 = vpop.f32.mrb[0].mxu0
    %v7190 = vadd.f32 %v7137, %v7189
    %7191 = vdwg.mxu0
    %7192 = vmatprep.subr.bf16.mxu0 0
    %7193 = vmatpush1.bf16.msra.mxu0 %v6944
    %7194 = vmatprep.subr.bf16.mxu0 0
    %7195 = vmatpush1.bf16.msra.mxu0 %v6947
    %7196 = vmatprep.subr.bf16.mxu0 0
    %7197 = vmatpush1.bf16.msra.mxu0 %v6950
    %7198 = vmatprep.subr.bf16.mxu0 0
    %7199 = vmatpush1.bf16.msra.mxu0 %v6953
    %7200 = vmatprep.subr.bf16.mxu0 0
    %7201 = vmatpush1.bf16.msra.mxu0 %v6956
    %7202 = vmatprep.subr.bf16.mxu0 0
    %7203 = vmatpush1.bf16.msra.mxu0 %v6959
    %7204 = vmatprep.subr.bf16.mxu0 0
    %7205 = vmatpush1.bf16.msra.mxu0 %v6962
    %7206 = vmatprep.subr.bf16.mxu0 0
    %7207 = vmatpush1.bf16.msra.mxu0 %v6965
    %7208 = vmatprep.subr.bf16.mxu0 0
    %7209 = vmatpush1.bf16.msra.mxu0 %v6968
    %7210 = vmatprep.subr.bf16.mxu0 0
    %7211 = vmatpush1.bf16.msra.mxu0 %v6971
    %7212 = vmatprep.subr.bf16.mxu0 0
    %7213 = vmatpush1.bf16.msra.mxu0 %v6974
    %7214 = vmatprep.subr.bf16.mxu0 0
    %7215 = vmatpush1.bf16.msra.mxu0 %v6977
    %7216 = vmatprep.subr.bf16.mxu0 0
    %7217 = vmatpush1.bf16.msra.mxu0 %v6980
    %7218 = vmatprep.subr.bf16.mxu0 0
    %7219 = vmatpush1.bf16.msra.mxu0 %v6983
    %7220 = vmatprep.subr.bf16.mxu0 0
    %7221 = vmatpush1.bf16.msra.mxu0 %v6986
    %7222 = vmatprep.subr.bf16.mxu0 0
    %7223 = vmatpush1.bf16.msra.mxu0 %v6989
    %7224 = vmatprep.mubr.bf16.mxu0 %v6601
    %7225 = vmatmul.mubr.bf16.gmra.mrb[0].mxu0 %v6600
    %v7226 = vpop.f32.mrb[0].mxu0
    %v7227 = vadd.f32 0.0, %v7226
    %v7228 = vpop.f32.mrb[0].mxu0
    %v7229 = vpop.f32.mrb[0].mxu0
    %v7230 = vadd.f32 0.0, %v7229
    %v7231 = vpop.f32.mrb[0].mxu0
    %7232 = vmatprep.mubr.bf16.mxu0 %v6604
    %7233 = vmatmul.mubr.bf16.gmra.mrb[0].mxu0 %v6603
    %v7234 = vpop.f32.mrb[0].mxu0
    %v7235 = vadd.f32 0.0, %v7234
    %v7236 = vpop.f32.mrb[0].mxu0
    %v7237 = vpop.f32.mrb[0].mxu0
    %v7238 = vadd.f32 0.0, %v7237
    %v7239 = vpop.f32.mrb[0].mxu0
    %7240 = vdwg.mxu0
    %7241 = vmatprep.subr.bf16.mxu0 0
    %7242 = vmatpush1.bf16.msra.mxu0 %v6992
    %7243 = vmatprep.subr.bf16.mxu0 0
    %7244 = vmatpush1.bf16.msra.mxu0 %v6995
    %7245 = vmatprep.subr.bf16.mxu0 0
    %7246 = vmatpush1.bf16.msra.mxu0 %v6998
    %7247 = vmatprep.subr.bf16.mxu0 0
    %7248 = vmatpush1.bf16.msra.mxu0 %v7001
    %7249 = vmatprep.subr.bf16.mxu0 0
    %7250 = vmatpush1.bf16.msra.mxu0 %v7004
    %7251 = vmatprep.subr.bf16.mxu0 0
    %7252 = vmatpush1.bf16.msra.mxu0 %v7007
    %7253 = vmatprep.subr.bf16.mxu0 0
    %7254 = vmatpush1.bf16.msra.mxu0 %v7010
    %7255 = vmatprep.subr.bf16.mxu0 0
    %7256 = vmatpush1.bf16.msra.mxu0 %v7013
    %7257 = vmatprep.subr.bf16.mxu0 0
    %7258 = vmatpush1.bf16.msra.mxu0 0
    %7259 = vmatprep.subr.bf16.mxu0 0
    %7260 = vmatpush1.bf16.msra.mxu0 0
    %7261 = vmatprep.subr.bf16.mxu0 0
    %7262 = vmatpush1.bf16.msra.mxu0 0
    %7263 = vmatprep.subr.bf16.mxu0 0
    %7264 = vmatpush1.bf16.msra.mxu0 0
    %7265 = vmatprep.subr.bf16.mxu0 0
    %7266 = vmatpush1.bf16.msra.mxu0 0
    %7267 = vmatprep.subr.bf16.mxu0 0
    %7268 = vmatpush1.bf16.msra.mxu0 0
    %7269 = vmatprep.subr.bf16.mxu0 0
    %7270 = vmatpush1.bf16.msra.mxu0 0
    %7271 = vmatprep.subr.bf16.mxu0 0
    %7272 = vmatpush1.bf16.msra.mxu0 0
    %7273 = vmatprep.mubr.bf16.mxu0 0
    %7274 = vmatmul.mubr.bf16.gmra.mrb[0].mxu0 %v6602
    %v7275 = vpop.f32.mrb[0].mxu0
    %v7276 = vadd.f32 %v7227, %v7275
    %v7277 = vpop.f32.mrb[0].mxu0
    %v7278 = vpop.f32.mrb[0].mxu0
    %v7279 = vadd.f32 %v7230, %v7278
    %v7280 = vpop.f32.mrb[0].mxu0
    %7281 = vmatprep.mubr.bf16.mxu0 0
    %7282 = vmatmul.mubr.bf16.gmra.mrb[0].mxu0 %v6605
    %v7283 = vpop.f32.mrb[0].mxu0
    %v7284 = vadd.f32 %v7235, %v7283
    %v7285 = vpop.f32.mrb[0].mxu0
    %v7286 = vpop.f32.mrb[0].mxu0
    %v7287 = vadd.f32 %v7238, %v7286
    %v7288 = vpop.f32.mrb[0].mxu0
    %7289 = vdwg.mxu0
    %v7290 = vadd.f32 %v277, %v7174
    %v7291 = vadd.f32 %v278, %v7176
    %v7292 = vadd.f32 %v279, %v7276
    %v7293 = vadd.f32 %v280, %v7178
    %v7294 = vadd.f32 %v281, %v7180
    %v7295 = vadd.f32 %v282, %v7279
    %v7296 = vadd.f32 %v283, %v7184
    %v7297 = vadd.f32 %v284, %v7186
    %v7298 = vadd.f32 %v285, %v7284
    %v7299 = vadd.f32 %v286, %v7188
    %v7300 = vadd.f32 %v287, %v7190
    %v7301 = vadd.f32 %v288, %v7287
    %v7302 = vld [vmem:[#allocation20] sm:$0x7]
    %v7303 = vld [vmem:[#allocation22] sm:$0x7]
    %v7304 = vadd.f32 %v7290, %v7291
    %v7305 = vadd.f32 %v7304, %v7292
    %7306 = vadd.xlane.f32.xlu0 %v7305
    %v7307 = vpop.xlane.xlu0 %7306
    %v7308 = vadd.f32 %v7293, %v7294
    %v7309 = vadd.f32 %v7308, %v7295
    %7310 = vadd.xlane.f32.xlu0 %v7309
    %v7311 = vpop.xlane.xlu0 %7310
    %v7312 = vadd.f32 %v7296, %v7297
    %v7313 = vadd.f32 %v7312, %v7298
    %7314 = vadd.xlane.f32.xlu0 %v7313
    %v7315 = vpop.xlane.xlu0 %7314
    %v7316 = vadd.f32 %v7299, %v7300
    %v7317 = vadd.f32 %v7316, %v7301
    %7318 = vadd.xlane.f32.xlu0 %v7317
    %v7319 = vpop.xlane.xlu0 %7318
    %v7320 = vmul.f32 %v7307, %v307
    %v7321 = vmul.f32 %v7311, %v307
    %v7322 = vmul.f32 %v7315, %v307
    %v7323 = vmul.f32 %v7319, %v307
    %v7324 = vsub.f32 %v7290, %v7320
    %v7325 = vsub.f32 %v7291, %v7320
    %v7326 = vsub.f32 %v7292, %v7320
    %v7327 = vsub.f32 %v7293, %v7321
    %v7328 = vsub.f32 %v7294, %v7321
    %v7329 = vsub.f32 %v7295, %v7321
    %v7330 = vsub.f32 %v7296, %v7322
    %v7331 = vsub.f32 %v7297, %v7322
    %v7332 = vsub.f32 %v7298, %v7322
    %v7333 = vsub.f32 %v7299, %v7323
    %v7334 = vsub.f32 %v7300, %v7323
    %v7335 = vsub.f32 %v7301, %v7323
    %v7336 = vmul.f32 %v7324, %v7324
    %v7337 = vmul.f32 %v7325, %v7325
    %v7338 = vmul.f32 %v7326, %v7326
    %v7339 = vmul.f32 %v7327, %v7327
    %v7340 = vmul.f32 %v7328, %v7328
    %v7341 = vmul.f32 %v7329, %v7329
    %v7342 = vmul.f32 %v7330, %v7330
    %v7343 = vmul.f32 %v7331, %v7331
    %v7344 = vmul.f32 %v7332, %v7332
    %v7345 = vmul.f32 %v7333, %v7333
    %v7346 = vmul.f32 %v7334, %v7334
    %v7347 = vmul.f32 %v7335, %v7335
    %v7348 = vadd.f32 %v7336, %v7337
    %v7349 = vadd.f32 %v7348, %v7338
    %7350 = vadd.xlane.f32.xlu0 %v7349
    %v7351 = vpop.xlane.xlu0 %7350
    %v7352 = vadd.f32 %v7339, %v7340
    %v7353 = vadd.f32 %v7352, %v7341
    %7354 = vadd.xlane.f32.xlu0 %v7353
    %v7355 = vpop.xlane.xlu0 %7354
    %v7356 = vadd.f32 %v7342, %v7343
    %v7357 = vadd.f32 %v7356, %v7344
    %7358 = vadd.xlane.f32.xlu0 %v7357
    %v7359 = vpop.xlane.xlu0 %7358
    %v7360 = vadd.f32 %v7345, %v7346
    %v7361 = vadd.f32 %v7360, %v7347
    %7362 = vadd.xlane.f32.xlu0 %v7361
    %v7363 = vpop.xlane.xlu0 %7362
    %v7364 = vmul.f32 %v7351, %v307
    %v7365 = vmul.f32 %v7355, %v307
    %v7366 = vmul.f32 %v7359, %v307
    %v7367 = vmul.f32 %v7363, %v307
    %v7368 = vadd.f32 %v7364, 1e-05
    %v7369 = vadd.f32 %v7365, 1e-05
    %v7370 = vadd.f32 %v7366, 1e-05
    %v7371 = vadd.f32 %v7367, 1e-05
    %v7372 = vrsqrt.pop %v7368
    %v7373 = vrsqrt.pop %v7369
    %v7374 = vrsqrt.pop %v7370
    %v7375 = vrsqrt.pop %v7371
    %v7376 = vmul.f32 %v7324, %v7372
    %v7377 = vmul.f32 %v7325, %v7372
    %v7378 = vmul.f32 %v7326, %v7372
    %v7379 = vmul.f32 %v7327, %v7373
    %v7380 = vmul.f32 %v7328, %v7373
    %v7381 = vmul.f32 %v7329, %v7373
    %v7382 = vmul.f32 %v7330, %v7374
    %v7383 = vmul.f32 %v7331, %v7374
    %v7384 = vmul.f32 %v7332, %v7374
    %v7385 = vmul.f32 %v7333, %v7375
    %v7386 = vmul.f32 %v7334, %v7375
    %v7387 = vmul.f32 %v7335, %v7375
    %v7389 = vlaneseq
    %v7390 = vshrl.u32 %v7389, 7
    %v7391 = vsub.s32 0, %v7390
    %v7392 = vrot.slane %v7302, %v7391
    %v7393 = vlaneseq
    %v7394 = vshrl.u32 %v7393, 7
    %v7395 = vsub.s32 1, %v7394
    %v7396 = vrot.slane %v7302, %v7395
    %v7397 = vlaneseq
    %v7398 = vshrl.u32 %v7397, 7
    %v7399 = vsub.s32 2, %v7398
    %v7400 = vrot.slane %v7302, %v7399
    %v7404 = vmul.f32 %v7376, %v7392
    %v7405 = vmul.f32 %v7377, %v7396
    %v7406 = vmul.f32 %v7378, %v7400
    %v7407 = vmul.f32 %v7379, %v7392
    %v7408 = vmul.f32 %v7380, %v7396
    %v7409 = vmul.f32 %v7381, %v7400
    %v7410 = vmul.f32 %v7382, %v7392
    %v7411 = vmul.f32 %v7383, %v7396
    %v7412 = vmul.f32 %v7384, %v7400
    %v7413 = vmul.f32 %v7385, %v7392
    %v7414 = vmul.f32 %v7386, %v7396
    %v7415 = vmul.f32 %v7387, %v7400
    %v7417 = vlaneseq
    %v7418 = vshrl.u32 %v7417, 7
    %v7419 = vsub.s32 0, %v7418
    %v7420 = vrot.slane %v7303, %v7419
    %v7421 = vlaneseq
    %v7422 = vshrl.u32 %v7421, 7
    %v7423 = vsub.s32 1, %v7422
    %v7424 = vrot.slane %v7303, %v7423
    %v7425 = vlaneseq
    %v7426 = vshrl.u32 %v7425, 7
    %v7427 = vsub.s32 2, %v7426
    %v7428 = vrot.slane %v7303, %v7427
    %v7432 = vadd.f32 %v7404, %v7420
    %v7433 = vadd.f32 %v7405, %v7424
    %v7434 = vadd.f32 %v7406, %v7428
    %v7435 = vadd.f32 %v7407, %v7420
    %v7436 = vadd.f32 %v7408, %v7424
    %v7437 = vadd.f32 %v7409, %v7428
    %v7438 = vadd.f32 %v7410, %v7420
    %v7439 = vadd.f32 %v7411, %v7424
    %v7440 = vadd.f32 %v7412, %v7428
    %v7441 = vadd.f32 %v7413, %v7420
    %v7442 = vadd.f32 %v7414, %v7424
    %v7443 = vadd.f32 %v7415, %v7428
    %v7444 = vpack.c.bf16 %v7435, %v7432
    %v7445 = vpack.c.bf16 %v7436, %v7433
    %v7446 = vpack.c.bf16 %v7437, %v7434
    %v7447 = vpack.c.bf16 %v7441, %v7438
    %v7448 = vpack.c.bf16 %v7442, %v7439
    %v7449 = vpack.c.bf16 %v7443, %v7440
    %v7450 = vld [vmem:[#allocation23] sm:$0xff]
    %v7451 = vld [vmem:[#allocation23 + $0x8] sm:$0xff]
    %v7452 = vld [vmem:[#allocation23 + $0x10] sm:$0xff]
    %v7453 = vld [vmem:[#allocation23 + $0x18] sm:$0xff]
    %v7454 = vld [vmem:[#allocation23 + $0x20] sm:$0xff]
    %v7455 = vld [vmem:[#allocation23 + $0x28] sm:$0xff]
    %v7456 = vld [vmem:[#allocation23 + $0x30] sm:$0xff]
    %v7457 = vld [vmem:[#allocation23 + $0x38] sm:$0xff]
    %v7458 = vld [vmem:[#allocation23 + $0x40] sm:$0xff]
    %v7459 = vld [vmem:[#allocation23 + $0x48] sm:$0xff]
    %v7460 = vld [vmem:[#allocation23 + $0x50] sm:$0xff]
    %v7461 = vld [vmem:[#allocation23 + $0x58] sm:$0xff]
    %v7462 = vld [vmem:[#allocation23 + $0x60] sm:$0xff]
    %v7463 = vld [vmem:[#allocation23 + $0x68] sm:$0xff]
    %v7464 = vld [vmem:[#allocation23 + $0x70] sm:$0xff]
    %v7465 = vld [vmem:[#allocation23 + $0x78] sm:$0xff]
    %v7466 = vld [vmem:[#allocation23 + $0x80] sm:$0xff]
    %v7467 = vld [vmem:[#allocation23 + $0x88] sm:$0xff]
    %v7468 = vld [vmem:[#allocation23 + $0x90] sm:$0xff]
    %v7469 = vld [vmem:[#allocation23 + $0x98] sm:$0xff]
    %v7470 = vld [vmem:[#allocation23 + $0xa0] sm:$0xff]
    %v7471 = vld [vmem:[#allocation23 + $0xa8] sm:$0xff]
    %v7472 = vld [vmem:[#allocation23 + $0xb0] sm:$0xff]
    %v7473 = vld [vmem:[#allocation23 + $0xb8] sm:$0xff]
    %v7474 = vld [vmem:[#allocation23 + $0xc0] sm:$0xff]
    %v7475 = vld [vmem:[#allocation23 + $0xc8] sm:$0xff]
    %v7476 = vld [vmem:[#allocation23 + $0xd0] sm:$0xff]
    %v7477 = vld [vmem:[#allocation23 + $0xd8] sm:$0xff]
    %v7478 = vld [vmem:[#allocation23 + $0xe0] sm:$0xff]
    %v7479 = vld [vmem:[#allocation23 + $0xe8] sm:$0xff]
    %v7480 = vld [vmem:[#allocation23 + $0xf0] sm:$0xff]
    %v7481 = vld [vmem:[#allocation23 + $0xf8] sm:$0xff]
    %v7482 = vld [vmem:[#allocation23 + $0x100] sm:$0xff]
    %v7483 = vld [vmem:[#allocation23 + $0x108] sm:$0xff]
    %v7484 = vld [vmem:[#allocation23 + $0x110] sm:$0xff]
    %v7485 = vld [vmem:[#allocation23 + $0x118] sm:$0xff]
    %v7486 = vld [vmem:[#allocation23 + $0x120] sm:$0xff]
    %v7487 = vld [vmem:[#allocation23 + $0x128] sm:$0xff]
    %v7488 = vld [vmem:[#allocation23 + $0x130] sm:$0xff]
    %v7489 = vld [vmem:[#allocation23 + $0x138] sm:$0xff]
    %v7490 = vld [vmem:[#allocation23 + $0x140] sm:$0xff]
    %v7491 = vld [vmem:[#allocation23 + $0x148] sm:$0xff]
    %v7492 = vld [vmem:[#allocation23 + $0x150] sm:$0xff]
    %v7493 = vld [vmem:[#allocation23 + $0x158] sm:$0xff]
    %v7494 = vld [vmem:[#allocation23 + $0x160] sm:$0xff]
    %v7495 = vld [vmem:[#allocation23 + $0x168] sm:$0xff]
    %v7496 = vld [vmem:[#allocation23 + $0x170] sm:$0xff]
    %v7497 = vld [vmem:[#allocation23 + $0x178] sm:$0xff]
    %v7498 = vld [vmem:[#allocation23 + $0x180] sm:$0xff]
    %v7499 = vld [vmem:[#allocation23 + $0x188] sm:$0xff]
    %v7500 = vld [vmem:[#allocation23 + $0x190] sm:$0xff]
    %v7501 = vld [vmem:[#allocation23 + $0x198] sm:$0xff]
    %v7502 = vld [vmem:[#allocation23 + $0x1a0] sm:$0xff]
    %v7503 = vld [vmem:[#allocation23 + $0x1a8] sm:$0xff]
    %v7504 = vld [vmem:[#allocation23 + $0x1b0] sm:$0xff]
    %v7505 = vld [vmem:[#allocation23 + $0x1b8] sm:$0xff]
    %v7506 = vld [vmem:[#allocation23 + $0x1c0] sm:$0xff]
    %v7507 = vld [vmem:[#allocation23 + $0x1c8] sm:$0xff]
    %v7508 = vld [vmem:[#allocation23 + $0x1d0] sm:$0xff]
    %v7509 = vld [vmem:[#allocation23 + $0x1d8] sm:$0xff]
    %v7510 = vld [vmem:[#allocation23 + $0x1e0] sm:$0xff]
    %v7511 = vld [vmem:[#allocation23 + $0x1e8] sm:$0xff]
    %v7512 = vld [vmem:[#allocation23 + $0x1f0] sm:$0xff]
    %v7513 = vld [vmem:[#allocation23 + $0x1f8] sm:$0xff]
    %v7514 = vld [vmem:[#allocation23 + $0x200] sm:$0xff]
    %v7515 = vld [vmem:[#allocation23 + $0x208] sm:$0xff]
    %v7516 = vld [vmem:[#allocation23 + $0x210] sm:$0xff]
    %v7517 = vld [vmem:[#allocation23 + $0x218] sm:$0xff]
    %v7518 = vld [vmem:[#allocation23 + $0x220] sm:$0xff]
    %v7519 = vld [vmem:[#allocation23 + $0x228] sm:$0xff]
    %v7520 = vld [vmem:[#allocation23 + $0x230] sm:$0xff]
    %v7521 = vld [vmem:[#allocation23 + $0x238] sm:$0xff]
    %v7522 = vld [vmem:[#allocation23 + $0x240] sm:$0xff]
    %v7523 = vld [vmem:[#allocation23 + $0x248] sm:$0xff]
    %v7524 = vld [vmem:[#allocation23 + $0x250] sm:$0xff]
    %v7525 = vld [vmem:[#allocation23 + $0x258] sm:$0xff]
    %v7526 = vld [vmem:[#allocation23 + $0x260] sm:$0xff]
    %v7527 = vld [vmem:[#allocation23 + $0x268] sm:$0xff]
    %v7528 = vld [vmem:[#allocation23 + $0x270] sm:$0xff]
    %v7529 = vld [vmem:[#allocation23 + $0x278] sm:$0xff]
    %v7530 = vld [vmem:[#allocation23 + $0x280] sm:$0xff]
    %v7531 = vld [vmem:[#allocation23 + $0x288] sm:$0xff]
    %v7532 = vld [vmem:[#allocation23 + $0x290] sm:$0xff]
    %v7533 = vld [vmem:[#allocation23 + $0x298] sm:$0xff]
    %v7534 = vld [vmem:[#allocation23 + $0x2a0] sm:$0xff]
    %v7535 = vld [vmem:[#allocation23 + $0x2a8] sm:$0xff]
    %v7536 = vld [vmem:[#allocation23 + $0x2b0] sm:$0xff]
    %v7537 = vld [vmem:[#allocation23 + $0x2b8] sm:$0xff]
    %v7538 = vld [vmem:[#allocation23 + $0x2c0] sm:$0xff]
    %v7539 = vld [vmem:[#allocation23 + $0x2c8] sm:$0xff]
    %v7540 = vld [vmem:[#allocation23 + $0x2d0] sm:$0xff]
    %v7541 = vld [vmem:[#allocation23 + $0x2d8] sm:$0xff]
    %v7542 = vld [vmem:[#allocation23 + $0x2e0] sm:$0xff]
    %v7543 = vld [vmem:[#allocation23 + $0x2e8] sm:$0xff]
    %v7544 = vld [vmem:[#allocation23 + $0x2f0] sm:$0xff]
    %v7545 = vld [vmem:[#allocation23 + $0x2f8] sm:$0xff]
    %v7546 = vld [vmem:[#allocation23 + $0x300] sm:$0xff]
    %v7547 = vld [vmem:[#allocation23 + $0x308] sm:$0xff]
    %v7548 = vld [vmem:[#allocation23 + $0x310] sm:$0xff]
    %v7549 = vld [vmem:[#allocation23 + $0x318] sm:$0xff]
    %v7550 = vld [vmem:[#allocation23 + $0x320] sm:$0xff]
    %v7551 = vld [vmem:[#allocation23 + $0x328] sm:$0xff]
    %v7552 = vld [vmem:[#allocation23 + $0x330] sm:$0xff]
    %v7553 = vld [vmem:[#allocation23 + $0x338] sm:$0xff]
    %v7554 = vld [vmem:[#allocation23 + $0x340] sm:$0xff]
    %v7555 = vld [vmem:[#allocation23 + $0x348] sm:$0xff]
    %v7556 = vld [vmem:[#allocation23 + $0x350] sm:$0xff]
    %v7557 = vld [vmem:[#allocation23 + $0x358] sm:$0xff]
    %v7558 = vld [vmem:[#allocation23 + $0x360] sm:$0xff]
    %v7559 = vld [vmem:[#allocation23 + $0x368] sm:$0xff]
    %v7560 = vld [vmem:[#allocation23 + $0x370] sm:$0xff]
    %v7561 = vld [vmem:[#allocation23 + $0x378] sm:$0xff]
    %v7562 = vld [vmem:[#allocation23 + $0x380] sm:$0xff]
    %v7563 = vld [vmem:[#allocation23 + $0x388] sm:$0xff]
    %v7564 = vld [vmem:[#allocation23 + $0x390] sm:$0xff]
    %v7565 = vld [vmem:[#allocation23 + $0x398] sm:$0xff]
    %v7566 = vld [vmem:[#allocation23 + $0x3a0] sm:$0xff]
    %v7567 = vld [vmem:[#allocation23 + $0x3a8] sm:$0xff]
    %v7568 = vld [vmem:[#allocation23 + $0x3b0] sm:$0xff]
    %v7569 = vld [vmem:[#allocation23 + $0x3b8] sm:$0xff]
    %v7570 = vld [vmem:[#allocation23 + $0x3c0] sm:$0xff]
    %v7571 = vld [vmem:[#allocation23 + $0x3c8] sm:$0xff]
    %v7572 = vld [vmem:[#allocation23 + $0x3d0] sm:$0xff]
    %v7573 = vld [vmem:[#allocation23 + $0x3d8] sm:$0xff]
    %v7574 = vld [vmem:[#allocation23 + $0x3e0] sm:$0xff]
    %v7575 = vld [vmem:[#allocation23 + $0x3e8] sm:$0xff]
    %v7576 = vld [vmem:[#allocation23 + $0x3f0] sm:$0xff]
    %v7577 = vld [vmem:[#allocation23 + $0x3f8] sm:$0xff]
    %v7578 = vld [vmem:[#allocation23 + $0x400] sm:$0xff]
    %v7579 = vld [vmem:[#allocation23 + $0x408] sm:$0xff]
    %v7580 = vld [vmem:[#allocation23 + $0x410] sm:$0xff]
    %v7581 = vld [vmem:[#allocation23 + $0x418] sm:$0xff]
    %v7582 = vld [vmem:[#allocation23 + $0x420] sm:$0xff]
    %v7583 = vld [vmem:[#allocation23 + $0x428] sm:$0xff]
    %v7584 = vld [vmem:[#allocation23 + $0x430] sm:$0xff]
    %v7585 = vld [vmem:[#allocation23 + $0x438] sm:$0xff]
    %v7586 = vld [vmem:[#allocation23 + $0x440] sm:$0xff]
    %v7587 = vld [vmem:[#allocation23 + $0x448] sm:$0xff]
    %v7588 = vld [vmem:[#allocation23 + $0x450] sm:$0xff]
    %v7589 = vld [vmem:[#allocation23 + $0x458] sm:$0xff]
    %v7590 = vld [vmem:[#allocation23 + $0x460] sm:$0xff]
    %v7591 = vld [vmem:[#allocation23 + $0x468] sm:$0xff]
    %v7592 = vld [vmem:[#allocation23 + $0x470] sm:$0xff]
    %v7593 = vld [vmem:[#allocation23 + $0x478] sm:$0xff]
    %v7594 = vld [vmem:[#allocation23 + $0x480] sm:$0xff]
    %v7595 = vld [vmem:[#allocation23 + $0x488] sm:$0xff]
    %v7596 = vld [vmem:[#allocation23 + $0x490] sm:$0xff]
    %v7597 = vld [vmem:[#allocation23 + $0x498] sm:$0xff]
    %v7598 = vld [vmem:[#allocation23 + $0x4a0] sm:$0xff]
    %v7599 = vld [vmem:[#allocation23 + $0x4a8] sm:$0xff]
    %v7600 = vld [vmem:[#allocation23 + $0x4b0] sm:$0xff]
    %v7601 = vld [vmem:[#allocation23 + $0x4b8] sm:$0xff]
    %v7602 = vld [vmem:[#allocation23 + $0x4c0] sm:$0xff]
    %v7603 = vld [vmem:[#allocation23 + $0x4c8] sm:$0xff]
    %v7604 = vld [vmem:[#allocation23 + $0x4d0] sm:$0xff]
    %v7605 = vld [vmem:[#allocation23 + $0x4d8] sm:$0xff]
    %v7606 = vld [vmem:[#allocation23 + $0x4e0] sm:$0xff]
    %v7607 = vld [vmem:[#allocation23 + $0x4e8] sm:$0xff]
    %v7608 = vld [vmem:[#allocation23 + $0x4f0] sm:$0xff]
    %v7609 = vld [vmem:[#allocation23 + $0x4f8] sm:$0xff]
    %v7610 = vld [vmem:[#allocation23 + $0x500] sm:$0xff]
    %v7611 = vld [vmem:[#allocation23 + $0x508] sm:$0xff]
    %v7612 = vld [vmem:[#allocation23 + $0x510] sm:$0xff]
    %v7613 = vld [vmem:[#allocation23 + $0x518] sm:$0xff]
    %v7614 = vld [vmem:[#allocation23 + $0x520] sm:$0xff]
    %v7615 = vld [vmem:[#allocation23 + $0x528] sm:$0xff]
    %v7616 = vld [vmem:[#allocation23 + $0x530] sm:$0xff]
    %v7617 = vld [vmem:[#allocation23 + $0x538] sm:$0xff]
    %v7618 = vld [vmem:[#allocation23 + $0x540] sm:$0xff]
    %v7619 = vld [vmem:[#allocation23 + $0x548] sm:$0xff]
    %v7620 = vld [vmem:[#allocation23 + $0x550] sm:$0xff]
    %v7621 = vld [vmem:[#allocation23 + $0x558] sm:$0xff]
    %v7622 = vld [vmem:[#allocation23 + $0x560] sm:$0xff]
    %v7623 = vld [vmem:[#allocation23 + $0x568] sm:$0xff]
    %v7624 = vld [vmem:[#allocation23 + $0x570] sm:$0xff]
    %v7625 = vld [vmem:[#allocation23 + $0x578] sm:$0xff]
    %v7626 = vld [vmem:[#allocation23 + $0x580] sm:$0xff]
    %v7627 = vld [vmem:[#allocation23 + $0x588] sm:$0xff]
    %v7628 = vld [vmem:[#allocation23 + $0x590] sm:$0xff]
    %v7629 = vld [vmem:[#allocation23 + $0x598] sm:$0xff]
    %v7630 = vld [vmem:[#allocation23 + $0x5a0] sm:$0xff]
    %v7631 = vld [vmem:[#allocation23 + $0x5a8] sm:$0xff]
    %v7632 = vld [vmem:[#allocation23 + $0x5b0] sm:$0xff]
    %v7633 = vld [vmem:[#allocation23 + $0x5b8] sm:$0xff]
    %v7634 = vld [vmem:[#allocation23 + $0x5c0] sm:$0xff]
    %v7635 = vld [vmem:[#allocation23 + $0x5c8] sm:$0xff]
    %v7636 = vld [vmem:[#allocation23 + $0x5d0] sm:$0xff]
    %v7637 = vld [vmem:[#allocation23 + $0x5d8] sm:$0xff]
    %v7638 = vld [vmem:[#allocation23 + $0x5e0] sm:$0xff]
    %v7639 = vld [vmem:[#allocation23 + $0x5e8] sm:$0xff]
    %v7640 = vld [vmem:[#allocation23 + $0x5f0] sm:$0xff]
    %v7641 = vld [vmem:[#allocation23 + $0x5f8] sm:$0xff]
    %v7642 = vld [vmem:[#allocation23 + $0x600] sm:$0xff]
    %v7643 = vld [vmem:[#allocation23 + $0x608] sm:$0xff]
    %v7644 = vld [vmem:[#allocation23 + $0x610] sm:$0xff]
    %v7645 = vld [vmem:[#allocation23 + $0x618] sm:$0xff]
    %v7646 = vld [vmem:[#allocation23 + $0x620] sm:$0xff]
    %v7647 = vld [vmem:[#allocation23 + $0x628] sm:$0xff]
    %v7648 = vld [vmem:[#allocation23 + $0x630] sm:$0xff]
    %v7649 = vld [vmem:[#allocation23 + $0x638] sm:$0xff]
    %v7650 = vld [vmem:[#allocation23 + $0x640] sm:$0xff]
    %v7651 = vld [vmem:[#allocation23 + $0x648] sm:$0xff]
    %v7652 = vld [vmem:[#allocation23 + $0x650] sm:$0xff]
    %v7653 = vld [vmem:[#allocation23 + $0x658] sm:$0xff]
    %v7654 = vld [vmem:[#allocation23 + $0x660] sm:$0xff]
    %v7655 = vld [vmem:[#allocation23 + $0x668] sm:$0xff]
    %v7656 = vld [vmem:[#allocation23 + $0x670] sm:$0xff]
    %v7657 = vld [vmem:[#allocation23 + $0x678] sm:$0xff]
    %v7658 = vld [vmem:[#allocation23 + $0x680] sm:$0xff]
    %v7659 = vld [vmem:[#allocation23 + $0x688] sm:$0xff]
    %v7660 = vld [vmem:[#allocation23 + $0x690] sm:$0xff]
    %v7661 = vld [vmem:[#allocation23 + $0x698] sm:$0xff]
    %v7662 = vld [vmem:[#allocation23 + $0x6a0] sm:$0xff]
    %v7663 = vld [vmem:[#allocation23 + $0x6a8] sm:$0xff]
    %v7664 = vld [vmem:[#allocation23 + $0x6b0] sm:$0xff]
    %v7665 = vld [vmem:[#allocation23 + $0x6b8] sm:$0xff]
    %v7666 = vld [vmem:[#allocation23 + $0x6c0] sm:$0xff]
    %v7667 = vld [vmem:[#allocation23 + $0x6c8] sm:$0xff]
    %v7668 = vld [vmem:[#allocation23 + $0x6d0] sm:$0xff]
    %v7669 = vld [vmem:[#allocation23 + $0x6d8] sm:$0xff]
    %v7670 = vld [vmem:[#allocation23 + $0x6e0] sm:$0xff]
    %v7671 = vld [vmem:[#allocation23 + $0x6e8] sm:$0xff]
    %v7672 = vld [vmem:[#allocation23 + $0x6f0] sm:$0xff]
    %v7673 = vld [vmem:[#allocation23 + $0x6f8] sm:$0xff]
    %v7674 = vld [vmem:[#allocation23 + $0x700] sm:$0xff]
    %v7675 = vld [vmem:[#allocation23 + $0x708] sm:$0xff]
    %v7676 = vld [vmem:[#allocation23 + $0x710] sm:$0xff]
    %v7677 = vld [vmem:[#allocation23 + $0x718] sm:$0xff]
    %v7678 = vld [vmem:[#allocation23 + $0x720] sm:$0xff]
    %v7679 = vld [vmem:[#allocation23 + $0x728] sm:$0xff]
    %v7680 = vld [vmem:[#allocation23 + $0x730] sm:$0xff]
    %v7681 = vld [vmem:[#allocation23 + $0x738] sm:$0xff]
    %v7682 = vld [vmem:[#allocation23 + $0x740] sm:$0xff]
    %v7683 = vld [vmem:[#allocation23 + $0x748] sm:$0xff]
    %v7684 = vld [vmem:[#allocation23 + $0x750] sm:$0xff]
    %v7685 = vld [vmem:[#allocation23 + $0x758] sm:$0xff]
    %v7686 = vld [vmem:[#allocation23 + $0x760] sm:$0xff]
    %v7687 = vld [vmem:[#allocation23 + $0x768] sm:$0xff]
    %v7688 = vld [vmem:[#allocation23 + $0x770] sm:$0xff]
    %v7689 = vld [vmem:[#allocation23 + $0x778] sm:$0xff]
    %v7690 = vld [vmem:[#allocation23 + $0x780] sm:$0xff]
    %v7691 = vld [vmem:[#allocation23 + $0x788] sm:$0xff]
    %v7692 = vld [vmem:[#allocation23 + $0x790] sm:$0xff]
    %v7693 = vld [vmem:[#allocation23 + $0x798] sm:$0xff]
    %v7694 = vld [vmem:[#allocation23 + $0x7a0] sm:$0xff]
    %v7695 = vld [vmem:[#allocation23 + $0x7a8] sm:$0xff]
    %v7696 = vld [vmem:[#allocation23 + $0x7b0] sm:$0xff]
    %v7697 = vld [vmem:[#allocation23 + $0x7b8] sm:$0xff]
    %v7698 = vld [vmem:[#allocation23 + $0x7c0] sm:$0xff]
    %v7699 = vld [vmem:[#allocation23 + $0x7c8] sm:$0xff]
    %v7700 = vld [vmem:[#allocation23 + $0x7d0] sm:$0xff]
    %v7701 = vld [vmem:[#allocation23 + $0x7d8] sm:$0xff]
    %v7702 = vld [vmem:[#allocation23 + $0x7e0] sm:$0xff]
    %v7703 = vld [vmem:[#allocation23 + $0x7e8] sm:$0xff]
    %v7704 = vld [vmem:[#allocation23 + $0x7f0] sm:$0xff]
    %v7705 = vld [vmem:[#allocation23 + $0x7f8] sm:$0xff]
    %v7706 = vld [vmem:[#allocation23 + $0x800] sm:$0xff]
    %v7707 = vld [vmem:[#allocation23 + $0x808] sm:$0xff]
    %v7708 = vld [vmem:[#allocation23 + $0x810] sm:$0xff]
    %v7709 = vld [vmem:[#allocation23 + $0x818] sm:$0xff]
    %v7710 = vld [vmem:[#allocation23 + $0x820] sm:$0xff]
    %v7711 = vld [vmem:[#allocation23 + $0x828] sm:$0xff]
    %v7712 = vld [vmem:[#allocation23 + $0x830] sm:$0xff]
    %v7713 = vld [vmem:[#allocation23 + $0x838] sm:$0xff]
    %v7714 = vld [vmem:[#allocation23 + $0x840] sm:$0xff]
    %v7715 = vld [vmem:[#allocation23 + $0x848] sm:$0xff]
    %v7716 = vld [vmem:[#allocation23 + $0x850] sm:$0xff]
    %v7717 = vld [vmem:[#allocation23 + $0x858] sm:$0xff]
    %v7718 = vld [vmem:[#allocation23 + $0x860] sm:$0xff]
    %v7719 = vld [vmem:[#allocation23 + $0x868] sm:$0xff]
    %v7720 = vld [vmem:[#allocation23 + $0x870] sm:$0xff]
    %v7721 = vld [vmem:[#allocation23 + $0x878] sm:$0xff]
    %v7722 = vld [vmem:[#allocation23 + $0x880] sm:$0xff]
    %v7723 = vld [vmem:[#allocation23 + $0x888] sm:$0xff]
    %v7724 = vld [vmem:[#allocation23 + $0x890] sm:$0xff]
    %v7725 = vld [vmem:[#allocation23 + $0x898] sm:$0xff]
    %v7726 = vld [vmem:[#allocation23 + $0x8a0] sm:$0xff]
    %v7727 = vld [vmem:[#allocation23 + $0x8a8] sm:$0xff]
    %v7728 = vld [vmem:[#allocation23 + $0x8b0] sm:$0xff]
    %v7729 = vld [vmem:[#allocation23 + $0x8b8] sm:$0xff]
    %v7730 = vld [vmem:[#allocation23 + $0x8c0] sm:$0xff]
    %v7731 = vld [vmem:[#allocation23 + $0x8c8] sm:$0xff]
    %v7732 = vld [vmem:[#allocation23 + $0x8d0] sm:$0xff]
    %v7733 = vld [vmem:[#allocation23 + $0x8d8] sm:$0xff]
    %v7734 = vld [vmem:[#allocation23 + $0x8e0] sm:$0xff]
    %v7735 = vld [vmem:[#allocation23 + $0x8e8] sm:$0xff]
    %v7736 = vld [vmem:[#allocation23 + $0x8f0] sm:$0xff]
    %v7737 = vld [vmem:[#allocation23 + $0x8f8] sm:$0xff]
    %v7738 = vld [vmem:[#allocation25] sm:$0xff]
    %v7739 = vld [vmem:[#allocation25 + $0x8] sm:$0xf]
    %v7742 = vlaneseq
    %v7743 = vshrl.u32 %v7742, 7
    %v7744 = vsub.s32 0, %v7743
    %v7745 = vrot.slane %v7738, %v7744
    %v7746 = vlaneseq
    %v7747 = vshrl.u32 %v7746, 7
    %v7748 = vsub.s32 1, %v7747
    %v7749 = vrot.slane %v7738, %v7748
    %v7750 = vlaneseq
    %v7751 = vshrl.u32 %v7750, 7
    %v7752 = vsub.s32 2, %v7751
    %v7753 = vrot.slane %v7738, %v7752
    %v7754 = vlaneseq
    %v7755 = vshrl.u32 %v7754, 7
    %v7756 = vsub.s32 3, %v7755
    %v7757 = vrot.slane %v7738, %v7756
    %v7758 = vlaneseq
    %v7759 = vshrl.u32 %v7758, 7
    %v7760 = vsub.s32 4, %v7759
    %v7761 = vrot.slane %v7738, %v7760
    %v7762 = vlaneseq
    %v7763 = vshrl.u32 %v7762, 7
    %v7764 = vsub.s32 5, %v7763
    %v7765 = vrot.slane %v7738, %v7764
    %v7766 = vlaneseq
    %v7767 = vshrl.u32 %v7766, 7
    %v7768 = vsub.s32 6, %v7767
    %v7769 = vrot.slane %v7738, %v7768
    %v7770 = vlaneseq
    %v7771 = vshrl.u32 %v7770, 7
    %v7772 = vsub.s32 7, %v7771
    %v7773 = vrot.slane %v7738, %v7772
    %v7774 = vlaneseq
    %v7775 = vshrl.u32 %v7774, 7
    %v7776 = vsub.s32 0, %v7775
    %v7777 = vrot.slane %v7739, %v7776
    %v7778 = vlaneseq
    %v7779 = vshrl.u32 %v7778, 7
    %v7780 = vsub.s32 1, %v7779
    %v7781 = vrot.slane %v7739, %v7780
    %v7782 = vlaneseq
    %v7783 = vshrl.u32 %v7782, 7
    %v7784 = vsub.s32 2, %v7783
    %v7785 = vrot.slane %v7739, %v7784
    %v7786 = vlaneseq
    %v7787 = vshrl.u32 %v7786, 7
    %v7788 = vsub.s32 3, %v7787
    %v7789 = vrot.slane %v7739, %v7788
    %v8090 = vunpack.c.l.b16 %v7450
    %v8091 = vunpack.c.h.b16 %v7450
    %v8092 = vunpack.c.l.b16 %v7451
    %v8093 = vunpack.c.h.b16 %v7451
    %v8094 = vunpack.c.l.b16 %v7452
    %v8095 = vunpack.c.h.b16 %v7452
    %v8096 = vunpack.c.l.b16 %v7453
    %v8097 = vunpack.c.h.b16 %v7453
    %v8098 = vunpack.c.l.b16 %v7454
    %v8099 = vunpack.c.h.b16 %v7454
    %v8100 = vunpack.c.l.b16 %v7455
    %v8101 = vunpack.c.h.b16 %v7455
    %v8102 = vunpack.c.l.b16 %v7456
    %v8103 = vunpack.c.h.b16 %v7456
    %v8104 = vunpack.c.l.b16 %v7457
    %v8105 = vunpack.c.h.b16 %v7457
    %v8106 = vunpack.c.l.b16 %v7458
    %v8107 = vunpack.c.h.b16 %v7458
    %v8108 = vunpack.c.l.b16 %v7459
    %v8109 = vunpack.c.h.b16 %v7459
    %v8110 = vunpack.c.l.b16 %v7460
    %v8111 = vunpack.c.h.b16 %v7460
    %v8112 = vunpack.c.l.b16 %v7461
    %v8113 = vunpack.c.h.b16 %v7461
    %v8114 = vunpack.c.l.b16 %v7462
    %v8115 = vunpack.c.h.b16 %v7462
    %v8116 = vunpack.c.l.b16 %v7463
    %v8117 = vunpack.c.h.b16 %v7463
    %v8118 = vunpack.c.l.b16 %v7464
    %v8119 = vunpack.c.h.b16 %v7464
    %v8120 = vunpack.c.l.b16 %v7465
    %v8121 = vunpack.c.h.b16 %v7465
    %v8122 = vunpack.c.l.b16 %v7466
    %v8123 = vunpack.c.h.b16 %v7466
    %v8124 = vunpack.c.l.b16 %v7467
    %v8125 = vunpack.c.h.b16 %v7467
    %v8126 = vunpack.c.l.b16 %v7468
    %v8127 = vunpack.c.h.b16 %v7468
    %v8128 = vunpack.c.l.b16 %v7469
    %v8129 = vunpack.c.h.b16 %v7469
    %v8130 = vunpack.c.l.b16 %v7470
    %v8131 = vunpack.c.h.b16 %v7470
    %v8132 = vunpack.c.l.b16 %v7471
    %v8133 = vunpack.c.h.b16 %v7471
    %v8134 = vunpack.c.l.b16 %v7472
    %v8135 = vunpack.c.h.b16 %v7472
    %v8136 = vunpack.c.l.b16 %v7473
    %v8137 = vunpack.c.h.b16 %v7473
    %v8138 = vunpack.c.l.b16 %v7474
    %v8139 = vunpack.c.h.b16 %v7474
    %v8140 = vunpack.c.l.b16 %v7475
    %v8141 = vunpack.c.h.b16 %v7475
    %v8142 = vunpack.c.l.b16 %v7476
    %v8143 = vunpack.c.h.b16 %v7476
    %v8144 = vunpack.c.l.b16 %v7477
    %v8145 = vunpack.c.h.b16 %v7477
    %v8146 = vunpack.c.l.b16 %v7478
    %v8147 = vunpack.c.h.b16 %v7478
    %v8148 = vunpack.c.l.b16 %v7479
    %v8149 = vunpack.c.h.b16 %v7479
    %v8150 = vunpack.c.l.b16 %v7480
    %v8151 = vunpack.c.h.b16 %v7480
    %v8152 = vunpack.c.l.b16 %v7481
    %v8153 = vunpack.c.h.b16 %v7481
    %v8154 = vunpack.c.l.b16 %v7482
    %v8155 = vunpack.c.h.b16 %v7482
    %v8156 = vunpack.c.l.b16 %v7483
    %v8157 = vunpack.c.h.b16 %v7483
    %v8158 = vunpack.c.l.b16 %v7484
    %v8159 = vunpack.c.h.b16 %v7484
    %v8160 = vunpack.c.l.b16 %v7485
    %v8161 = vunpack.c.h.b16 %v7485
    %v8162 = vunpack.c.l.b16 %v7486
    %v8163 = vunpack.c.h.b16 %v7486
    %v8164 = vunpack.c.l.b16 %v7487
    %v8165 = vunpack.c.h.b16 %v7487
    %v8166 = vunpack.c.l.b16 %v7488
    %v8167 = vunpack.c.h.b16 %v7488
    %v8168 = vunpack.c.l.b16 %v7489
    %v8169 = vunpack.c.h.b16 %v7489
    %v8170 = vunpack.c.l.b16 %v7490
    %v8171 = vunpack.c.h.b16 %v7490
    %v8172 = vunpack.c.l.b16 %v7491
    %v8173 = vunpack.c.h.b16 %v7491
    %v8174 = vunpack.c.l.b16 %v7492
    %v8175 = vunpack.c.h.b16 %v7492
    %v8176 = vunpack.c.l.b16 %v7493
    %v8177 = vunpack.c.h.b16 %v7493
    %v8178 = vunpack.c.l.b16 %v7494
    %v8179 = vunpack.c.h.b16 %v7494
    %v8180 = vunpack.c.l.b16 %v7495
    %v8181 = vunpack.c.h.b16 %v7495
    %v8182 = vunpack.c.l.b16 %v7496
    %v8183 = vunpack.c.h.b16 %v7496
    %v8184 = vunpack.c.l.b16 %v7497
    %v8185 = vunpack.c.h.b16 %v7497
    %v8186 = vunpack.c.l.b16 %v7498
    %v8187 = vunpack.c.h.b16 %v7498
    %v8188 = vunpack.c.l.b16 %v7499
    %v8189 = vunpack.c.h.b16 %v7499
    %v8190 = vunpack.c.l.b16 %v7500
    %v8191 = vunpack.c.h.b16 %v7500
    %v8192 = vunpack.c.l.b16 %v7501
    %v8193 = vunpack.c.h.b16 %v7501
    %v8194 = vunpack.c.l.b16 %v7502
    %v8195 = vunpack.c.h.b16 %v7502
    %v8196 = vunpack.c.l.b16 %v7503
    %v8197 = vunpack.c.h.b16 %v7503
    %v8198 = vunpack.c.l.b16 %v7504
    %v8199 = vunpack.c.h.b16 %v7504
    %v8200 = vunpack.c.l.b16 %v7505
    %v8201 = vunpack.c.h.b16 %v7505
    %v8202 = vunpack.c.l.b16 %v7506
    %v8203 = vunpack.c.h.b16 %v7506
    %v8204 = vunpack.c.l.b16 %v7507
    %v8205 = vunpack.c.h.b16 %v7507
    %v8206 = vunpack.c.l.b16 %v7508
    %v8207 = vunpack.c.h.b16 %v7508
    %v8208 = vunpack.c.l.b16 %v7509
    %v8209 = vunpack.c.h.b16 %v7509
    %v8210 = vunpack.c.l.b16 %v7510
    %v8211 = vunpack.c.h.b16 %v7510
    %v8212 = vunpack.c.l.b16 %v7511
    %v8213 = vunpack.c.h.b16 %v7511
    %v8214 = vunpack.c.l.b16 %v7512
    %v8215 = vunpack.c.h.b16 %v7512
    %v8216 = vunpack.c.l.b16 %v7513
    %v8217 = vunpack.c.h.b16 %v7513
    %v8218 = vunpack.c.l.b16 %v7514
    %v8219 = vunpack.c.h.b16 %v7514
    %v8220 = vunpack.c.l.b16 %v7515
    %v8221 = vunpack.c.h.b16 %v7515
    %v8222 = vunpack.c.l.b16 %v7516
    %v8223 = vunpack.c.h.b16 %v7516
    %v8224 = vunpack.c.l.b16 %v7517
    %v8225 = vunpack.c.h.b16 %v7517
    %v8226 = vunpack.c.l.b16 %v7518
    %v8227 = vunpack.c.h.b16 %v7518
    %v8228 = vunpack.c.l.b16 %v7519
    %v8229 = vunpack.c.h.b16 %v7519
    %v8230 = vunpack.c.l.b16 %v7520
    %v8231 = vunpack.c.h.b16 %v7520
    %v8232 = vunpack.c.l.b16 %v7521
    %v8233 = vunpack.c.h.b16 %v7521
    %v8234 = vunpack.c.l.b16 %v7522
    %v8235 = vunpack.c.h.b16 %v7522
    %v8236 = vunpack.c.l.b16 %v7523
    %v8237 = vunpack.c.h.b16 %v7523
    %v8238 = vunpack.c.l.b16 %v7524
    %v8239 = vunpack.c.h.b16 %v7524
    %v8240 = vunpack.c.l.b16 %v7525
    %v8241 = vunpack.c.h.b16 %v7525
    %v8242 = vunpack.c.l.b16 %v7526
    %v8243 = vunpack.c.h.b16 %v7526
    %v8244 = vunpack.c.l.b16 %v7527
    %v8245 = vunpack.c.h.b16 %v7527
    %v8246 = vunpack.c.l.b16 %v7528
    %v8247 = vunpack.c.h.b16 %v7528
    %v8248 = vunpack.c.l.b16 %v7529
    %v8249 = vunpack.c.h.b16 %v7529
    %v8250 = vunpack.c.l.b16 %v7530
    %v8251 = vunpack.c.h.b16 %v7530
    %v8252 = vunpack.c.l.b16 %v7531
    %v8253 = vunpack.c.h.b16 %v7531
    %v8254 = vunpack.c.l.b16 %v7532
    %v8255 = vunpack.c.h.b16 %v7532
    %v8256 = vunpack.c.l.b16 %v7533
    %v8257 = vunpack.c.h.b16 %v7533
    %v8258 = vunpack.c.l.b16 %v7534
    %v8259 = vunpack.c.h.b16 %v7534
    %v8260 = vunpack.c.l.b16 %v7535
    %v8261 = vunpack.c.h.b16 %v7535
    %v8262 = vunpack.c.l.b16 %v7536
    %v8263 = vunpack.c.h.b16 %v7536
    %v8264 = vunpack.c.l.b16 %v7537
    %v8265 = vunpack.c.h.b16 %v7537
    %v8266 = vunpack.c.l.b16 %v7538
    %v8267 = vunpack.c.h.b16 %v7538
    %v8268 = vunpack.c.l.b16 %v7539
    %v8269 = vunpack.c.h.b16 %v7539
    %v8270 = vunpack.c.l.b16 %v7540
    %v8271 = vunpack.c.h.b16 %v7540
    %v8272 = vunpack.c.l.b16 %v7541
    %v8273 = vunpack.c.h.b16 %v7541
    %v8274 = vunpack.c.l.b16 %v7542
    %v8275 = vunpack.c.h.b16 %v7542
    %v8276 = vunpack.c.l.b16 %v7543
    %v8277 = vunpack.c.h.b16 %v7543
    %v8278 = vunpack.c.l.b16 %v7544
    %v8279 = vunpack.c.h.b16 %v7544
    %v8280 = vunpack.c.l.b16 %v7545
    %v8281 = vunpack.c.h.b16 %v7545
    %v8282 = vunpack.c.l.b16 %v7546
    %v8283 = vunpack.c.h.b16 %v7546
    %v8284 = vunpack.c.l.b16 %v7547
    %v8285 = vunpack.c.h.b16 %v7547
    %v8286 = vunpack.c.l.b16 %v7548
    %v8287 = vunpack.c.h.b16 %v7548
    %v8288 = vunpack.c.l.b16 %v7549
    %v8289 = vunpack.c.h.b16 %v7549
    %v8290 = vunpack.c.l.b16 %v7550
    %v8291 = vunpack.c.h.b16 %v7550
    %v8292 = vunpack.c.l.b16 %v7551
    %v8293 = vunpack.c.h.b16 %v7551
    %v8294 = vunpack.c.l.b16 %v7552
    %v8295 = vunpack.c.h.b16 %v7552
    %v8296 = vunpack.c.l.b16 %v7553
    %v8297 = vunpack.c.h.b16 %v7553
    %v8298 = vunpack.c.l.b16 %v7554
    %v8299 = vunpack.c.h.b16 %v7554
    %v8300 = vunpack.c.l.b16 %v7555
    %v8301 = vunpack.c.h.b16 %v7555
    %v8302 = vunpack.c.l.b16 %v7556
    %v8303 = vunpack.c.h.b16 %v7556
    %v8304 = vunpack.c.l.b16 %v7557
    %v8305 = vunpack.c.h.b16 %v7557
    %v8306 = vunpack.c.l.b16 %v7558
    %v8307 = vunpack.c.h.b16 %v7558
    %v8308 = vunpack.c.l.b16 %v7559
    %v8309 = vunpack.c.h.b16 %v7559
    %v8310 = vunpack.c.l.b16 %v7560
    %v8311 = vunpack.c.h.b16 %v7560
    %v8312 = vunpack.c.l.b16 %v7561
    %v8313 = vunpack.c.h.b16 %v7561
    %v8314 = vunpack.c.l.b16 %v7562
    %v8315 = vunpack.c.h.b16 %v7562
    %v8316 = vunpack.c.l.b16 %v7563
    %v8317 = vunpack.c.h.b16 %v7563
    %v8318 = vunpack.c.l.b16 %v7564
    %v8319 = vunpack.c.h.b16 %v7564
    %v8320 = vunpack.c.l.b16 %v7565
    %v8321 = vunpack.c.h.b16 %v7565
    %v8322 = vunpack.c.l.b16 %v7566
    %v8323 = vunpack.c.h.b16 %v7566
    %v8324 = vunpack.c.l.b16 %v7567
    %v8325 = vunpack.c.h.b16 %v7567
    %v8326 = vunpack.c.l.b16 %v7568
    %v8327 = vunpack.c.h.b16 %v7568
    %v8328 = vunpack.c.l.b16 %v7569
    %v8329 = vunpack.c.h.b16 %v7569
    %v8330 = vunpack.c.l.b16 %v7570
    %v8331 = vunpack.c.h.b16 %v7570
    %v8332 = vunpack.c.l.b16 %v7571
    %v8333 = vunpack.c.h.b16 %v7571
    %v8334 = vunpack.c.l.b16 %v7572
    %v8335 = vunpack.c.h.b16 %v7572
    %v8336 = vunpack.c.l.b16 %v7573
    %v8337 = vunpack.c.h.b16 %v7573
    %v8338 = vunpack.c.l.b16 %v7574
    %v8339 = vunpack.c.h.b16 %v7574
    %v8340 = vunpack.c.l.b16 %v7575
    %v8341 = vunpack.c.h.b16 %v7575
    %v8342 = vunpack.c.l.b16 %v7576
    %v8343 = vunpack.c.h.b16 %v7576
    %v8344 = vunpack.c.l.b16 %v7577
    %v8345 = vunpack.c.h.b16 %v7577
    %v8346 = vunpack.c.l.b16 %v7578
    %v8347 = vunpack.c.h.b16 %v7578
    %v8348 = vunpack.c.l.b16 %v7579
    %v8349 = vunpack.c.h.b16 %v7579
    %v8350 = vunpack.c.l.b16 %v7580
    %v8351 = vunpack.c.h.b16 %v7580
    %v8352 = vunpack.c.l.b16 %v7581
    %v8353 = vunpack.c.h.b16 %v7581
    %v8354 = vunpack.c.l.b16 %v7582
    %v8355 = vunpack.c.h.b16 %v7582
    %v8356 = vunpack.c.l.b16 %v7583
    %v8357 = vunpack.c.h.b16 %v7583
    %v8358 = vunpack.c.l.b16 %v7584
    %v8359 = vunpack.c.h.b16 %v7584
    %v8360 = vunpack.c.l.b16 %v7585
    %v8361 = vunpack.c.h.b16 %v7585
    %v8362 = vunpack.c.l.b16 %v7586
    %v8363 = vunpack.c.h.b16 %v7586
    %v8364 = vunpack.c.l.b16 %v7587
    %v8365 = vunpack.c.h.b16 %v7587
    %v8366 = vunpack.c.l.b16 %v7588
    %v8367 = vunpack.c.h.b16 %v7588
    %v8368 = vunpack.c.l.b16 %v7589
    %v8369 = vunpack.c.h.b16 %v7589
    %v8370 = vunpack.c.l.b16 %v7590
    %v8371 = vunpack.c.h.b16 %v7590
    %v8372 = vunpack.c.l.b16 %v7591
    %v8373 = vunpack.c.h.b16 %v7591
    %v8374 = vunpack.c.l.b16 %v7592
    %v8375 = vunpack.c.h.b16 %v7592
    %v8376 = vunpack.c.l.b16 %v7593
    %v8377 = vunpack.c.h.b16 %v7593
    %v8378 = vunpack.c.l.b16 %v7594
    %v8379 = vunpack.c.h.b16 %v7594
    %v8380 = vunpack.c.l.b16 %v7595
    %v8381 = vunpack.c.h.b16 %v7595
    %v8382 = vunpack.c.l.b16 %v7596
    %v8383 = vunpack.c.h.b16 %v7596
    %v8384 = vunpack.c.l.b16 %v7597
    %v8385 = vunpack.c.h.b16 %v7597
    %v8386 = vunpack.c.l.b16 %v7598
    %v8387 = vunpack.c.h.b16 %v7598
    %v8388 = vunpack.c.l.b16 %v7599
    %v8389 = vunpack.c.h.b16 %v7599
    %v8390 = vunpack.c.l.b16 %v7600
    %v8391 = vunpack.c.h.b16 %v7600
    %v8392 = vunpack.c.l.b16 %v7601
    %v8393 = vunpack.c.h.b16 %v7601
    %v8394 = vunpack.c.l.b16 %v7602
    %v8395 = vunpack.c.h.b16 %v7602
    %v8396 = vunpack.c.l.b16 %v7603
    %v8397 = vunpack.c.h.b16 %v7603
    %v8398 = vunpack.c.l.b16 %v7604
    %v8399 = vunpack.c.h.b16 %v7604
    %v8400 = vunpack.c.l.b16 %v7605
    %v8401 = vunpack.c.h.b16 %v7605
    %v8402 = vunpack.c.l.b16 %v7606
    %v8403 = vunpack.c.h.b16 %v7606
    %v8404 = vunpack.c.l.b16 %v7607
    %v8405 = vunpack.c.h.b16 %v7607
    %v8406 = vunpack.c.l.b16 %v7608
    %v8407 = vunpack.c.h.b16 %v7608
    %v8408 = vunpack.c.l.b16 %v7609
    %v8409 = vunpack.c.h.b16 %v7609
    %v8410 = vunpack.c.l.b16 %v7610
    %v8411 = vunpack.c.h.b16 %v7610
    %v8412 = vunpack.c.l.b16 %v7611
    %v8413 = vunpack.c.h.b16 %v7611
    %v8414 = vunpack.c.l.b16 %v7612
    %v8415 = vunpack.c.h.b16 %v7612
    %v8416 = vunpack.c.l.b16 %v7613
    %v8417 = vunpack.c.h.b16 %v7613
    %v8418 = vunpack.c.l.b16 %v7614
    %v8419 = vunpack.c.h.b16 %v7614
    %v8420 = vunpack.c.l.b16 %v7615
    %v8421 = vunpack.c.h.b16 %v7615
    %v8422 = vunpack.c.l.b16 %v7616
    %v8423 = vunpack.c.h.b16 %v7616
    %v8424 = vunpack.c.l.b16 %v7617
    %v8425 = vunpack.c.h.b16 %v7617
    %v8426 = vunpack.c.l.b16 %v7618
    %v8427 = vunpack.c.h.b16 %v7618
    %v8428 = vunpack.c.l.b16 %v7619
    %v8429 = vunpack.c.h.b16 %v7619
    %v8430 = vunpack.c.l.b16 %v7620
    %v8431 = vunpack.c.h.b16 %v7620
    %v8432 = vunpack.c.l.b16 %v7621
    %v8433 = vunpack.c.h.b16 %v7621
    %v8434 = vunpack.c.l.b16 %v7622
    %v8435 = vunpack.c.h.b16 %v7622
    %v8436 = vunpack.c.l.b16 %v7623
    %v8437 = vunpack.c.h.b16 %v7623
    %v8438 = vunpack.c.l.b16 %v7624
    %v8439 = vunpack.c.h.b16 %v7624
    %v8440 = vunpack.c.l.b16 %v7625
    %v8441 = vunpack.c.h.b16 %v7625
    %v8442 = vunpack.c.l.b16 %v7626
    %v8443 = vunpack.c.h.b16 %v7626
    %v8444 = vunpack.c.l.b16 %v7627
    %v8445 = vunpack.c.h.b16 %v7627
    %v8446 = vunpack.c.l.b16 %v7628
    %v8447 = vunpack.c.h.b16 %v7628
    %v8448 = vunpack.c.l.b16 %v7629
    %v8449 = vunpack.c.h.b16 %v7629
    %v8450 = vunpack.c.l.b16 %v7630
    %v8451 = vunpack.c.h.b16 %v7630
    %v8452 = vunpack.c.l.b16 %v7631
    %v8453 = vunpack.c.h.b16 %v7631
    %v8454 = vunpack.c.l.b16 %v7632
    %v8455 = vunpack.c.h.b16 %v7632
    %v8456 = vunpack.c.l.b16 %v7633
    %v8457 = vunpack.c.h.b16 %v7633
    %v8458 = vunpack.c.l.b16 %v7634
    %v8459 = vunpack.c.h.b16 %v7634
    %v8460 = vunpack.c.l.b16 %v7635
    %v8461 = vunpack.c.h.b16 %v7635
    %v8462 = vunpack.c.l.b16 %v7636
    %v8463 = vunpack.c.h.b16 %v7636
    %v8464 = vunpack.c.l.b16 %v7637
    %v8465 = vunpack.c.h.b16 %v7637
    %v8466 = vunpack.c.l.b16 %v7638
    %v8467 = vunpack.c.h.b16 %v7638
    %v8468 = vunpack.c.l.b16 %v7639
    %v8469 = vunpack.c.h.b16 %v7639
    %v8470 = vunpack.c.l.b16 %v7640
    %v8471 = vunpack.c.h.b16 %v7640
    %v8472 = vunpack.c.l.b16 %v7641
    %v8473 = vunpack.c.h.b16 %v7641
    %v8474 = vunpack.c.l.b16 %v7642
    %v8475 = vunpack.c.h.b16 %v7642
    %v8476 = vunpack.c.l.b16 %v7643
    %v8477 = vunpack.c.h.b16 %v7643
    %v8478 = vunpack.c.l.b16 %v7644
    %v8479 = vunpack.c.h.b16 %v7644
    %v8480 = vunpack.c.l.b16 %v7645
    %v8481 = vunpack.c.h.b16 %v7645
    %v8482 = vunpack.c.l.b16 %v7646
    %v8483 = vunpack.c.h.b16 %v7646
    %v8484 = vunpack.c.l.b16 %v7647
    %v8485 = vunpack.c.h.b16 %v7647
    %v8486 = vunpack.c.l.b16 %v7648
    %v8487 = vunpack.c.h.b16 %v7648
    %v8488 = vunpack.c.l.b16 %v7649
    %v8489 = vunpack.c.h.b16 %v7649
    %v8490 = vunpack.c.l.b16 %v7650
    %v8491 = vunpack.c.h.b16 %v7650
    %v8492 = vunpack.c.l.b16 %v7651
    %v8493 = vunpack.c.h.b16 %v7651
    %v8494 = vunpack.c.l.b16 %v7652
    %v8495 = vunpack.c.h.b16 %v7652
    %v8496 = vunpack.c.l.b16 %v7653
    %v8497 = vunpack.c.h.b16 %v7653
    %v8498 = vunpack.c.l.b16 %v7654
    %v8499 = vunpack.c.h.b16 %v7654
    %v8500 = vunpack.c.l.b16 %v7655
    %v8501 = vunpack.c.h.b16 %v7655
    %v8502 = vunpack.c.l.b16 %v7656
    %v8503 = vunpack.c.h.b16 %v7656
    %v8504 = vunpack.c.l.b16 %v7657
    %v8505 = vunpack.c.h.b16 %v7657
    %v8506 = vunpack.c.l.b16 %v7658
    %v8507 = vunpack.c.h.b16 %v7658
    %v8508 = vunpack.c.l.b16 %v7659
    %v8509 = vunpack.c.h.b16 %v7659
    %v8510 = vunpack.c.l.b16 %v7660
    %v8511 = vunpack.c.h.b16 %v7660
    %v8512 = vunpack.c.l.b16 %v7661
    %v8513 = vunpack.c.h.b16 %v7661
    %v8514 = vunpack.c.l.b16 %v7662
    %v8515 = vunpack.c.h.b16 %v7662
    %v8516 = vunpack.c.l.b16 %v7663
    %v8517 = vunpack.c.h.b16 %v7663
    %v8518 = vunpack.c.l.b16 %v7664
    %v8519 = vunpack.c.h.b16 %v7664
    %v8520 = vunpack.c.l.b16 %v7665
    %v8521 = vunpack.c.h.b16 %v7665
    %v8522 = vunpack.c.l.b16 %v7666
    %v8523 = vunpack.c.h.b16 %v7666
    %v8524 = vunpack.c.l.b16 %v7667
    %v8525 = vunpack.c.h.b16 %v7667
    %v8526 = vunpack.c.l.b16 %v7668
    %v8527 = vunpack.c.h.b16 %v7668
    %v8528 = vunpack.c.l.b16 %v7669
    %v8529 = vunpack.c.h.b16 %v7669
    %v8530 = vunpack.c.l.b16 %v7670
    %v8531 = vunpack.c.h.b16 %v7670
    %v8532 = vunpack.c.l.b16 %v7671
    %v8533 = vunpack.c.h.b16 %v7671
    %v8534 = vunpack.c.l.b16 %v7672
    %v8535 = vunpack.c.h.b16 %v7672
    %v8536 = vunpack.c.l.b16 %v7673
    %v8537 = vunpack.c.h.b16 %v7673
    %v8538 = vunpack.c.l.b16 %v7674
    %v8539 = vunpack.c.h.b16 %v7674
    %v8540 = vunpack.c.l.b16 %v7675
    %v8541 = vunpack.c.h.b16 %v7675
    %v8542 = vunpack.c.l.b16 %v7676
    %v8543 = vunpack.c.h.b16 %v7676
    %v8544 = vunpack.c.l.b16 %v7677
    %v8545 = vunpack.c.h.b16 %v7677
    %v8546 = vunpack.c.l.b16 %v7678
    %v8547 = vunpack.c.h.b16 %v7678
    %v8548 = vunpack.c.l.b16 %v7679
    %v8549 = vunpack.c.h.b16 %v7679
    %v8550 = vunpack.c.l.b16 %v7680
    %v8551 = vunpack.c.h.b16 %v7680
    %v8552 = vunpack.c.l.b16 %v7681
    %v8553 = vunpack.c.h.b16 %v7681
    %v8554 = vunpack.c.l.b16 %v7682
    %v8555 = vunpack.c.h.b16 %v7682
    %v8556 = vunpack.c.l.b16 %v7683
    %v8557 = vunpack.c.h.b16 %v7683
    %v8558 = vunpack.c.l.b16 %v7684
    %v8559 = vunpack.c.h.b16 %v7684
    %v8560 = vunpack.c.l.b16 %v7685
    %v8561 = vunpack.c.h.b16 %v7685
    %v8562 = vunpack.c.l.b16 %v7686
    %v8563 = vunpack.c.h.b16 %v7686
    %v8564 = vunpack.c.l.b16 %v7687
    %v8565 = vunpack.c.h.b16 %v7687
    %v8566 = vunpack.c.l.b16 %v7688
    %v8567 = vunpack.c.h.b16 %v7688
    %v8568 = vunpack.c.l.b16 %v7689
    %v8569 = vunpack.c.h.b16 %v7689
    %v8570 = vunpack.c.l.b16 %v7690
    %v8571 = vunpack.c.h.b16 %v7690
    %v8572 = vunpack.c.l.b16 %v7691
    %v8573 = vunpack.c.h.b16 %v7691
    %v8574 = vunpack.c.l.b16 %v7692
    %v8575 = vunpack.c.h.b16 %v7692
    %v8576 = vunpack.c.l.b16 %v7693
    %v8577 = vunpack.c.h.b16 %v7693
    %v8578 = vunpack.c.l.b16 %v7694
    %v8579 = vunpack.c.h.b16 %v7694
    %v8580 = vunpack.c.l.b16 %v7695
    %v8581 = vunpack.c.h.b16 %v7695
    %v8582 = vunpack.c.l.b16 %v7696
    %v8583 = vunpack.c.h.b16 %v7696
    %v8584 = vunpack.c.l.b16 %v7697
    %v8585 = vunpack.c.h.b16 %v7697
    %v8586 = vunpack.c.l.b16 %v7698
    %v8587 = vunpack.c.h.b16 %v7698
    %v8588 = vunpack.c.l.b16 %v7699
    %v8589 = vunpack.c.h.b16 %v7699
    %v8590 = vunpack.c.l.b16 %v7700
    %v8591 = vunpack.c.h.b16 %v7700
    %v8592 = vunpack.c.l.b16 %v7701
    %v8593 = vunpack.c.h.b16 %v7701
    %v8594 = vunpack.c.l.b16 %v7702
    %v8595 = vunpack.c.h.b16 %v7702
    %v8596 = vunpack.c.l.b16 %v7703
    %v8597 = vunpack.c.h.b16 %v7703
    %v8598 = vunpack.c.l.b16 %v7704
    %v8599 = vunpack.c.h.b16 %v7704
    %v8600 = vunpack.c.l.b16 %v7705
    %v8601 = vunpack.c.h.b16 %v7705
    %v8602 = vunpack.c.l.b16 %v7706
    %v8603 = vunpack.c.h.b16 %v7706
    %v8604 = vunpack.c.l.b16 %v7707
    %v8605 = vunpack.c.h.b16 %v7707
    %v8606 = vunpack.c.l.b16 %v7708
    %v8607 = vunpack.c.h.b16 %v7708
    %v8608 = vunpack.c.l.b16 %v7709
    %v8609 = vunpack.c.h.b16 %v7709
    %v8610 = vunpack.c.l.b16 %v7710
    %v8611 = vunpack.c.h.b16 %v7710
    %v8612 = vunpack.c.l.b16 %v7711
    %v8613 = vunpack.c.h.b16 %v7711
    %v8614 = vunpack.c.l.b16 %v7712
    %v8615 = vunpack.c.h.b16 %v7712
    %v8616 = vunpack.c.l.b16 %v7713
    %v8617 = vunpack.c.h.b16 %v7713
    %v8618 = vunpack.c.l.b16 %v7714
    %v8619 = vunpack.c.h.b16 %v7714
    %v8620 = vunpack.c.l.b16 %v7715
    %v8621 = vunpack.c.h.b16 %v7715
    %v8622 = vunpack.c.l.b16 %v7716
    %v8623 = vunpack.c.h.b16 %v7716
    %v8624 = vunpack.c.l.b16 %v7717
    %v8625 = vunpack.c.h.b16 %v7717
    %v8626 = vunpack.c.l.b16 %v7718
    %v8627 = vunpack.c.h.b16 %v7718
    %v8628 = vunpack.c.l.b16 %v7719
    %v8629 = vunpack.c.h.b16 %v7719
    %v8630 = vunpack.c.l.b16 %v7720
    %v8631 = vunpack.c.h.b16 %v7720
    %v8632 = vunpack.c.l.b16 %v7721
    %v8633 = vunpack.c.h.b16 %v7721
    %v8634 = vunpack.c.l.b16 %v7722
    %v8635 = vunpack.c.h.b16 %v7722
    %v8636 = vunpack.c.l.b16 %v7723
    %v8637 = vunpack.c.h.b16 %v7723
    %v8638 = vunpack.c.l.b16 %v7724
    %v8639 = vunpack.c.h.b16 %v7724
    %v8640 = vunpack.c.l.b16 %v7725
    %v8641 = vunpack.c.h.b16 %v7725
    %v8642 = vunpack.c.l.b16 %v7726
    %v8643 = vunpack.c.h.b16 %v7726
    %v8644 = vunpack.c.l.b16 %v7727
    %v8645 = vunpack.c.h.b16 %v7727
    %v8646 = vunpack.c.l.b16 %v7728
    %v8647 = vunpack.c.h.b16 %v7728
    %v8648 = vunpack.c.l.b16 %v7729
    %v8649 = vunpack.c.h.b16 %v7729
    %v8650 = vunpack.c.l.b16 %v7730
    %v8651 = vunpack.c.h.b16 %v7730
    %v8652 = vunpack.c.l.b16 %v7731
    %v8653 = vunpack.c.h.b16 %v7731
    %v8654 = vunpack.c.l.b16 %v7732
    %v8655 = vunpack.c.h.b16 %v7732
    %v8656 = vunpack.c.l.b16 %v7733
    %v8657 = vunpack.c.h.b16 %v7733
    %v8658 = vunpack.c.l.b16 %v7734
    %v8659 = vunpack.c.h.b16 %v7734
    %v8660 = vunpack.c.l.b16 %v7735
    %v8661 = vunpack.c.h.b16 %v7735
    %v8662 = vunpack.c.l.b16 %v7736
    %v8663 = vunpack.c.h.b16 %v7736
    %v8664 = vunpack.c.l.b16 %v7737
    %v8665 = vunpack.c.h.b16 %v7737
    %v8666 = vpack.c.b16 %v8102, %v8090
    %v8667 = vpack.c.b16 %v8103, %v8091
    %v8668 = vpack.c.b16 %v8104, %v8092
    %v8669 = vpack.c.b16 %v8105, %v8093
    %v8670 = vpack.c.b16 %v8106, %v8094
    %v8671 = vpack.c.b16 %v8107, %v8095
    %v8672 = vpack.c.b16 %v8108, %v8096
    %v8673 = vpack.c.b16 %v8109, %v8097
    %v8674 = vpack.c.b16 %v8110, %v8098
    %v8675 = vpack.c.b16 %v8111, %v8099
    %v8676 = vpack.c.b16 %v8112, %v8100
    %v8677 = vpack.c.b16 %v8113, %v8101
    %v8678 = vpack.c.b16 %v8126, %v8114
    %v8679 = vpack.c.b16 %v8127, %v8115
    %v8680 = vpack.c.b16 %v8128, %v8116
    %v8681 = vpack.c.b16 %v8129, %v8117
    %v8682 = vpack.c.b16 %v8130, %v8118
    %v8683 = vpack.c.b16 %v8131, %v8119
    %v8684 = vpack.c.b16 %v8132, %v8120
    %v8685 = vpack.c.b16 %v8133, %v8121
    %v8686 = vpack.c.b16 %v8134, %v8122
    %v8687 = vpack.c.b16 %v8135, %v8123
    %v8688 = vpack.c.b16 %v8136, %v8124
    %v8689 = vpack.c.b16 %v8137, %v8125
    %v8690 = vpack.c.b16 %v8150, %v8138
    %v8691 = vpack.c.b16 %v8151, %v8139
    %v8692 = vpack.c.b16 %v8152, %v8140
    %v8693 = vpack.c.b16 %v8153, %v8141
    %v8694 = vpack.c.b16 %v8154, %v8142
    %v8695 = vpack.c.b16 %v8155, %v8143
    %v8696 = vpack.c.b16 %v8156, %v8144
    %v8697 = vpack.c.b16 %v8157, %v8145
    %v8698 = vpack.c.b16 %v8158, %v8146
    %v8699 = vpack.c.b16 %v8159, %v8147
    %v8700 = vpack.c.b16 %v8160, %v8148
    %v8701 = vpack.c.b16 %v8161, %v8149
    %v8702 = vpack.c.b16 %v8174, %v8162
    %v8703 = vpack.c.b16 %v8175, %v8163
    %v8704 = vpack.c.b16 %v8176, %v8164
    %v8705 = vpack.c.b16 %v8177, %v8165
    %v8706 = vpack.c.b16 %v8178, %v8166
    %v8707 = vpack.c.b16 %v8179, %v8167
    %v8708 = vpack.c.b16 %v8180, %v8168
    %v8709 = vpack.c.b16 %v8181, %v8169
    %v8710 = vpack.c.b16 %v8182, %v8170
    %v8711 = vpack.c.b16 %v8183, %v8171
    %v8712 = vpack.c.b16 %v8184, %v8172
    %v8713 = vpack.c.b16 %v8185, %v8173
    %v8714 = vpack.c.b16 %v8198, %v8186
    %v8715 = vpack.c.b16 %v8199, %v8187
    %v8716 = vpack.c.b16 %v8200, %v8188
    %v8717 = vpack.c.b16 %v8201, %v8189
    %v8718 = vpack.c.b16 %v8202, %v8190
    %v8719 = vpack.c.b16 %v8203, %v8191
    %v8720 = vpack.c.b16 %v8204, %v8192
    %v8721 = vpack.c.b16 %v8205, %v8193
    %v8722 = vpack.c.b16 %v8206, %v8194
    %v8723 = vpack.c.b16 %v8207, %v8195
    %v8724 = vpack.c.b16 %v8208, %v8196
    %v8725 = vpack.c.b16 %v8209, %v8197
    %v8726 = vpack.c.b16 %v8222, %v8210
    %v8727 = vpack.c.b16 %v8223, %v8211
    %v8728 = vpack.c.b16 %v8224, %v8212
    %v8729 = vpack.c.b16 %v8225, %v8213
    %v8730 = vpack.c.b16 %v8226, %v8214
    %v8731 = vpack.c.b16 %v8227, %v8215
    %v8732 = vpack.c.b16 %v8228, %v8216
    %v8733 = vpack.c.b16 %v8229, %v8217
    %v8734 = vpack.c.b16 %v8230, %v8218
    %v8735 = vpack.c.b16 %v8231, %v8219
    %v8736 = vpack.c.b16 %v8232, %v8220
    %v8737 = vpack.c.b16 %v8233, %v8221
    %v8738 = vpack.c.b16 %v8246, %v8234
    %v8739 = vpack.c.b16 %v8247, %v8235
    %v8740 = vpack.c.b16 %v8248, %v8236
    %v8741 = vpack.c.b16 %v8249, %v8237
    %v8742 = vpack.c.b16 %v8250, %v8238
    %v8743 = vpack.c.b16 %v8251, %v8239
    %v8744 = vpack.c.b16 %v8252, %v8240
    %v8745 = vpack.c.b16 %v8253, %v8241
    %v8746 = vpack.c.b16 %v8254, %v8242
    %v8747 = vpack.c.b16 %v8255, %v8243
    %v8748 = vpack.c.b16 %v8256, %v8244
    %v8749 = vpack.c.b16 %v8257, %v8245
    %v8750 = vpack.c.b16 %v8270, %v8258
    %v8751 = vpack.c.b16 %v8271, %v8259
    %v8752 = vpack.c.b16 %v8272, %v8260
    %v8753 = vpack.c.b16 %v8273, %v8261
    %v8754 = vpack.c.b16 %v8274, %v8262
    %v8755 = vpack.c.b16 %v8275, %v8263
    %v8756 = vpack.c.b16 %v8276, %v8264
    %v8757 = vpack.c.b16 %v8277, %v8265
    %v8758 = vpack.c.b16 %v8278, %v8266
    %v8759 = vpack.c.b16 %v8279, %v8267
    %v8760 = vpack.c.b16 %v8280, %v8268
    %v8761 = vpack.c.b16 %v8281, %v8269
    %v8762 = vpack.c.b16 %v8294, %v8282
    %v8763 = vpack.c.b16 %v8295, %v8283
    %v8764 = vpack.c.b16 %v8296, %v8284
    %v8765 = vpack.c.b16 %v8297, %v8285
    %v8766 = vpack.c.b16 %v8298, %v8286
    %v8767 = vpack.c.b16 %v8299, %v8287
    %v8768 = vpack.c.b16 %v8300, %v8288
    %v8769 = vpack.c.b16 %v8301, %v8289
    %v8770 = vpack.c.b16 %v8302, %v8290
    %v8771 = vpack.c.b16 %v8303, %v8291
    %v8772 = vpack.c.b16 %v8304, %v8292
    %v8773 = vpack.c.b16 %v8305, %v8293
    %v8774 = vpack.c.b16 %v8318, %v8306
    %v8775 = vpack.c.b16 %v8319, %v8307
    %v8776 = vpack.c.b16 %v8320, %v8308
    %v8777 = vpack.c.b16 %v8321, %v8309
    %v8778 = vpack.c.b16 %v8322, %v8310
    %v8779 = vpack.c.b16 %v8323, %v8311
    %v8780 = vpack.c.b16 %v8324, %v8312
    %v8781 = vpack.c.b16 %v8325, %v8313
    %v8782 = vpack.c.b16 %v8326, %v8314
    %v8783 = vpack.c.b16 %v8327, %v8315
    %v8784 = vpack.c.b16 %v8328, %v8316
    %v8785 = vpack.c.b16 %v8329, %v8317
    %v8786 = vpack.c.b16 %v8342, %v8330
    %v8787 = vpack.c.b16 %v8343, %v8331
    %v8788 = vpack.c.b16 %v8344, %v8332
    %v8789 = vpack.c.b16 %v8345, %v8333
    %v8790 = vpack.c.b16 %v8346, %v8334
    %v8791 = vpack.c.b16 %v8347, %v8335
    %v8792 = vpack.c.b16 %v8348, %v8336
    %v8793 = vpack.c.b16 %v8349, %v8337
    %v8794 = vpack.c.b16 %v8350, %v8338
    %v8795 = vpack.c.b16 %v8351, %v8339
    %v8796 = vpack.c.b16 %v8352, %v8340
    %v8797 = vpack.c.b16 %v8353, %v8341
    %v8798 = vpack.c.b16 %v8366, %v8354
    %v8799 = vpack.c.b16 %v8367, %v8355
    %v8800 = vpack.c.b16 %v8368, %v8356
    %v8801 = vpack.c.b16 %v8369, %v8357
    %v8802 = vpack.c.b16 %v8370, %v8358
    %v8803 = vpack.c.b16 %v8371, %v8359
    %v8804 = vpack.c.b16 %v8372, %v8360
    %v8805 = vpack.c.b16 %v8373, %v8361
    %v8806 = vpack.c.b16 %v8374, %v8362
    %v8807 = vpack.c.b16 %v8375, %v8363
    %v8808 = vpack.c.b16 %v8376, %v8364
    %v8809 = vpack.c.b16 %v8377, %v8365
    %v8810 = vpack.c.b16 %v8390, %v8378
    %v8811 = vpack.c.b16 %v8391, %v8379
    %v8812 = vpack.c.b16 %v8392, %v8380
    %v8813 = vpack.c.b16 %v8393, %v8381
    %v8814 = vpack.c.b16 %v8394, %v8382
    %v8815 = vpack.c.b16 %v8395, %v8383
    %v8816 = vpack.c.b16 %v8396, %v8384
    %v8817 = vpack.c.b16 %v8397, %v8385
    %v8818 = vpack.c.b16 %v8398, %v8386
    %v8819 = vpack.c.b16 %v8399, %v8387
    %v8820 = vpack.c.b16 %v8400, %v8388
    %v8821 = vpack.c.b16 %v8401, %v8389
    %v8822 = vpack.c.b16 %v8414, %v8402
    %v8823 = vpack.c.b16 %v8415, %v8403
    %v8824 = vpack.c.b16 %v8416, %v8404
    %v8825 = vpack.c.b16 %v8417, %v8405
    %v8826 = vpack.c.b16 %v8418, %v8406
    %v8827 = vpack.c.b16 %v8419, %v8407
    %v8828 = vpack.c.b16 %v8420, %v8408
    %v8829 = vpack.c.b16 %v8421, %v8409
    %v8830 = vpack.c.b16 %v8422, %v8410
    %v8831 = vpack.c.b16 %v8423, %v8411
    %v8832 = vpack.c.b16 %v8424, %v8412
    %v8833 = vpack.c.b16 %v8425, %v8413
    %v8834 = vpack.c.b16 %v8438, %v8426
    %v8835 = vpack.c.b16 %v8439, %v8427
    %v8836 = vpack.c.b16 %v8440, %v8428
    %v8837 = vpack.c.b16 %v8441, %v8429
    %v8838 = vpack.c.b16 %v8442, %v8430
    %v8839 = vpack.c.b16 %v8443, %v8431
    %v8840 = vpack.c.b16 %v8444, %v8432
    %v8841 = vpack.c.b16 %v8445, %v8433
    %v8842 = vpack.c.b16 %v8446, %v8434
    %v8843 = vpack.c.b16 %v8447, %v8435
    %v8844 = vpack.c.b16 %v8448, %v8436
    %v8845 = vpack.c.b16 %v8449, %v8437
    %v8846 = vpack.c.b16 %v8462, %v8450
    %v8847 = vpack.c.b16 %v8463, %v8451
    %v8848 = vpack.c.b16 %v8464, %v8452
    %v8849 = vpack.c.b16 %v8465, %v8453
    %v8850 = vpack.c.b16 %v8466, %v8454
    %v8851 = vpack.c.b16 %v8467, %v8455
    %v8852 = vpack.c.b16 %v8468, %v8456
    %v8853 = vpack.c.b16 %v8469, %v8457
    %v8854 = vpack.c.b16 %v8470, %v8458
    %v8855 = vpack.c.b16 %v8471, %v8459
    %v8856 = vpack.c.b16 %v8472, %v8460
    %v8857 = vpack.c.b16 %v8473, %v8461
    %v8858 = vpack.c.b16 %v8486, %v8474
    %v8859 = vpack.c.b16 %v8487, %v8475
    %v8860 = vpack.c.b16 %v8488, %v8476
    %v8861 = vpack.c.b16 %v8489, %v8477
    %v8862 = vpack.c.b16 %v8490, %v8478
    %v8863 = vpack.c.b16 %v8491, %v8479
    %v8864 = vpack.c.b16 %v8492, %v8480
    %v8865 = vpack.c.b16 %v8493, %v8481
    %v8866 = vpack.c.b16 %v8494, %v8482
    %v8867 = vpack.c.b16 %v8495, %v8483
    %v8868 = vpack.c.b16 %v8496, %v8484
    %v8869 = vpack.c.b16 %v8497, %v8485
    %v8870 = vpack.c.b16 %v8510, %v8498
    %v8871 = vpack.c.b16 %v8511, %v8499
    %v8872 = vpack.c.b16 %v8512, %v8500
    %v8873 = vpack.c.b16 %v8513, %v8501
    %v8874 = vpack.c.b16 %v8514, %v8502
    %v8875 = vpack.c.b16 %v8515, %v8503
    %v8876 = vpack.c.b16 %v8516, %v8504
    %v8877 = vpack.c.b16 %v8517, %v8505
    %v8878 = vpack.c.b16 %v8518, %v8506
    %v8879 = vpack.c.b16 %v8519, %v8507
    %v8880 = vpack.c.b16 %v8520, %v8508
    %v8881 = vpack.c.b16 %v8521, %v8509
    %v8882 = vpack.c.b16 %v8534, %v8522
    %v8883 = vpack.c.b16 %v8535, %v8523
    %v8884 = vpack.c.b16 %v8536, %v8524
    %v8885 = vpack.c.b16 %v8537, %v8525
    %v8886 = vpack.c.b16 %v8538, %v8526
    %v8887 = vpack.c.b16 %v8539, %v8527
    %v8888 = vpack.c.b16 %v8540, %v8528
    %v8889 = vpack.c.b16 %v8541, %v8529
    %v8890 = vpack.c.b16 %v8542, %v8530
    %v8891 = vpack.c.b16 %v8543, %v8531
    %v8892 = vpack.c.b16 %v8544, %v8532
    %v8893 = vpack.c.b16 %v8545, %v8533
    %v8894 = vpack.c.b16 %v8558, %v8546
    %v8895 = vpack.c.b16 %v8559, %v8547
    %v8896 = vpack.c.b16 %v8560, %v8548
    %v8897 = vpack.c.b16 %v8561, %v8549
    %v8898 = vpack.c.b16 %v8562, %v8550
    %v8899 = vpack.c.b16 %v8563, %v8551
    %v8900 = vpack.c.b16 %v8564, %v8552
    %v8901 = vpack.c.b16 %v8565, %v8553
    %v8902 = vpack.c.b16 %v8566, %v8554
    %v8903 = vpack.c.b16 %v8567, %v8555
    %v8904 = vpack.c.b16 %v8568, %v8556
    %v8905 = vpack.c.b16 %v8569, %v8557
    %v8906 = vpack.c.b16 %v8582, %v8570
    %v8907 = vpack.c.b16 %v8583, %v8571
    %v8908 = vpack.c.b16 %v8584, %v8572
    %v8909 = vpack.c.b16 %v8585, %v8573
    %v8910 = vpack.c.b16 %v8586, %v8574
    %v8911 = vpack.c.b16 %v8587, %v8575
    %v8912 = vpack.c.b16 %v8588, %v8576
    %v8913 = vpack.c.b16 %v8589, %v8577
    %v8914 = vpack.c.b16 %v8590, %v8578
    %v8915 = vpack.c.b16 %v8591, %v8579
    %v8916 = vpack.c.b16 %v8592, %v8580
    %v8917 = vpack.c.b16 %v8593, %v8581
    %v8918 = vpack.c.b16 %v8606, %v8594
    %v8919 = vpack.c.b16 %v8607, %v8595
    %v8920 = vpack.c.b16 %v8608, %v8596
    %v8921 = vpack.c.b16 %v8609, %v8597
    %v8922 = vpack.c.b16 %v8610, %v8598
    %v8923 = vpack.c.b16 %v8611, %v8599
    %v8924 = vpack.c.b16 %v8612, %v8600
    %v8925 = vpack.c.b16 %v8613, %v8601
    %v8926 = vpack.c.b16 %v8614, %v8602
    %v8927 = vpack.c.b16 %v8615, %v8603
    %v8928 = vpack.c.b16 %v8616, %v8604
    %v8929 = vpack.c.b16 %v8617, %v8605
    %v8930 = vpack.c.b16 %v8630, %v8618
    %v8931 = vpack.c.b16 %v8631, %v8619
    %v8932 = vpack.c.b16 %v8632, %v8620
    %v8933 = vpack.c.b16 %v8633, %v8621
    %v8934 = vpack.c.b16 %v8634, %v8622
    %v8935 = vpack.c.b16 %v8635, %v8623
    %v8936 = vpack.c.b16 %v8636, %v8624
    %v8937 = vpack.c.b16 %v8637, %v8625
    %v8938 = vpack.c.b16 %v8638, %v8626
    %v8939 = vpack.c.b16 %v8639, %v8627
    %v8940 = vpack.c.b16 %v8640, %v8628
    %v8941 = vpack.c.b16 %v8641, %v8629
    %v8942 = vpack.c.b16 %v8654, %v8642
    %v8943 = vpack.c.b16 %v8655, %v8643
    %v8944 = vpack.c.b16 %v8656, %v8644
    %v8945 = vpack.c.b16 %v8657, %v8645
    %v8946 = vpack.c.b16 %v8658, %v8646
    %v8947 = vpack.c.b16 %v8659, %v8647
    %v8948 = vpack.c.b16 %v8660, %v8648
    %v8949 = vpack.c.b16 %v8661, %v8649
    %v8950 = vpack.c.b16 %v8662, %v8650
    %v8951 = vpack.c.b16 %v8663, %v8651
    %v8952 = vpack.c.b16 %v8664, %v8652
    %v8953 = vpack.c.b16 %v8665, %v8653
    %9242 = vmatprep.subr.bf16.mxu0 %v8667
    %9243 = vmatpush1.bf16.msra.mxu0 %v8666
    %9244 = vmatprep.subr.bf16.mxu0 %v8679
    %9245 = vmatpush1.bf16.msra.mxu0 %v8678
    %9246 = vmatprep.subr.bf16.mxu0 %v8691
    %9247 = vmatpush1.bf16.msra.mxu0 %v8690
    %9248 = vmatprep.subr.bf16.mxu0 %v8703
    %9249 = vmatpush1.bf16.msra.mxu0 %v8702
    %9250 = vmatprep.subr.bf16.mxu0 %v8715
    %9251 = vmatpush1.bf16.msra.mxu0 %v8714
    %9252 = vmatprep.subr.bf16.mxu0 %v8727
    %9253 = vmatpush1.bf16.msra.mxu0 %v8726
    %9254 = vmatprep.subr.bf16.mxu0 %v8739
    %9255 = vmatpush1.bf16.msra.mxu0 %v8738
    %9256 = vmatprep.subr.bf16.mxu0 %v8751
    %9257 = vmatpush1.bf16.msra.mxu0 %v8750
    %9258 = vmatprep.subr.bf16.mxu0 %v8763
    %9259 = vmatpush1.bf16.msra.mxu0 %v8762
    %9260 = vmatprep.subr.bf16.mxu0 %v8775
    %9261 = vmatpush1.bf16.msra.mxu0 %v8774
    %9262 = vmatprep.subr.bf16.mxu0 %v8787
    %9263 = vmatpush1.bf16.msra.mxu0 %v8786
    %9264 = vmatprep.subr.bf16.mxu0 %v8799
    %9265 = vmatpush1.bf16.msra.mxu0 %v8798
    %9266 = vmatprep.subr.bf16.mxu0 %v8811
    %9267 = vmatpush1.bf16.msra.mxu0 %v8810
    %9268 = vmatprep.subr.bf16.mxu0 %v8823
    %9269 = vmatpush1.bf16.msra.mxu0 %v8822
    %9270 = vmatprep.subr.bf16.mxu0 %v8835
    %9271 = vmatpush1.bf16.msra.mxu0 %v8834
    %9272 = vmatprep.subr.bf16.mxu0 %v8847
    %9273 = vmatpush1.bf16.msra.mxu0 %v8846
    %9274 = vmatprep.mubr.bf16.mxu0 %v7445
    %9275 = vmatmul.mubr.bf16.gmra.mrb[0].mxu0 %v7444
    %v9276 = vpop.f32.mrb[0].mxu0
    %v9277 = vadd.f32 %v7745, %v9276
    %v9278 = vpop.f32.mrb[0].mxu0
    %v9279 = vadd.f32 %v7749, %v9278
    %v9280 = vpop.f32.mrb[0].mxu0
    %v9281 = vadd.f32 %v7745, %v9280
    %v9282 = vpop.f32.mrb[0].mxu0
    %v9283 = vadd.f32 %v7749, %v9282
    %9284 = vmatprep.mubr.bf16.mxu0 %v7448
    %9285 = vmatmul.mubr.bf16.gmra.mrb[0].mxu0 %v7447
    %v9286 = vpop.f32.mrb[0].mxu0
    %v9287 = vadd.f32 %v7745, %v9286
    %v9288 = vpop.f32.mrb[0].mxu0
    %v9289 = vadd.f32 %v7749, %v9288
    %v9290 = vpop.f32.mrb[0].mxu0
    %v9291 = vadd.f32 %v7745, %v9290
    %v9292 = vpop.f32.mrb[0].mxu0
    %v9293 = vadd.f32 %v7749, %v9292
    %9294 = vdwg.mxu0
    %9295 = vmatprep.subr.bf16.mxu0 %v8859
    %9296 = vmatpush1.bf16.msra.mxu0 %v8858
    %9297 = vmatprep.subr.bf16.mxu0 %v8871
    %9298 = vmatpush1.bf16.msra.mxu0 %v8870
    %9299 = vmatprep.subr.bf16.mxu0 %v8883
    %9300 = vmatpush1.bf16.msra.mxu0 %v8882
    %9301 = vmatprep.subr.bf16.mxu0 %v8895
    %9302 = vmatpush1.bf16.msra.mxu0 %v8894
    %9303 = vmatprep.subr.bf16.mxu0 %v8907
    %9304 = vmatpush1.bf16.msra.mxu0 %v8906
    %9305 = vmatprep.subr.bf16.mxu0 %v8919
    %9306 = vmatpush1.bf16.msra.mxu0 %v8918
    %9307 = vmatprep.subr.bf16.mxu0 %v8931
    %9308 = vmatpush1.bf16.msra.mxu0 %v8930
    %9309 = vmatprep.subr.bf16.mxu0 %v8943
    %9310 = vmatpush1.bf16.msra.mxu0 %v8942
    %9311 = vmatprep.subr.bf16.mxu0 0
    %9312 = vmatpush1.bf16.msra.mxu0 0
    %9313 = vmatprep.subr.bf16.mxu0 0
    %9314 = vmatpush1.bf16.msra.mxu0 0
    %9315 = vmatprep.subr.bf16.mxu0 0
    %9316 = vmatpush1.bf16.msra.mxu0 0
    %9317 = vmatprep.subr.bf16.mxu0 0
    %9318 = vmatpush1.bf16.msra.mxu0 0
    %9319 = vmatprep.subr.bf16.mxu0 0
    %9320 = vmatpush1.bf16.msra.mxu0 0
    %9321 = vmatprep.subr.bf16.mxu0 0
    %9322 = vmatpush1.bf16.msra.mxu0 0
    %9323 = vmatprep.subr.bf16.mxu0 0
    %9324 = vmatpush1.bf16.msra.mxu0 0
    %9325 = vmatprep.subr.bf16.mxu0 0
    %9326 = vmatpush1.bf16.msra.mxu0 0
    %9327 = vmatprep.mubr.bf16.mxu0 0
    %9328 = vmatmul.mubr.bf16.gmra.mrb[0].mxu0 %v7446
    %v9329 = vpop.f32.mrb[0].mxu0
    %v9330 = vadd.f32 %v9277, %v9329
    %v9331 = vpop.f32.mrb[0].mxu0
    %v9332 = vadd.f32 %v9279, %v9331
    %v9333 = vpop.f32.mrb[0].mxu0
    %v9334 = vadd.f32 %v9281, %v9333
    %v9335 = vpop.f32.mrb[0].mxu0
    %v9336 = vadd.f32 %v9283, %v9335
    %9337 = vmatprep.mubr.bf16.mxu0 0
    %9338 = vmatmul.mubr.bf16.gmra.mrb[0].mxu0 %v7449
    %v9339 = vpop.f32.mrb[0].mxu0
    %v9340 = vadd.f32 %v9287, %v9339
    %v9341 = vpop.f32.mrb[0].mxu0
    %v9342 = vadd.f32 %v9289, %v9341
    %v9343 = vpop.f32.mrb[0].mxu0
    %v9344 = vadd.f32 %v9291, %v9343
    %v9345 = vpop.f32.mrb[0].mxu0
    %v9346 = vadd.f32 %v9293, %v9345
    %9347 = vdwg.mxu0
    %9348 = vmatprep.subr.bf16.mxu0 %v8669
    %9349 = vmatpush1.bf16.msra.mxu0 %v8668
    %9350 = vmatprep.subr.bf16.mxu0 %v8681
    %9351 = vmatpush1.bf16.msra.mxu0 %v8680
    %9352 = vmatprep.subr.bf16.mxu0 %v8693
    %9353 = vmatpush1.bf16.msra.mxu0 %v8692
    %9354 = vmatprep.subr.bf16.mxu0 %v8705
    %9355 = vmatpush1.bf16.msra.mxu0 %v8704
    %9356 = vmatprep.subr.bf16.mxu0 %v8717
    %9357 = vmatpush1.bf16.msra.mxu0 %v8716
    %9358 = vmatprep.subr.bf16.mxu0 %v8729
    %9359 = vmatpush1.bf16.msra.mxu0 %v8728
    %9360 = vmatprep.subr.bf16.mxu0 %v8741
    %9361 = vmatpush1.bf16.msra.mxu0 %v8740
    %9362 = vmatprep.subr.bf16.mxu0 %v8753
    %9363 = vmatpush1.bf16.msra.mxu0 %v8752
    %9364 = vmatprep.subr.bf16.mxu0 %v8765
    %9365 = vmatpush1.bf16.msra.mxu0 %v8764
    %9366 = vmatprep.subr.bf16.mxu0 %v8777
    %9367 = vmatpush1.bf16.msra.mxu0 %v8776
    %9368 = vmatprep.subr.bf16.mxu0 %v8789
    %9369 = vmatpush1.bf16.msra.mxu0 %v8788
    %9370 = vmatprep.subr.bf16.mxu0 %v8801
    %9371 = vmatpush1.bf16.msra.mxu0 %v8800
    %9372 = vmatprep.subr.bf16.mxu0 %v8813
    %9373 = vmatpush1.bf16.msra.mxu0 %v8812
    %9374 = vmatprep.subr.bf16.mxu0 %v8825
    %9375 = vmatpush1.bf16.msra.mxu0 %v8824
    %9376 = vmatprep.subr.bf16.mxu0 %v8837
    %9377 = vmatpush1.bf16.msra.mxu0 %v8836
    %9378 = vmatprep.subr.bf16.mxu0 %v8849
    %9379 = vmatpush1.bf16.msra.mxu0 %v8848
    %9380 = vmatprep.mubr.bf16.mxu0 %v7445
    %9381 = vmatmul.mubr.bf16.gmra.mrb[0].mxu0 %v7444
    %v9382 = vpop.f32.mrb[0].mxu0
    %v9383 = vadd.f32 %v7753, %v9382
    %v9384 = vpop.f32.mrb[0].mxu0
    %v9385 = vadd.f32 %v7757, %v9384
    %v9386 = vpop.f32.mrb[0].mxu0
    %v9387 = vadd.f32 %v7753, %v9386
    %v9388 = vpop.f32.mrb[0].mxu0
    %v9389 = vadd.f32 %v7757, %v9388
    %9390 = vmatprep.mubr.bf16.mxu0 %v7448
    %9391 = vmatmul.mubr.bf16.gmra.mrb[0].mxu0 %v7447
    %v9392 = vpop.f32.mrb[0].mxu0
    %v9393 = vadd.f32 %v7753, %v9392
    %v9394 = vpop.f32.mrb[0].mxu0
    %v9395 = vadd.f32 %v7757, %v9394
    %v9396 = vpop.f32.mrb[0].mxu0
    %v9397 = vadd.f32 %v7753, %v9396
    %v9398 = vpop.f32.mrb[0].mxu0
    %v9399 = vadd.f32 %v7757, %v9398
    %9400 = vdwg.mxu0
    %9401 = vmatprep.subr.bf16.mxu0 %v8861
    %9402 = vmatpush1.bf16.msra.mxu0 %v8860
    %9403 = vmatprep.subr.bf16.mxu0 %v8873
    %9404 = vmatpush1.bf16.msra.mxu0 %v8872
    %9405 = vmatprep.subr.bf16.mxu0 %v8885
    %9406 = vmatpush1.bf16.msra.mxu0 %v8884
    %9407 = vmatprep.subr.bf16.mxu0 %v8897
    %9408 = vmatpush1.bf16.msra.mxu0 %v8896
    %9409 = vmatprep.subr.bf16.mxu0 %v8909
    %9410 = vmatpush1.bf16.msra.mxu0 %v8908
    %9411 = vmatprep.subr.bf16.mxu0 %v8921
    %9412 = vmatpush1.bf16.msra.mxu0 %v8920
    %9413 = vmatprep.subr.bf16.mxu0 %v8933
    %9414 = vmatpush1.bf16.msra.mxu0 %v8932
    %9415 = vmatprep.subr.bf16.mxu0 %v8945
    %9416 = vmatpush1.bf16.msra.mxu0 %v8944
    %9417 = vmatprep.subr.bf16.mxu0 0
    %9418 = vmatpush1.bf16.msra.mxu0 0
    %9419 = vmatprep.subr.bf16.mxu0 0
    %9420 = vmatpush1.bf16.msra.mxu0 0
    %9421 = vmatprep.subr.bf16.mxu0 0
    %9422 = vmatpush1.bf16.msra.mxu0 0
    %9423 = vmatprep.subr.bf16.mxu0 0
    %9424 = vmatpush1.bf16.msra.mxu0 0
    %9425 = vmatprep.subr.bf16.mxu0 0
    %9426 = vmatpush1.bf16.msra.mxu0 0
    %9427 = vmatprep.subr.bf16.mxu0 0
    %9428 = vmatpush1.bf16.msra.mxu0 0
    %9429 = vmatprep.subr.bf16.mxu0 0
    %9430 = vmatpush1.bf16.msra.mxu0 0
    %9431 = vmatprep.subr.bf16.mxu0 0
    %9432 = vmatpush1.bf16.msra.mxu0 0
    %9433 = vmatprep.mubr.bf16.mxu0 0
    %9434 = vmatmul.mubr.bf16.gmra.mrb[0].mxu0 %v7446
    %v9435 = vpop.f32.mrb[0].mxu0
    %v9436 = vadd.f32 %v9383, %v9435
    %v9437 = vpop.f32.mrb[0].mxu0
    %v9438 = vadd.f32 %v9385, %v9437
    %v9439 = vpop.f32.mrb[0].mxu0
    %v9440 = vadd.f32 %v9387, %v9439
    %v9441 = vpop.f32.mrb[0].mxu0
    %v9442 = vadd.f32 %v9389, %v9441
    %9443 = vmatprep.mubr.bf16.mxu0 0
    %9444 = vmatmul.mubr.bf16.gmra.mrb[0].mxu0 %v7449
    %v9445 = vpop.f32.mrb[0].mxu0
    %v9446 = vadd.f32 %v9393, %v9445
    %v9447 = vpop.f32.mrb[0].mxu0
    %v9448 = vadd.f32 %v9395, %v9447
    %v9449 = vpop.f32.mrb[0].mxu0
    %v9450 = vadd.f32 %v9397, %v9449
    %v9451 = vpop.f32.mrb[0].mxu0
    %v9452 = vadd.f32 %v9399, %v9451
    %9453 = vdwg.mxu0
    %9454 = vmatprep.subr.bf16.mxu0 %v8671
    %9455 = vmatpush1.bf16.msra.mxu0 %v8670
    %9456 = vmatprep.subr.bf16.mxu0 %v8683
    %9457 = vmatpush1.bf16.msra.mxu0 %v8682
    %9458 = vmatprep.subr.bf16.mxu0 %v8695
    %9459 = vmatpush1.bf16.msra.mxu0 %v8694
    %9460 = vmatprep.subr.bf16.mxu0 %v8707
    %9461 = vmatpush1.bf16.msra.mxu0 %v8706
    %9462 = vmatprep.subr.bf16.mxu0 %v8719
    %9463 = vmatpush1.bf16.msra.mxu0 %v8718
    %9464 = vmatprep.subr.bf16.mxu0 %v8731
    %9465 = vmatpush1.bf16.msra.mxu0 %v8730
    %9466 = vmatprep.subr.bf16.mxu0 %v8743
    %9467 = vmatpush1.bf16.msra.mxu0 %v8742
    %9468 = vmatprep.subr.bf16.mxu0 %v8755
    %9469 = vmatpush1.bf16.msra.mxu0 %v8754
    %9470 = vmatprep.subr.bf16.mxu0 %v8767
    %9471 = vmatpush1.bf16.msra.mxu0 %v8766
    %9472 = vmatprep.subr.bf16.mxu0 %v8779
    %9473 = vmatpush1.bf16.msra.mxu0 %v8778
    %9474 = vmatprep.subr.bf16.mxu0 %v8791
    %9475 = vmatpush1.bf16.msra.mxu0 %v8790
    %9476 = vmatprep.subr.bf16.mxu0 %v8803
    %9477 = vmatpush1.bf16.msra.mxu0 %v8802
    %9478 = vmatprep.subr.bf16.mxu0 %v8815
    %9479 = vmatpush1.bf16.msra.mxu0 %v8814
    %9480 = vmatprep.subr.bf16.mxu0 %v8827
    %9481 = vmatpush1.bf16.msra.mxu0 %v8826
    %9482 = vmatprep.subr.bf16.mxu0 %v8839
    %9483 = vmatpush1.bf16.msra.mxu0 %v8838
    %9484 = vmatprep.subr.bf16.mxu0 %v8851
    %9485 = vmatpush1.bf16.msra.mxu0 %v8850
    %9486 = vmatprep.mubr.bf16.mxu0 %v7445
    %9487 = vmatmul.mubr.bf16.gmra.mrb[0].mxu0 %v7444
    %v9488 = vpop.f32.mrb[0].mxu0
    %v9489 = vadd.f32 %v7761, %v9488
    %v9490 = vpop.f32.mrb[0].mxu0
    %v9491 = vadd.f32 %v7765, %v9490
    %v9492 = vpop.f32.mrb[0].mxu0
    %v9493 = vadd.f32 %v7761, %v9492
    %v9494 = vpop.f32.mrb[0].mxu0
    %v9495 = vadd.f32 %v7765, %v9494
    %9496 = vmatprep.mubr.bf16.mxu0 %v7448
    %9497 = vmatmul.mubr.bf16.gmra.mrb[0].mxu0 %v7447
    %v9498 = vpop.f32.mrb[0].mxu0
    %v9499 = vadd.f32 %v7761, %v9498
    %v9500 = vpop.f32.mrb[0].mxu0
    %v9501 = vadd.f32 %v7765, %v9500
    %v9502 = vpop.f32.mrb[0].mxu0
    %v9503 = vadd.f32 %v7761, %v9502
    %v9504 = vpop.f32.mrb[0].mxu0
    %v9505 = vadd.f32 %v7765, %v9504
    %9506 = vdwg.mxu0
    %9507 = vmatprep.subr.bf16.mxu0 %v8863
    %9508 = vmatpush1.bf16.msra.mxu0 %v8862
    %9509 = vmatprep.subr.bf16.mxu0 %v8875
    %9510 = vmatpush1.bf16.msra.mxu0 %v8874
    %9511 = vmatprep.subr.bf16.mxu0 %v8887
    %9512 = vmatpush1.bf16.msra.mxu0 %v8886
    %9513 = vmatprep.subr.bf16.mxu0 %v8899
    %9514 = vmatpush1.bf16.msra.mxu0 %v8898
    %9515 = vmatprep.subr.bf16.mxu0 %v8911
    %9516 = vmatpush1.bf16.msra.mxu0 %v8910
    %9517 = vmatprep.subr.bf16.mxu0 %v8923
    %9518 = vmatpush1.bf16.msra.mxu0 %v8922
    %9519 = vmatprep.subr.bf16.mxu0 %v8935
    %9520 = vmatpush1.bf16.msra.mxu0 %v8934
    %9521 = vmatprep.subr.bf16.mxu0 %v8947
    %9522 = vmatpush1.bf16.msra.mxu0 %v8946
    %9523 = vmatprep.subr.bf16.mxu0 0
    %9524 = vmatpush1.bf16.msra.mxu0 0
    %9525 = vmatprep.subr.bf16.mxu0 0
    %9526 = vmatpush1.bf16.msra.mxu0 0
    %9527 = vmatprep.subr.bf16.mxu0 0
    %9528 = vmatpush1.bf16.msra.mxu0 0
    %9529 = vmatprep.subr.bf16.mxu0 0
    %9530 = vmatpush1.bf16.msra.mxu0 0
    %9531 = vmatprep.subr.bf16.mxu0 0
    %9532 = vmatpush1.bf16.msra.mxu0 0
    %9533 = vmatprep.subr.bf16.mxu0 0
    %9534 = vmatpush1.bf16.msra.mxu0 0
    %9535 = vmatprep.subr.bf16.mxu0 0
    %9536 = vmatpush1.bf16.msra.mxu0 0
    %9537 = vmatprep.subr.bf16.mxu0 0
    %9538 = vmatpush1.bf16.msra.mxu0 0
    %9539 = vmatprep.mubr.bf16.mxu0 0
    %9540 = vmatmul.mubr.bf16.gmra.mrb[0].mxu0 %v7446
    %v9541 = vpop.f32.mrb[0].mxu0
    %v9542 = vadd.f32 %v9489, %v9541
    %v9543 = vpop.f32.mrb[0].mxu0
    %v9544 = vadd.f32 %v9491, %v9543
    %v9545 = vpop.f32.mrb[0].mxu0
    %v9546 = vadd.f32 %v9493, %v9545
    %v9547 = vpop.f32.mrb[0].mxu0
    %v9548 = vadd.f32 %v9495, %v9547
    %9549 = vmatprep.mubr.bf16.mxu0 0
    %9550 = vmatmul.mubr.bf16.gmra.mrb[0].mxu0 %v7449
    %v9551 = vpop.f32.mrb[0].mxu0
    %v9552 = vadd.f32 %v9499, %v9551
    %v9553 = vpop.f32.mrb[0].mxu0
    %v9554 = vadd.f32 %v9501, %v9553
    %v9555 = vpop.f32.mrb[0].mxu0
    %v9556 = vadd.f32 %v9503, %v9555
    %v9557 = vpop.f32.mrb[0].mxu0
    %v9558 = vadd.f32 %v9505, %v9557
    %9559 = vdwg.mxu0
    %9560 = vmatprep.subr.bf16.mxu0 %v8673
    %9561 = vmatpush1.bf16.msra.mxu0 %v8672
    %9562 = vmatprep.subr.bf16.mxu0 %v8685
    %9563 = vmatpush1.bf16.msra.mxu0 %v8684
    %9564 = vmatprep.subr.bf16.mxu0 %v8697
    %9565 = vmatpush1.bf16.msra.mxu0 %v8696
    %9566 = vmatprep.subr.bf16.mxu0 %v8709
    %9567 = vmatpush1.bf16.msra.mxu0 %v8708
    %9568 = vmatprep.subr.bf16.mxu0 %v8721
    %9569 = vmatpush1.bf16.msra.mxu0 %v8720
    %9570 = vmatprep.subr.bf16.mxu0 %v8733
    %9571 = vmatpush1.bf16.msra.mxu0 %v8732
    %9572 = vmatprep.subr.bf16.mxu0 %v8745
    %9573 = vmatpush1.bf16.msra.mxu0 %v8744
    %9574 = vmatprep.subr.bf16.mxu0 %v8757
    %9575 = vmatpush1.bf16.msra.mxu0 %v8756
    %9576 = vmatprep.subr.bf16.mxu0 %v8769
    %9577 = vmatpush1.bf16.msra.mxu0 %v8768
    %9578 = vmatprep.subr.bf16.mxu0 %v8781
    %9579 = vmatpush1.bf16.msra.mxu0 %v8780
    %9580 = vmatprep.subr.bf16.mxu0 %v8793
    %9581 = vmatpush1.bf16.msra.mxu0 %v8792
    %9582 = vmatprep.subr.bf16.mxu0 %v8805
    %9583 = vmatpush1.bf16.msra.mxu0 %v8804
    %9584 = vmatprep.subr.bf16.mxu0 %v8817
    %9585 = vmatpush1.bf16.msra.mxu0 %v8816
    %9586 = vmatprep.subr.bf16.mxu0 %v8829
    %9587 = vmatpush1.bf16.msra.mxu0 %v8828
    %9588 = vmatprep.subr.bf16.mxu0 %v8841
    %9589 = vmatpush1.bf16.msra.mxu0 %v8840
    %9590 = vmatprep.subr.bf16.mxu0 %v8853
    %9591 = vmatpush1.bf16.msra.mxu0 %v8852
    %9592 = vmatprep.mubr.bf16.mxu0 %v7445
    %9593 = vmatmul.mubr.bf16.gmra.mrb[0].mxu0 %v7444
    %v9594 = vpop.f32.mrb[0].mxu0
    %v9595 = vadd.f32 %v7769, %v9594
    %v9596 = vpop.f32.mrb[0].mxu0
    %v9597 = vadd.f32 %v7773, %v9596
    %v9598 = vpop.f32.mrb[0].mxu0
    %v9599 = vadd.f32 %v7769, %v9598
    %v9600 = vpop.f32.mrb[0].mxu0
    %v9601 = vadd.f32 %v7773, %v9600
    %9602 = vmatprep.mubr.bf16.mxu0 %v7448
    %9603 = vmatmul.mubr.bf16.gmra.mrb[0].mxu0 %v7447
    %v9604 = vpop.f32.mrb[0].mxu0
    %v9605 = vadd.f32 %v7769, %v9604
    %v9606 = vpop.f32.mrb[0].mxu0
    %v9607 = vadd.f32 %v7773, %v9606
    %v9608 = vpop.f32.mrb[0].mxu0
    %v9609 = vadd.f32 %v7769, %v9608
    %v9610 = vpop.f32.mrb[0].mxu0
    %v9611 = vadd.f32 %v7773, %v9610
    %9612 = vdwg.mxu0
    %9613 = vmatprep.subr.bf16.mxu0 %v8865
    %9614 = vmatpush1.bf16.msra.mxu0 %v8864
    %9615 = vmatprep.subr.bf16.mxu0 %v8877
    %9616 = vmatpush1.bf16.msra.mxu0 %v8876
    %9617 = vmatprep.subr.bf16.mxu0 %v8889
    %9618 = vmatpush1.bf16.msra.mxu0 %v8888
    %9619 = vmatprep.subr.bf16.mxu0 %v8901
    %9620 = vmatpush1.bf16.msra.mxu0 %v8900
    %9621 = vmatprep.subr.bf16.mxu0 %v8913
    %9622 = vmatpush1.bf16.msra.mxu0 %v8912
    %9623 = vmatprep.subr.bf16.mxu0 %v8925
    %9624 = vmatpush1.bf16.msra.mxu0 %v8924
    %9625 = vmatprep.subr.bf16.mxu0 %v8937
    %9626 = vmatpush1.bf16.msra.mxu0 %v8936
    %9627 = vmatprep.subr.bf16.mxu0 %v8949
    %9628 = vmatpush1.bf16.msra.mxu0 %v8948
    %9629 = vmatprep.subr.bf16.mxu0 0
    %9630 = vmatpush1.bf16.msra.mxu0 0
    %9631 = vmatprep.subr.bf16.mxu0 0
    %9632 = vmatpush1.bf16.msra.mxu0 0
    %9633 = vmatprep.subr.bf16.mxu0 0
    %9634 = vmatpush1.bf16.msra.mxu0 0
    %9635 = vmatprep.subr.bf16.mxu0 0
    %9636 = vmatpush1.bf16.msra.mxu0 0
    %9637 = vmatprep.subr.bf16.mxu0 0
    %9638 = vmatpush1.bf16.msra.mxu0 0
    %9639 = vmatprep.subr.bf16.mxu0 0
    %9640 = vmatpush1.bf16.msra.mxu0 0
    %9641 = vmatprep.subr.bf16.mxu0 0
    %9642 = vmatpush1.bf16.msra.mxu0 0
    %9643 = vmatprep.subr.bf16.mxu0 0
    %9644 = vmatpush1.bf16.msra.mxu0 0
    %9645 = vmatprep.mubr.bf16.mxu0 0
    %9646 = vmatmul.mubr.bf16.gmra.mrb[0].mxu0 %v7446
    %v9647 = vpop.f32.mrb[0].mxu0
    %v9648 = vadd.f32 %v9595, %v9647
    %v9649 = vpop.f32.mrb[0].mxu0
    %v9650 = vadd.f32 %v9597, %v9649
    %v9651 = vpop.f32.mrb[0].mxu0
    %v9652 = vadd.f32 %v9599, %v9651
    %v9653 = vpop.f32.mrb[0].mxu0
    %v9654 = vadd.f32 %v9601, %v9653
    %9655 = vmatprep.mubr.bf16.mxu0 0
    %9656 = vmatmul.mubr.bf16.gmra.mrb[0].mxu0 %v7449
    %v9657 = vpop.f32.mrb[0].mxu0
    %v9658 = vadd.f32 %v9605, %v9657
    %v9659 = vpop.f32.mrb[0].mxu0
    %v9660 = vadd.f32 %v9607, %v9659
    %v9661 = vpop.f32.mrb[0].mxu0
    %v9662 = vadd.f32 %v9609, %v9661
    %v9663 = vpop.f32.mrb[0].mxu0
    %v9664 = vadd.f32 %v9611, %v9663
    %9665 = vdwg.mxu0
    %9666 = vmatprep.subr.bf16.mxu0 %v8675
    %9667 = vmatpush1.bf16.msra.mxu0 %v8674
    %9668 = vmatprep.subr.bf16.mxu0 %v8687
    %9669 = vmatpush1.bf16.msra.mxu0 %v8686
    %9670 = vmatprep.subr.bf16.mxu0 %v8699
    %9671 = vmatpush1.bf16.msra.mxu0 %v8698
    %9672 = vmatprep.subr.bf16.mxu0 %v8711
    %9673 = vmatpush1.bf16.msra.mxu0 %v8710
    %9674 = vmatprep.subr.bf16.mxu0 %v8723
    %9675 = vmatpush1.bf16.msra.mxu0 %v8722
    %9676 = vmatprep.subr.bf16.mxu0 %v8735
    %9677 = vmatpush1.bf16.msra.mxu0 %v8734
    %9678 = vmatprep.subr.bf16.mxu0 %v8747
    %9679 = vmatpush1.bf16.msra.mxu0 %v8746
    %9680 = vmatprep.subr.bf16.mxu0 %v8759
    %9681 = vmatpush1.bf16.msra.mxu0 %v8758
    %9682 = vmatprep.subr.bf16.mxu0 %v8771
    %9683 = vmatpush1.bf16.msra.mxu0 %v8770
    %9684 = vmatprep.subr.bf16.mxu0 %v8783
    %9685 = vmatpush1.bf16.msra.mxu0 %v8782
    %9686 = vmatprep.subr.bf16.mxu0 %v8795
    %9687 = vmatpush1.bf16.msra.mxu0 %v8794
    %9688 = vmatprep.subr.bf16.mxu0 %v8807
    %9689 = vmatpush1.bf16.msra.mxu0 %v8806
    %9690 = vmatprep.subr.bf16.mxu0 %v8819
    %9691 = vmatpush1.bf16.msra.mxu0 %v8818
    %9692 = vmatprep.subr.bf16.mxu0 %v8831
    %9693 = vmatpush1.bf16.msra.mxu0 %v8830
    %9694 = vmatprep.subr.bf16.mxu0 %v8843
    %9695 = vmatpush1.bf16.msra.mxu0 %v8842
    %9696 = vmatprep.subr.bf16.mxu0 %v8855
    %9697 = vmatpush1.bf16.msra.mxu0 %v8854
    %9698 = vmatprep.mubr.bf16.mxu0 %v7445
    %9699 = vmatmul.mubr.bf16.gmra.mrb[0].mxu0 %v7444
    %v9700 = vpop.f32.mrb[0].mxu0
    %v9701 = vadd.f32 %v7777, %v9700
    %v9702 = vpop.f32.mrb[0].mxu0
    %v9703 = vadd.f32 %v7781, %v9702
    %v9704 = vpop.f32.mrb[0].mxu0
    %v9705 = vadd.f32 %v7777, %v9704
    %v9706 = vpop.f32.mrb[0].mxu0
    %v9707 = vadd.f32 %v7781, %v9706
    %9708 = vmatprep.mubr.bf16.mxu0 %v7448
    %9709 = vmatmul.mubr.bf16.gmra.mrb[0].mxu0 %v7447
    %v9710 = vpop.f32.mrb[0].mxu0
    %v9711 = vadd.f32 %v7777, %v9710
    %v9712 = vpop.f32.mrb[0].mxu0
    %v9713 = vadd.f32 %v7781, %v9712
    %v9714 = vpop.f32.mrb[0].mxu0
    %v9715 = vadd.f32 %v7777, %v9714
    %v9716 = vpop.f32.mrb[0].mxu0
    %v9717 = vadd.f32 %v7781, %v9716
    %9718 = vdwg.mxu0
    %9719 = vmatprep.subr.bf16.mxu0 %v8867
    %9720 = vmatpush1.bf16.msra.mxu0 %v8866
    %9721 = vmatprep.subr.bf16.mxu0 %v8879
    %9722 = vmatpush1.bf16.msra.mxu0 %v8878
    %9723 = vmatprep.subr.bf16.mxu0 %v8891
    %9724 = vmatpush1.bf16.msra.mxu0 %v8890
    %9725 = vmatprep.subr.bf16.mxu0 %v8903
    %9726 = vmatpush1.bf16.msra.mxu0 %v8902
    %9727 = vmatprep.subr.bf16.mxu0 %v8915
    %9728 = vmatpush1.bf16.msra.mxu0 %v8914
    %9729 = vmatprep.subr.bf16.mxu0 %v8927
    %9730 = vmatpush1.bf16.msra.mxu0 %v8926
    %9731 = vmatprep.subr.bf16.mxu0 %v8939
    %9732 = vmatpush1.bf16.msra.mxu0 %v8938
    %9733 = vmatprep.subr.bf16.mxu0 %v8951
    %9734 = vmatpush1.bf16.msra.mxu0 %v8950
    %9735 = vmatprep.subr.bf16.mxu0 0
    %9736 = vmatpush1.bf16.msra.mxu0 0
    %9737 = vmatprep.subr.bf16.mxu0 0
    %9738 = vmatpush1.bf16.msra.mxu0 0
    %9739 = vmatprep.subr.bf16.mxu0 0
    %9740 = vmatpush1.bf16.msra.mxu0 0
    %9741 = vmatprep.subr.bf16.mxu0 0
    %9742 = vmatpush1.bf16.msra.mxu0 0
    %9743 = vmatprep.subr.bf16.mxu0 0
    %9744 = vmatpush1.bf16.msra.mxu0 0
    %9745 = vmatprep.subr.bf16.mxu0 0
    %9746 = vmatpush1.bf16.msra.mxu0 0
    %9747 = vmatprep.subr.bf16.mxu0 0
    %9748 = vmatpush1.bf16.msra.mxu0 0
    %9749 = vmatprep.subr.bf16.mxu0 0
    %9750 = vmatpush1.bf16.msra.mxu0 0
    %9751 = vmatprep.mubr.bf16.mxu0 0
    %9752 = vmatmul.mubr.bf16.gmra.mrb[0].mxu0 %v7446
    %v9753 = vpop.f32.mrb[0].mxu0
    %v9754 = vadd.f32 %v9701, %v9753
    %v9755 = vpop.f32.mrb[0].mxu0
    %v9756 = vadd.f32 %v9703, %v9755
    %v9757 = vpop.f32.mrb[0].mxu0
    %v9758 = vadd.f32 %v9705, %v9757
    %v9759 = vpop.f32.mrb[0].mxu0
    %v9760 = vadd.f32 %v9707, %v9759
    %9761 = vmatprep.mubr.bf16.mxu0 0
    %9762 = vmatmul.mubr.bf16.gmra.mrb[0].mxu0 %v7449
    %v9763 = vpop.f32.mrb[0].mxu0
    %v9764 = vadd.f32 %v9711, %v9763
    %v9765 = vpop.f32.mrb[0].mxu0
    %v9766 = vadd.f32 %v9713, %v9765
    %v9767 = vpop.f32.mrb[0].mxu0
    %v9768 = vadd.f32 %v9715, %v9767
    %v9769 = vpop.f32.mrb[0].mxu0
    %v9770 = vadd.f32 %v9717, %v9769
    %9771 = vdwg.mxu0
    %9772 = vmatprep.subr.bf16.mxu0 %v8677
    %9773 = vmatpush1.bf16.msra.mxu0 %v8676
    %9774 = vmatprep.subr.bf16.mxu0 %v8689
    %9775 = vmatpush1.bf16.msra.mxu0 %v8688
    %9776 = vmatprep.subr.bf16.mxu0 %v8701
    %9777 = vmatpush1.bf16.msra.mxu0 %v8700
    %9778 = vmatprep.subr.bf16.mxu0 %v8713
    %9779 = vmatpush1.bf16.msra.mxu0 %v8712
    %9780 = vmatprep.subr.bf16.mxu0 %v8725
    %9781 = vmatpush1.bf16.msra.mxu0 %v8724
    %9782 = vmatprep.subr.bf16.mxu0 %v8737
    %9783 = vmatpush1.bf16.msra.mxu0 %v8736
    %9784 = vmatprep.subr.bf16.mxu0 %v8749
    %9785 = vmatpush1.bf16.msra.mxu0 %v8748
    %9786 = vmatprep.subr.bf16.mxu0 %v8761
    %9787 = vmatpush1.bf16.msra.mxu0 %v8760
    %9788 = vmatprep.subr.bf16.mxu0 %v8773
    %9789 = vmatpush1.bf16.msra.mxu0 %v8772
    %9790 = vmatprep.subr.bf16.mxu0 %v8785
    %9791 = vmatpush1.bf16.msra.mxu0 %v8784
    %9792 = vmatprep.subr.bf16.mxu0 %v8797
    %9793 = vmatpush1.bf16.msra.mxu0 %v8796
    %9794 = vmatprep.subr.bf16.mxu0 %v8809
    %9795 = vmatpush1.bf16.msra.mxu0 %v8808
    %9796 = vmatprep.subr.bf16.mxu0 %v8821
    %9797 = vmatpush1.bf16.msra.mxu0 %v8820
    %9798 = vmatprep.subr.bf16.mxu0 %v8833
    %9799 = vmatpush1.bf16.msra.mxu0 %v8832
    %9800 = vmatprep.subr.bf16.mxu0 %v8845
    %9801 = vmatpush1.bf16.msra.mxu0 %v8844
    %9802 = vmatprep.subr.bf16.mxu0 %v8857
    %9803 = vmatpush1.bf16.msra.mxu0 %v8856
    %9804 = vmatprep.mubr.bf16.mxu0 %v7445
    %9805 = vmatmul.mubr.bf16.gmra.mrb[0].mxu0 %v7444
    %v9806 = vpop.f32.mrb[0].mxu0
    %v9807 = vadd.f32 %v7785, %v9806
    %v9808 = vpop.f32.mrb[0].mxu0
    %v9809 = vadd.f32 %v7789, %v9808
    %v9810 = vpop.f32.mrb[0].mxu0
    %v9811 = vadd.f32 %v7785, %v9810
    %v9812 = vpop.f32.mrb[0].mxu0
    %v9813 = vadd.f32 %v7789, %v9812
    %9814 = vmatprep.mubr.bf16.mxu0 %v7448
    %9815 = vmatmul.mubr.bf16.gmra.mrb[0].mxu0 %v7447
    %v9816 = vpop.f32.mrb[0].mxu0
    %v9817 = vadd.f32 %v7785, %v9816
    %v9818 = vpop.f32.mrb[0].mxu0
    %v9819 = vadd.f32 %v7789, %v9818
    %v9820 = vpop.f32.mrb[0].mxu0
    %v9821 = vadd.f32 %v7785, %v9820
    %v9822 = vpop.f32.mrb[0].mxu0
    %v9823 = vadd.f32 %v7789, %v9822
    %9824 = vdwg.mxu0
    %9825 = vmatprep.subr.bf16.mxu0 %v8869
    %9826 = vmatpush1.bf16.msra.mxu0 %v8868
    %9827 = vmatprep.subr.bf16.mxu0 %v8881
    %9828 = vmatpush1.bf16.msra.mxu0 %v8880
    %9829 = vmatprep.subr.bf16.mxu0 %v8893
    %9830 = vmatpush1.bf16.msra.mxu0 %v8892
    %9831 = vmatprep.subr.bf16.mxu0 %v8905
    %9832 = vmatpush1.bf16.msra.mxu0 %v8904
    %9833 = vmatprep.subr.bf16.mxu0 %v8917
    %9834 = vmatpush1.bf16.msra.mxu0 %v8916
    %9835 = vmatprep.subr.bf16.mxu0 %v8929
    %9836 = vmatpush1.bf16.msra.mxu0 %v8928
    %9837 = vmatprep.subr.bf16.mxu0 %v8941
    %9838 = vmatpush1.bf16.msra.mxu0 %v8940
    %9839 = vmatprep.subr.bf16.mxu0 %v8953
    %9840 = vmatpush1.bf16.msra.mxu0 %v8952
    %9841 = vmatprep.subr.bf16.mxu0 0
    %9842 = vmatpush1.bf16.msra.mxu0 0
    %9843 = vmatprep.subr.bf16.mxu0 0
    %9844 = vmatpush1.bf16.msra.mxu0 0
    %9845 = vmatprep.subr.bf16.mxu0 0
    %9846 = vmatpush1.bf16.msra.mxu0 0
    %9847 = vmatprep.subr.bf16.mxu0 0
    %9848 = vmatpush1.bf16.msra.mxu0 0
    %9849 = vmatprep.subr.bf16.mxu0 0
    %9850 = vmatpush1.bf16.msra.mxu0 0
    %9851 = vmatprep.subr.bf16.mxu0 0
    %9852 = vmatpush1.bf16.msra.mxu0 0
    %9853 = vmatprep.subr.bf16.mxu0 0
    %9854 = vmatpush1.bf16.msra.mxu0 0
    %9855 = vmatprep.subr.bf16.mxu0 0
    %9856 = vmatpush1.bf16.msra.mxu0 0
    %9857 = vmatprep.mubr.bf16.mxu0 0
    %9858 = vmatmul.mubr.bf16.gmra.mrb[0].mxu0 %v7446
    %v9859 = vpop.f32.mrb[0].mxu0
    %v9860 = vadd.f32 %v9807, %v9859
    %v9861 = vpop.f32.mrb[0].mxu0
    %v9862 = vadd.f32 %v9809, %v9861
    %v9863 = vpop.f32.mrb[0].mxu0
    %v9864 = vadd.f32 %v9811, %v9863
    %v9865 = vpop.f32.mrb[0].mxu0
    %v9866 = vadd.f32 %v9813, %v9865
    %9867 = vmatprep.mubr.bf16.mxu0 0
    %9868 = vmatmul.mubr.bf16.gmra.mrb[0].mxu0 %v7449
    %v9869 = vpop.f32.mrb[0].mxu0
    %v9870 = vadd.f32 %v9817, %v9869
    %v9871 = vpop.f32.mrb[0].mxu0
    %v9872 = vadd.f32 %v9819, %v9871
    %v9873 = vpop.f32.mrb[0].mxu0
    %v9874 = vadd.f32 %v9821, %v9873
    %v9875 = vpop.f32.mrb[0].mxu0
    %v9876 = vadd.f32 %v9823, %v9875
    %9877 = vdwg.mxu0
    %v9878 = vmul.f32 %v9330, 0.5
    %v9879 = vmul.f32 %v9332, 0.5
    %v9880 = vmul.f32 %v9436, 0.5
    %v9881 = vmul.f32 %v9438, 0.5
    %v9882 = vmul.f32 %v9542, 0.5
    %v9883 = vmul.f32 %v9544, 0.5
    %v9884 = vmul.f32 %v9648, 0.5
    %v9885 = vmul.f32 %v9650, 0.5
    %v9886 = vmul.f32 %v9754, 0.5
    %v9887 = vmul.f32 %v9756, 0.5
    %v9888 = vmul.f32 %v9860, 0.5
    %v9889 = vmul.f32 %v9862, 0.5
    %v9890 = vmul.f32 %v9334, 0.5
    %v9891 = vmul.f32 %v9336, 0.5
    %v9892 = vmul.f32 %v9440, 0.5
    %v9893 = vmul.f32 %v9442, 0.5
    %v9894 = vmul.f32 %v9546, 0.5
    %v9895 = vmul.f32 %v9548, 0.5
    %v9896 = vmul.f32 %v9652, 0.5
    %v9897 = vmul.f32 %v9654, 0.5
    %v9898 = vmul.f32 %v9758, 0.5
    %v9899 = vmul.f32 %v9760, 0.5
    %v9900 = vmul.f32 %v9864, 0.5
    %v9901 = vmul.f32 %v9866, 0.5
    %v9902 = vmul.f32 %v9340, 0.5
    %v9903 = vmul.f32 %v9342, 0.5
    %v9904 = vmul.f32 %v9446, 0.5
    %v9905 = vmul.f32 %v9448, 0.5
    %v9906 = vmul.f32 %v9552, 0.5
    %v9907 = vmul.f32 %v9554, 0.5
    %v9908 = vmul.f32 %v9658, 0.5
    %v9909 = vmul.f32 %v9660, 0.5
    %v9910 = vmul.f32 %v9764, 0.5
    %v9911 = vmul.f32 %v9766, 0.5
    %v9912 = vmul.f32 %v9870, 0.5
    %v9913 = vmul.f32 %v9872, 0.5
    %v9914 = vmul.f32 %v9344, 0.5
    %v9915 = vmul.f32 %v9346, 0.5
    %v9916 = vmul.f32 %v9450, 0.5
    %v9917 = vmul.f32 %v9452, 0.5
    %v9918 = vmul.f32 %v9556, 0.5
    %v9919 = vmul.f32 %v9558, 0.5
    %v9920 = vmul.f32 %v9662, 0.5
    %v9921 = vmul.f32 %v9664, 0.5
    %v9922 = vmul.f32 %v9768, 0.5
    %v9923 = vmul.f32 %v9770, 0.5
    %v9924 = vmul.f32 %v9874, 0.5
    %v9925 = vmul.f32 %v9876, 0.5
    %v9926 = vmul.f32 %v9330, 0.044715
    %v9927 = vmul.f32 %v9332, 0.044715
    %v9928 = vmul.f32 %v9436, 0.044715
    %v9929 = vmul.f32 %v9438, 0.044715
    %v9930 = vmul.f32 %v9542, 0.044715
    %v9931 = vmul.f32 %v9544, 0.044715
    %v9932 = vmul.f32 %v9648, 0.044715
    %v9933 = vmul.f32 %v9650, 0.044715
    %v9934 = vmul.f32 %v9754, 0.044715
    %v9935 = vmul.f32 %v9756, 0.044715
    %v9936 = vmul.f32 %v9860, 0.044715
    %v9937 = vmul.f32 %v9862, 0.044715
    %v9938 = vmul.f32 %v9334, 0.044715
    %v9939 = vmul.f32 %v9336, 0.044715
    %v9940 = vmul.f32 %v9440, 0.044715
    %v9941 = vmul.f32 %v9442, 0.044715
    %v9942 = vmul.f32 %v9546, 0.044715
    %v9943 = vmul.f32 %v9548, 0.044715
    %v9944 = vmul.f32 %v9652, 0.044715
    %v9945 = vmul.f32 %v9654, 0.044715
    %v9946 = vmul.f32 %v9758, 0.044715
    %v9947 = vmul.f32 %v9760, 0.044715
    %v9948 = vmul.f32 %v9864, 0.044715
    %v9949 = vmul.f32 %v9866, 0.044715
    %v9950 = vmul.f32 %v9340, 0.044715
    %v9951 = vmul.f32 %v9342, 0.044715
    %v9952 = vmul.f32 %v9446, 0.044715
    %v9953 = vmul.f32 %v9448, 0.044715
    %v9954 = vmul.f32 %v9552, 0.044715
    %v9955 = vmul.f32 %v9554, 0.044715
    %v9956 = vmul.f32 %v9658, 0.044715
    %v9957 = vmul.f32 %v9660, 0.044715
    %v9958 = vmul.f32 %v9764, 0.044715
    %v9959 = vmul.f32 %v9766, 0.044715
    %v9960 = vmul.f32 %v9870, 0.044715
    %v9961 = vmul.f32 %v9872, 0.044715
    %v9962 = vmul.f32 %v9344, 0.044715
    %v9963 = vmul.f32 %v9346, 0.044715
    %v9964 = vmul.f32 %v9450, 0.044715
    %v9965 = vmul.f32 %v9452, 0.044715
    %v9966 = vmul.f32 %v9556, 0.044715
    %v9967 = vmul.f32 %v9558, 0.044715
    %v9968 = vmul.f32 %v9662, 0.044715
    %v9969 = vmul.f32 %v9664, 0.044715
    %v9970 = vmul.f32 %v9768, 0.044715
    %v9971 = vmul.f32 %v9770, 0.044715
    %v9972 = vmul.f32 %v9874, 0.044715
    %v9973 = vmul.f32 %v9876, 0.044715
    %v9974 = vmul.f32 %v9926, %v9330
    %v9975 = vmul.f32 %v9927, %v9332
    %v9976 = vmul.f32 %v9928, %v9436
    %v9977 = vmul.f32 %v9929, %v9438
    %v9978 = vmul.f32 %v9930, %v9542
    %v9979 = vmul.f32 %v9931, %v9544
    %v9980 = vmul.f32 %v9932, %v9648
    %v9981 = vmul.f32 %v9933, %v9650
    %v9982 = vmul.f32 %v9934, %v9754
    %v9983 = vmul.f32 %v9935, %v9756
    %v9984 = vmul.f32 %v9936, %v9860
    %v9985 = vmul.f32 %v9937, %v9862
    %v9986 = vmul.f32 %v9938, %v9334
    %v9987 = vmul.f32 %v9939, %v9336
    %v9988 = vmul.f32 %v9940, %v9440
    %v9989 = vmul.f32 %v9941, %v9442
    %v9990 = vmul.f32 %v9942, %v9546
    %v9991 = vmul.f32 %v9943, %v9548
    %v9992 = vmul.f32 %v9944, %v9652
    %v9993 = vmul.f32 %v9945, %v9654
    %v9994 = vmul.f32 %v9946, %v9758
    %v9995 = vmul.f32 %v9947, %v9760
    %v9996 = vmul.f32 %v9948, %v9864
    %v9997 = vmul.f32 %v9949, %v9866
    %v9998 = vmul.f32 %v9950, %v9340
    %v9999 = vmul.f32 %v9951, %v9342
    %v10000 = vmul.f32 %v9952, %v9446
    %v10001 = vmul.f32 %v9953, %v9448
    %v10002 = vmul.f32 %v9954, %v9552
    %v10003 = vmul.f32 %v9955, %v9554
    %v10004 = vmul.f32 %v9956, %v9658
    %v10005 = vmul.f32 %v9957, %v9660
    %v10006 = vmul.f32 %v9958, %v9764
    %v10007 = vmul.f32 %v9959, %v9766
    %v10008 = vmul.f32 %v9960, %v9870
    %v10009 = vmul.f32 %v9961, %v9872
    %v10010 = vmul.f32 %v9962, %v9344
    %v10011 = vmul.f32 %v9963, %v9346
    %v10012 = vmul.f32 %v9964, %v9450
    %v10013 = vmul.f32 %v9965, %v9452
    %v10014 = vmul.f32 %v9966, %v9556
    %v10015 = vmul.f32 %v9967, %v9558
    %v10016 = vmul.f32 %v9968, %v9662
    %v10017 = vmul.f32 %v9969, %v9664
    %v10018 = vmul.f32 %v9970, %v9768
    %v10019 = vmul.f32 %v9971, %v9770
    %v10020 = vmul.f32 %v9972, %v9874
    %v10021 = vmul.f32 %v9973, %v9876
    %v10022 = vmul.f32 %v9974, %v9330
    %v10023 = vmul.f32 %v9975, %v9332
    %v10024 = vmul.f32 %v9976, %v9436
    %v10025 = vmul.f32 %v9977, %v9438
    %v10026 = vmul.f32 %v9978, %v9542
    %v10027 = vmul.f32 %v9979, %v9544
    %v10028 = vmul.f32 %v9980, %v9648
    %v10029 = vmul.f32 %v9981, %v9650
    %v10030 = vmul.f32 %v9982, %v9754
    %v10031 = vmul.f32 %v9983, %v9756
    %v10032 = vmul.f32 %v9984, %v9860
    %v10033 = vmul.f32 %v9985, %v9862
    %v10034 = vmul.f32 %v9986, %v9334
    %v10035 = vmul.f32 %v9987, %v9336
    %v10036 = vmul.f32 %v9988, %v9440
    %v10037 = vmul.f32 %v9989, %v9442
    %v10038 = vmul.f32 %v9990, %v9546
    %v10039 = vmul.f32 %v9991, %v9548
    %v10040 = vmul.f32 %v9992, %v9652
    %v10041 = vmul.f32 %v9993, %v9654
    %v10042 = vmul.f32 %v9994, %v9758
    %v10043 = vmul.f32 %v9995, %v9760
    %v10044 = vmul.f32 %v9996, %v9864
    %v10045 = vmul.f32 %v9997, %v9866
    %v10046 = vmul.f32 %v9998, %v9340
    %v10047 = vmul.f32 %v9999, %v9342
    %v10048 = vmul.f32 %v10000, %v9446
    %v10049 = vmul.f32 %v10001, %v9448
    %v10050 = vmul.f32 %v10002, %v9552
    %v10051 = vmul.f32 %v10003, %v9554
    %v10052 = vmul.f32 %v10004, %v9658
    %v10053 = vmul.f32 %v10005, %v9660
    %v10054 = vmul.f32 %v10006, %v9764
    %v10055 = vmul.f32 %v10007, %v9766
    %v10056 = vmul.f32 %v10008, %v9870
    %v10057 = vmul.f32 %v10009, %v9872
    %v10058 = vmul.f32 %v10010, %v9344
    %v10059 = vmul.f32 %v10011, %v9346
    %v10060 = vmul.f32 %v10012, %v9450
    %v10061 = vmul.f32 %v10013, %v9452
    %v10062 = vmul.f32 %v10014, %v9556
    %v10063 = vmul.f32 %v10015, %v9558
    %v10064 = vmul.f32 %v10016, %v9662
    %v10065 = vmul.f32 %v10017, %v9664
    %v10066 = vmul.f32 %v10018, %v9768
    %v10067 = vmul.f32 %v10019, %v9770
    %v10068 = vmul.f32 %v10020, %v9874
    %v10069 = vmul.f32 %v10021, %v9876
    %v10070 = vadd.f32 %v9330, %v10022
    %v10071 = vadd.f32 %v9332, %v10023
    %v10072 = vadd.f32 %v9436, %v10024
    %v10073 = vadd.f32 %v9438, %v10025
    %v10074 = vadd.f32 %v9542, %v10026
    %v10075 = vadd.f32 %v9544, %v10027
    %v10076 = vadd.f32 %v9648, %v10028
    %v10077 = vadd.f32 %v9650, %v10029
    %v10078 = vadd.f32 %v9754, %v10030
    %v10079 = vadd.f32 %v9756, %v10031
    %v10080 = vadd.f32 %v9860, %v10032
    %v10081 = vadd.f32 %v9862, %v10033
    %v10082 = vadd.f32 %v9334, %v10034
    %v10083 = vadd.f32 %v9336, %v10035
    %v10084 = vadd.f32 %v9440, %v10036
    %v10085 = vadd.f32 %v9442, %v10037
    %v10086 = vadd.f32 %v9546, %v10038
    %v10087 = vadd.f32 %v9548, %v10039
    %v10088 = vadd.f32 %v9652, %v10040
    %v10089 = vadd.f32 %v9654, %v10041
    %v10090 = vadd.f32 %v9758, %v10042
    %v10091 = vadd.f32 %v9760, %v10043
    %v10092 = vadd.f32 %v9864, %v10044
    %v10093 = vadd.f32 %v9866, %v10045
    %v10094 = vadd.f32 %v9340, %v10046
    %v10095 = vadd.f32 %v9342, %v10047
    %v10096 = vadd.f32 %v9446, %v10048
    %v10097 = vadd.f32 %v9448, %v10049
    %v10098 = vadd.f32 %v9552, %v10050
    %v10099 = vadd.f32 %v9554, %v10051
    %v10100 = vadd.f32 %v9658, %v10052
    %v10101 = vadd.f32 %v9660, %v10053
    %v10102 = vadd.f32 %v9764, %v10054
    %v10103 = vadd.f32 %v9766, %v10055
    %v10104 = vadd.f32 %v9870, %v10056
    %v10105 = vadd.f32 %v9872, %v10057
    %v10106 = vadd.f32 %v9344, %v10058
    %v10107 = vadd.f32 %v9346, %v10059
    %v10108 = vadd.f32 %v9450, %v10060
    %v10109 = vadd.f32 %v9452, %v10061
    %v10110 = vadd.f32 %v9556, %v10062
    %v10111 = vadd.f32 %v9558, %v10063
    %v10112 = vadd.f32 %v9662, %v10064
    %v10113 = vadd.f32 %v9664, %v10065
    %v10114 = vadd.f32 %v9768, %v10066
    %v10115 = vadd.f32 %v9770, %v10067
    %v10116 = vadd.f32 %v9874, %v10068
    %v10117 = vadd.f32 %v9876, %v10069
    %v10118 = vmul.f32 %v10070, 0.7978846
    %v10119 = vmul.f32 %v10071, 0.7978846
    %v10120 = vmul.f32 %v10072, 0.7978846
    %v10121 = vmul.f32 %v10073, 0.7978846
    %v10122 = vmul.f32 %v10074, 0.7978846
    %v10123 = vmul.f32 %v10075, 0.7978846
    %v10124 = vmul.f32 %v10076, 0.7978846
    %v10125 = vmul.f32 %v10077, 0.7978846
    %v10126 = vmul.f32 %v10078, 0.7978846
    %v10127 = vmul.f32 %v10079, 0.7978846
    %v10128 = vmul.f32 %v10080, 0.7978846
    %v10129 = vmul.f32 %v10081, 0.7978846
    %v10130 = vmul.f32 %v10082, 0.7978846
    %v10131 = vmul.f32 %v10083, 0.7978846
    %v10132 = vmul.f32 %v10084, 0.7978846
    %v10133 = vmul.f32 %v10085, 0.7978846
    %v10134 = vmul.f32 %v10086, 0.7978846
    %v10135 = vmul.f32 %v10087, 0.7978846
    %v10136 = vmul.f32 %v10088, 0.7978846
    %v10137 = vmul.f32 %v10089, 0.7978846
    %v10138 = vmul.f32 %v10090, 0.7978846
    %v10139 = vmul.f32 %v10091, 0.7978846
    %v10140 = vmul.f32 %v10092, 0.7978846
    %v10141 = vmul.f32 %v10093, 0.7978846
    %v10142 = vmul.f32 %v10094, 0.7978846
    %v10143 = vmul.f32 %v10095, 0.7978846
    %v10144 = vmul.f32 %v10096, 0.7978846
    %v10145 = vmul.f32 %v10097, 0.7978846
    %v10146 = vmul.f32 %v10098, 0.7978846
    %v10147 = vmul.f32 %v10099, 0.7978846
    %v10148 = vmul.f32 %v10100, 0.7978846
    %v10149 = vmul.f32 %v10101, 0.7978846
    %v10150 = vmul.f32 %v10102, 0.7978846
    %v10151 = vmul.f32 %v10103, 0.7978846
    %v10152 = vmul.f32 %v10104, 0.7978846
    %v10153 = vmul.f32 %v10105, 0.7978846
    %v10154 = vmul.f32 %v10106, 0.7978846
    %v10155 = vmul.f32 %v10107, 0.7978846
    %v10156 = vmul.f32 %v10108, 0.7978846
    %v10157 = vmul.f32 %v10109, 0.7978846
    %v10158 = vmul.f32 %v10110, 0.7978846
    %v10159 = vmul.f32 %v10111, 0.7978846
    %v10160 = vmul.f32 %v10112, 0.7978846
    %v10161 = vmul.f32 %v10113, 0.7978846
    %v10162 = vmul.f32 %v10114, 0.7978846
    %v10163 = vmul.f32 %v10115, 0.7978846
    %v10164 = vmul.f32 %v10116, 0.7978846
    %v10165 = vmul.f32 %v10117, 0.7978846
    %v10166 = vtanh.pop %v10118
    %v10167 = vtanh.pop %v10119
    %v10168 = vtanh.pop %v10120
    %v10169 = vtanh.pop %v10121
    %v10170 = vtanh.pop %v10122
    %v10171 = vtanh.pop %v10123
    %v10172 = vtanh.pop %v10124
    %v10173 = vtanh.pop %v10125
    %v10174 = vtanh.pop %v10126
    %v10175 = vtanh.pop %v10127
    %v10176 = vtanh.pop %v10128
    %v10177 = vtanh.pop %v10129
    %v10178 = vtanh.pop %v10130
    %v10179 = vtanh.pop %v10131
    %v10180 = vtanh.pop %v10132
    %v10181 = vtanh.pop %v10133
    %v10182 = vtanh.pop %v10134
    %v10183 = vtanh.pop %v10135
    %v10184 = vtanh.pop %v10136
    %v10185 = vtanh.pop %v10137
    %v10186 = vtanh.pop %v10138
    %v10187 = vtanh.pop %v10139
    %v10188 = vtanh.pop %v10140
    %v10189 = vtanh.pop %v10141
    %v10190 = vtanh.pop %v10142
    %v10191 = vtanh.pop %v10143
    %v10192 = vtanh.pop %v10144
    %v10193 = vtanh.pop %v10145
    %v10194 = vtanh.pop %v10146
    %v10195 = vtanh.pop %v10147
    %v10196 = vtanh.pop %v10148
    %v10197 = vtanh.pop %v10149
    %v10198 = vtanh.pop %v10150
    %v10199 = vtanh.pop %v10151
    %v10200 = vtanh.pop %v10152
    %v10201 = vtanh.pop %v10153
    %v10202 = vtanh.pop %v10154
    %v10203 = vtanh.pop %v10155
    %v10204 = vtanh.pop %v10156
    %v10205 = vtanh.pop %v10157
    %v10206 = vtanh.pop %v10158
    %v10207 = vtanh.pop %v10159
    %v10208 = vtanh.pop %v10160
    %v10209 = vtanh.pop %v10161
    %v10210 = vtanh.pop %v10162
    %v10211 = vtanh.pop %v10163
    %v10212 = vtanh.pop %v10164
    %v10213 = vtanh.pop %v10165
    %v10214 = vadd.f32 %v10166, 1.0
    %v10215 = vadd.f32 %v10167, 1.0
    %v10216 = vadd.f32 %v10168, 1.0
    %v10217 = vadd.f32 %v10169, 1.0
    %v10218 = vadd.f32 %v10170, 1.0
    %v10219 = vadd.f32 %v10171, 1.0
    %v10220 = vadd.f32 %v10172, 1.0
    %v10221 = vadd.f32 %v10173, 1.0
    %v10222 = vadd.f32 %v10174, 1.0
    %v10223 = vadd.f32 %v10175, 1.0
    %v10224 = vadd.f32 %v10176, 1.0
    %v10225 = vadd.f32 %v10177, 1.0
    %v10226 = vadd.f32 %v10178, 1.0
    %v10227 = vadd.f32 %v10179, 1.0
    %v10228 = vadd.f32 %v10180, 1.0
    %v10229 = vadd.f32 %v10181, 1.0
    %v10230 = vadd.f32 %v10182, 1.0
    %v10231 = vadd.f32 %v10183, 1.0
    %v10232 = vadd.f32 %v10184, 1.0
    %v10233 = vadd.f32 %v10185, 1.0
    %v10234 = vadd.f32 %v10186, 1.0
    %v10235 = vadd.f32 %v10187, 1.0
    %v10236 = vadd.f32 %v10188, 1.0
    %v10237 = vadd.f32 %v10189, 1.0
    %v10238 = vadd.f32 %v10190, 1.0
    %v10239 = vadd.f32 %v10191, 1.0
    %v10240 = vadd.f32 %v10192, 1.0
    %v10241 = vadd.f32 %v10193, 1.0
    %v10242 = vadd.f32 %v10194, 1.0
    %v10243 = vadd.f32 %v10195, 1.0
    %v10244 = vadd.f32 %v10196, 1.0
    %v10245 = vadd.f32 %v10197, 1.0
    %v10246 = vadd.f32 %v10198, 1.0
    %v10247 = vadd.f32 %v10199, 1.0
    %v10248 = vadd.f32 %v10200, 1.0
    %v10249 = vadd.f32 %v10201, 1.0
    %v10250 = vadd.f32 %v10202, 1.0
    %v10251 = vadd.f32 %v10203, 1.0
    %v10252 = vadd.f32 %v10204, 1.0
    %v10253 = vadd.f32 %v10205, 1.0
    %v10254 = vadd.f32 %v10206, 1.0
    %v10255 = vadd.f32 %v10207, 1.0
    %v10256 = vadd.f32 %v10208, 1.0
    %v10257 = vadd.f32 %v10209, 1.0
    %v10258 = vadd.f32 %v10210, 1.0
    %v10259 = vadd.f32 %v10211, 1.0
    %v10260 = vadd.f32 %v10212, 1.0
    %v10261 = vadd.f32 %v10213, 1.0
    %v10262 = vmul.f32 %v9878, %v10214
    %v10263 = vmul.f32 %v9879, %v10215
    %v10264 = vmul.f32 %v9880, %v10216
    %v10265 = vmul.f32 %v9881, %v10217
    %v10266 = vmul.f32 %v9882, %v10218
    %v10267 = vmul.f32 %v9883, %v10219
    %v10268 = vmul.f32 %v9884, %v10220
    %v10269 = vmul.f32 %v9885, %v10221
    %v10270 = vmul.f32 %v9886, %v10222
    %v10271 = vmul.f32 %v9887, %v10223
    %v10272 = vmul.f32 %v9888, %v10224
    %v10273 = vmul.f32 %v9889, %v10225
    %v10274 = vmul.f32 %v9890, %v10226
    %v10275 = vmul.f32 %v9891, %v10227
    %v10276 = vmul.f32 %v9892, %v10228
    %v10277 = vmul.f32 %v9893, %v10229
    %v10278 = vmul.f32 %v9894, %v10230
    %v10279 = vmul.f32 %v9895, %v10231
    %v10280 = vmul.f32 %v9896, %v10232
    %v10281 = vmul.f32 %v9897, %v10233
    %v10282 = vmul.f32 %v9898, %v10234
    %v10283 = vmul.f32 %v9899, %v10235
    %v10284 = vmul.f32 %v9900, %v10236
    %v10285 = vmul.f32 %v9901, %v10237
    %v10286 = vmul.f32 %v9902, %v10238
    %v10287 = vmul.f32 %v9903, %v10239
    %v10288 = vmul.f32 %v9904, %v10240
    %v10289 = vmul.f32 %v9905, %v10241
    %v10290 = vmul.f32 %v9906, %v10242
    %v10291 = vmul.f32 %v9907, %v10243
    %v10292 = vmul.f32 %v9908, %v10244
    %v10293 = vmul.f32 %v9909, %v10245
    %v10294 = vmul.f32 %v9910, %v10246
    %v10295 = vmul.f32 %v9911, %v10247
    %v10296 = vmul.f32 %v9912, %v10248
    %v10297 = vmul.f32 %v9913, %v10249
    %v10298 = vmul.f32 %v9914, %v10250
    %v10299 = vmul.f32 %v9915, %v10251
    %v10300 = vmul.f32 %v9916, %v10252
    %v10301 = vmul.f32 %v9917, %v10253
    %v10302 = vmul.f32 %v9918, %v10254
    %v10303 = vmul.f32 %v9919, %v10255
    %v10304 = vmul.f32 %v9920, %v10256
    %v10305 = vmul.f32 %v9921, %v10257
    %v10306 = vmul.f32 %v9922, %v10258
    %v10307 = vmul.f32 %v9923, %v10259
    %v10308 = vmul.f32 %v9924, %v10260
    %v10309 = vmul.f32 %v9925, %v10261
    %v10310 = vpack.c.bf16 %v10274, %v10262
    %v10311 = vpack.c.bf16 %v10275, %v10263
    %v10312 = vpack.c.bf16 %v10276, %v10264
    %v10313 = vpack.c.bf16 %v10277, %v10265
    %v10314 = vpack.c.bf16 %v10278, %v10266
    %v10315 = vpack.c.bf16 %v10279, %v10267
    %v10316 = vpack.c.bf16 %v10280, %v10268
    %v10317 = vpack.c.bf16 %v10281, %v10269
    %v10318 = vpack.c.bf16 %v10282, %v10270
    %v10319 = vpack.c.bf16 %v10283, %v10271
    %v10320 = vpack.c.bf16 %v10284, %v10272
    %v10321 = vpack.c.bf16 %v10285, %v10273
    %v10322 = vpack.c.bf16 %v10298, %v10286
    %v10323 = vpack.c.bf16 %v10299, %v10287
    %v10324 = vpack.c.bf16 %v10300, %v10288
    %v10325 = vpack.c.bf16 %v10301, %v10289
    %v10326 = vpack.c.bf16 %v10302, %v10290
    %v10327 = vpack.c.bf16 %v10303, %v10291
    %v10328 = vpack.c.bf16 %v10304, %v10292
    %v10329 = vpack.c.bf16 %v10305, %v10293
    %v10330 = vpack.c.bf16 %v10306, %v10294
    %v10331 = vpack.c.bf16 %v10307, %v10295
    %v10332 = vpack.c.bf16 %v10308, %v10296
    %v10333 = vpack.c.bf16 %v10309, %v10297
    %v10334 = vld [vmem:[#allocation26] sm:$0xff]
    %v10335 = vld [vmem:[#allocation26 + $0x8] sm:$0xf]
    %v10336 = vld [vmem:[#allocation26 + $0xc] sm:$0xff]
    %v10337 = vld [vmem:[#allocation26 + $0x14] sm:$0xf]
    %v10338 = vld [vmem:[#allocation26 + $0x18] sm:$0xff]
    %v10339 = vld [vmem:[#allocation26 + $0x20] sm:$0xf]
    %v10340 = vld [vmem:[#allocation26 + $0x24] sm:$0xff]
    %v10341 = vld [vmem:[#allocation26 + $0x2c] sm:$0xf]
    %v10342 = vld [vmem:[#allocation26 + $0x30] sm:$0xff]
    %v10343 = vld [vmem:[#allocation26 + $0x38] sm:$0xf]
    %v10344 = vld [vmem:[#allocation26 + $0x3c] sm:$0xff]
    %v10345 = vld [vmem:[#allocation26 + $0x44] sm:$0xf]
    %v10346 = vld [vmem:[#allocation26 + $0x48] sm:$0xff]
    %v10347 = vld [vmem:[#allocation26 + $0x50] sm:$0xf]
    %v10348 = vld [vmem:[#allocation26 + $0x54] sm:$0xff]
    %v10349 = vld [vmem:[#allocation26 + $0x5c] sm:$0xf]
    %v10350 = vld [vmem:[#allocation26 + $0x60] sm:$0xff]
    %v10351 = vld [vmem:[#allocation26 + $0x68] sm:$0xf]
    %v10352 = vld [vmem:[#allocation26 + $0x6c] sm:$0xff]
    %v10353 = vld [vmem:[#allocation26 + $0x74] sm:$0xf]
    %v10354 = vld [vmem:[#allocation26 + $0x78] sm:$0xff]
    %v10355 = vld [vmem:[#allocation26 + $0x80] sm:$0xf]
    %v10356 = vld [vmem:[#allocation26 + $0x84] sm:$0xff]
    %v10357 = vld [vmem:[#allocation26 + $0x8c] sm:$0xf]
    %v10358 = vld [vmem:[#allocation26 + $0x90] sm:$0xff]
    %v10359 = vld [vmem:[#allocation26 + $0x98] sm:$0xf]
    %v10360 = vld [vmem:[#allocation26 + $0x9c] sm:$0xff]
    %v10361 = vld [vmem:[#allocation26 + $0xa4] sm:$0xf]
    %v10362 = vld [vmem:[#allocation26 + $0xa8] sm:$0xff]
    %v10363 = vld [vmem:[#allocation26 + $0xb0] sm:$0xf]
    %v10364 = vld [vmem:[#allocation26 + $0xb4] sm:$0xff]
    %v10365 = vld [vmem:[#allocation26 + $0xbc] sm:$0xf]
    %v10366 = vld [vmem:[#allocation26 + $0xc0] sm:$0xff]
    %v10367 = vld [vmem:[#allocation26 + $0xc8] sm:$0xf]
    %v10368 = vld [vmem:[#allocation26 + $0xcc] sm:$0xff]
    %v10369 = vld [vmem:[#allocation26 + $0xd4] sm:$0xf]
    %v10370 = vld [vmem:[#allocation26 + $0xd8] sm:$0xff]
    %v10371 = vld [vmem:[#allocation26 + $0xe0] sm:$0xf]
    %v10372 = vld [vmem:[#allocation26 + $0xe4] sm:$0xff]
    %v10373 = vld [vmem:[#allocation26 + $0xec] sm:$0xf]
    %v10374 = vld [vmem:[#allocation26 + $0xf0] sm:$0xff]
    %v10375 = vld [vmem:[#allocation26 + $0xf8] sm:$0xf]
    %v10376 = vld [vmem:[#allocation26 + $0xfc] sm:$0xff]
    %v10377 = vld [vmem:[#allocation26 + $0x104] sm:$0xf]
    %v10378 = vld [vmem:[#allocation26 + $0x108] sm:$0xff]
    %v10379 = vld [vmem:[#allocation26 + $0x110] sm:$0xf]
    %v10380 = vld [vmem:[#allocation26 + $0x114] sm:$0xff]
    %v10381 = vld [vmem:[#allocation26 + $0x11c] sm:$0xf]
    %v10382 = vld [vmem:[#allocation26 + $0x120] sm:$0xff]
    %v10383 = vld [vmem:[#allocation26 + $0x128] sm:$0xf]
    %v10384 = vld [vmem:[#allocation26 + $0x12c] sm:$0xff]
    %v10385 = vld [vmem:[#allocation26 + $0x134] sm:$0xf]
    %v10386 = vld [vmem:[#allocation26 + $0x138] sm:$0xff]
    %v10387 = vld [vmem:[#allocation26 + $0x140] sm:$0xf]
    %v10388 = vld [vmem:[#allocation26 + $0x144] sm:$0xff]
    %v10389 = vld [vmem:[#allocation26 + $0x14c] sm:$0xf]
    %v10390 = vld [vmem:[#allocation26 + $0x150] sm:$0xff]
    %v10391 = vld [vmem:[#allocation26 + $0x158] sm:$0xf]
    %v10392 = vld [vmem:[#allocation26 + $0x15c] sm:$0xff]
    %v10393 = vld [vmem:[#allocation26 + $0x164] sm:$0xf]
    %v10394 = vld [vmem:[#allocation26 + $0x168] sm:$0xff]
    %v10395 = vld [vmem:[#allocation26 + $0x170] sm:$0xf]
    %v10396 = vld [vmem:[#allocation26 + $0x174] sm:$0xff]
    %v10397 = vld [vmem:[#allocation26 + $0x17c] sm:$0xf]
    %v10398 = vld [vmem:[#allocation26 + $0x180] sm:$0xff]
    %v10399 = vld [vmem:[#allocation26 + $0x188] sm:$0xf]
    %v10400 = vld [vmem:[#allocation26 + $0x18c] sm:$0xff]
    %v10401 = vld [vmem:[#allocation26 + $0x194] sm:$0xf]
    %v10402 = vld [vmem:[#allocation26 + $0x198] sm:$0xff]
    %v10403 = vld [vmem:[#allocation26 + $0x1a0] sm:$0xf]
    %v10404 = vld [vmem:[#allocation26 + $0x1a4] sm:$0xff]
    %v10405 = vld [vmem:[#allocation26 + $0x1ac] sm:$0xf]
    %v10406 = vld [vmem:[#allocation26 + $0x1b0] sm:$0xff]
    %v10407 = vld [vmem:[#allocation26 + $0x1b8] sm:$0xf]
    %v10408 = vld [vmem:[#allocation26 + $0x1bc] sm:$0xff]
    %v10409 = vld [vmem:[#allocation26 + $0x1c4] sm:$0xf]
    %v10410 = vld [vmem:[#allocation26 + $0x1c8] sm:$0xff]
    %v10411 = vld [vmem:[#allocation26 + $0x1d0] sm:$0xf]
    %v10412 = vld [vmem:[#allocation26 + $0x1d4] sm:$0xff]
    %v10413 = vld [vmem:[#allocation26 + $0x1dc] sm:$0xf]
    %v10414 = vld [vmem:[#allocation26 + $0x1e0] sm:$0xff]
    %v10415 = vld [vmem:[#allocation26 + $0x1e8] sm:$0xf]
    %v10416 = vld [vmem:[#allocation26 + $0x1ec] sm:$0xff]
    %v10417 = vld [vmem:[#allocation26 + $0x1f4] sm:$0xf]
    %v10418 = vld [vmem:[#allocation26 + $0x1f8] sm:$0xff]
    %v10419 = vld [vmem:[#allocation26 + $0x200] sm:$0xf]
    %v10420 = vld [vmem:[#allocation26 + $0x204] sm:$0xff]
    %v10421 = vld [vmem:[#allocation26 + $0x20c] sm:$0xf]
    %v10422 = vld [vmem:[#allocation26 + $0x210] sm:$0xff]
    %v10423 = vld [vmem:[#allocation26 + $0x218] sm:$0xf]
    %v10424 = vld [vmem:[#allocation26 + $0x21c] sm:$0xff]
    %v10425 = vld [vmem:[#allocation26 + $0x224] sm:$0xf]
    %v10426 = vld [vmem:[#allocation26 + $0x228] sm:$0xff]
    %v10427 = vld [vmem:[#allocation26 + $0x230] sm:$0xf]
    %v10428 = vld [vmem:[#allocation26 + $0x234] sm:$0xff]
    %v10429 = vld [vmem:[#allocation26 + $0x23c] sm:$0xf]
    %v10430 = vld [vmem:[#allocation26 + $0x240] sm:$0xff]
    %v10431 = vld [vmem:[#allocation26 + $0x248] sm:$0xf]
    %v10432 = vld [vmem:[#allocation26 + $0x24c] sm:$0xff]
    %v10433 = vld [vmem:[#allocation26 + $0x254] sm:$0xf]
    %v10434 = vld [vmem:[#allocation26 + $0x258] sm:$0xff]
    %v10435 = vld [vmem:[#allocation26 + $0x260] sm:$0xf]
    %v10436 = vld [vmem:[#allocation26 + $0x264] sm:$0xff]
    %v10437 = vld [vmem:[#allocation26 + $0x26c] sm:$0xf]
    %v10438 = vld [vmem:[#allocation26 + $0x270] sm:$0xff]
    %v10439 = vld [vmem:[#allocation26 + $0x278] sm:$0xf]
    %v10440 = vld [vmem:[#allocation26 + $0x27c] sm:$0xff]
    %v10441 = vld [vmem:[#allocation26 + $0x284] sm:$0xf]
    %v10442 = vld [vmem:[#allocation26 + $0x288] sm:$0xff]
    %v10443 = vld [vmem:[#allocation26 + $0x290] sm:$0xf]
    %v10444 = vld [vmem:[#allocation26 + $0x294] sm:$0xff]
    %v10445 = vld [vmem:[#allocation26 + $0x29c] sm:$0xf]
    %v10446 = vld [vmem:[#allocation26 + $0x2a0] sm:$0xff]
    %v10447 = vld [vmem:[#allocation26 + $0x2a8] sm:$0xf]
    %v10448 = vld [vmem:[#allocation26 + $0x2ac] sm:$0xff]
    %v10449 = vld [vmem:[#allocation26 + $0x2b4] sm:$0xf]
    %v10450 = vld [vmem:[#allocation26 + $0x2b8] sm:$0xff]
    %v10451 = vld [vmem:[#allocation26 + $0x2c0] sm:$0xf]
    %v10452 = vld [vmem:[#allocation26 + $0x2c4] sm:$0xff]
    %v10453 = vld [vmem:[#allocation26 + $0x2cc] sm:$0xf]
    %v10454 = vld [vmem:[#allocation26 + $0x2d0] sm:$0xff]
    %v10455 = vld [vmem:[#allocation26 + $0x2d8] sm:$0xf]
    %v10456 = vld [vmem:[#allocation26 + $0x2dc] sm:$0xff]
    %v10457 = vld [vmem:[#allocation26 + $0x2e4] sm:$0xf]
    %v10458 = vld [vmem:[#allocation26 + $0x2e8] sm:$0xff]
    %v10459 = vld [vmem:[#allocation26 + $0x2f0] sm:$0xf]
    %v10460 = vld [vmem:[#allocation26 + $0x2f4] sm:$0xff]
    %v10461 = vld [vmem:[#allocation26 + $0x2fc] sm:$0xf]
    %v10462 = vld [vmem:[#allocation26 + $0x300] sm:$0xff]
    %v10463 = vld [vmem:[#allocation26 + $0x308] sm:$0xf]
    %v10464 = vld [vmem:[#allocation26 + $0x30c] sm:$0xff]
    %v10465 = vld [vmem:[#allocation26 + $0x314] sm:$0xf]
    %v10466 = vld [vmem:[#allocation26 + $0x318] sm:$0xff]
    %v10467 = vld [vmem:[#allocation26 + $0x320] sm:$0xf]
    %v10468 = vld [vmem:[#allocation26 + $0x324] sm:$0xff]
    %v10469 = vld [vmem:[#allocation26 + $0x32c] sm:$0xf]
    %v10470 = vld [vmem:[#allocation26 + $0x330] sm:$0xff]
    %v10471 = vld [vmem:[#allocation26 + $0x338] sm:$0xf]
    %v10472 = vld [vmem:[#allocation26 + $0x33c] sm:$0xff]
    %v10473 = vld [vmem:[#allocation26 + $0x344] sm:$0xf]
    %v10474 = vld [vmem:[#allocation26 + $0x348] sm:$0xff]
    %v10475 = vld [vmem:[#allocation26 + $0x350] sm:$0xf]
    %v10476 = vld [vmem:[#allocation26 + $0x354] sm:$0xff]
    %v10477 = vld [vmem:[#allocation26 + $0x35c] sm:$0xf]
    %v10478 = vld [vmem:[#allocation26 + $0x360] sm:$0xff]
    %v10479 = vld [vmem:[#allocation26 + $0x368] sm:$0xf]
    %v10480 = vld [vmem:[#allocation26 + $0x36c] sm:$0xff]
    %v10481 = vld [vmem:[#allocation26 + $0x374] sm:$0xf]
    %v10482 = vld [vmem:[#allocation26 + $0x378] sm:$0xff]
    %v10483 = vld [vmem:[#allocation26 + $0x380] sm:$0xf]
    %v10484 = vld [vmem:[#allocation26 + $0x384] sm:$0xff]
    %v10485 = vld [vmem:[#allocation26 + $0x38c] sm:$0xf]
    %v10486 = vld [vmem:[#allocation26 + $0x390] sm:$0xff]
    %v10487 = vld [vmem:[#allocation26 + $0x398] sm:$0xf]
    %v10488 = vld [vmem:[#allocation26 + $0x39c] sm:$0xff]
    %v10489 = vld [vmem:[#allocation26 + $0x3a4] sm:$0xf]
    %v10490 = vld [vmem:[#allocation26 + $0x3a8] sm:$0xff]
    %v10491 = vld [vmem:[#allocation26 + $0x3b0] sm:$0xf]
    %v10492 = vld [vmem:[#allocation26 + $0x3b4] sm:$0xff]
    %v10493 = vld [vmem:[#allocation26 + $0x3bc] sm:$0xf]
    %v10494 = vld [vmem:[#allocation26 + $0x3c0] sm:$0xff]
    %v10495 = vld [vmem:[#allocation26 + $0x3c8] sm:$0xf]
    %v10496 = vld [vmem:[#allocation26 + $0x3cc] sm:$0xff]
    %v10497 = vld [vmem:[#allocation26 + $0x3d4] sm:$0xf]
    %v10498 = vld [vmem:[#allocation26 + $0x3d8] sm:$0xff]
    %v10499 = vld [vmem:[#allocation26 + $0x3e0] sm:$0xf]
    %v10500 = vld [vmem:[#allocation26 + $0x3e4] sm:$0xff]
    %v10501 = vld [vmem:[#allocation26 + $0x3ec] sm:$0xf]
    %v10502 = vld [vmem:[#allocation26 + $0x3f0] sm:$0xff]
    %v10503 = vld [vmem:[#allocation26 + $0x3f8] sm:$0xf]
    %v10504 = vld [vmem:[#allocation26 + $0x3fc] sm:$0xff]
    %v10505 = vld [vmem:[#allocation26 + $0x404] sm:$0xf]
    %v10506 = vld [vmem:[#allocation26 + $0x408] sm:$0xff]
    %v10507 = vld [vmem:[#allocation26 + $0x410] sm:$0xf]
    %v10508 = vld [vmem:[#allocation26 + $0x414] sm:$0xff]
    %v10509 = vld [vmem:[#allocation26 + $0x41c] sm:$0xf]
    %v10510 = vld [vmem:[#allocation26 + $0x420] sm:$0xff]
    %v10511 = vld [vmem:[#allocation26 + $0x428] sm:$0xf]
    %v10512 = vld [vmem:[#allocation26 + $0x42c] sm:$0xff]
    %v10513 = vld [vmem:[#allocation26 + $0x434] sm:$0xf]
    %v10514 = vld [vmem:[#allocation26 + $0x438] sm:$0xff]
    %v10515 = vld [vmem:[#allocation26 + $0x440] sm:$0xf]
    %v10516 = vld [vmem:[#allocation26 + $0x444] sm:$0xff]
    %v10517 = vld [vmem:[#allocation26 + $0x44c] sm:$0xf]
    %v10518 = vld [vmem:[#allocation26 + $0x450] sm:$0xff]
    %v10519 = vld [vmem:[#allocation26 + $0x458] sm:$0xf]
    %v10520 = vld [vmem:[#allocation26 + $0x45c] sm:$0xff]
    %v10521 = vld [vmem:[#allocation26 + $0x464] sm:$0xf]
    %v10522 = vld [vmem:[#allocation26 + $0x468] sm:$0xff]
    %v10523 = vld [vmem:[#allocation26 + $0x470] sm:$0xf]
    %v10524 = vld [vmem:[#allocation26 + $0x474] sm:$0xff]
    %v10525 = vld [vmem:[#allocation26 + $0x47c] sm:$0xf]
    %v10526 = vld [vmem:[#allocation26 + $0x480] sm:$0xff]
    %v10527 = vld [vmem:[#allocation26 + $0x488] sm:$0xf]
    %v10528 = vld [vmem:[#allocation26 + $0x48c] sm:$0xff]
    %v10529 = vld [vmem:[#allocation26 + $0x494] sm:$0xf]
    %v10530 = vld [vmem:[#allocation26 + $0x498] sm:$0xff]
    %v10531 = vld [vmem:[#allocation26 + $0x4a0] sm:$0xf]
    %v10532 = vld [vmem:[#allocation26 + $0x4a4] sm:$0xff]
    %v10533 = vld [vmem:[#allocation26 + $0x4ac] sm:$0xf]
    %v10534 = vld [vmem:[#allocation26 + $0x4b0] sm:$0xff]
    %v10535 = vld [vmem:[#allocation26 + $0x4b8] sm:$0xf]
    %v10536 = vld [vmem:[#allocation26 + $0x4bc] sm:$0xff]
    %v10537 = vld [vmem:[#allocation26 + $0x4c4] sm:$0xf]
    %v10538 = vld [vmem:[#allocation26 + $0x4c8] sm:$0xff]
    %v10539 = vld [vmem:[#allocation26 + $0x4d0] sm:$0xf]
    %v10540 = vld [vmem:[#allocation26 + $0x4d4] sm:$0xff]
    %v10541 = vld [vmem:[#allocation26 + $0x4dc] sm:$0xf]
    %v10542 = vld [vmem:[#allocation26 + $0x4e0] sm:$0xff]
    %v10543 = vld [vmem:[#allocation26 + $0x4e8] sm:$0xf]
    %v10544 = vld [vmem:[#allocation26 + $0x4ec] sm:$0xff]
    %v10545 = vld [vmem:[#allocation26 + $0x4f4] sm:$0xf]
    %v10546 = vld [vmem:[#allocation26 + $0x4f8] sm:$0xff]
    %v10547 = vld [vmem:[#allocation26 + $0x500] sm:$0xf]
    %v10548 = vld [vmem:[#allocation26 + $0x504] sm:$0xff]
    %v10549 = vld [vmem:[#allocation26 + $0x50c] sm:$0xf]
    %v10550 = vld [vmem:[#allocation26 + $0x510] sm:$0xff]
    %v10551 = vld [vmem:[#allocation26 + $0x518] sm:$0xf]
    %v10552 = vld [vmem:[#allocation26 + $0x51c] sm:$0xff]
    %v10553 = vld [vmem:[#allocation26 + $0x524] sm:$0xf]
    %v10554 = vld [vmem:[#allocation26 + $0x528] sm:$0xff]
    %v10555 = vld [vmem:[#allocation26 + $0x530] sm:$0xf]
    %v10556 = vld [vmem:[#allocation26 + $0x534] sm:$0xff]
    %v10557 = vld [vmem:[#allocation26 + $0x53c] sm:$0xf]
    %v10558 = vld [vmem:[#allocation26 + $0x540] sm:$0xff]
    %v10559 = vld [vmem:[#allocation26 + $0x548] sm:$0xf]
    %v10560 = vld [vmem:[#allocation26 + $0x54c] sm:$0xff]
    %v10561 = vld [vmem:[#allocation26 + $0x554] sm:$0xf]
    %v10562 = vld [vmem:[#allocation26 + $0x558] sm:$0xff]
    %v10563 = vld [vmem:[#allocation26 + $0x560] sm:$0xf]
    %v10564 = vld [vmem:[#allocation26 + $0x564] sm:$0xff]
    %v10565 = vld [vmem:[#allocation26 + $0x56c] sm:$0xf]
    %v10566 = vld [vmem:[#allocation26 + $0x570] sm:$0xff]
    %v10567 = vld [vmem:[#allocation26 + $0x578] sm:$0xf]
    %v10568 = vld [vmem:[#allocation26 + $0x57c] sm:$0xff]
    %v10569 = vld [vmem:[#allocation26 + $0x584] sm:$0xf]
    %v10570 = vld [vmem:[#allocation26 + $0x588] sm:$0xff]
    %v10571 = vld [vmem:[#allocation26 + $0x590] sm:$0xf]
    %v10572 = vld [vmem:[#allocation26 + $0x594] sm:$0xff]
    %v10573 = vld [vmem:[#allocation26 + $0x59c] sm:$0xf]
    %v10574 = vld [vmem:[#allocation26 + $0x5a0] sm:$0xff]
    %v10575 = vld [vmem:[#allocation26 + $0x5a8] sm:$0xf]
    %v10576 = vld [vmem:[#allocation26 + $0x5ac] sm:$0xff]
    %v10577 = vld [vmem:[#allocation26 + $0x5b4] sm:$0xf]
    %v10578 = vld [vmem:[#allocation26 + $0x5b8] sm:$0xff]
    %v10579 = vld [vmem:[#allocation26 + $0x5c0] sm:$0xf]
    %v10580 = vld [vmem:[#allocation26 + $0x5c4] sm:$0xff]
    %v10581 = vld [vmem:[#allocation26 + $0x5cc] sm:$0xf]
    %v10582 = vld [vmem:[#allocation26 + $0x5d0] sm:$0xff]
    %v10583 = vld [vmem:[#allocation26 + $0x5d8] sm:$0xf]
    %v10584 = vld [vmem:[#allocation26 + $0x5dc] sm:$0xff]
    %v10585 = vld [vmem:[#allocation26 + $0x5e4] sm:$0xf]
    %v10586 = vld [vmem:[#allocation26 + $0x5e8] sm:$0xff]
    %v10587 = vld [vmem:[#allocation26 + $0x5f0] sm:$0xf]
    %v10588 = vld [vmem:[#allocation26 + $0x5f4] sm:$0xff]
    %v10589 = vld [vmem:[#allocation26 + $0x5fc] sm:$0xf]
    %v10590 = vld [vmem:[#allocation26 + $0x600] sm:$0xff]
    %v10591 = vld [vmem:[#allocation26 + $0x608] sm:$0xf]
    %v10592 = vld [vmem:[#allocation26 + $0x60c] sm:$0xff]
    %v10593 = vld [vmem:[#allocation26 + $0x614] sm:$0xf]
    %v10594 = vld [vmem:[#allocation26 + $0x618] sm:$0xff]
    %v10595 = vld [vmem:[#allocation26 + $0x620] sm:$0xf]
    %v10596 = vld [vmem:[#allocation26 + $0x624] sm:$0xff]
    %v10597 = vld [vmem:[#allocation26 + $0x62c] sm:$0xf]
    %v10598 = vld [vmem:[#allocation26 + $0x630] sm:$0xff]
    %v10599 = vld [vmem:[#allocation26 + $0x638] sm:$0xf]
    %v10600 = vld [vmem:[#allocation26 + $0x63c] sm:$0xff]
    %v10601 = vld [vmem:[#allocation26 + $0x644] sm:$0xf]
    %v10602 = vld [vmem:[#allocation26 + $0x648] sm:$0xff]
    %v10603 = vld [vmem:[#allocation26 + $0x650] sm:$0xf]
    %v10604 = vld [vmem:[#allocation26 + $0x654] sm:$0xff]
    %v10605 = vld [vmem:[#allocation26 + $0x65c] sm:$0xf]
    %v10606 = vld [vmem:[#allocation26 + $0x660] sm:$0xff]
    %v10607 = vld [vmem:[#allocation26 + $0x668] sm:$0xf]
    %v10608 = vld [vmem:[#allocation26 + $0x66c] sm:$0xff]
    %v10609 = vld [vmem:[#allocation26 + $0x674] sm:$0xf]
    %v10610 = vld [vmem:[#allocation26 + $0x678] sm:$0xff]
    %v10611 = vld [vmem:[#allocation26 + $0x680] sm:$0xf]
    %v10612 = vld [vmem:[#allocation26 + $0x684] sm:$0xff]
    %v10613 = vld [vmem:[#allocation26 + $0x68c] sm:$0xf]
    %v10614 = vld [vmem:[#allocation26 + $0x690] sm:$0xff]
    %v10615 = vld [vmem:[#allocation26 + $0x698] sm:$0xf]
    %v10616 = vld [vmem:[#allocation26 + $0x69c] sm:$0xff]
    %v10617 = vld [vmem:[#allocation26 + $0x6a4] sm:$0xf]
    %v10618 = vld [vmem:[#allocation26 + $0x6a8] sm:$0xff]
    %v10619 = vld [vmem:[#allocation26 + $0x6b0] sm:$0xf]
    %v10620 = vld [vmem:[#allocation26 + $0x6b4] sm:$0xff]
    %v10621 = vld [vmem:[#allocation26 + $0x6bc] sm:$0xf]
    %v10622 = vld [vmem:[#allocation26 + $0x6c0] sm:$0xff]
    %v10623 = vld [vmem:[#allocation26 + $0x6c8] sm:$0xf]
    %v10624 = vld [vmem:[#allocation26 + $0x6cc] sm:$0xff]
    %v10625 = vld [vmem:[#allocation26 + $0x6d4] sm:$0xf]
    %v10626 = vld [vmem:[#allocation26 + $0x6d8] sm:$0xff]
    %v10627 = vld [vmem:[#allocation26 + $0x6e0] sm:$0xf]
    %v10628 = vld [vmem:[#allocation26 + $0x6e4] sm:$0xff]
    %v10629 = vld [vmem:[#allocation26 + $0x6ec] sm:$0xf]
    %v10630 = vld [vmem:[#allocation26 + $0x6f0] sm:$0xff]
    %v10631 = vld [vmem:[#allocation26 + $0x6f8] sm:$0xf]
    %v10632 = vld [vmem:[#allocation26 + $0x6fc] sm:$0xff]
    %v10633 = vld [vmem:[#allocation26 + $0x704] sm:$0xf]
    %v10634 = vld [vmem:[#allocation26 + $0x708] sm:$0xff]
    %v10635 = vld [vmem:[#allocation26 + $0x710] sm:$0xf]
    %v10636 = vld [vmem:[#allocation26 + $0x714] sm:$0xff]
    %v10637 = vld [vmem:[#allocation26 + $0x71c] sm:$0xf]
    %v10638 = vld [vmem:[#allocation26 + $0x720] sm:$0xff]
    %v10639 = vld [vmem:[#allocation26 + $0x728] sm:$0xf]
    %v10640 = vld [vmem:[#allocation26 + $0x72c] sm:$0xff]
    %v10641 = vld [vmem:[#allocation26 + $0x734] sm:$0xf]
    %v10642 = vld [vmem:[#allocation26 + $0x738] sm:$0xff]
    %v10643 = vld [vmem:[#allocation26 + $0x740] sm:$0xf]
    %v10644 = vld [vmem:[#allocation26 + $0x744] sm:$0xff]
    %v10645 = vld [vmem:[#allocation26 + $0x74c] sm:$0xf]
    %v10646 = vld [vmem:[#allocation26 + $0x750] sm:$0xff]
    %v10647 = vld [vmem:[#allocation26 + $0x758] sm:$0xf]
    %v10648 = vld [vmem:[#allocation26 + $0x75c] sm:$0xff]
    %v10649 = vld [vmem:[#allocation26 + $0x764] sm:$0xf]
    %v10650 = vld [vmem:[#allocation26 + $0x768] sm:$0xff]
    %v10651 = vld [vmem:[#allocation26 + $0x770] sm:$0xf]
    %v10652 = vld [vmem:[#allocation26 + $0x774] sm:$0xff]
    %v10653 = vld [vmem:[#allocation26 + $0x77c] sm:$0xf]
    %v10654 = vld [vmem:[#allocation26 + $0x780] sm:$0xff]
    %v10655 = vld [vmem:[#allocation26 + $0x788] sm:$0xf]
    %v10656 = vld [vmem:[#allocation26 + $0x78c] sm:$0xff]
    %v10657 = vld [vmem:[#allocation26 + $0x794] sm:$0xf]
    %v10658 = vld [vmem:[#allocation26 + $0x798] sm:$0xff]
    %v10659 = vld [vmem:[#allocation26 + $0x7a0] sm:$0xf]
    %v10660 = vld [vmem:[#allocation26 + $0x7a4] sm:$0xff]
    %v10661 = vld [vmem:[#allocation26 + $0x7ac] sm:$0xf]
    %v10662 = vld [vmem:[#allocation26 + $0x7b0] sm:$0xff]
    %v10663 = vld [vmem:[#allocation26 + $0x7b8] sm:$0xf]
    %v10664 = vld [vmem:[#allocation26 + $0x7bc] sm:$0xff]
    %v10665 = vld [vmem:[#allocation26 + $0x7c4] sm:$0xf]
    %v10666 = vld [vmem:[#allocation26 + $0x7c8] sm:$0xff]
    %v10667 = vld [vmem:[#allocation26 + $0x7d0] sm:$0xf]
    %v10668 = vld [vmem:[#allocation26 + $0x7d4] sm:$0xff]
    %v10669 = vld [vmem:[#allocation26 + $0x7dc] sm:$0xf]
    %v10670 = vld [vmem:[#allocation26 + $0x7e0] sm:$0xff]
    %v10671 = vld [vmem:[#allocation26 + $0x7e8] sm:$0xf]
    %v10672 = vld [vmem:[#allocation26 + $0x7ec] sm:$0xff]
    %v10673 = vld [vmem:[#allocation26 + $0x7f4] sm:$0xf]
    %v10674 = vld [vmem:[#allocation26 + $0x7f8] sm:$0xff]
    %v10675 = vld [vmem:[#allocation26 + $0x800] sm:$0xf]
    %v10676 = vld [vmem:[#allocation26 + $0x804] sm:$0xff]
    %v10677 = vld [vmem:[#allocation26 + $0x80c] sm:$0xf]
    %v10678 = vld [vmem:[#allocation26 + $0x810] sm:$0xff]
    %v10679 = vld [vmem:[#allocation26 + $0x818] sm:$0xf]
    %v10680 = vld [vmem:[#allocation26 + $0x81c] sm:$0xff]
    %v10681 = vld [vmem:[#allocation26 + $0x824] sm:$0xf]
    %v10682 = vld [vmem:[#allocation26 + $0x828] sm:$0xff]
    %v10683 = vld [vmem:[#allocation26 + $0x830] sm:$0xf]
    %v10684 = vld [vmem:[#allocation26 + $0x834] sm:$0xff]
    %v10685 = vld [vmem:[#allocation26 + $0x83c] sm:$0xf]
    %v10686 = vld [vmem:[#allocation26 + $0x840] sm:$0xff]
    %v10687 = vld [vmem:[#allocation26 + $0x848] sm:$0xf]
    %v10688 = vld [vmem:[#allocation26 + $0x84c] sm:$0xff]
    %v10689 = vld [vmem:[#allocation26 + $0x854] sm:$0xf]
    %v10690 = vld [vmem:[#allocation26 + $0x858] sm:$0xff]
    %v10691 = vld [vmem:[#allocation26 + $0x860] sm:$0xf]
    %v10692 = vld [vmem:[#allocation26 + $0x864] sm:$0xff]
    %v10693 = vld [vmem:[#allocation26 + $0x86c] sm:$0xf]
    %v10694 = vld [vmem:[#allocation26 + $0x870] sm:$0xff]
    %v10695 = vld [vmem:[#allocation26 + $0x878] sm:$0xf]
    %v10696 = vld [vmem:[#allocation26 + $0x87c] sm:$0xff]
    %v10697 = vld [vmem:[#allocation26 + $0x884] sm:$0xf]
    %v10698 = vld [vmem:[#allocation26 + $0x888] sm:$0xff]
    %v10699 = vld [vmem:[#allocation26 + $0x890] sm:$0xf]
    %v10700 = vld [vmem:[#allocation26 + $0x894] sm:$0xff]
    %v10701 = vld [vmem:[#allocation26 + $0x89c] sm:$0xf]
    %v10702 = vld [vmem:[#allocation26 + $0x8a0] sm:$0xff]
    %v10703 = vld [vmem:[#allocation26 + $0x8a8] sm:$0xf]
    %v10704 = vld [vmem:[#allocation26 + $0x8ac] sm:$0xff]
    %v10705 = vld [vmem:[#allocation26 + $0x8b4] sm:$0xf]
    %v10706 = vld [vmem:[#allocation26 + $0x8b8] sm:$0xff]
    %v10707 = vld [vmem:[#allocation26 + $0x8c0] sm:$0xf]
    %v10708 = vld [vmem:[#allocation26 + $0x8c4] sm:$0xff]
    %v10709 = vld [vmem:[#allocation26 + $0x8cc] sm:$0xf]
    %v10710 = vld [vmem:[#allocation26 + $0x8d0] sm:$0xff]
    %v10711 = vld [vmem:[#allocation26 + $0x8d8] sm:$0xf]
    %v10712 = vld [vmem:[#allocation26 + $0x8dc] sm:$0xff]
    %v10713 = vld [vmem:[#allocation26 + $0x8e4] sm:$0xf]
    %v10714 = vld [vmem:[#allocation26 + $0x8e8] sm:$0xff]
    %v10715 = vld [vmem:[#allocation26 + $0x8f0] sm:$0xf]
    %v10716 = vld [vmem:[#allocation26 + $0x8f4] sm:$0xff]
    %v10717 = vld [vmem:[#allocation26 + $0x8fc] sm:$0xf]
    %v10718 = vld [vmem:[#allocation28] sm:$0x7]
    %v10720 = vlaneseq
    %v10721 = vshrl.u32 %v10720, 7
    %v10722 = vsub.s32 0, %v10721
    %v10723 = vrot.slane %v10718, %v10722
    %v10724 = vlaneseq
    %v10725 = vshrl.u32 %v10724, 7
    %v10726 = vsub.s32 1, %v10725
    %v10727 = vrot.slane %v10718, %v10726
    %v10728 = vlaneseq
    %v10729 = vshrl.u32 %v10728, 7
    %v10730 = vsub.s32 2, %v10729
    %v10731 = vrot.slane %v10718, %v10730
    %v11119 = vunpack.c.l.b16 %v10334
    %v11120 = vunpack.c.h.b16 %v10334
    %v11121 = vunpack.c.l.b16 %v10335
    %v11122 = vunpack.c.l.b16 %v10336
    %v11123 = vunpack.c.h.b16 %v10336
    %v11124 = vunpack.c.l.b16 %v10337
    %v11125 = vunpack.c.l.b16 %v10338
    %v11126 = vunpack.c.h.b16 %v10338
    %v11127 = vunpack.c.l.b16 %v10339
    %v11128 = vunpack.c.l.b16 %v10340
    %v11129 = vunpack.c.h.b16 %v10340
    %v11130 = vunpack.c.l.b16 %v10341
    %v11131 = vunpack.c.l.b16 %v10342
    %v11132 = vunpack.c.h.b16 %v10342
    %v11133 = vunpack.c.l.b16 %v10343
    %v11134 = vunpack.c.l.b16 %v10344
    %v11135 = vunpack.c.h.b16 %v10344
    %v11136 = vunpack.c.l.b16 %v10345
    %v11137 = vunpack.c.l.b16 %v10346
    %v11138 = vunpack.c.h.b16 %v10346
    %v11139 = vunpack.c.l.b16 %v10347
    %v11140 = vunpack.c.l.b16 %v10348
    %v11141 = vunpack.c.h.b16 %v10348
    %v11142 = vunpack.c.l.b16 %v10349
    %v11143 = vunpack.c.l.b16 %v10350
    %v11144 = vunpack.c.h.b16 %v10350
    %v11145 = vunpack.c.l.b16 %v10351
    %v11146 = vunpack.c.l.b16 %v10352
    %v11147 = vunpack.c.h.b16 %v10352
    %v11148 = vunpack.c.l.b16 %v10353
    %v11149 = vunpack.c.l.b16 %v10354
    %v11150 = vunpack.c.h.b16 %v10354
    %v11151 = vunpack.c.l.b16 %v10355
    %v11152 = vunpack.c.l.b16 %v10356
    %v11153 = vunpack.c.h.b16 %v10356
    %v11154 = vunpack.c.l.b16 %v10357
    %v11155 = vunpack.c.l.b16 %v10358
    %v11156 = vunpack.c.h.b16 %v10358
    %v11157 = vunpack.c.l.b16 %v10359
    %v11158 = vunpack.c.l.b16 %v10360
    %v11159 = vunpack.c.h.b16 %v10360
    %v11160 = vunpack.c.l.b16 %v10361
    %v11161 = vunpack.c.l.b16 %v10362
    %v11162 = vunpack.c.h.b16 %v10362
    %v11163 = vunpack.c.l.b16 %v10363
    %v11164 = vunpack.c.l.b16 %v10364
    %v11165 = vunpack.c.h.b16 %v10364
    %v11166 = vunpack.c.l.b16 %v10365
    %v11167 = vunpack.c.l.b16 %v10366
    %v11168 = vunpack.c.h.b16 %v10366
    %v11169 = vunpack.c.l.b16 %v10367
    %v11170 = vunpack.c.l.b16 %v10368
    %v11171 = vunpack.c.h.b16 %v10368
    %v11172 = vunpack.c.l.b16 %v10369
    %v11173 = vunpack.c.l.b16 %v10370
    %v11174 = vunpack.c.h.b16 %v10370
    %v11175 = vunpack.c.l.b16 %v10371
    %v11176 = vunpack.c.l.b16 %v10372
    %v11177 = vunpack.c.h.b16 %v10372
    %v11178 = vunpack.c.l.b16 %v10373
    %v11179 = vunpack.c.l.b16 %v10374
    %v11180 = vunpack.c.h.b16 %v10374
    %v11181 = vunpack.c.l.b16 %v10375
    %v11182 = vunpack.c.l.b16 %v10376
    %v11183 = vunpack.c.h.b16 %v10376
    %v11184 = vunpack.c.l.b16 %v10377
    %v11185 = vunpack.c.l.b16 %v10378
    %v11186 = vunpack.c.h.b16 %v10378
    %v11187 = vunpack.c.l.b16 %v10379
    %v11188 = vunpack.c.l.b16 %v10380
    %v11189 = vunpack.c.h.b16 %v10380
    %v11190 = vunpack.c.l.b16 %v10381
    %v11191 = vunpack.c.l.b16 %v10382
    %v11192 = vunpack.c.h.b16 %v10382
    %v11193 = vunpack.c.l.b16 %v10383
    %v11194 = vunpack.c.l.b16 %v10384
    %v11195 = vunpack.c.h.b16 %v10384
    %v11196 = vunpack.c.l.b16 %v10385
    %v11197 = vunpack.c.l.b16 %v10386
    %v11198 = vunpack.c.h.b16 %v10386
    %v11199 = vunpack.c.l.b16 %v10387
    %v11200 = vunpack.c.l.b16 %v10388
    %v11201 = vunpack.c.h.b16 %v10388
    %v11202 = vunpack.c.l.b16 %v10389
    %v11203 = vunpack.c.l.b16 %v10390
    %v11204 = vunpack.c.h.b16 %v10390
    %v11205 = vunpack.c.l.b16 %v10391
    %v11206 = vunpack.c.l.b16 %v10392
    %v11207 = vunpack.c.h.b16 %v10392
    %v11208 = vunpack.c.l.b16 %v10393
    %v11209 = vunpack.c.l.b16 %v10394
    %v11210 = vunpack.c.h.b16 %v10394
    %v11211 = vunpack.c.l.b16 %v10395
    %v11212 = vunpack.c.l.b16 %v10396
    %v11213 = vunpack.c.h.b16 %v10396
    %v11214 = vunpack.c.l.b16 %v10397
    %v11215 = vunpack.c.l.b16 %v10398
    %v11216 = vunpack.c.h.b16 %v10398
    %v11217 = vunpack.c.l.b16 %v10399
    %v11218 = vunpack.c.l.b16 %v10400
    %v11219 = vunpack.c.h.b16 %v10400
    %v11220 = vunpack.c.l.b16 %v10401
    %v11221 = vunpack.c.l.b16 %v10402
    %v11222 = vunpack.c.h.b16 %v10402
    %v11223 = vunpack.c.l.b16 %v10403
    %v11224 = vunpack.c.l.b16 %v10404
    %v11225 = vunpack.c.h.b16 %v10404
    %v11226 = vunpack.c.l.b16 %v10405
    %v11227 = vunpack.c.l.b16 %v10406
    %v11228 = vunpack.c.h.b16 %v10406
    %v11229 = vunpack.c.l.b16 %v10407
    %v11230 = vunpack.c.l.b16 %v10408
    %v11231 = vunpack.c.h.b16 %v10408
    %v11232 = vunpack.c.l.b16 %v10409
    %v11233 = vunpack.c.l.b16 %v10410
    %v11234 = vunpack.c.h.b16 %v10410
    %v11235 = vunpack.c.l.b16 %v10411
    %v11236 = vunpack.c.l.b16 %v10412
    %v11237 = vunpack.c.h.b16 %v10412
    %v11238 = vunpack.c.l.b16 %v10413
    %v11239 = vunpack.c.l.b16 %v10414
    %v11240 = vunpack.c.h.b16 %v10414
    %v11241 = vunpack.c.l.b16 %v10415
    %v11242 = vunpack.c.l.b16 %v10416
    %v11243 = vunpack.c.h.b16 %v10416
    %v11244 = vunpack.c.l.b16 %v10417
    %v11245 = vunpack.c.l.b16 %v10418
    %v11246 = vunpack.c.h.b16 %v10418
    %v11247 = vunpack.c.l.b16 %v10419
    %v11248 = vunpack.c.l.b16 %v10420
    %v11249 = vunpack.c.h.b16 %v10420
    %v11250 = vunpack.c.l.b16 %v10421
    %v11251 = vunpack.c.l.b16 %v10422
    %v11252 = vunpack.c.h.b16 %v10422
    %v11253 = vunpack.c.l.b16 %v10423
    %v11254 = vunpack.c.l.b16 %v10424
    %v11255 = vunpack.c.h.b16 %v10424
    %v11256 = vunpack.c.l.b16 %v10425
    %v11257 = vunpack.c.l.b16 %v10426
    %v11258 = vunpack.c.h.b16 %v10426
    %v11259 = vunpack.c.l.b16 %v10427
    %v11260 = vunpack.c.l.b16 %v10428
    %v11261 = vunpack.c.h.b16 %v10428
    %v11262 = vunpack.c.l.b16 %v10429
    %v11263 = vunpack.c.l.b16 %v10430
    %v11264 = vunpack.c.h.b16 %v10430
    %v11265 = vunpack.c.l.b16 %v10431
    %v11266 = vunpack.c.l.b16 %v10432
    %v11267 = vunpack.c.h.b16 %v10432
    %v11268 = vunpack.c.l.b16 %v10433
    %v11269 = vunpack.c.l.b16 %v10434
    %v11270 = vunpack.c.h.b16 %v10434
    %v11271 = vunpack.c.l.b16 %v10435
    %v11272 = vunpack.c.l.b16 %v10436
    %v11273 = vunpack.c.h.b16 %v10436
    %v11274 = vunpack.c.l.b16 %v10437
    %v11275 = vunpack.c.l.b16 %v10438
    %v11276 = vunpack.c.h.b16 %v10438
    %v11277 = vunpack.c.l.b16 %v10439
    %v11278 = vunpack.c.l.b16 %v10440
    %v11279 = vunpack.c.h.b16 %v10440
    %v11280 = vunpack.c.l.b16 %v10441
    %v11281 = vunpack.c.l.b16 %v10442
    %v11282 = vunpack.c.h.b16 %v10442
    %v11283 = vunpack.c.l.b16 %v10443
    %v11284 = vunpack.c.l.b16 %v10444
    %v11285 = vunpack.c.h.b16 %v10444
    %v11286 = vunpack.c.l.b16 %v10445
    %v11287 = vunpack.c.l.b16 %v10446
    %v11288 = vunpack.c.h.b16 %v10446
    %v11289 = vunpack.c.l.b16 %v10447
    %v11290 = vunpack.c.l.b16 %v10448
    %v11291 = vunpack.c.h.b16 %v10448
    %v11292 = vunpack.c.l.b16 %v10449
    %v11293 = vunpack.c.l.b16 %v10450
    %v11294 = vunpack.c.h.b16 %v10450
    %v11295 = vunpack.c.l.b16 %v10451
    %v11296 = vunpack.c.l.b16 %v10452
    %v11297 = vunpack.c.h.b16 %v10452
    %v11298 = vunpack.c.l.b16 %v10453
    %v11299 = vunpack.c.l.b16 %v10454
    %v11300 = vunpack.c.h.b16 %v10454
    %v11301 = vunpack.c.l.b16 %v10455
    %v11302 = vunpack.c.l.b16 %v10456
    %v11303 = vunpack.c.h.b16 %v10456
    %v11304 = vunpack.c.l.b16 %v10457
    %v11305 = vunpack.c.l.b16 %v10458
    %v11306 = vunpack.c.h.b16 %v10458
    %v11307 = vunpack.c.l.b16 %v10459
    %v11308 = vunpack.c.l.b16 %v10460
    %v11309 = vunpack.c.h.b16 %v10460
    %v11310 = vunpack.c.l.b16 %v10461
    %v11311 = vunpack.c.l.b16 %v10462
    %v11312 = vunpack.c.h.b16 %v10462
    %v11313 = vunpack.c.l.b16 %v10463
    %v11314 = vunpack.c.l.b16 %v10464
    %v11315 = vunpack.c.h.b16 %v10464
    %v11316 = vunpack.c.l.b16 %v10465
    %v11317 = vunpack.c.l.b16 %v10466
    %v11318 = vunpack.c.h.b16 %v10466
    %v11319 = vunpack.c.l.b16 %v10467
    %v11320 = vunpack.c.l.b16 %v10468
    %v11321 = vunpack.c.h.b16 %v10468
    %v11322 = vunpack.c.l.b16 %v10469
    %v11323 = vunpack.c.l.b16 %v10470
    %v11324 = vunpack.c.h.b16 %v10470
    %v11325 = vunpack.c.l.b16 %v10471
    %v11326 = vunpack.c.l.b16 %v10472
    %v11327 = vunpack.c.h.b16 %v10472
    %v11328 = vunpack.c.l.b16 %v10473
    %v11329 = vunpack.c.l.b16 %v10474
    %v11330 = vunpack.c.h.b16 %v10474
    %v11331 = vunpack.c.l.b16 %v10475
    %v11332 = vunpack.c.l.b16 %v10476
    %v11333 = vunpack.c.h.b16 %v10476
    %v11334 = vunpack.c.l.b16 %v10477
    %v11335 = vunpack.c.l.b16 %v10478
    %v11336 = vunpack.c.h.b16 %v10478
    %v11337 = vunpack.c.l.b16 %v10479
    %v11338 = vunpack.c.l.b16 %v10480
    %v11339 = vunpack.c.h.b16 %v10480
    %v11340 = vunpack.c.l.b16 %v10481
    %v11341 = vunpack.c.l.b16 %v10482
    %v11342 = vunpack.c.h.b16 %v10482
    %v11343 = vunpack.c.l.b16 %v10483
    %v11344 = vunpack.c.l.b16 %v10484
    %v11345 = vunpack.c.h.b16 %v10484
    %v11346 = vunpack.c.l.b16 %v10485
    %v11347 = vunpack.c.l.b16 %v10486
    %v11348 = vunpack.c.h.b16 %v10486
    %v11349 = vunpack.c.l.b16 %v10487
    %v11350 = vunpack.c.l.b16 %v10488
    %v11351 = vunpack.c.h.b16 %v10488
    %v11352 = vunpack.c.l.b16 %v10489
    %v11353 = vunpack.c.l.b16 %v10490
    %v11354 = vunpack.c.h.b16 %v10490
    %v11355 = vunpack.c.l.b16 %v10491
    %v11356 = vunpack.c.l.b16 %v10492
    %v11357 = vunpack.c.h.b16 %v10492
    %v11358 = vunpack.c.l.b16 %v10493
    %v11359 = vunpack.c.l.b16 %v10494
    %v11360 = vunpack.c.h.b16 %v10494
    %v11361 = vunpack.c.l.b16 %v10495
    %v11362 = vunpack.c.l.b16 %v10496
    %v11363 = vunpack.c.h.b16 %v10496
    %v11364 = vunpack.c.l.b16 %v10497
    %v11365 = vunpack.c.l.b16 %v10498
    %v11366 = vunpack.c.h.b16 %v10498
    %v11367 = vunpack.c.l.b16 %v10499
    %v11368 = vunpack.c.l.b16 %v10500
    %v11369 = vunpack.c.h.b16 %v10500
    %v11370 = vunpack.c.l.b16 %v10501
    %v11371 = vunpack.c.l.b16 %v10502
    %v11372 = vunpack.c.h.b16 %v10502
    %v11373 = vunpack.c.l.b16 %v10503
    %v11374 = vunpack.c.l.b16 %v10504
    %v11375 = vunpack.c.h.b16 %v10504
    %v11376 = vunpack.c.l.b16 %v10505
    %v11377 = vunpack.c.l.b16 %v10506
    %v11378 = vunpack.c.h.b16 %v10506
    %v11379 = vunpack.c.l.b16 %v10507
    %v11380 = vunpack.c.l.b16 %v10508
    %v11381 = vunpack.c.h.b16 %v10508
    %v11382 = vunpack.c.l.b16 %v10509
    %v11383 = vunpack.c.l.b16 %v10510
    %v11384 = vunpack.c.h.b16 %v10510
    %v11385 = vunpack.c.l.b16 %v10511
    %v11386 = vunpack.c.l.b16 %v10512
    %v11387 = vunpack.c.h.b16 %v10512
    %v11388 = vunpack.c.l.b16 %v10513
    %v11389 = vunpack.c.l.b16 %v10514
    %v11390 = vunpack.c.h.b16 %v10514
    %v11391 = vunpack.c.l.b16 %v10515
    %v11392 = vunpack.c.l.b16 %v10516
    %v11393 = vunpack.c.h.b16 %v10516
    %v11394 = vunpack.c.l.b16 %v10517
    %v11395 = vunpack.c.l.b16 %v10518
    %v11396 = vunpack.c.h.b16 %v10518
    %v11397 = vunpack.c.l.b16 %v10519
    %v11398 = vunpack.c.l.b16 %v10520
    %v11399 = vunpack.c.h.b16 %v10520
    %v11400 = vunpack.c.l.b16 %v10521
    %v11401 = vunpack.c.l.b16 %v10522
    %v11402 = vunpack.c.h.b16 %v10522
    %v11403 = vunpack.c.l.b16 %v10523
    %v11404 = vunpack.c.l.b16 %v10524
    %v11405 = vunpack.c.h.b16 %v10524
    %v11406 = vunpack.c.l.b16 %v10525
    %v11407 = vunpack.c.l.b16 %v10526
    %v11408 = vunpack.c.h.b16 %v10526
    %v11409 = vunpack.c.l.b16 %v10527
    %v11410 = vunpack.c.l.b16 %v10528
    %v11411 = vunpack.c.h.b16 %v10528
    %v11412 = vunpack.c.l.b16 %v10529
    %v11413 = vunpack.c.l.b16 %v10530
    %v11414 = vunpack.c.h.b16 %v10530
    %v11415 = vunpack.c.l.b16 %v10531
    %v11416 = vunpack.c.l.b16 %v10532
    %v11417 = vunpack.c.h.b16 %v10532
    %v11418 = vunpack.c.l.b16 %v10533
    %v11419 = vunpack.c.l.b16 %v10534
    %v11420 = vunpack.c.h.b16 %v10534
    %v11421 = vunpack.c.l.b16 %v10535
    %v11422 = vunpack.c.l.b16 %v10536
    %v11423 = vunpack.c.h.b16 %v10536
    %v11424 = vunpack.c.l.b16 %v10537
    %v11425 = vunpack.c.l.b16 %v10538
    %v11426 = vunpack.c.h.b16 %v10538
    %v11427 = vunpack.c.l.b16 %v10539
    %v11428 = vunpack.c.l.b16 %v10540
    %v11429 = vunpack.c.h.b16 %v10540
    %v11430 = vunpack.c.l.b16 %v10541
    %v11431 = vunpack.c.l.b16 %v10542
    %v11432 = vunpack.c.h.b16 %v10542
    %v11433 = vunpack.c.l.b16 %v10543
    %v11434 = vunpack.c.l.b16 %v10544
    %v11435 = vunpack.c.h.b16 %v10544
    %v11436 = vunpack.c.l.b16 %v10545
    %v11437 = vunpack.c.l.b16 %v10546
    %v11438 = vunpack.c.h.b16 %v10546
    %v11439 = vunpack.c.l.b16 %v10547
    %v11440 = vunpack.c.l.b16 %v10548
    %v11441 = vunpack.c.h.b16 %v10548
    %v11442 = vunpack.c.l.b16 %v10549
    %v11443 = vunpack.c.l.b16 %v10550
    %v11444 = vunpack.c.h.b16 %v10550
    %v11445 = vunpack.c.l.b16 %v10551
    %v11446 = vunpack.c.l.b16 %v10552
    %v11447 = vunpack.c.h.b16 %v10552
    %v11448 = vunpack.c.l.b16 %v10553
    %v11449 = vunpack.c.l.b16 %v10554
    %v11450 = vunpack.c.h.b16 %v10554
    %v11451 = vunpack.c.l.b16 %v10555
    %v11452 = vunpack.c.l.b16 %v10556
    %v11453 = vunpack.c.h.b16 %v10556
    %v11454 = vunpack.c.l.b16 %v10557
    %v11455 = vunpack.c.l.b16 %v10558
    %v11456 = vunpack.c.h.b16 %v10558
    %v11457 = vunpack.c.l.b16 %v10559
    %v11458 = vunpack.c.l.b16 %v10560
    %v11459 = vunpack.c.h.b16 %v10560
    %v11460 = vunpack.c.l.b16 %v10561
    %v11461 = vunpack.c.l.b16 %v10562
    %v11462 = vunpack.c.h.b16 %v10562
    %v11463 = vunpack.c.l.b16 %v10563
    %v11464 = vunpack.c.l.b16 %v10564
    %v11465 = vunpack.c.h.b16 %v10564
    %v11466 = vunpack.c.l.b16 %v10565
    %v11467 = vunpack.c.l.b16 %v10566
    %v11468 = vunpack.c.h.b16 %v10566
    %v11469 = vunpack.c.l.b16 %v10567
    %v11470 = vunpack.c.l.b16 %v10568
    %v11471 = vunpack.c.h.b16 %v10568
    %v11472 = vunpack.c.l.b16 %v10569
    %v11473 = vunpack.c.l.b16 %v10570
    %v11474 = vunpack.c.h.b16 %v10570
    %v11475 = vunpack.c.l.b16 %v10571
    %v11476 = vunpack.c.l.b16 %v10572
    %v11477 = vunpack.c.h.b16 %v10572
    %v11478 = vunpack.c.l.b16 %v10573
    %v11479 = vunpack.c.l.b16 %v10574
    %v11480 = vunpack.c.h.b16 %v10574
    %v11481 = vunpack.c.l.b16 %v10575
    %v11482 = vunpack.c.l.b16 %v10576
    %v11483 = vunpack.c.h.b16 %v10576
    %v11484 = vunpack.c.l.b16 %v10577
    %v11485 = vunpack.c.l.b16 %v10578
    %v11486 = vunpack.c.h.b16 %v10578
    %v11487 = vunpack.c.l.b16 %v10579
    %v11488 = vunpack.c.l.b16 %v10580
    %v11489 = vunpack.c.h.b16 %v10580
    %v11490 = vunpack.c.l.b16 %v10581
    %v11491 = vunpack.c.l.b16 %v10582
    %v11492 = vunpack.c.h.b16 %v10582
    %v11493 = vunpack.c.l.b16 %v10583
    %v11494 = vunpack.c.l.b16 %v10584
    %v11495 = vunpack.c.h.b16 %v10584
    %v11496 = vunpack.c.l.b16 %v10585
    %v11497 = vunpack.c.l.b16 %v10586
    %v11498 = vunpack.c.h.b16 %v10586
    %v11499 = vunpack.c.l.b16 %v10587
    %v11500 = vunpack.c.l.b16 %v10588
    %v11501 = vunpack.c.h.b16 %v10588
    %v11502 = vunpack.c.l.b16 %v10589
    %v11503 = vunpack.c.l.b16 %v10590
    %v11504 = vunpack.c.h.b16 %v10590
    %v11505 = vunpack.c.l.b16 %v10591
    %v11506 = vunpack.c.l.b16 %v10592
    %v11507 = vunpack.c.h.b16 %v10592
    %v11508 = vunpack.c.l.b16 %v10593
    %v11509 = vunpack.c.l.b16 %v10594
    %v11510 = vunpack.c.h.b16 %v10594
    %v11511 = vunpack.c.l.b16 %v10595
    %v11512 = vunpack.c.l.b16 %v10596
    %v11513 = vunpack.c.h.b16 %v10596
    %v11514 = vunpack.c.l.b16 %v10597
    %v11515 = vunpack.c.l.b16 %v10598
    %v11516 = vunpack.c.h.b16 %v10598
    %v11517 = vunpack.c.l.b16 %v10599
    %v11518 = vunpack.c.l.b16 %v10600
    %v11519 = vunpack.c.h.b16 %v10600
    %v11520 = vunpack.c.l.b16 %v10601
    %v11521 = vunpack.c.l.b16 %v10602
    %v11522 = vunpack.c.h.b16 %v10602
    %v11523 = vunpack.c.l.b16 %v10603
    %v11524 = vunpack.c.l.b16 %v10604
    %v11525 = vunpack.c.h.b16 %v10604
    %v11526 = vunpack.c.l.b16 %v10605
    %v11527 = vunpack.c.l.b16 %v10606
    %v11528 = vunpack.c.h.b16 %v10606
    %v11529 = vunpack.c.l.b16 %v10607
    %v11530 = vunpack.c.l.b16 %v10608
    %v11531 = vunpack.c.h.b16 %v10608
    %v11532 = vunpack.c.l.b16 %v10609
    %v11533 = vunpack.c.l.b16 %v10610
    %v11534 = vunpack.c.h.b16 %v10610
    %v11535 = vunpack.c.l.b16 %v10611
    %v11536 = vunpack.c.l.b16 %v10612
    %v11537 = vunpack.c.h.b16 %v10612
    %v11538 = vunpack.c.l.b16 %v10613
    %v11539 = vunpack.c.l.b16 %v10614
    %v11540 = vunpack.c.h.b16 %v10614
    %v11541 = vunpack.c.l.b16 %v10615
    %v11542 = vunpack.c.l.b16 %v10616
    %v11543 = vunpack.c.h.b16 %v10616
    %v11544 = vunpack.c.l.b16 %v10617
    %v11545 = vunpack.c.l.b16 %v10618
    %v11546 = vunpack.c.h.b16 %v10618
    %v11547 = vunpack.c.l.b16 %v10619
    %v11548 = vunpack.c.l.b16 %v10620
    %v11549 = vunpack.c.h.b16 %v10620
    %v11550 = vunpack.c.l.b16 %v10621
    %v11551 = vunpack.c.l.b16 %v10622
    %v11552 = vunpack.c.h.b16 %v10622
    %v11553 = vunpack.c.l.b16 %v10623
    %v11554 = vunpack.c.l.b16 %v10624
    %v11555 = vunpack.c.h.b16 %v10624
    %v11556 = vunpack.c.l.b16 %v10625
    %v11557 = vunpack.c.l.b16 %v10626
    %v11558 = vunpack.c.h.b16 %v10626
    %v11559 = vunpack.c.l.b16 %v10627
    %v11560 = vunpack.c.l.b16 %v10628
    %v11561 = vunpack.c.h.b16 %v10628
    %v11562 = vunpack.c.l.b16 %v10629
    %v11563 = vunpack.c.l.b16 %v10630
    %v11564 = vunpack.c.h.b16 %v10630
    %v11565 = vunpack.c.l.b16 %v10631
    %v11566 = vunpack.c.l.b16 %v10632
    %v11567 = vunpack.c.h.b16 %v10632
    %v11568 = vunpack.c.l.b16 %v10633
    %v11569 = vunpack.c.l.b16 %v10634
    %v11570 = vunpack.c.h.b16 %v10634
    %v11571 = vunpack.c.l.b16 %v10635
    %v11572 = vunpack.c.l.b16 %v10636
    %v11573 = vunpack.c.h.b16 %v10636
    %v11574 = vunpack.c.l.b16 %v10637
    %v11575 = vunpack.c.l.b16 %v10638
    %v11576 = vunpack.c.h.b16 %v10638
    %v11577 = vunpack.c.l.b16 %v10639
    %v11578 = vunpack.c.l.b16 %v10640
    %v11579 = vunpack.c.h.b16 %v10640
    %v11580 = vunpack.c.l.b16 %v10641
    %v11581 = vunpack.c.l.b16 %v10642
    %v11582 = vunpack.c.h.b16 %v10642
    %v11583 = vunpack.c.l.b16 %v10643
    %v11584 = vunpack.c.l.b16 %v10644
    %v11585 = vunpack.c.h.b16 %v10644
    %v11586 = vunpack.c.l.b16 %v10645
    %v11587 = vunpack.c.l.b16 %v10646
    %v11588 = vunpack.c.h.b16 %v10646
    %v11589 = vunpack.c.l.b16 %v10647
    %v11590 = vunpack.c.l.b16 %v10648
    %v11591 = vunpack.c.h.b16 %v10648
    %v11592 = vunpack.c.l.b16 %v10649
    %v11593 = vunpack.c.l.b16 %v10650
    %v11594 = vunpack.c.h.b16 %v10650
    %v11595 = vunpack.c.l.b16 %v10651
    %v11596 = vunpack.c.l.b16 %v10652
    %v11597 = vunpack.c.h.b16 %v10652
    %v11598 = vunpack.c.l.b16 %v10653
    %v11599 = vunpack.c.l.b16 %v10654
    %v11600 = vunpack.c.h.b16 %v10654
    %v11601 = vunpack.c.l.b16 %v10655
    %v11602 = vunpack.c.l.b16 %v10656
    %v11603 = vunpack.c.h.b16 %v10656
    %v11604 = vunpack.c.l.b16 %v10657
    %v11605 = vunpack.c.l.b16 %v10658
    %v11606 = vunpack.c.h.b16 %v10658
    %v11607 = vunpack.c.l.b16 %v10659
    %v11608 = vunpack.c.l.b16 %v10660
    %v11609 = vunpack.c.h.b16 %v10660
    %v11610 = vunpack.c.l.b16 %v10661
    %v11611 = vunpack.c.l.b16 %v10662
    %v11612 = vunpack.c.h.b16 %v10662
    %v11613 = vunpack.c.l.b16 %v10663
    %v11614 = vunpack.c.l.b16 %v10664
    %v11615 = vunpack.c.h.b16 %v10664
    %v11616 = vunpack.c.l.b16 %v10665
    %v11617 = vunpack.c.l.b16 %v10666
    %v11618 = vunpack.c.h.b16 %v10666
    %v11619 = vunpack.c.l.b16 %v10667
    %v11620 = vunpack.c.l.b16 %v10668
    %v11621 = vunpack.c.h.b16 %v10668
    %v11622 = vunpack.c.l.b16 %v10669
    %v11623 = vunpack.c.l.b16 %v10670
    %v11624 = vunpack.c.h.b16 %v10670
    %v11625 = vunpack.c.l.b16 %v10671
    %v11626 = vunpack.c.l.b16 %v10672
    %v11627 = vunpack.c.h.b16 %v10672
    %v11628 = vunpack.c.l.b16 %v10673
    %v11629 = vunpack.c.l.b16 %v10674
    %v11630 = vunpack.c.h.b16 %v10674
    %v11631 = vunpack.c.l.b16 %v10675
    %v11632 = vunpack.c.l.b16 %v10676
    %v11633 = vunpack.c.h.b16 %v10676
    %v11634 = vunpack.c.l.b16 %v10677
    %v11635 = vunpack.c.l.b16 %v10678
    %v11636 = vunpack.c.h.b16 %v10678
    %v11637 = vunpack.c.l.b16 %v10679
    %v11638 = vunpack.c.l.b16 %v10680
    %v11639 = vunpack.c.h.b16 %v10680
    %v11640 = vunpack.c.l.b16 %v10681
    %v11641 = vunpack.c.l.b16 %v10682
    %v11642 = vunpack.c.h.b16 %v10682
    %v11643 = vunpack.c.l.b16 %v10683
    %v11644 = vunpack.c.l.b16 %v10684
    %v11645 = vunpack.c.h.b16 %v10684
    %v11646 = vunpack.c.l.b16 %v10685
    %v11647 = vunpack.c.l.b16 %v10686
    %v11648 = vunpack.c.h.b16 %v10686
    %v11649 = vunpack.c.l.b16 %v10687
    %v11650 = vunpack.c.l.b16 %v10688
    %v11651 = vunpack.c.h.b16 %v10688
    %v11652 = vunpack.c.l.b16 %v10689
    %v11653 = vunpack.c.l.b16 %v10690
    %v11654 = vunpack.c.h.b16 %v10690
    %v11655 = vunpack.c.l.b16 %v10691
    %v11656 = vunpack.c.l.b16 %v10692
    %v11657 = vunpack.c.h.b16 %v10692
    %v11658 = vunpack.c.l.b16 %v10693
    %v11659 = vunpack.c.l.b16 %v10694
    %v11660 = vunpack.c.h.b16 %v10694
    %v11661 = vunpack.c.l.b16 %v10695
    %v11662 = vunpack.c.l.b16 %v10696
    %v11663 = vunpack.c.h.b16 %v10696
    %v11664 = vunpack.c.l.b16 %v10697
    %v11665 = vunpack.c.l.b16 %v10698
    %v11666 = vunpack.c.h.b16 %v10698
    %v11667 = vunpack.c.l.b16 %v10699
    %v11668 = vunpack.c.l.b16 %v10700
    %v11669 = vunpack.c.h.b16 %v10700
    %v11670 = vunpack.c.l.b16 %v10701
    %v11671 = vunpack.c.l.b16 %v10702
    %v11672 = vunpack.c.h.b16 %v10702
    %v11673 = vunpack.c.l.b16 %v10703
    %v11674 = vunpack.c.l.b16 %v10704
    %v11675 = vunpack.c.h.b16 %v10704
    %v11676 = vunpack.c.l.b16 %v10705
    %v11677 = vunpack.c.l.b16 %v10706
    %v11678 = vunpack.c.h.b16 %v10706
    %v11679 = vunpack.c.l.b16 %v10707
    %v11680 = vunpack.c.l.b16 %v10708
    %v11681 = vunpack.c.h.b16 %v10708
    %v11682 = vunpack.c.l.b16 %v10709
    %v11683 = vunpack.c.l.b16 %v10710
    %v11684 = vunpack.c.h.b16 %v10710
    %v11685 = vunpack.c.l.b16 %v10711
    %v11686 = vunpack.c.l.b16 %v10712
    %v11687 = vunpack.c.h.b16 %v10712
    %v11688 = vunpack.c.l.b16 %v10713
    %v11689 = vunpack.c.l.b16 %v10714
    %v11690 = vunpack.c.h.b16 %v10714
    %v11691 = vunpack.c.l.b16 %v10715
    %v11692 = vunpack.c.l.b16 %v10716
    %v11693 = vunpack.c.h.b16 %v10716
    %v11694 = vunpack.c.l.b16 %v10717
    %v11695 = vpack.c.b16 %v11122, %v11119
    %v11696 = vpack.c.b16 %v11123, %v11120
    %v11697 = vpack.c.b16 %v11124, %v11121
    %v11698 = vpack.c.b16 %v11128, %v11125
    %v11699 = vpack.c.b16 %v11129, %v11126
    %v11700 = vpack.c.b16 %v11130, %v11127
    %v11701 = vpack.c.b16 %v11134, %v11131
    %v11702 = vpack.c.b16 %v11135, %v11132
    %v11703 = vpack.c.b16 %v11136, %v11133
    %v11704 = vpack.c.b16 %v11140, %v11137
    %v11705 = vpack.c.b16 %v11141, %v11138
    %v11706 = vpack.c.b16 %v11142, %v11139
    %v11707 = vpack.c.b16 %v11146, %v11143
    %v11708 = vpack.c.b16 %v11147, %v11144
    %v11709 = vpack.c.b16 %v11148, %v11145
    %v11710 = vpack.c.b16 %v11152, %v11149
    %v11711 = vpack.c.b16 %v11153, %v11150
    %v11712 = vpack.c.b16 %v11154, %v11151
    %v11713 = vpack.c.b16 %v11158, %v11155
    %v11714 = vpack.c.b16 %v11159, %v11156
    %v11715 = vpack.c.b16 %v11160, %v11157
    %v11716 = vpack.c.b16 %v11164, %v11161
    %v11717 = vpack.c.b16 %v11165, %v11162
    %v11718 = vpack.c.b16 %v11166, %v11163
    %v11719 = vpack.c.b16 %v11170, %v11167
    %v11720 = vpack.c.b16 %v11171, %v11168
    %v11721 = vpack.c.b16 %v11172, %v11169
    %v11722 = vpack.c.b16 %v11176, %v11173
    %v11723 = vpack.c.b16 %v11177, %v11174
    %v11724 = vpack.c.b16 %v11178, %v11175
    %v11725 = vpack.c.b16 %v11182, %v11179
    %v11726 = vpack.c.b16 %v11183, %v11180
    %v11727 = vpack.c.b16 %v11184, %v11181
    %v11728 = vpack.c.b16 %v11188, %v11185
    %v11729 = vpack.c.b16 %v11189, %v11186
    %v11730 = vpack.c.b16 %v11190, %v11187
    %v11731 = vpack.c.b16 %v11194, %v11191
    %v11732 = vpack.c.b16 %v11195, %v11192
    %v11733 = vpack.c.b16 %v11196, %v11193
    %v11734 = vpack.c.b16 %v11200, %v11197
    %v11735 = vpack.c.b16 %v11201, %v11198
    %v11736 = vpack.c.b16 %v11202, %v11199
    %v11737 = vpack.c.b16 %v11206, %v11203
    %v11738 = vpack.c.b16 %v11207, %v11204
    %v11739 = vpack.c.b16 %v11208, %v11205
    %v11740 = vpack.c.b16 %v11212, %v11209
    %v11741 = vpack.c.b16 %v11213, %v11210
    %v11742 = vpack.c.b16 %v11214, %v11211
    %v11743 = vpack.c.b16 %v11218, %v11215
    %v11744 = vpack.c.b16 %v11219, %v11216
    %v11745 = vpack.c.b16 %v11220, %v11217
    %v11746 = vpack.c.b16 %v11224, %v11221
    %v11747 = vpack.c.b16 %v11225, %v11222
    %v11748 = vpack.c.b16 %v11226, %v11223
    %v11749 = vpack.c.b16 %v11230, %v11227
    %v11750 = vpack.c.b16 %v11231, %v11228
    %v11751 = vpack.c.b16 %v11232, %v11229
    %v11752 = vpack.c.b16 %v11236, %v11233
    %v11753 = vpack.c.b16 %v11237, %v11234
    %v11754 = vpack.c.b16 %v11238, %v11235
    %v11755 = vpack.c.b16 %v11242, %v11239
    %v11756 = vpack.c.b16 %v11243, %v11240
    %v11757 = vpack.c.b16 %v11244, %v11241
    %v11758 = vpack.c.b16 %v11248, %v11245
    %v11759 = vpack.c.b16 %v11249, %v11246
    %v11760 = vpack.c.b16 %v11250, %v11247
    %v11761 = vpack.c.b16 %v11254, %v11251
    %v11762 = vpack.c.b16 %v11255, %v11252
    %v11763 = vpack.c.b16 %v11256, %v11253
    %v11764 = vpack.c.b16 %v11260, %v11257
    %v11765 = vpack.c.b16 %v11261, %v11258
    %v11766 = vpack.c.b16 %v11262, %v11259
    %v11767 = vpack.c.b16 %v11266, %v11263
    %v11768 = vpack.c.b16 %v11267, %v11264
    %v11769 = vpack.c.b16 %v11268, %v11265
    %v11770 = vpack.c.b16 %v11272, %v11269
    %v11771 = vpack.c.b16 %v11273, %v11270
    %v11772 = vpack.c.b16 %v11274, %v11271
    %v11773 = vpack.c.b16 %v11278, %v11275
    %v11774 = vpack.c.b16 %v11279, %v11276
    %v11775 = vpack.c.b16 %v11280, %v11277
    %v11776 = vpack.c.b16 %v11284, %v11281
    %v11777 = vpack.c.b16 %v11285, %v11282
    %v11778 = vpack.c.b16 %v11286, %v11283
    %v11779 = vpack.c.b16 %v11290, %v11287
    %v11780 = vpack.c.b16 %v11291, %v11288
    %v11781 = vpack.c.b16 %v11292, %v11289
    %v11782 = vpack.c.b16 %v11296, %v11293
    %v11783 = vpack.c.b16 %v11297, %v11294
    %v11784 = vpack.c.b16 %v11298, %v11295
    %v11785 = vpack.c.b16 %v11302, %v11299
    %v11786 = vpack.c.b16 %v11303, %v11300
    %v11787 = vpack.c.b16 %v11304, %v11301
    %v11788 = vpack.c.b16 %v11308, %v11305
    %v11789 = vpack.c.b16 %v11309, %v11306
    %v11790 = vpack.c.b16 %v11310, %v11307
    %v11791 = vpack.c.b16 %v11314, %v11311
    %v11792 = vpack.c.b16 %v11315, %v11312
    %v11793 = vpack.c.b16 %v11316, %v11313
    %v11794 = vpack.c.b16 %v11320, %v11317
    %v11795 = vpack.c.b16 %v11321, %v11318
    %v11796 = vpack.c.b16 %v11322, %v11319
    %v11797 = vpack.c.b16 %v11326, %v11323
    %v11798 = vpack.c.b16 %v11327, %v11324
    %v11799 = vpack.c.b16 %v11328, %v11325
    %v11800 = vpack.c.b16 %v11332, %v11329
    %v11801 = vpack.c.b16 %v11333, %v11330
    %v11802 = vpack.c.b16 %v11334, %v11331
    %v11803 = vpack.c.b16 %v11338, %v11335
    %v11804 = vpack.c.b16 %v11339, %v11336
    %v11805 = vpack.c.b16 %v11340, %v11337
    %v11806 = vpack.c.b16 %v11344, %v11341
    %v11807 = vpack.c.b16 %v11345, %v11342
    %v11808 = vpack.c.b16 %v11346, %v11343
    %v11809 = vpack.c.b16 %v11350, %v11347
    %v11810 = vpack.c.b16 %v11351, %v11348
    %v11811 = vpack.c.b16 %v11352, %v11349
    %v11812 = vpack.c.b16 %v11356, %v11353
    %v11813 = vpack.c.b16 %v11357, %v11354
    %v11814 = vpack.c.b16 %v11358, %v11355
    %v11815 = vpack.c.b16 %v11362, %v11359
    %v11816 = vpack.c.b16 %v11363, %v11360
    %v11817 = vpack.c.b16 %v11364, %v11361
    %v11818 = vpack.c.b16 %v11368, %v11365
    %v11819 = vpack.c.b16 %v11369, %v11366
    %v11820 = vpack.c.b16 %v11370, %v11367
    %v11821 = vpack.c.b16 %v11374, %v11371
    %v11822 = vpack.c.b16 %v11375, %v11372
    %v11823 = vpack.c.b16 %v11376, %v11373
    %v11824 = vpack.c.b16 %v11380, %v11377
    %v11825 = vpack.c.b16 %v11381, %v11378
    %v11826 = vpack.c.b16 %v11382, %v11379
    %v11827 = vpack.c.b16 %v11386, %v11383
    %v11828 = vpack.c.b16 %v11387, %v11384
    %v11829 = vpack.c.b16 %v11388, %v11385
    %v11830 = vpack.c.b16 %v11392, %v11389
    %v11831 = vpack.c.b16 %v11393, %v11390
    %v11832 = vpack.c.b16 %v11394, %v11391
    %v11833 = vpack.c.b16 %v11398, %v11395
    %v11834 = vpack.c.b16 %v11399, %v11396
    %v11835 = vpack.c.b16 %v11400, %v11397
    %v11836 = vpack.c.b16 %v11404, %v11401
    %v11837 = vpack.c.b16 %v11405, %v11402
    %v11838 = vpack.c.b16 %v11406, %v11403
    %v11839 = vpack.c.b16 %v11410, %v11407
    %v11840 = vpack.c.b16 %v11411, %v11408
    %v11841 = vpack.c.b16 %v11412, %v11409
    %v11842 = vpack.c.b16 %v11416, %v11413
    %v11843 = vpack.c.b16 %v11417, %v11414
    %v11844 = vpack.c.b16 %v11418, %v11415
    %v11845 = vpack.c.b16 %v11422, %v11419
    %v11846 = vpack.c.b16 %v11423, %v11420
    %v11847 = vpack.c.b16 %v11424, %v11421
    %v11848 = vpack.c.b16 %v11428, %v11425
    %v11849 = vpack.c.b16 %v11429, %v11426
    %v11850 = vpack.c.b16 %v11430, %v11427
    %v11851 = vpack.c.b16 %v11434, %v11431
    %v11852 = vpack.c.b16 %v11435, %v11432
    %v11853 = vpack.c.b16 %v11436, %v11433
    %v11854 = vpack.c.b16 %v11440, %v11437
    %v11855 = vpack.c.b16 %v11441, %v11438
    %v11856 = vpack.c.b16 %v11442, %v11439
    %v11857 = vpack.c.b16 %v11446, %v11443
    %v11858 = vpack.c.b16 %v11447, %v11444
    %v11859 = vpack.c.b16 %v11448, %v11445
    %v11860 = vpack.c.b16 %v11452, %v11449
    %v11861 = vpack.c.b16 %v11453, %v11450
    %v11862 = vpack.c.b16 %v11454, %v11451
    %v11863 = vpack.c.b16 %v11458, %v11455
    %v11864 = vpack.c.b16 %v11459, %v11456
    %v11865 = vpack.c.b16 %v11460, %v11457
    %v11866 = vpack.c.b16 %v11464, %v11461
    %v11867 = vpack.c.b16 %v11465, %v11462
    %v11868 = vpack.c.b16 %v11466, %v11463
    %v11869 = vpack.c.b16 %v11470, %v11467
    %v11870 = vpack.c.b16 %v11471, %v11468
    %v11871 = vpack.c.b16 %v11472, %v11469
    %v11872 = vpack.c.b16 %v11476, %v11473
    %v11873 = vpack.c.b16 %v11477, %v11474
    %v11874 = vpack.c.b16 %v11478, %v11475
    %v11875 = vpack.c.b16 %v11482, %v11479
    %v11876 = vpack.c.b16 %v11483, %v11480
    %v11877 = vpack.c.b16 %v11484, %v11481
    %v11878 = vpack.c.b16 %v11488, %v11485
    %v11879 = vpack.c.b16 %v11489, %v11486
    %v11880 = vpack.c.b16 %v11490, %v11487
    %v11881 = vpack.c.b16 %v11494, %v11491
    %v11882 = vpack.c.b16 %v11495, %v11492
    %v11883 = vpack.c.b16 %v11496, %v11493
    %v11884 = vpack.c.b16 %v11500, %v11497
    %v11885 = vpack.c.b16 %v11501, %v11498
    %v11886 = vpack.c.b16 %v11502, %v11499
    %v11887 = vpack.c.b16 %v11506, %v11503
    %v11888 = vpack.c.b16 %v11507, %v11504
    %v11889 = vpack.c.b16 %v11508, %v11505
    %v11890 = vpack.c.b16 %v11512, %v11509
    %v11891 = vpack.c.b16 %v11513, %v11510
    %v11892 = vpack.c.b16 %v11514, %v11511
    %v11893 = vpack.c.b16 %v11518, %v11515
    %v11894 = vpack.c.b16 %v11519, %v11516
    %v11895 = vpack.c.b16 %v11520, %v11517
    %v11896 = vpack.c.b16 %v11524, %v11521
    %v11897 = vpack.c.b16 %v11525, %v11522
    %v11898 = vpack.c.b16 %v11526, %v11523
    %v11899 = vpack.c.b16 %v11530, %v11527
    %v11900 = vpack.c.b16 %v11531, %v11528
    %v11901 = vpack.c.b16 %v11532, %v11529
    %v11902 = vpack.c.b16 %v11536, %v11533
    %v11903 = vpack.c.b16 %v11537, %v11534
    %v11904 = vpack.c.b16 %v11538, %v11535
    %v11905 = vpack.c.b16 %v11542, %v11539
    %v11906 = vpack.c.b16 %v11543, %v11540
    %v11907 = vpack.c.b16 %v11544, %v11541
    %v11908 = vpack.c.b16 %v11548, %v11545
    %v11909 = vpack.c.b16 %v11549, %v11546
    %v11910 = vpack.c.b16 %v11550, %v11547
    %v11911 = vpack.c.b16 %v11554, %v11551
    %v11912 = vpack.c.b16 %v11555, %v11552
    %v11913 = vpack.c.b16 %v11556, %v11553
    %v11914 = vpack.c.b16 %v11560, %v11557
    %v11915 = vpack.c.b16 %v11561, %v11558
    %v11916 = vpack.c.b16 %v11562, %v11559
    %v11917 = vpack.c.b16 %v11566, %v11563
    %v11918 = vpack.c.b16 %v11567, %v11564
    %v11919 = vpack.c.b16 %v11568, %v11565
    %v11920 = vpack.c.b16 %v11572, %v11569
    %v11921 = vpack.c.b16 %v11573, %v11570
    %v11922 = vpack.c.b16 %v11574, %v11571
    %v11923 = vpack.c.b16 %v11578, %v11575
    %v11924 = vpack.c.b16 %v11579, %v11576
    %v11925 = vpack.c.b16 %v11580, %v11577
    %v11926 = vpack.c.b16 %v11584, %v11581
    %v11927 = vpack.c.b16 %v11585, %v11582
    %v11928 = vpack.c.b16 %v11586, %v11583
    %v11929 = vpack.c.b16 %v11590, %v11587
    %v11930 = vpack.c.b16 %v11591, %v11588
    %v11931 = vpack.c.b16 %v11592, %v11589
    %v11932 = vpack.c.b16 %v11596, %v11593
    %v11933 = vpack.c.b16 %v11597, %v11594
    %v11934 = vpack.c.b16 %v11598, %v11595
    %v11935 = vpack.c.b16 %v11602, %v11599
    %v11936 = vpack.c.b16 %v11603, %v11600
    %v11937 = vpack.c.b16 %v11604, %v11601
    %v11938 = vpack.c.b16 %v11608, %v11605
    %v11939 = vpack.c.b16 %v11609, %v11606
    %v11940 = vpack.c.b16 %v11610, %v11607
    %v11941 = vpack.c.b16 %v11614, %v11611
    %v11942 = vpack.c.b16 %v11615, %v11612
    %v11943 = vpack.c.b16 %v11616, %v11613
    %v11944 = vpack.c.b16 %v11620, %v11617
    %v11945 = vpack.c.b16 %v11621, %v11618
    %v11946 = vpack.c.b16 %v11622, %v11619
    %v11947 = vpack.c.b16 %v11626, %v11623
    %v11948 = vpack.c.b16 %v11627, %v11624
    %v11949 = vpack.c.b16 %v11628, %v11625
    %v11950 = vpack.c.b16 %v11632, %v11629
    %v11951 = vpack.c.b16 %v11633, %v11630
    %v11952 = vpack.c.b16 %v11634, %v11631
    %v11953 = vpack.c.b16 %v11638, %v11635
    %v11954 = vpack.c.b16 %v11639, %v11636
    %v11955 = vpack.c.b16 %v11640, %v11637
    %v11956 = vpack.c.b16 %v11644, %v11641
    %v11957 = vpack.c.b16 %v11645, %v11642
    %v11958 = vpack.c.b16 %v11646, %v11643
    %v11959 = vpack.c.b16 %v11650, %v11647
    %v11960 = vpack.c.b16 %v11651, %v11648
    %v11961 = vpack.c.b16 %v11652, %v11649
    %v11962 = vpack.c.b16 %v11656, %v11653
    %v11963 = vpack.c.b16 %v11657, %v11654
    %v11964 = vpack.c.b16 %v11658, %v11655
    %v11965 = vpack.c.b16 %v11662, %v11659
    %v11966 = vpack.c.b16 %v11663, %v11660
    %v11967 = vpack.c.b16 %v11664, %v11661
    %v11968 = vpack.c.b16 %v11668, %v11665
    %v11969 = vpack.c.b16 %v11669, %v11666
    %v11970 = vpack.c.b16 %v11670, %v11667
    %v11971 = vpack.c.b16 %v11674, %v11671
    %v11972 = vpack.c.b16 %v11675, %v11672
    %v11973 = vpack.c.b16 %v11676, %v11673
    %v11974 = vpack.c.b16 %v11680, %v11677
    %v11975 = vpack.c.b16 %v11681, %v11678
    %v11976 = vpack.c.b16 %v11682, %v11679
    %v11977 = vpack.c.b16 %v11686, %v11683
    %v11978 = vpack.c.b16 %v11687, %v11684
    %v11979 = vpack.c.b16 %v11688, %v11685
    %v11980 = vpack.c.b16 %v11692, %v11689
    %v11981 = vpack.c.b16 %v11693, %v11690
    %v11982 = vpack.c.b16 %v11694, %v11691
    %12271 = vmatprep.subr.bf16.mxu0 %v11696
    %12272 = vmatpush1.bf16.msra.mxu0 %v11695
    %12273 = vmatprep.subr.bf16.mxu0 %v11699
    %12274 = vmatpush1.bf16.msra.mxu0 %v11698
    %12275 = vmatprep.subr.bf16.mxu0 %v11702
    %12276 = vmatpush1.bf16.msra.mxu0 %v11701
    %12277 = vmatprep.subr.bf16.mxu0 %v11705
    %12278 = vmatpush1.bf16.msra.mxu0 %v11704
    %12279 = vmatprep.subr.bf16.mxu0 %v11708
    %12280 = vmatpush1.bf16.msra.mxu0 %v11707
    %12281 = vmatprep.subr.bf16.mxu0 %v11711
    %12282 = vmatpush1.bf16.msra.mxu0 %v11710
    %12283 = vmatprep.subr.bf16.mxu0 %v11714
    %12284 = vmatpush1.bf16.msra.mxu0 %v11713
    %12285 = vmatprep.subr.bf16.mxu0 %v11717
    %12286 = vmatpush1.bf16.msra.mxu0 %v11716
    %12287 = vmatprep.subr.bf16.mxu0 %v11720
    %12288 = vmatpush1.bf16.msra.mxu0 %v11719
    %12289 = vmatprep.subr.bf16.mxu0 %v11723
    %12290 = vmatpush1.bf16.msra.mxu0 %v11722
    %12291 = vmatprep.subr.bf16.mxu0 %v11726
    %12292 = vmatpush1.bf16.msra.mxu0 %v11725
    %12293 = vmatprep.subr.bf16.mxu0 %v11729
    %12294 = vmatpush1.bf16.msra.mxu0 %v11728
    %12295 = vmatprep.subr.bf16.mxu0 %v11732
    %12296 = vmatpush1.bf16.msra.mxu0 %v11731
    %12297 = vmatprep.subr.bf16.mxu0 %v11735
    %12298 = vmatpush1.bf16.msra.mxu0 %v11734
    %12299 = vmatprep.subr.bf16.mxu0 %v11738
    %12300 = vmatpush1.bf16.msra.mxu0 %v11737
    %12301 = vmatprep.subr.bf16.mxu0 %v11741
    %12302 = vmatpush1.bf16.msra.mxu0 %v11740
    %12303 = vmatprep.mubr.bf16.mxu0 %v10311
    %12304 = vmatmul.mubr.bf16.gmra.mrb[0].mxu0 %v10310
    %v12305 = vpop.f32.mrb[0].mxu0
    %v12306 = vadd.f32 %v10723, %v12305
    %v12307 = vpop.f32.mrb[0].mxu0
    %v12308 = vadd.f32 %v10727, %v12307
    %v12309 = vpop.f32.mrb[0].mxu0
    %v12310 = vadd.f32 %v10723, %v12309
    %v12311 = vpop.f32.mrb[0].mxu0
    %v12312 = vadd.f32 %v10727, %v12311
    %12313 = vmatprep.mubr.bf16.mxu0 %v10323
    %12314 = vmatmul.mubr.bf16.gmra.mrb[0].mxu0 %v10322
    %v12315 = vpop.f32.mrb[0].mxu0
    %v12316 = vadd.f32 %v10723, %v12315
    %v12317 = vpop.f32.mrb[0].mxu0
    %v12318 = vadd.f32 %v10727, %v12317
    %v12319 = vpop.f32.mrb[0].mxu0
    %v12320 = vadd.f32 %v10723, %v12319
    %v12321 = vpop.f32.mrb[0].mxu0
    %v12322 = vadd.f32 %v10727, %v12321
    %12323 = vdwg.mxu0
    %12324 = vmatprep.subr.bf16.mxu0 %v11744
    %12325 = vmatpush1.bf16.msra.mxu0 %v11743
    %12326 = vmatprep.subr.bf16.mxu0 %v11747
    %12327 = vmatpush1.bf16.msra.mxu0 %v11746
    %12328 = vmatprep.subr.bf16.mxu0 %v11750
    %12329 = vmatpush1.bf16.msra.mxu0 %v11749
    %12330 = vmatprep.subr.bf16.mxu0 %v11753
    %12331 = vmatpush1.bf16.msra.mxu0 %v11752
    %12332 = vmatprep.subr.bf16.mxu0 %v11756
    %12333 = vmatpush1.bf16.msra.mxu0 %v11755
    %12334 = vmatprep.subr.bf16.mxu0 %v11759
    %12335 = vmatpush1.bf16.msra.mxu0 %v11758
    %12336 = vmatprep.subr.bf16.mxu0 %v11762
    %12337 = vmatpush1.bf16.msra.mxu0 %v11761
    %12338 = vmatprep.subr.bf16.mxu0 %v11765
    %12339 = vmatpush1.bf16.msra.mxu0 %v11764
    %12340 = vmatprep.subr.bf16.mxu0 %v11768
    %12341 = vmatpush1.bf16.msra.mxu0 %v11767
    %12342 = vmatprep.subr.bf16.mxu0 %v11771
    %12343 = vmatpush1.bf16.msra.mxu0 %v11770
    %12344 = vmatprep.subr.bf16.mxu0 %v11774
    %12345 = vmatpush1.bf16.msra.mxu0 %v11773
    %12346 = vmatprep.subr.bf16.mxu0 %v11777
    %12347 = vmatpush1.bf16.msra.mxu0 %v11776
    %12348 = vmatprep.subr.bf16.mxu0 %v11780
    %12349 = vmatpush1.bf16.msra.mxu0 %v11779
    %12350 = vmatprep.subr.bf16.mxu0 %v11783
    %12351 = vmatpush1.bf16.msra.mxu0 %v11782
    %12352 = vmatprep.subr.bf16.mxu0 %v11786
    %12353 = vmatpush1.bf16.msra.mxu0 %v11785
    %12354 = vmatprep.subr.bf16.mxu0 %v11789
    %12355 = vmatpush1.bf16.msra.mxu0 %v11788
    %12356 = vmatprep.mubr.bf16.mxu0 %v10313
    %12357 = vmatmul.mubr.bf16.gmra.mrb[0].mxu0 %v10312
    %v12358 = vpop.f32.mrb[0].mxu0
    %v12359 = vadd.f32 %v12306, %v12358
    %v12360 = vpop.f32.mrb[0].mxu0
    %v12361 = vadd.f32 %v12308, %v12360
    %v12362 = vpop.f32.mrb[0].mxu0
    %v12363 = vadd.f32 %v12310, %v12362
    %v12364 = vpop.f32.mrb[0].mxu0
    %v12365 = vadd.f32 %v12312, %v12364
    %12366 = vmatprep.mubr.bf16.mxu0 %v10325
    %12367 = vmatmul.mubr.bf16.gmra.mrb[0].mxu0 %v10324
    %v12368 = vpop.f32.mrb[0].mxu0
    %v12369 = vadd.f32 %v12316, %v12368
    %v12370 = vpop.f32.mrb[0].mxu0
    %v12371 = vadd.f32 %v12318, %v12370
    %v12372 = vpop.f32.mrb[0].mxu0
    %v12373 = vadd.f32 %v12320, %v12372
    %v12374 = vpop.f32.mrb[0].mxu0
    %v12375 = vadd.f32 %v12322, %v12374
    %12376 = vdwg.mxu0
    %12377 = vmatprep.subr.bf16.mxu0 %v11792
    %12378 = vmatpush1.bf16.msra.mxu0 %v11791
    %12379 = vmatprep.subr.bf16.mxu0 %v11795
    %12380 = vmatpush1.bf16.msra.mxu0 %v11794
    %12381 = vmatprep.subr.bf16.mxu0 %v11798
    %12382 = vmatpush1.bf16.msra.mxu0 %v11797
    %12383 = vmatprep.subr.bf16.mxu0 %v11801
    %12384 = vmatpush1.bf16.msra.mxu0 %v11800
    %12385 = vmatprep.subr.bf16.mxu0 %v11804
    %12386 = vmatpush1.bf16.msra.mxu0 %v11803
    %12387 = vmatprep.subr.bf16.mxu0 %v11807
    %12388 = vmatpush1.bf16.msra.mxu0 %v11806
    %12389 = vmatprep.subr.bf16.mxu0 %v11810
    %12390 = vmatpush1.bf16.msra.mxu0 %v11809
    %12391 = vmatprep.subr.bf16.mxu0 %v11813
    %12392 = vmatpush1.bf16.msra.mxu0 %v11812
    %12393 = vmatprep.subr.bf16.mxu0 %v11816
    %12394 = vmatpush1.bf16.msra.mxu0 %v11815
    %12395 = vmatprep.subr.bf16.mxu0 %v11819
    %12396 = vmatpush1.bf16.msra.mxu0 %v11818
    %12397 = vmatprep.subr.bf16.mxu0 %v11822
    %12398 = vmatpush1.bf16.msra.mxu0 %v11821
    %12399 = vmatprep.subr.bf16.mxu0 %v11825
    %12400 = vmatpush1.bf16.msra.mxu0 %v11824
    %12401 = vmatprep.subr.bf16.mxu0 %v11828
    %12402 = vmatpush1.bf16.msra.mxu0 %v11827
    %12403 = vmatprep.subr.bf16.mxu0 %v11831
    %12404 = vmatpush1.bf16.msra.mxu0 %v11830
    %12405 = vmatprep.subr.bf16.mxu0 %v11834
    %12406 = vmatpush1.bf16.msra.mxu0 %v11833
    %12407 = vmatprep.subr.bf16.mxu0 %v11837
    %12408 = vmatpush1.bf16.msra.mxu0 %v11836
    %12409 = vmatprep.mubr.bf16.mxu0 %v10315
    %12410 = vmatmul.mubr.bf16.gmra.mrb[0].mxu0 %v10314
    %v12411 = vpop.f32.mrb[0].mxu0
    %v12412 = vadd.f32 %v12359, %v12411
    %v12413 = vpop.f32.mrb[0].mxu0
    %v12414 = vadd.f32 %v12361, %v12413
    %v12415 = vpop.f32.mrb[0].mxu0
    %v12416 = vadd.f32 %v12363, %v12415
    %v12417 = vpop.f32.mrb[0].mxu0
    %v12418 = vadd.f32 %v12365, %v12417
    %12419 = vmatprep.mubr.bf16.mxu0 %v10327
    %12420 = vmatmul.mubr.bf16.gmra.mrb[0].mxu0 %v10326
    %v12421 = vpop.f32.mrb[0].mxu0
    %v12422 = vadd.f32 %v12369, %v12421
    %v12423 = vpop.f32.mrb[0].mxu0
    %v12424 = vadd.f32 %v12371, %v12423
    %v12425 = vpop.f32.mrb[0].mxu0
    %v12426 = vadd.f32 %v12373, %v12425
    %v12427 = vpop.f32.mrb[0].mxu0
    %v12428 = vadd.f32 %v12375, %v12427
    %12429 = vdwg.mxu0
    %12430 = vmatprep.subr.bf16.mxu0 %v11840
    %12431 = vmatpush1.bf16.msra.mxu0 %v11839
    %12432 = vmatprep.subr.bf16.mxu0 %v11843
    %12433 = vmatpush1.bf16.msra.mxu0 %v11842
    %12434 = vmatprep.subr.bf16.mxu0 %v11846
    %12435 = vmatpush1.bf16.msra.mxu0 %v11845
    %12436 = vmatprep.subr.bf16.mxu0 %v11849
    %12437 = vmatpush1.bf16.msra.mxu0 %v11848
    %12438 = vmatprep.subr.bf16.mxu0 %v11852
    %12439 = vmatpush1.bf16.msra.mxu0 %v11851
    %12440 = vmatprep.subr.bf16.mxu0 %v11855
    %12441 = vmatpush1.bf16.msra.mxu0 %v11854
    %12442 = vmatprep.subr.bf16.mxu0 %v11858
    %12443 = vmatpush1.bf16.msra.mxu0 %v11857
    %12444 = vmatprep.subr.bf16.mxu0 %v11861
    %12445 = vmatpush1.bf16.msra.mxu0 %v11860
    %12446 = vmatprep.subr.bf16.mxu0 %v11864
    %12447 = vmatpush1.bf16.msra.mxu0 %v11863
    %12448 = vmatprep.subr.bf16.mxu0 %v11867
    %12449 = vmatpush1.bf16.msra.mxu0 %v11866
    %12450 = vmatprep.subr.bf16.mxu0 %v11870
    %12451 = vmatpush1.bf16.msra.mxu0 %v11869
    %12452 = vmatprep.subr.bf16.mxu0 %v11873
    %12453 = vmatpush1.bf16.msra.mxu0 %v11872
    %12454 = vmatprep.subr.bf16.mxu0 %v11876
    %12455 = vmatpush1.bf16.msra.mxu0 %v11875
    %12456 = vmatprep.subr.bf16.mxu0 %v11879
    %12457 = vmatpush1.bf16.msra.mxu0 %v11878
    %12458 = vmatprep.subr.bf16.mxu0 %v11882
    %12459 = vmatpush1.bf16.msra.mxu0 %v11881
    %12460 = vmatprep.subr.bf16.mxu0 %v11885
    %12461 = vmatpush1.bf16.msra.mxu0 %v11884
    %12462 = vmatprep.mubr.bf16.mxu0 %v10317
    %12463 = vmatmul.mubr.bf16.gmra.mrb[0].mxu0 %v10316
    %v12464 = vpop.f32.mrb[0].mxu0
    %v12465 = vadd.f32 %v12412, %v12464
    %v12466 = vpop.f32.mrb[0].mxu0
    %v12467 = vadd.f32 %v12414, %v12466
    %v12468 = vpop.f32.mrb[0].mxu0
    %v12469 = vadd.f32 %v12416, %v12468
    %v12470 = vpop.f32.mrb[0].mxu0
    %v12471 = vadd.f32 %v12418, %v12470
    %12472 = vmatprep.mubr.bf16.mxu0 %v10329
    %12473 = vmatmul.mubr.bf16.gmra.mrb[0].mxu0 %v10328
    %v12474 = vpop.f32.mrb[0].mxu0
    %v12475 = vadd.f32 %v12422, %v12474
    %v12476 = vpop.f32.mrb[0].mxu0
    %v12477 = vadd.f32 %v12424, %v12476
    %v12478 = vpop.f32.mrb[0].mxu0
    %v12479 = vadd.f32 %v12426, %v12478
    %v12480 = vpop.f32.mrb[0].mxu0
    %v12481 = vadd.f32 %v12428, %v12480
    %12482 = vdwg.mxu0
    %12483 = vmatprep.subr.bf16.mxu0 %v11888
    %12484 = vmatpush1.bf16.msra.mxu0 %v11887
    %12485 = vmatprep.subr.bf16.mxu0 %v11891
    %12486 = vmatpush1.bf16.msra.mxu0 %v11890
    %12487 = vmatprep.subr.bf16.mxu0 %v11894
    %12488 = vmatpush1.bf16.msra.mxu0 %v11893
    %12489 = vmatprep.subr.bf16.mxu0 %v11897
    %12490 = vmatpush1.bf16.msra.mxu0 %v11896
    %12491 = vmatprep.subr.bf16.mxu0 %v11900
    %12492 = vmatpush1.bf16.msra.mxu0 %v11899
    %12493 = vmatprep.subr.bf16.mxu0 %v11903
    %12494 = vmatpush1.bf16.msra.mxu0 %v11902
    %12495 = vmatprep.subr.bf16.mxu0 %v11906
    %12496 = vmatpush1.bf16.msra.mxu0 %v11905
    %12497 = vmatprep.subr.bf16.mxu0 %v11909
    %12498 = vmatpush1.bf16.msra.mxu0 %v11908
    %12499 = vmatprep.subr.bf16.mxu0 %v11912
    %12500 = vmatpush1.bf16.msra.mxu0 %v11911
    %12501 = vmatprep.subr.bf16.mxu0 %v11915
    %12502 = vmatpush1.bf16.msra.mxu0 %v11914
    %12503 = vmatprep.subr.bf16.mxu0 %v11918
    %12504 = vmatpush1.bf16.msra.mxu0 %v11917
    %12505 = vmatprep.subr.bf16.mxu0 %v11921
    %12506 = vmatpush1.bf16.msra.mxu0 %v11920
    %12507 = vmatprep.subr.bf16.mxu0 %v11924
    %12508 = vmatpush1.bf16.msra.mxu0 %v11923
    %12509 = vmatprep.subr.bf16.mxu0 %v11927
    %12510 = vmatpush1.bf16.msra.mxu0 %v11926
    %12511 = vmatprep.subr.bf16.mxu0 %v11930
    %12512 = vmatpush1.bf16.msra.mxu0 %v11929
    %12513 = vmatprep.subr.bf16.mxu0 %v11933
    %12514 = vmatpush1.bf16.msra.mxu0 %v11932
    %12515 = vmatprep.mubr.bf16.mxu0 %v10319
    %12516 = vmatmul.mubr.bf16.gmra.mrb[0].mxu0 %v10318
    %v12517 = vpop.f32.mrb[0].mxu0
    %v12518 = vadd.f32 %v12465, %v12517
    %v12519 = vpop.f32.mrb[0].mxu0
    %v12520 = vadd.f32 %v12467, %v12519
    %v12521 = vpop.f32.mrb[0].mxu0
    %v12522 = vadd.f32 %v12469, %v12521
    %v12523 = vpop.f32.mrb[0].mxu0
    %v12524 = vadd.f32 %v12471, %v12523
    %12525 = vmatprep.mubr.bf16.mxu0 %v10331
    %12526 = vmatmul.mubr.bf16.gmra.mrb[0].mxu0 %v10330
    %v12527 = vpop.f32.mrb[0].mxu0
    %v12528 = vadd.f32 %v12475, %v12527
    %v12529 = vpop.f32.mrb[0].mxu0
    %v12530 = vadd.f32 %v12477, %v12529
    %v12531 = vpop.f32.mrb[0].mxu0
    %v12532 = vadd.f32 %v12479, %v12531
    %v12533 = vpop.f32.mrb[0].mxu0
    %v12534 = vadd.f32 %v12481, %v12533
    %12535 = vdwg.mxu0
    %12536 = vmatprep.subr.bf16.mxu0 %v11936
    %12537 = vmatpush1.bf16.msra.mxu0 %v11935
    %12538 = vmatprep.subr.bf16.mxu0 %v11939
    %12539 = vmatpush1.bf16.msra.mxu0 %v11938
    %12540 = vmatprep.subr.bf16.mxu0 %v11942
    %12541 = vmatpush1.bf16.msra.mxu0 %v11941
    %12542 = vmatprep.subr.bf16.mxu0 %v11945
    %12543 = vmatpush1.bf16.msra.mxu0 %v11944
    %12544 = vmatprep.subr.bf16.mxu0 %v11948
    %12545 = vmatpush1.bf16.msra.mxu0 %v11947
    %12546 = vmatprep.subr.bf16.mxu0 %v11951
    %12547 = vmatpush1.bf16.msra.mxu0 %v11950
    %12548 = vmatprep.subr.bf16.mxu0 %v11954
    %12549 = vmatpush1.bf16.msra.mxu0 %v11953
    %12550 = vmatprep.subr.bf16.mxu0 %v11957
    %12551 = vmatpush1.bf16.msra.mxu0 %v11956
    %12552 = vmatprep.subr.bf16.mxu0 %v11960
    %12553 = vmatpush1.bf16.msra.mxu0 %v11959
    %12554 = vmatprep.subr.bf16.mxu0 %v11963
    %12555 = vmatpush1.bf16.msra.mxu0 %v11962
    %12556 = vmatprep.subr.bf16.mxu0 %v11966
    %12557 = vmatpush1.bf16.msra.mxu0 %v11965
    %12558 = vmatprep.subr.bf16.mxu0 %v11969
    %12559 = vmatpush1.bf16.msra.mxu0 %v11968
    %12560 = vmatprep.subr.bf16.mxu0 %v11972
    %12561 = vmatpush1.bf16.msra.mxu0 %v11971
    %12562 = vmatprep.subr.bf16.mxu0 %v11975
    %12563 = vmatpush1.bf16.msra.mxu0 %v11974
    %12564 = vmatprep.subr.bf16.mxu0 %v11978
    %12565 = vmatpush1.bf16.msra.mxu0 %v11977
    %12566 = vmatprep.subr.bf16.mxu0 %v11981
    %12567 = vmatpush1.bf16.msra.mxu0 %v11980
    %12568 = vmatprep.mubr.bf16.mxu0 %v10321
    %12569 = vmatmul.mubr.bf16.gmra.mrb[0].mxu0 %v10320
    %v12570 = vpop.f32.mrb[0].mxu0
    %v12571 = vadd.f32 %v12518, %v12570
    %v12572 = vpop.f32.mrb[0].mxu0
    %v12573 = vadd.f32 %v12520, %v12572
    %v12574 = vpop.f32.mrb[0].mxu0
    %v12575 = vadd.f32 %v12522, %v12574
    %v12576 = vpop.f32.mrb[0].mxu0
    %v12577 = vadd.f32 %v12524, %v12576
    %12578 = vmatprep.mubr.bf16.mxu0 %v10333
    %12579 = vmatmul.mubr.bf16.gmra.mrb[0].mxu0 %v10332
    %v12580 = vpop.f32.mrb[0].mxu0
    %v12581 = vadd.f32 %v12528, %v12580
    %v12582 = vpop.f32.mrb[0].mxu0
    %v12583 = vadd.f32 %v12530, %v12582
    %v12584 = vpop.f32.mrb[0].mxu0
    %v12585 = vadd.f32 %v12532, %v12584
    %v12586 = vpop.f32.mrb[0].mxu0
    %v12587 = vadd.f32 %v12534, %v12586
    %12588 = vdwg.mxu0
    %12589 = vmatprep.subr.bf16.mxu0 0
    %12590 = vmatpush1.bf16.msra.mxu0 %v11697
    %12591 = vmatprep.subr.bf16.mxu0 0
    %12592 = vmatpush1.bf16.msra.mxu0 %v11700
    %12593 = vmatprep.subr.bf16.mxu0 0
    %12594 = vmatpush1.bf16.msra.mxu0 %v11703
    %12595 = vmatprep.subr.bf16.mxu0 0
    %12596 = vmatpush1.bf16.msra.mxu0 %v11706
    %12597 = vmatprep.subr.bf16.mxu0 0
    %12598 = vmatpush1.bf16.msra.mxu0 %v11709
    %12599 = vmatprep.subr.bf16.mxu0 0
    %12600 = vmatpush1.bf16.msra.mxu0 %v11712
    %12601 = vmatprep.subr.bf16.mxu0 0
    %12602 = vmatpush1.bf16.msra.mxu0 %v11715
    %12603 = vmatprep.subr.bf16.mxu0 0
    %12604 = vmatpush1.bf16.msra.mxu0 %v11718
    %12605 = vmatprep.subr.bf16.mxu0 0
    %12606 = vmatpush1.bf16.msra.mxu0 %v11721
    %12607 = vmatprep.subr.bf16.mxu0 0
    %12608 = vmatpush1.bf16.msra.mxu0 %v11724
    %12609 = vmatprep.subr.bf16.mxu0 0
    %12610 = vmatpush1.bf16.msra.mxu0 %v11727
    %12611 = vmatprep.subr.bf16.mxu0 0
    %12612 = vmatpush1.bf16.msra.mxu0 %v11730
    %12613 = vmatprep.subr.bf16.mxu0 0
    %12614 = vmatpush1.bf16.msra.mxu0 %v11733
    %12615 = vmatprep.subr.bf16.mxu0 0
    %12616 = vmatpush1.bf16.msra.mxu0 %v11736
    %12617 = vmatprep.subr.bf16.mxu0 0
    %12618 = vmatpush1.bf16.msra.mxu0 %v11739
    %12619 = vmatprep.subr.bf16.mxu0 0
    %12620 = vmatpush1.bf16.msra.mxu0 %v11742
    %12621 = vmatprep.mubr.bf16.mxu0 %v10311
    %12622 = vmatmul.mubr.bf16.gmra.mrb[0].mxu0 %v10310
    %v12623 = vpop.f32.mrb[0].mxu0
    %v12624 = vadd.f32 %v10731, %v12623
    %v12625 = vpop.f32.mrb[0].mxu0
    %v12626 = vpop.f32.mrb[0].mxu0
    %v12627 = vadd.f32 %v10731, %v12626
    %v12628 = vpop.f32.mrb[0].mxu0
    %12629 = vmatprep.mubr.bf16.mxu0 %v10323
    %12630 = vmatmul.mubr.bf16.gmra.mrb[0].mxu0 %v10322
    %v12631 = vpop.f32.mrb[0].mxu0
    %v12632 = vadd.f32 %v10731, %v12631
    %v12633 = vpop.f32.mrb[0].mxu0
    %v12634 = vpop.f32.mrb[0].mxu0
    %v12635 = vadd.f32 %v10731, %v12634
    %v12636 = vpop.f32.mrb[0].mxu0
    %12637 = vdwg.mxu0
    %12638 = vmatprep.subr.bf16.mxu0 0
    %12639 = vmatpush1.bf16.msra.mxu0 %v11745
    %12640 = vmatprep.subr.bf16.mxu0 0
    %12641 = vmatpush1.bf16.msra.mxu0 %v11748
    %12642 = vmatprep.subr.bf16.mxu0 0
    %12643 = vmatpush1.bf16.msra.mxu0 %v11751
    %12644 = vmatprep.subr.bf16.mxu0 0
    %12645 = vmatpush1.bf16.msra.mxu0 %v11754
    %12646 = vmatprep.subr.bf16.mxu0 0
    %12647 = vmatpush1.bf16.msra.mxu0 %v11757
    %12648 = vmatprep.subr.bf16.mxu0 0
    %12649 = vmatpush1.bf16.msra.mxu0 %v11760
    %12650 = vmatprep.subr.bf16.mxu0 0
    %12651 = vmatpush1.bf16.msra.mxu0 %v11763
    %12652 = vmatprep.subr.bf16.mxu0 0
    %12653 = vmatpush1.bf16.msra.mxu0 %v11766
    %12654 = vmatprep.subr.bf16.mxu0 0
    %12655 = vmatpush1.bf16.msra.mxu0 %v11769
    %12656 = vmatprep.subr.bf16.mxu0 0
    %12657 = vmatpush1.bf16.msra.mxu0 %v11772
    %12658 = vmatprep.subr.bf16.mxu0 0
    %12659 = vmatpush1.bf16.msra.mxu0 %v11775
    %12660 = vmatprep.subr.bf16.mxu0 0
    %12661 = vmatpush1.bf16.msra.mxu0 %v11778
    %12662 = vmatprep.subr.bf16.mxu0 0
    %12663 = vmatpush1.bf16.msra.mxu0 %v11781
    %12664 = vmatprep.subr.bf16.mxu0 0
    %12665 = vmatpush1.bf16.msra.mxu0 %v11784
    %12666 = vmatprep.subr.bf16.mxu0 0
    %12667 = vmatpush1.bf16.msra.mxu0 %v11787
    %12668 = vmatprep.subr.bf16.mxu0 0
    %12669 = vmatpush1.bf16.msra.mxu0 %v11790
    %12670 = vmatprep.mubr.bf16.mxu0 %v10313
    %12671 = vmatmul.mubr.bf16.gmra.mrb[0].mxu0 %v10312
    %v12672 = vpop.f32.mrb[0].mxu0
    %v12673 = vadd.f32 %v12624, %v12672
    %v12674 = vpop.f32.mrb[0].mxu0
    %v12675 = vpop.f32.mrb[0].mxu0
    %v12676 = vadd.f32 %v12627, %v12675
    %v12677 = vpop.f32.mrb[0].mxu0
    %12678 = vmatprep.mubr.bf16.mxu0 %v10325
    %12679 = vmatmul.mubr.bf16.gmra.mrb[0].mxu0 %v10324
    %v12680 = vpop.f32.mrb[0].mxu0
    %v12681 = vadd.f32 %v12632, %v12680
    %v12682 = vpop.f32.mrb[0].mxu0
    %v12683 = vpop.f32.mrb[0].mxu0
    %v12684 = vadd.f32 %v12635, %v12683
    %v12685 = vpop.f32.mrb[0].mxu0
    %12686 = vdwg.mxu0
    %12687 = vmatprep.subr.bf16.mxu0 0
    %12688 = vmatpush1.bf16.msra.mxu0 %v11793
    %12689 = vmatprep.subr.bf16.mxu0 0
    %12690 = vmatpush1.bf16.msra.mxu0 %v11796
    %12691 = vmatprep.subr.bf16.mxu0 0
    %12692 = vmatpush1.bf16.msra.mxu0 %v11799
    %12693 = vmatprep.subr.bf16.mxu0 0
    %12694 = vmatpush1.bf16.msra.mxu0 %v11802
    %12695 = vmatprep.subr.bf16.mxu0 0
    %12696 = vmatpush1.bf16.msra.mxu0 %v11805
    %12697 = vmatprep.subr.bf16.mxu0 0
    %12698 = vmatpush1.bf16.msra.mxu0 %v11808
    %12699 = vmatprep.subr.bf16.mxu0 0
    %12700 = vmatpush1.bf16.msra.mxu0 %v11811
    %12701 = vmatprep.subr.bf16.mxu0 0
    %12702 = vmatpush1.bf16.msra.mxu0 %v11814
    %12703 = vmatprep.subr.bf16.mxu0 0
    %12704 = vmatpush1.bf16.msra.mxu0 %v11817
    %12705 = vmatprep.subr.bf16.mxu0 0
    %12706 = vmatpush1.bf16.msra.mxu0 %v11820
    %12707 = vmatprep.subr.bf16.mxu0 0
    %12708 = vmatpush1.bf16.msra.mxu0 %v11823
    %12709 = vmatprep.subr.bf16.mxu0 0
    %12710 = vmatpush1.bf16.msra.mxu0 %v11826
    %12711 = vmatprep.subr.bf16.mxu0 0
    %12712 = vmatpush1.bf16.msra.mxu0 %v11829
    %12713 = vmatprep.subr.bf16.mxu0 0
    %12714 = vmatpush1.bf16.msra.mxu0 %v11832
    %12715 = vmatprep.subr.bf16.mxu0 0
    %12716 = vmatpush1.bf16.msra.mxu0 %v11835
    %12717 = vmatprep.subr.bf16.mxu0 0
    %12718 = vmatpush1.bf16.msra.mxu0 %v11838
    %12719 = vmatprep.mubr.bf16.mxu0 %v10315
    %12720 = vmatmul.mubr.bf16.gmra.mrb[0].mxu0 %v10314
    %v12721 = vpop.f32.mrb[0].mxu0
    %v12722 = vadd.f32 %v12673, %v12721
    %v12723 = vpop.f32.mrb[0].mxu0
    %v12724 = vpop.f32.mrb[0].mxu0
    %v12725 = vadd.f32 %v12676, %v12724
    %v12726 = vpop.f32.mrb[0].mxu0
    %12727 = vmatprep.mubr.bf16.mxu0 %v10327
    %12728 = vmatmul.mubr.bf16.gmra.mrb[0].mxu0 %v10326
    %v12729 = vpop.f32.mrb[0].mxu0
    %v12730 = vadd.f32 %v12681, %v12729
    %v12731 = vpop.f32.mrb[0].mxu0
    %v12732 = vpop.f32.mrb[0].mxu0
    %v12733 = vadd.f32 %v12684, %v12732
    %v12734 = vpop.f32.mrb[0].mxu0
    %12735 = vdwg.mxu0
    %12736 = vmatprep.subr.bf16.mxu0 0
    %12737 = vmatpush1.bf16.msra.mxu0 %v11841
    %12738 = vmatprep.subr.bf16.mxu0 0
    %12739 = vmatpush1.bf16.msra.mxu0 %v11844
    %12740 = vmatprep.subr.bf16.mxu0 0
    %12741 = vmatpush1.bf16.msra.mxu0 %v11847
    %12742 = vmatprep.subr.bf16.mxu0 0
    %12743 = vmatpush1.bf16.msra.mxu0 %v11850
    %12744 = vmatprep.subr.bf16.mxu0 0
    %12745 = vmatpush1.bf16.msra.mxu0 %v11853
    %12746 = vmatprep.subr.bf16.mxu0 0
    %12747 = vmatpush1.bf16.msra.mxu0 %v11856
    %12748 = vmatprep.subr.bf16.mxu0 0
    %12749 = vmatpush1.bf16.msra.mxu0 %v11859
    %12750 = vmatprep.subr.bf16.mxu0 0
    %12751 = vmatpush1.bf16.msra.mxu0 %v11862
    %12752 = vmatprep.subr.bf16.mxu0 0
    %12753 = vmatpush1.bf16.msra.mxu0 %v11865
    %12754 = vmatprep.subr.bf16.mxu0 0
    %12755 = vmatpush1.bf16.msra.mxu0 %v11868
    %12756 = vmatprep.subr.bf16.mxu0 0
    %12757 = vmatpush1.bf16.msra.mxu0 %v11871
    %12758 = vmatprep.subr.bf16.mxu0 0
    %12759 = vmatpush1.bf16.msra.mxu0 %v11874
    %12760 = vmatprep.subr.bf16.mxu0 0
    %12761 = vmatpush1.bf16.msra.mxu0 %v11877
    %12762 = vmatprep.subr.bf16.mxu0 0
    %12763 = vmatpush1.bf16.msra.mxu0 %v11880
    %12764 = vmatprep.subr.bf16.mxu0 0
    %12765 = vmatpush1.bf16.msra.mxu0 %v11883
    %12766 = vmatprep.subr.bf16.mxu0 0
    %12767 = vmatpush1.bf16.msra.mxu0 %v11886
    %12768 = vmatprep.mubr.bf16.mxu0 %v10317
    %12769 = vmatmul.mubr.bf16.gmra.mrb[0].mxu0 %v10316
    %v12770 = vpop.f32.mrb[0].mxu0
    %v12771 = vadd.f32 %v12722, %v12770
    %v12772 = vpop.f32.mrb[0].mxu0
    %v12773 = vpop.f32.mrb[0].mxu0
    %v12774 = vadd.f32 %v12725, %v12773
    %v12775 = vpop.f32.mrb[0].mxu0
    %12776 = vmatprep.mubr.bf16.mxu0 %v10329
    %12777 = vmatmul.mubr.bf16.gmra.mrb[0].mxu0 %v10328
    %v12778 = vpop.f32.mrb[0].mxu0
    %v12779 = vadd.f32 %v12730, %v12778
    %v12780 = vpop.f32.mrb[0].mxu0
    %v12781 = vpop.f32.mrb[0].mxu0
    %v12782 = vadd.f32 %v12733, %v12781
    %v12783 = vpop.f32.mrb[0].mxu0
    %12784 = vdwg.mxu0
    %12785 = vmatprep.subr.bf16.mxu0 0
    %12786 = vmatpush1.bf16.msra.mxu0 %v11889
    %12787 = vmatprep.subr.bf16.mxu0 0
    %12788 = vmatpush1.bf16.msra.mxu0 %v11892
    %12789 = vmatprep.subr.bf16.mxu0 0
    %12790 = vmatpush1.bf16.msra.mxu0 %v11895
    %12791 = vmatprep.subr.bf16.mxu0 0
    %12792 = vmatpush1.bf16.msra.mxu0 %v11898
    %12793 = vmatprep.subr.bf16.mxu0 0
    %12794 = vmatpush1.bf16.msra.mxu0 %v11901
    %12795 = vmatprep.subr.bf16.mxu0 0
    %12796 = vmatpush1.bf16.msra.mxu0 %v11904
    %12797 = vmatprep.subr.bf16.mxu0 0
    %12798 = vmatpush1.bf16.msra.mxu0 %v11907
    %12799 = vmatprep.subr.bf16.mxu0 0
    %12800 = vmatpush1.bf16.msra.mxu0 %v11910
    %12801 = vmatprep.subr.bf16.mxu0 0
    %12802 = vmatpush1.bf16.msra.mxu0 %v11913
    %12803 = vmatprep.subr.bf16.mxu0 0
    %12804 = vmatpush1.bf16.msra.mxu0 %v11916
    %12805 = vmatprep.subr.bf16.mxu0 0
    %12806 = vmatpush1.bf16.msra.mxu0 %v11919
    %12807 = vmatprep.subr.bf16.mxu0 0
    %12808 = vmatpush1.bf16.msra.mxu0 %v11922
    %12809 = vmatprep.subr.bf16.mxu0 0
    %12810 = vmatpush1.bf16.msra.mxu0 %v11925
    %12811 = vmatprep.subr.bf16.mxu0 0
    %12812 = vmatpush1.bf16.msra.mxu0 %v11928
    %12813 = vmatprep.subr.bf16.mxu0 0
    %12814 = vmatpush1.bf16.msra.mxu0 %v11931
    %12815 = vmatprep.subr.bf16.mxu0 0
    %12816 = vmatpush1.bf16.msra.mxu0 %v11934
    %12817 = vmatprep.mubr.bf16.mxu0 %v10319
    %12818 = vmatmul.mubr.bf16.gmra.mrb[0].mxu0 %v10318
    %v12819 = vpop.f32.mrb[0].mxu0
    %v12820 = vadd.f32 %v12771, %v12819
    %v12821 = vpop.f32.mrb[0].mxu0
    %v12822 = vpop.f32.mrb[0].mxu0
    %v12823 = vadd.f32 %v12774, %v12822
    %v12824 = vpop.f32.mrb[0].mxu0
    %12825 = vmatprep.mubr.bf16.mxu0 %v10331
    %12826 = vmatmul.mubr.bf16.gmra.mrb[0].mxu0 %v10330
    %v12827 = vpop.f32.mrb[0].mxu0
    %v12828 = vadd.f32 %v12779, %v12827
    %v12829 = vpop.f32.mrb[0].mxu0
    %v12830 = vpop.f32.mrb[0].mxu0
    %v12831 = vadd.f32 %v12782, %v12830
    %v12832 = vpop.f32.mrb[0].mxu0
    %12833 = vdwg.mxu0
    %12834 = vmatprep.subr.bf16.mxu0 0
    %12835 = vmatpush1.bf16.msra.mxu0 %v11937
    %12836 = vmatprep.subr.bf16.mxu0 0
    %12837 = vmatpush1.bf16.msra.mxu0 %v11940
    %12838 = vmatprep.subr.bf16.mxu0 0
    %12839 = vmatpush1.bf16.msra.mxu0 %v11943
    %12840 = vmatprep.subr.bf16.mxu0 0
    %12841 = vmatpush1.bf16.msra.mxu0 %v11946
    %12842 = vmatprep.subr.bf16.mxu0 0
    %12843 = vmatpush1.bf16.msra.mxu0 %v11949
    %12844 = vmatprep.subr.bf16.mxu0 0
    %12845 = vmatpush1.bf16.msra.mxu0 %v11952
    %12846 = vmatprep.subr.bf16.mxu0 0
    %12847 = vmatpush1.bf16.msra.mxu0 %v11955
    %12848 = vmatprep.subr.bf16.mxu0 0
    %12849 = vmatpush1.bf16.msra.mxu0 %v11958
    %12850 = vmatprep.subr.bf16.mxu0 0
    %12851 = vmatpush1.bf16.msra.mxu0 %v11961
    %12852 = vmatprep.subr.bf16.mxu0 0
    %12853 = vmatpush1.bf16.msra.mxu0 %v11964
    %12854 = vmatprep.subr.bf16.mxu0 0
    %12855 = vmatpush1.bf16.msra.mxu0 %v11967
    %12856 = vmatprep.subr.bf16.mxu0 0
    %12857 = vmatpush1.bf16.msra.mxu0 %v11970
    %12858 = vmatprep.subr.bf16.mxu0 0
    %12859 = vmatpush1.bf16.msra.mxu0 %v11973
    %12860 = vmatprep.subr.bf16.mxu0 0
    %12861 = vmatpush1.bf16.msra.mxu0 %v11976
    %12862 = vmatprep.subr.bf16.mxu0 0
    %12863 = vmatpush1.bf16.msra.mxu0 %v11979
    %12864 = vmatprep.subr.bf16.mxu0 0
    %12865 = vmatpush1.bf16.msra.mxu0 %v11982
    %12866 = vmatprep.mubr.bf16.mxu0 %v10321
    %12867 = vmatmul.mubr.bf16.gmra.mrb[0].mxu0 %v10320
    %v12868 = vpop.f32.mrb[0].mxu0
    %v12869 = vadd.f32 %v12820, %v12868
    %v12870 = vpop.f32.mrb[0].mxu0
    %v12871 = vpop.f32.mrb[0].mxu0
    %v12872 = vadd.f32 %v12823, %v12871
    %v12873 = vpop.f32.mrb[0].mxu0
    %12874 = vmatprep.mubr.bf16.mxu0 %v10333
    %12875 = vmatmul.mubr.bf16.gmra.mrb[0].mxu0 %v10332
    %v12876 = vpop.f32.mrb[0].mxu0
    %v12877 = vadd.f32 %v12828, %v12876
    %v12878 = vpop.f32.mrb[0].mxu0
    %v12879 = vpop.f32.mrb[0].mxu0
    %v12880 = vadd.f32 %v12831, %v12879
    %v12881 = vpop.f32.mrb[0].mxu0
    %12882 = vdwg.mxu0
    %v12883 = vadd.f32 %v7290, %v12571
    %v12884 = vadd.f32 %v7291, %v12573
    %v12885 = vadd.f32 %v7292, %v12869
    %v12886 = vadd.f32 %v7293, %v12575
    %v12887 = vadd.f32 %v7294, %v12577
    %v12888 = vadd.f32 %v7295, %v12872
    %v12889 = vadd.f32 %v7296, %v12581
    %v12890 = vadd.f32 %v7297, %v12583
    %v12891 = vadd.f32 %v7298, %v12877
    %v12892 = vadd.f32 %v7299, %v12585
    %v12893 = vadd.f32 %v7300, %v12587
    %v12894 = vadd.f32 %v7301, %v12880
    %12895 = vst [vmem:[#allocation29] sm:$0xff] %v12883
    %12896 = vst [vmem:[#allocation29 + $0x8] sm:$0xff] %v12884
    %12897 = vst [vmem:[#allocation29 + $0x10] sm:$0xff] %v12885
    %12898 = vst [vmem:[#allocation29 + $0x18] sm:$0xff] %v12886
    %12899 = vst [vmem:[#allocation29 + $0x20] sm:$0xff] %v12887
    %12900 = vst [vmem:[#allocation29 + $0x28] sm:$0xff] %v12888
    %12901 = vst [vmem:[#allocation29 + $0x30] sm:$0xff] %v12889
    %12902 = vst [vmem:[#allocation29 + $0x38] sm:$0xff] %v12890
    %12903 = vst [vmem:[#allocation29 + $0x40] sm:$0xff] %v12891
    %12904 = vst [vmem:[#allocation29 + $0x48] sm:$0xff] %v12892
    %12905 = vst [vmem:[#allocation29 + $0x50] sm:$0xff] %v12893
    %12906 = vst [vmem:[#allocation29 + $0x58] sm:$0xff] %v12894
    // Predicated region
    $region146: #{block_forward.1} parent=1 // pred_check
      _
    $region147: #{block_forward.1} parent=1 // pred_check_branch
      %12908 = sbr.rel (0) target = $region149
    $region148: #{block_forward.1} parent=1 // pred_region
      %s12910 = ssub.s32 1536, 1536
      %12911 = vsyncadd [#allocation4], %s12910
      %s12912 = sshll.u32 [#allocation29], 4
      %s12913 = int_to_ptr.vmem [resolvable:$true] %s12912
      %12918 = dma.vmem_to_hbm [thread:$0]  %s12913, 1536, %s19, [#allocation4], 384, 384, 24
    $region149: #{block_forward.1} parent=1 // pred_fallthru
      _
    // Predicated region
    $region150: #{block_forward.1} parent=1 // pred_check
      _
    $region151: #{block_forward.1} parent=1 // pred_check_branch
      %12920 = sbr.rel (0) target = $region153
    $region152: #{block_forward.1} parent=1 // pred_region
      _
    $region153: #{block_forward.1} parent=1 // pred_fallthru
      _
    // Predicated region
    $region154: #{block_forward.1} parent=1 // pred_check
      _
    $region155: #{block_forward.1} parent=1 // pred_check_branch
      %12922 = sbr.rel (0) target = $region157
    $region156: #{block_forward.1} parent=1 // pred_region
      _
    $region157: #{block_forward.1} parent=1 // pred_fallthru
      _
    // Predicated region
    $region158: #{block_forward.1} parent=1 // pred_check
      _
    $region159: #{block_forward.1} parent=1 // pred_check_branch
      %12924 = sbr.rel (0) target = $region161
    $region160: #{block_forward.1} parent=1 // pred_region
      %12925 = dma.done [#allocation4], 1536
    $region161: #{block_forward.1} parent=1 // pred_fallthru
      _
    // Predicated region
    $region162: #{block_forward.1} parent=1 // pred_check
      _
    $region163: #{block_forward.1} parent=1 // pred_check_branch
      %12927 = sbr.rel (0) target = $region165
    $region164: #{block_forward.1} parent=1 // pred_region
      _
    $region165: #{block_forward.1} parent=1 // pred_fallthru
      _
    // Predicated region
    $region166: #{block_forward.1} parent=1 // pred_check
      _
    $region167: #{block_forward.1} parent=1 // pred_check_branch
      %12929 = sbr.rel (0) target = $region169
    $region168: #{block_forward.1} parent=1 // pred_region
      _
    $region169: #{block_forward.1} parent=1 // pred_fallthru
      _
    %12930 = vsyncpa [#allocation3], 1
    %12931 = vsyncpa [#allocation6], 1
    %12932 = vsyncpa [#allocation9], 1
    %12933 = vsyncpa [#allocation12], 1
    %12934 = vsyncpa [#allocation15], 1
    %12935 = vsyncpa [#allocation18], 1
    %12936 = vsyncpa [#allocation21], 1
    %12937 = vsyncpa [#allocation24], 1
    %12938 = vsyncpa [#allocation27], 1
    %12939 = vsyncpa [#allocation4], 1

</llo_original>
